<compile_context>
chip_gen: v7x
topology: tpu7x:2x2x1
jax: 0.10.0
libtpu: 0.0.40
codegen_flags: <defaults>
</compile_context>

<pallas_src>
import functools

import jax
import jax.numpy as jnp
from jax import lax
from jax.experimental import pallas as pl
from jax.experimental.pallas import tpu as pltpu

BN_EPS = 1e-5
TILE_PIXELS = 8192                  # pixels per row tile (review: 8192-16384)
VMEM_LIMIT = 32 * 1024 * 1024       # comfortably fits every generation
CPAD = 16                           # bf16 sublane tile: channel padding unit


def _pad16(c):
    return -(-c // CPAD) * CPAD


# ----------------------------------------------------------------------------
# Pass 1: fused dilated 3x3 conv -> z (bf16) + per-tile BN partial sums.
# ----------------------------------------------------------------------------
def _conv_stats_kernel(*refs, chans, cout, d, th, W, n_tiles, multi_tile):
    """One (batch, row-tile) block.

    mains[s]: (1, C_s, th*W) bf16 (channel-major, spatially flattened,
    channels padded to the bf16 sublane tile).  tops/bots[s] (multi-tile only)
    hold a lane-aligned block of the neighbouring row tile; only the last /
    first d*W entries are used (zeroed at the image border).
    """
    ns = len(chans)
    mains, refs = refs[:ns], refs[ns:]
    if multi_tile:
        tops, refs = refs[:ns], refs[ns:]
        bots, refs = refs[:ns], refs[ns:]
    else:
        tops = bots = None
    w_ref, z_ref, stat_ref = refs

    thW = th * W
    dW = d * W

    # --- build the ky/stream-stacked (3*Cin, thW) bf16 operand (aligned) ----
    pieces = []
    for s, c in enumerate(chans):
        xm = mains[s][0]                                     # (c, thW) bf16
        if multi_tile:
            i = pl.program_id(1)
            hb = tops[s].shape[-1]
            zhalo = jnp.zeros((c, dW), xm.dtype)
            top = jnp.where(i > 0, tops[s][0][:, hb - dW:], zhalo)
            bot = jnp.where(i < n_tiles - 1, bots[s][0][:, :dW], zhalo)
        else:
            top = jnp.zeros((c, dW), xm.dtype)
            bot = jnp.zeros((c, dW), xm.dtype)
        if dW < thW:
            v0 = jnp.concatenate([top, xm[:, :thW - dW]], axis=1)   # rows y-d
            v2 = jnp.concatenate([xm[:, dW:], bot], axis=1)         # rows y+d
        else:            # tile height == dilation: +/-d rows come fully from halo
            v0, v2 = top, bot
        pieces += [v0, xm, v2]
    lhs = jnp.concatenate(pieces, axis=0)                    # (K, thW) bf16

    # --- one deep-K MXU dot per horizontal tap -------------------------------
    u0 = jnp.dot(w_ref[0], lhs, preferred_element_type=jnp.float32)
    u1 = jnp.dot(w_ref[1], lhs, preferred_element_type=jnp.float32)
    u2 = jnp.dot(w_ref[2], lhs, preferred_element_type=jnp.float32)

    # --- horizontal taps resolved on the (small, f32) output side ------------
    col = lax.broadcasted_iota(jnp.int32, (1, thW), 1) % W
    zc = jnp.zeros((cout, d), jnp.float32)
    left = jnp.concatenate([zc, u0[:, :thW - d]], axis=1)    # u0 evaluated at x-d
    right = jnp.concatenate([u2[:, d:], zc], axis=1)         # u2 evaluated at x+d
    z = u1 + jnp.where(col >= d, left, 0.0) + jnp.where(col < W - d, right, 0.0)

    z_ref[0] = z.astype(z_ref.dtype)
    s1 = jnp.sum(z, axis=1, keepdims=True)                   # (cout, 1)
    s2 = jnp.sum(z * z, axis=1, keepdims=True)
    stat_ref[0, 0] = jnp.concatenate([s1, s2], axis=1)       # (cout, 2)


# ----------------------------------------------------------------------------
# Pass 2: pure elementwise folded-BN FMA + ReLU (+ fused residual).
# ----------------------------------------------------------------------------
def _apply_kernel(*refs, has_residual):
    if has_residual:
        z_ref, st_ref, res_ref, out_ref = refs
    else:
        z_ref, st_ref, out_ref = refs
        res_ref = None
    st = st_ref[...]                                         # (cout, 2) f32
    y = jnp.maximum(z_ref[0].astype(jnp.float32) * st[:, 0:1] + st[:, 1:2], 0.0)
    if has_residual:
        y = y + res_ref[0].astype(jnp.float32)
    out_ref[0] = y.astype(out_ref.dtype)


# ----------------------------------------------------------------------------
# Tiling helpers.
# ----------------------------------------------------------------------------
def _choose_tile(h, w, d, tile_pixels, n_batch):
    """Rows per grid tile: must divide h, be >= the dilation (so the +/-d row
    halo fits in one neighbouring tile) and give a lane-aligned tile
    ((th*w) % 128 == 0) unless it is the whole image.  Note: the whole-image
    fallback can be lane-unaligned (masked stores) on tiny inputs."""
    cands = [th for th in range(1, h + 1)
             if h % th == 0 and th >= d and (th == h or (th * w) % 128 == 0)]
    if not cands:
        cands = [h]
    fitting = [t for t in cands if t * w <= tile_pixels]
    pool = fitting if fitting else [min(cands)]
    if n_batch == 1:            # v7x: keep >= 2 parallel grid steps if possible
        multi = [t for t in pool if t < h]
        if multi:
            pool = multi
    th = max(pool)
    return th, h // th


def _halo_block(tile_len, halo_len):
    """Smallest lane-aligned (multiple of 128) divisor of tile_len covering the
    halo; falls back to a full tile."""
    for b in range(128, tile_len, 128):
        if tile_len % b == 0 and b >= halo_len:
            return b
    return tile_len


# ----------------------------------------------------------------------------
# REBNCONV wrapper: conv/stats pass + elementwise apply pass.
# ----------------------------------------------------------------------------
def rebnconv(xs, in_chans, params, dirate, residual=None,
             tile_pixels=TILE_PIXELS):
    """relu(batchnorm(conv3x3_dilated(concat(xs, channel)))) [+ residual].

    xs: list of (N, pad16(C_s), H, W) bf16 arrays (the channel concat of the
    PyTorch graph is fused into the kernel; channel dims carry zero padding up
    to the bf16 sublane tile).  Returns (N, pad16(Cout), H, W) bf16.
    """
    n, _, h, w = xs[0].shape
    chans_p = tuple(int(x.shape[1]) for x in xs)
    cout = int(params["w"].shape[0])
    cout_p = _pad16(cout)
    d = int(dirate)
    L = h * w

    th, n_tiles = _choose_tile(h, w, d, tile_pixels, n)
    multi_tile = n_tiles > 1
    thW, dW = th * w, d * w

    # channel-major, spatially flattened activations (channels -> sublanes,
    # pixels -> lanes); the reshape is metadata-only.
    xs_f = [x.reshape(n, cp, L).astype(jnp.bfloat16)
            for x, cp in zip(xs, chans_p)]

    # conv weight -> per-kx (Cout_p, K) bf16 matrices, K = sum_s 3*pad16(C_s);
    # K order = [stream][ky][channel] to match the in-kernel operand stacking.
    w4 = params["w"].astype(jnp.float32)
    per_kx = []
    for kx in range(3):
        blocks, off = [], 0
        for c, cp in zip(in_chans, chans_p):
            ws = jnp.transpose(w4[:, off:off + c, :, kx], (0, 2, 1))  # (co,3,c)
            ws = jnp.pad(ws, ((0, cout_p - cout), (0, 0), (0, cp - c)))
            blocks.append(ws.reshape(cout_p, 3 * cp))
            off += c
        per_kx.append(jnp.concatenate(blocks, axis=1))
    w_stk = jnp.stack(per_kx, axis=0).astype(jnp.bfloat16)   # (3, cout_p, K)
    K = int(w_stk.shape[-1])

    grid = (n, n_tiles)
    comp = pltpu.CompilerParams(
        dimension_semantics=("parallel", "parallel"),   # megacore / v7x 2 TCs
        vmem_limit_bytes=VMEM_LIMIT)

    in_specs = [pl.BlockSpec((1, cp, thW), lambda b, i: (b, 0, i))
                for cp in chans_p]
    inputs = list(xs_f)
    if multi_tile:
        hb = _halo_block(thW, dW)
        r = thW // hb
        nhb = L // hb
        in_specs += [pl.BlockSpec(
            (1, cp, hb), lambda b, i, r=r: (b, 0, jnp.maximum(i * r - 1, 0)))
            for cp in chans_p]
        in_specs += [pl.BlockSpec(
            (1, cp, hb),
            lambda b, i, r=r, m=nhb - 1: (b, 0, jnp.minimum((i + 1) * r, m)))
            for cp in chans_p]
        inputs += xs_f + xs_f
    in_specs.append(pl.BlockSpec((3, cout_p, K), lambda b, i: (0, 0, 0)))
    inputs.append(w_stk)

    kern = functools.partial(_conv_stats_kernel, chans=chans_p, cout=cout_p,
                             d=d, th=th, W=w, n_tiles=n_tiles,
                             multi_tile=multi_tile)
    halo_mul = 3 if multi_tile else 1
    cost1 = pl.CostEstimate(
        flops=2 * cout_p * K * n * L, transcendentals=0,
        bytes_accessed=2 * n * L * (sum(chans_p) * halo_mul + cout_p)
        + 8 * n * n_tiles * cout_p)

    z, partial = pl.pallas_call(
        kern,
        out_shape=(jax.ShapeDtypeStruct((n, cout_p, L), jnp.bfloat16),
                   jax.ShapeDtypeStruct((n, n_tiles, cout_p, 2), jnp.float32)),
        grid=grid,
        in_specs=in_specs,
        out_specs=(pl.BlockSpec((1, cout_p, thW), lambda b, i: (b, 0, i)),
                   pl.BlockSpec((1, 1, cout_p, 2), lambda b, i: (b, i, 0, 0))),
        compiler_params=comp,
        cost_estimate=cost1,
    )(*inputs)

    # fold batch mean/var + gamma/beta into one per-channel scale/shift.
    # (the conv bias cancels exactly against the BN mean subtraction; padded
    #  channels get gamma = beta = 0 and therefore stay exactly zero)
    tot = jnp.sum(partial, axis=(0, 1))                      # (cout_p, 2)
    count = jnp.float32(n * L)
    mean = tot[:, 0] / count
    var = jnp.maximum(tot[:, 1] / count - mean * mean, 0.0)
    gamma = jnp.pad(params["gamma"].astype(jnp.float32), (0, cout_p - cout))
    beta = jnp.pad(params["beta"].astype(jnp.float32), (0, cout_p - cout))
    scale = gamma * lax.rsqrt(var + BN_EPS)
    shift = beta - mean * scale
    st = jnp.stack([scale, shift], axis=1)                   # (cout_p, 2) f32

    in_specs2 = [pl.BlockSpec((1, cout_p, thW), lambda b, i: (b, 0, i)),
                 pl.BlockSpec((cout_p, 2), lambda b, i: (0, 0))]
    inputs2 = [z, st]
    if residual is not None:
        in_specs2.append(pl.BlockSpec((1, cout_p, thW), lambda b, i: (b, 0, i)))
        inputs2.append(residual.reshape(n, cout_p, L).astype(jnp.bfloat16))
    cost2 = pl.CostEstimate(
        flops=3 * n * cout_p * L, transcendentals=0,
        bytes_accessed=2 * n * cout_p * L * (3 if residual is not None else 2))

    y = pl.pallas_call(
        functools.partial(_apply_kernel, has_residual=residual is not None),
        out_shape=jax.ShapeDtypeStruct((n, cout_p, L), jnp.bfloat16),
        grid=grid,
        in_specs=in_specs2,
        out_specs=pl.BlockSpec((1, cout_p, thW), lambda b, i: (b, 0, i)),
        compiler_params=comp,
        cost_estimate=cost2,
    )(*inputs2)
    return y.reshape(n, cout_p, h, w)


# ----------------------------------------------------------------------------
# Glue ops (not the hot path).
# TODO(synk): MaxPool2d(ceil_mode) / bilinear align_corners upsampling are
#             cheap layout ops kept in plain JAX.
# ----------------------------------------------------------------------------
def _pad_channels(x):
    c = x.shape[1]
    cp = _pad16(c)
    if cp == c:
        return x
    return jnp.pad(x, ((0, 0), (0, cp - c), (0, 0), (0, 0)))


def maxpool2x2_ceil(x):
    n, c, h, w = x.shape
    ho, wo = -(-h // 2), -(-w // 2)
    xp = jnp.pad(x, ((0, 0), (0, 0), (0, 2 * ho - h), (0, 2 * wo - w)),
                 constant_values=-jnp.inf)
    return xp.reshape(n, c, ho, 2, wo, 2).max(axis=(3, 5))


def _interp_matrix(n_in, n_out):
    """align_corners=True bilinear interpolation matrix (n_out, n_in)."""
    if n_in == 1 or n_out == 1:
        m = jnp.zeros((n_out, n_in), jnp.float32)
        return m.at[:, 0].set(1.0)
    pos = jnp.arange(n_out, dtype=jnp.float32) * (n_in - 1) / (n_out - 1)
    lo = jnp.clip(jnp.floor(pos).astype(jnp.int32), 0, n_in - 2)
    frac = pos - lo.astype(jnp.float32)
    m = jnp.zeros((n_out, n_in), jnp.float32)
    rows = jnp.arange(n_out)
    m = m.at[rows, lo].add(1.0 - frac)
    m = m.at[rows, lo + 1].add(frac)
    return m


def upsample_like(src, tar):
    """F.interpolate(src, size=tar.shape[2:], mode='bilinear', align_corners=True)."""
    _, _, hs, ws = src.shape
    _, _, ht, wt = tar.shape
    my = _interp_matrix(hs, ht)
    mx = _interp_matrix(ws, wt)
    out = jnp.einsum("oh,nchw->ncow", my, src.astype(jnp.float32))
    out = jnp.einsum("pw,ncow->ncop", mx, out)
    return out.astype(src.dtype)


# ----------------------------------------------------------------------------
# Parameters (deterministic, shapes from RSU5.__init__).
# ----------------------------------------------------------------------------
def make_rebnconv_params(key, in_ch, out_ch):
    k1, k2 = jax.random.split(key)
    return dict(
        w=jax.random.normal(k1, (out_ch, in_ch, 3, 3), jnp.float32) * 0.1,
        b=jax.random.normal(k2, (out_ch,), jnp.float32) * 0.1,
        gamma=jnp.ones((out_ch,), jnp.float32),   # BatchNorm default init
        beta=jnp.zeros((out_ch,), jnp.float32),
    )


def make_rsu5_params(key, in_ch=3, mid_ch=12, out_ch=3):
    spec = [("in", in_ch, out_ch), ("1", out_ch, mid_ch), ("2", mid_ch, mid_ch),
            ("3", mid_ch, mid_ch), ("4", mid_ch, mid_ch), ("5", mid_ch, mid_ch),
            ("4d", 2 * mid_ch, mid_ch), ("3d", 2 * mid_ch, mid_ch),
            ("2d", 2 * mid_ch, mid_ch), ("1d", 2 * mid_ch, out_ch)]
    keys = jax.random.split(key, len(spec))
    return {name: make_rebnconv_params(k, ci, co)
            for k, (name, ci, co) in zip(keys, spec)}


# ----------------------------------------------------------------------------
# RSU5 forward (mirrors the PyTorch graph; concats/residual fused in kernels).
# ----------------------------------------------------------------------------
def rsu5_forward(x, params, tile_pixels=TILE_PIXELS):
    rc = functools.partial(rebnconv, tile_pixels=tile_pixels)
    in_ch = int(x.shape[1])
    out_ch = int(params["in"]["w"].shape[0])
    mid_ch = int(params["1"]["w"].shape[0])

    xp = _pad_channels(x.astype(jnp.bfloat16))
    hxin = rc([xp], [in_ch], params["in"], 1)
    hx1 = rc([hxin], [out_ch], params["1"], 1)
    hx = maxpool2x2_ceil(hx1)
    hx2 = rc([hx], [mid_ch], params["2"], 1)
    hx = maxpool2x2_ceil(hx2)
    hx3 = rc([hx], [mid_ch], params["3"], 1)
    hx = maxpool2x2_ceil(hx3)
    hx4 = rc([hx], [mid_ch], params["4"], 1)
    hx5 = rc([hx4], [mid_ch], params["5"], 2)
    hx4d = rc([hx5, hx4], [mid_ch, mid_ch], params["4d"], 1)     # fused concat
    hx4dup = upsample_like(hx4d, hx3)
    hx3d = rc([hx4dup, hx3], [mid_ch, mid_ch], params["3d"], 1)
    hx3dup = upsample_like(hx3d, hx2)
    hx2d = rc([hx3dup, hx2], [mid_ch, mid_ch], params["2d"], 1)
    hx2dup = upsample_like(hx2d, hx1)
    # final REBNCONV fuses the `+ hxin` residual into the apply pass
    hx1d = rc([hx2dup, hx1], [mid_ch, mid_ch], params["1d"], 1, residual=hxin)
    return hx1d[:, :out_ch].astype(jnp.float32)


# ----------------------------------------------------------------------------
# Pure-JAX f32 reference (mirrors the PyTorch module exactly).
# ----------------------------------------------------------------------------
def _rebnconv_ref(x, p, d):
    z = lax.conv_general_dilated(
        x, p["w"], window_strides=(1, 1), padding=((d, d), (d, d)),
        rhs_dilation=(d, d), dimension_numbers=("NCHW", "OIHW", "NCHW"))
    z = z + p["b"].reshape(1, -1, 1, 1)
    mean = jnp.mean(z, axis=(0, 2, 3), keepdims=True)
    var = jnp.mean(jnp.square(z - mean), axis=(0, 2, 3), keepdims=True)
    z = (z - mean) * lax.rsqrt(var + BN_EPS)
    z = z * p["gamma"].reshape(1, -1, 1, 1) + p["beta"].reshape(1, -1, 1, 1)
    return jnp.maximum(z, 0.0)


def rsu5_ref(x, params):
    hxin = _rebnconv_ref(x, params["in"], 1)
    hx1 = _rebnconv_ref(hxin, params["1"], 1)
    hx = maxpool2x2_ceil(hx1)
    hx2 = _rebnconv_ref(hx, params["2"], 1)
    hx = maxpool2x2_ceil(hx2)
    hx3 = _rebnconv_ref(hx, params["3"], 1)
    hx = maxpool2x2_ceil(hx3)
    hx4 = _rebnconv_ref(hx, params["4"], 1)
    hx5 = _rebnconv_ref(hx4, params["5"], 2)
    hx4d = _rebnconv_ref(jnp.concatenate([hx5, hx4], axis=1), params["4d"], 1)
    hx4dup = upsample_like(hx4d, hx3)
    hx3d = _rebnconv_ref(jnp.concatenate([hx4dup, hx3], axis=1), params["3d"], 1)
    hx3dup = upsample_like(hx3d, hx2)
    hx2d = _rebnconv_ref(jnp.concatenate([hx3dup, hx2], axis=1), params["2d"], 1)
    hx2dup = upsample_like(hx2d, hx1)
    hx1d = _rebnconv_ref(jnp.concatenate([hx2dup, hx1], axis=1), params["1d"], 1)
    return hx1d + hxin


if __name__ == "__main__":
    key = jax.random.PRNGKey(0)
    kx, kp = jax.random.split(key)

    # NCHW like the PyTorch module: (batch=2, in_ch=3, 16, 16)
    x = jax.random.normal(kx, (2, 3, 16, 16), jnp.float32)
    params = make_rsu5_params(kp, in_ch=3, mid_ch=12, out_ch=3)

    fwd = jax.jit(rsu5_forward, static_argnames=("tile_pixels",))
    out = jax.block_until_ready(fwd(x, params))
    assert out.shape == (2, 3, 16, 16)
    assert bool(jnp.all(jnp.isfinite(out)))

    # sanity-check against the f32 reference (bf16 activations -> loose tol)
    ref = jax.block_until_ready(jax.jit(rsu5_ref)(x, params))
    scale = float(jnp.max(jnp.abs(ref))) + 1e-6
    err = float(jnp.max(jnp.abs(out - ref))) / scale
    assert err < 0.15, f"kernel deviates from reference: rel max err {err:.4f}"

    # also exercise the multi-row-tile (halo) path on the same small input
    out_tiled = jax.block_until_ready(fwd(x, params, tile_pixels=128))
    err_tiled = float(jnp.max(jnp.abs(out_tiled - ref))) / scale
    assert err_tiled < 0.15, f"tiled path deviates: rel max err {err_tiled:.4f}"

    print("KERNEL_OK")
</pallas_src>

<mosaic_0001>
module attributes {stable_mosaic.version = 11 : i64} {
  func.func private @main(%arg0: i32) attributes {dimension_semantics = [#tpu.dimension_semantics<core_parallel>], iteration_bounds = array<i64: 2>, tpu.core_type = #tpu.core_type<sc_scalar_subcore>, window_params = []} {
    return
  }
}

module attributes {stable_mosaic.version = 11 : i64} {
  func.func private @main(%arg0: i32) attributes {dimension_semantics = [#tpu.dimension_semantics<core_parallel>], iteration_bounds = array<i64: 2>, tpu.core_type = #tpu.core_type<sc_scalar_subcore>, window_params = []} {
    return
  }
}

module attributes {stable_mosaic.version = 11 : i64} {
  func.func @_conv_stats_kernel(%arg0: i32, %arg1: i32, %arg2: memref<1x16x256xbf16, #tpu.memory_space<vmem>>, %arg3: memref<3x16x48xbf16, #tpu.memory_space<vmem>>, %arg4: memref<1x16x256xbf16, #tpu.memory_space<vmem>>, %arg5: memref<1x1x16x2xf32, #tpu.memory_space<vmem>>) attributes {dimension_semantics = [#tpu.dimension_semantics<parallel>, #tpu.dimension_semantics<parallel>], iteration_bounds = array<i64: 2, 1>, scalar_prefetch = 0 : i64, scratch_operands = 0 : i64, tpu.core_type = #tpu.core_type<tc>, window_params = [{transform_indices = @transform_0, window_bounds = array<i64: 1, 16, 256>}, {pipeline_mode = #tpu.pipeline_mode<synchronous>, transform_indices = @transform_1, window_bounds = array<i64: 3, 16, 48>}, {transform_indices = @transform_2, window_bounds = array<i64: 1, 16, 256>}, {transform_indices = @transform_3, window_bounds = array<i64: 1, 1, 16, 2>}]} {
    %c0 = arith.constant 0 : index
    %c0_0 = arith.constant 0 : index
    %c0_1 = arith.constant 0 : index
    %0 = vector.load %arg2[%c0, %c0_0, %c0_1] : memref<1x16x256xbf16, #tpu.memory_space<vmem>>, vector<1x16x256xbf16>
    %1 = vector.shape_cast %0 : vector<1x16x256xbf16> to vector<16x256xbf16>
    %cst = arith.constant 0.000000e+00 : bf16
    %2 = vector.broadcast %cst : bf16 to vector<16x16xbf16>
    %cst_2 = arith.constant 0.000000e+00 : bf16
    %3 = vector.broadcast %cst_2 : bf16 to vector<16x16xbf16>
    %4 = vector.extract_strided_slice %1 {offsets = [0, 0], sizes = [16, 240], strides = [1, 1]} : vector<16x256xbf16> to vector<16x240xbf16>
    %5 = tpu.concatenate %2, %4 in 1 : vector<16x16xbf16>, vector<16x240xbf16> -> vector<16x256xbf16>
    %6 = vector.extract_strided_slice %1 {offsets = [0, 16], sizes = [16, 240], strides = [1, 1]} : vector<16x256xbf16> to vector<16x240xbf16>
    %7 = tpu.concatenate %6, %3 in 1 : vector<16x240xbf16>, vector<16x16xbf16> -> vector<16x256xbf16>
    %8 = tpu.concatenate %5, %1, %7 in 0 : vector<16x256xbf16>, vector<16x256xbf16>, vector<16x256xbf16> -> vector<48x256xbf16>
    %c0_3 = arith.constant 0 : index
    %c0_4 = arith.constant 0 : index
    %c0_5 = arith.constant 0 : index
    %9 = vector.load %arg3[%c0_3, %c0_4, %c0_5] : memref<3x16x48xbf16, #tpu.memory_space<vmem>>, vector<1x16x48xbf16>
    %10 = vector.shape_cast %9 : vector<1x16x48xbf16> to vector<16x48xbf16>
    %cst_6 = arith.constant dense<0.000000e+00> : vector<16x256xf32>
    %11 = tpu.matmul %10, %8, %cst_6 {dimension_numbers = #tpu.dot_dimension_numbers<[1], [0], [0], [1], [0, 0, 1, 1], [], []>} : vector<16x48xbf16>, vector<48x256xbf16>, vector<16x256xf32> -> vector<16x256xf32>
    %c1 = arith.constant 1 : index
    %c0_7 = arith.constant 0 : index
    %c0_8 = arith.constant 0 : index
    %12 = vector.load %arg3[%c1, %c0_7, %c0_8] : memref<3x16x48xbf16, #tpu.memory_space<vmem>>, vector<1x16x48xbf16>
    %13 = vector.shape_cast %12 : vector<1x16x48xbf16> to vector<16x48xbf16>
    %cst_9 = arith.constant dense<0.000000e+00> : vector<16x256xf32>
    %14 = tpu.matmul %13, %8, %cst_9 {dimension_numbers = #tpu.dot_dimension_numbers<[1], [0], [0], [1], [0, 0, 1, 1], [], []>} : vector<16x48xbf16>, vector<48x256xbf16>, vector<16x256xf32> -> vector<16x256xf32>
    %c2 = arith.constant 2 : index
    %c0_10 = arith.constant 0 : index
    %c0_11 = arith.constant 0 : index
    %15 = vector.load %arg3[%c2, %c0_10, %c0_11] : memref<3x16x48xbf16, #tpu.memory_space<vmem>>, vector<1x16x48xbf16>
    %16 = vector.shape_cast %15 : vector<1x16x48xbf16> to vector<16x48xbf16>
    %cst_12 = arith.constant dense<0.000000e+00> : vector<16x256xf32>
    %17 = tpu.matmul %16, %8, %cst_12 {dimension_numbers = #tpu.dot_dimension_numbers<[1], [0], [0], [1], [0, 0, 1, 1], [], []>} : vector<16x48xbf16>, vector<48x256xbf16>, vector<16x256xf32> -> vector<16x256xf32>
    %18 = tpu.iota {dimensions = array<i32: 1>} : vector<1x256xi32>
    %c16_i32 = arith.constant 16 : i32
    %c0_i32 = arith.constant 0 : i32
    %19 = arith.cmpi eq, %c16_i32, %c0_i32 : i32
    %c1_i32 = arith.constant 1 : i32
    %20 = arith.select %19, %c1_i32, %c16_i32 : i32
    %21 = vector.broadcast %20 : i32 to vector<1x256xi32>
    %22 = arith.remsi %18, %21 : vector<1x256xi32>
    %c0_i32_13 = arith.constant 0 : i32
    %23 = vector.broadcast %c0_i32_13 : i32 to vector<1x256xi32>
    %24 = arith.cmpi ne, %22, %23 : vector<1x256xi32>
    %c0_i32_14 = arith.constant 0 : i32
    %25 = vector.broadcast %c0_i32_14 : i32 to vector<1x256xi32>
    %26 = arith.cmpi slt, %22, %25 : vector<1x256xi32>
    %c0_i32_15 = arith.constant 0 : i32
    %27 = arith.cmpi slt, %20, %c0_i32_15 : i32
    %28 = vector.broadcast %27 : i1 to vector<1x256xi1>
    %29 = vector.broadcast %28 : vector<1x256xi1> to vector<1x256xi1>
    %30 = arith.xori %26, %29 : vector<1x256xi1>
    %31 = arith.andi %30, %24 : vector<1x256xi1>
    %32 = vector.broadcast %20 : i32 to vector<1x256xi32>
    %33 = arith.addi %22, %32 : vector<1x256xi32>
    %34 = arith.select %31, %33, %22 : vector<1x256xi1>, vector<1x256xi32>
    %cst_16 = arith.constant 0.000000e+00 : f32
    %35 = vector.broadcast %cst_16 : f32 to vector<16x1xf32>
    %36 = vector.extract_strided_slice %11 {offsets = [0, 0], sizes = [16, 255], strides = [1, 1]} : vector<16x256xf32> to vector<16x255xf32>
    %37 = tpu.concatenate %35, %36 in 1 : vector<16x1xf32>, vector<16x255xf32> -> vector<16x256xf32>
    %38 = vector.extract_strided_slice %17 {offsets = [0, 1], sizes = [16, 255], strides = [1, 1]} : vector<16x256xf32> to vector<16x255xf32>
    %39 = tpu.concatenate %38, %35 in 1 : vector<16x255xf32>, vector<16x1xf32> -> vector<16x256xf32>
    %c1_i32_17 = arith.constant 1 : i32
    %40 = vector.broadcast %c1_i32_17 : i32 to vector<1x256xi32>
    %41 = arith.cmpi sge, %34, %40 : vector<1x256xi32>
    %cst_18 = arith.constant 0.000000e+00 : f32
    %42 = vector.shape_cast %41 : vector<1x256xi1> to vector<1x256xi1>
    %43 = vector.broadcast %42 : vector<1x256xi1> to vector<16x256xi1>
    %44 = vector.broadcast %cst_18 : f32 to vector<16x256xf32>
    %45 = arith.select %43, %37, %44 : vector<16x256xi1>, vector<16x256xf32>
    %46 = arith.addf %14, %45 : vector<16x256xf32>
    %c15_i32 = arith.constant 15 : i32
    %47 = vector.broadcast %c15_i32 : i32 to vector<1x256xi32>
    %48 = arith.cmpi slt, %34, %47 : vector<1x256xi32>
    %cst_19 = arith.constant 0.000000e+00 : f32
    %49 = vector.shape_cast %48 : vector<1x256xi1> to vector<1x256xi1>
    %50 = vector.broadcast %49 : vector<1x256xi1> to vector<16x256xi1>
    %51 = vector.broadcast %cst_19 : f32 to vector<16x256xf32>
    %52 = arith.select %50, %39, %51 : vector<16x256xi1>, vector<16x256xf32>
    %53 = arith.addf %46, %52 : vector<16x256xf32>
    %54 = arith.truncf %53 : vector<16x256xf32> to vector<16x256xbf16>
    %c0_20 = arith.constant 0 : index
    %c0_21 = arith.constant 0 : index
    %c0_22 = arith.constant 0 : index
    %55 = vector.load %arg4[%c0_20, %c0_21, %c0_22] : memref<1x16x256xbf16, #tpu.memory_space<vmem>>, vector<1x16x256xbf16>
    %56 = vector.shape_cast %55 : vector<1x16x256xbf16> to vector<16x256xbf16>
    %57 = vector.shape_cast %54 : vector<16x256xbf16> to vector<1x16x256xbf16>
    tpu.vector_store %arg4[%c0_20, %c0_21, %c0_22], %57 {strides = array<i32>} : memref<1x16x256xbf16, #tpu.memory_space<vmem>>, vector<1x16x256xbf16>,
    %cst_23 = arith.constant dense<0.000000e+00> : vector<16xf32>
    %58 = vector.multi_reduction <add>, %53, %cst_23 [1] : vector<16x256xf32> to vector<16xf32>
    %59 = vector.shape_cast %58 : vector<16xf32> to vector<16x1xf32>
    %60 = arith.mulf %53, %53 : vector<16x256xf32>
    %cst_24 = arith.constant dense<0.000000e+00> : vector<16xf32>
    %61 = vector.multi_reduction <add>, %60, %cst_24 [1] : vector<16x256xf32> to vector<16xf32>
    %62 = vector.shape_cast %61 : vector<16xf32> to vector<16x1xf32>
    %63 = tpu.concatenate %59, %62 in 1 : vector<16x1xf32>, vector<16x1xf32> -> vector<16x2xf32>
    %c0_25 = arith.constant 0 : index
    %c0_26 = arith.constant 0 : index
    %c0_27 = arith.constant 0 : index
    %c0_28 = arith.constant 0 : index
    %64 = vector.load %arg5[%c0_25, %c0_26, %c0_27, %c0_28] : memref<1x1x16x2xf32, #tpu.memory_space<vmem>>, vector<1x1x16x2xf32>
    %65 = vector.shape_cast %64 : vector<1x1x16x2xf32> to vector<16x2xf32>
    %66 = vector.shape_cast %63 : vector<16x2xf32> to vector<1x1x16x2xf32>
    tpu.vector_store %arg5[%c0_25, %c0_26, %c0_27, %c0_28], %66 {strides = array<i32>} : memref<1x1x16x2xf32, #tpu.memory_space<vmem>>, vector<1x1x16x2xf32>,
    return
  }
  func.func @transform_0(%arg0: i32, %arg1: i32) -> (i32, i32, i32) {
    %c0_i32 = arith.constant 0 : i32
    %c0_i32_0 = arith.constant 0 : i32
    return %arg0, %c0_i32, %arg1 : i32, i32, i32
  }
  func.func @transform_1(%arg0: i32, %arg1: i32) -> (i32, i32, i32) {
    %c0_i32 = arith.constant 0 : i32
    %c0_i32_0 = arith.constant 0 : i32
    %c0_i32_1 = arith.constant 0 : i32
    %c0_i32_2 = arith.constant 0 : i32
    return %c0_i32, %c0_i32_0, %c0_i32_1 : i32, i32, i32
  }
  func.func @transform_2(%arg0: i32, %arg1: i32) -> (i32, i32, i32) {
    %c0_i32 = arith.constant 0 : i32
    %c0_i32_0 = arith.constant 0 : i32
    return %arg0, %c0_i32, %arg1 : i32, i32, i32
  }
  func.func @transform_3(%arg0: i32, %arg1: i32) -> (i32, i32, i32, i32) {
    %c0_i32 = arith.constant 0 : i32
    %c0_i32_0 = arith.constant 0 : i32
    %c0_i32_1 = arith.constant 0 : i32
    return %arg0, %arg1, %c0_i32, %c0_i32_0 : i32, i32, i32, i32
  }
}

module attributes {stable_mosaic.version = 11 : i64} {
  func.func @_apply_kernel(%arg0: i32, %arg1: i32, %arg2: memref<1x16x256xbf16, #tpu.memory_space<vmem>>, %arg3: memref<16x2xf32, #tpu.memory_space<vmem>>, %arg4: memref<1x16x256xbf16, #tpu.memory_space<vmem>>) attributes {dimension_semantics = [#tpu.dimension_semantics<parallel>, #tpu.dimension_semantics<parallel>], iteration_bounds = array<i64: 2, 1>, scalar_prefetch = 0 : i64, scratch_operands = 0 : i64, tpu.core_type = #tpu.core_type<tc>, window_params = [{transform_indices = @transform_0, window_bounds = array<i64: 1, 16, 256>}, {pipeline_mode = #tpu.pipeline_mode<synchronous>, transform_indices = @transform_1, window_bounds = array<i64: 16, 2>}, {transform_indices = @transform_2, window_bounds = array<i64: 1, 16, 256>}]} {
    %c0 = arith.constant 0 : index
    %c0_0 = arith.constant 0 : index
    %0 = vector.load %arg3[%c0, %c0_0] : memref<16x2xf32, #tpu.memory_space<vmem>>, vector<16x2xf32>
    %c0_1 = arith.constant 0 : index
    %c0_2 = arith.constant 0 : index
    %c0_3 = arith.constant 0 : index
    %1 = vector.load %arg2[%c0_1, %c0_2, %c0_3] : memref<1x16x256xbf16, #tpu.memory_space<vmem>>, vector<1x16x256xbf16>
    %2 = vector.shape_cast %1 : vector<1x16x256xbf16> to vector<16x256xbf16>
    %3 = arith.extf %2 : vector<16x256xbf16> to vector<16x256xf32>
    %4 = vector.extract_strided_slice %0 {offsets = [0, 0], sizes = [16, 1], strides = [1, 1]} : vector<16x2xf32> to vector<16x1xf32>
    %5 = vector.broadcast %4 : vector<16x1xf32> to vector<16x256xf32>
    %6 = arith.mulf %3, %5 : vector<16x256xf32>
    %7 = vector.extract_strided_slice %0 {offsets = [0, 1], sizes = [16, 1], strides = [1, 1]} : vector<16x2xf32> to vector<16x1xf32>
    %8 = vector.broadcast %7 : vector<16x1xf32> to vector<16x256xf32>
    %9 = arith.addf %6, %8 : vector<16x256xf32>
    %cst = arith.constant 0.000000e+00 : f32
    %10 = vector.broadcast %cst : f32 to vector<16x256xf32>
    %11 = arith.maximumf %9, %10 : vector<16x256xf32>
    %12 = arith.truncf %11 : vector<16x256xf32> to vector<16x256xbf16>
    %c0_4 = arith.constant 0 : index
    %c0_5 = arith.constant 0 : index
    %c0_6 = arith.constant 0 : index
    %13 = vector.load %arg4[%c0_4, %c0_5, %c0_6] : memref<1x16x256xbf16, #tpu.memory_space<vmem>>, vector<1x16x256xbf16>
    %14 = vector.shape_cast %13 : vector<1x16x256xbf16> to vector<16x256xbf16>
    %15 = vector.shape_cast %12 : vector<16x256xbf16> to vector<1x16x256xbf16>
    tpu.vector_store %arg4[%c0_4, %c0_5, %c0_6], %15 {strides = array<i32>} : memref<1x16x256xbf16, #tpu.memory_space<vmem>>, vector<1x16x256xbf16>,
    return
  }
  func.func @transform_0(%arg0: i32, %arg1: i32) -> (i32, i32, i32) {
    %c0_i32 = arith.constant 0 : i32
    %c0_i32_0 = arith.constant 0 : i32
    return %arg0, %c0_i32, %arg1 : i32, i32, i32
  }
  func.func @transform_1(%arg0: i32, %arg1: i32) -> (i32, i32) {
    %c0_i32 = arith.constant 0 : i32
    %c0_i32_0 = arith.constant 0 : i32
    %c0_i32_1 = arith.constant 0 : i32
    return %c0_i32, %c0_i32_0 : i32, i32
  }
  func.func @transform_2(%arg0: i32, %arg1: i32) -> (i32, i32, i32) {
    %c0_i32 = arith.constant 0 : i32
    %c0_i32_0 = arith.constant 0 : i32
    return %arg0, %c0_i32, %arg1 : i32, i32, i32
  }
}

module attributes {stable_mosaic.version = 11 : i64} {
  func.func @_apply_kernel(%arg0: i32, %arg1: i32, %arg2: memref<1x16x64xbf16, #tpu.memory_space<vmem>>, %arg3: memref<16x2xf32, #tpu.memory_space<vmem>>, %arg4: memref<1x16x64xbf16, #tpu.memory_space<vmem>>) attributes {dimension_semantics = [#tpu.dimension_semantics<parallel>, #tpu.dimension_semantics<parallel>], iteration_bounds = array<i64: 2, 1>, scalar_prefetch = 0 : i64, scratch_operands = 0 : i64, tpu.core_type = #tpu.core_type<tc>, window_params = [{transform_indices = @transform_0, window_bounds = array<i64: 1, 16, 64>}, {pipeline_mode = #tpu.pipeline_mode<synchronous>, transform_indices = @transform_1, window_bounds = array<i64: 16, 2>}, {transform_indices = @transform_2, window_bounds = array<i64: 1, 16, 64>}]} {
    %c0 = arith.constant 0 : index
    %c0_0 = arith.constant 0 : index
    %0 = vector.load %arg3[%c0, %c0_0] : memref<16x2xf32, #tpu.memory_space<vmem>>, vector<16x2xf32>
    %c0_1 = arith.constant 0 : index
    %c0_2 = arith.constant 0 : index
    %c0_3 = arith.constant 0 : index
    %1 = vector.load %arg2[%c0_1, %c0_2, %c0_3] : memref<1x16x64xbf16, #tpu.memory_space<vmem>>, vector<1x16x64xbf16>
    %2 = vector.shape_cast %1 : vector<1x16x64xbf16> to vector<16x64xbf16>
    %3 = arith.extf %2 : vector<16x64xbf16> to vector<16x64xf32>
    %4 = vector.extract_strided_slice %0 {offsets = [0, 0], sizes = [16, 1], strides = [1, 1]} : vector<16x2xf32> to vector<16x1xf32>
    %5 = vector.broadcast %4 : vector<16x1xf32> to vector<16x64xf32>
    %6 = arith.mulf %3, %5 : vector<16x64xf32>
    %7 = vector.extract_strided_slice %0 {offsets = [0, 1], sizes = [16, 1], strides = [1, 1]} : vector<16x2xf32> to vector<16x1xf32>
    %8 = vector.broadcast %7 : vector<16x1xf32> to vector<16x64xf32>
    %9 = arith.addf %6, %8 : vector<16x64xf32>
    %cst = arith.constant 0.000000e+00 : f32
    %10 = vector.broadcast %cst : f32 to vector<16x64xf32>
    %11 = arith.maximumf %9, %10 : vector<16x64xf32>
    %12 = arith.truncf %11 : vector<16x64xf32> to vector<16x64xbf16>
    %c0_4 = arith.constant 0 : index
    %c0_5 = arith.constant 0 : index
    %c0_6 = arith.constant 0 : index
    %13 = vector.load %arg4[%c0_4, %c0_5, %c0_6] : memref<1x16x64xbf16, #tpu.memory_space<vmem>>, vector<1x16x64xbf16>
    %14 = vector.shape_cast %13 : vector<1x16x64xbf16> to vector<16x64xbf16>
    %15 = vector.shape_cast %12 : vector<16x64xbf16> to vector<1x16x64xbf16>
    tpu.vector_store %arg4[%c0_4, %c0_5, %c0_6], %15 {strides = array<i32>} : memref<1x16x64xbf16, #tpu.memory_space<vmem>>, vector<1x16x64xbf16>,
    return
  }
  func.func @transform_0(%arg0: i32, %arg1: i32) -> (i32, i32, i32) {
    %c0_i32 = arith.constant 0 : i32
    %c0_i32_0 = arith.constant 0 : i32
    return %arg0, %c0_i32, %arg1 : i32, i32, i32
  }
  func.func @transform_1(%arg0: i32, %arg1: i32) -> (i32, i32) {
    %c0_i32 = arith.constant 0 : i32
    %c0_i32_0 = arith.constant 0 : i32
    %c0_i32_1 = arith.constant 0 : i32
    return %c0_i32, %c0_i32_0 : i32, i32
  }
  func.func @transform_2(%arg0: i32, %arg1: i32) -> (i32, i32, i32) {
    %c0_i32 = arith.constant 0 : i32
    %c0_i32_0 = arith.constant 0 : i32
    return %arg0, %c0_i32, %arg1 : i32, i32, i32
  }
}

module attributes {stable_mosaic.version = 11 : i64} {
  func.func @_conv_stats_kernel(%arg0: i32, %arg1: i32, %arg2: memref<1x16x64xbf16, #tpu.memory_space<vmem>>, %arg3: memref<3x16x48xbf16, #tpu.memory_space<vmem>>, %arg4: memref<1x16x64xbf16, #tpu.memory_space<vmem>>, %arg5: memref<1x1x16x2xf32, #tpu.memory_space<vmem>>) attributes {dimension_semantics = [#tpu.dimension_semantics<parallel>, #tpu.dimension_semantics<parallel>], iteration_bounds = array<i64: 2, 1>, scalar_prefetch = 0 : i64, scratch_operands = 0 : i64, tpu.core_type = #tpu.core_type<tc>, window_params = [{transform_indices = @transform_0, window_bounds = array<i64: 1, 16, 64>}, {pipeline_mode = #tpu.pipeline_mode<synchronous>, transform_indices = @transform_1, window_bounds = array<i64: 3, 16, 48>}, {transform_indices = @transform_2, window_bounds = array<i64: 1, 16, 64>}, {transform_indices = @transform_3, window_bounds = array<i64: 1, 1, 16, 2>}]} {
    %c0 = arith.constant 0 : index
    %c0_0 = arith.constant 0 : index
    %c0_1 = arith.constant 0 : index
    %0 = vector.load %arg2[%c0, %c0_0, %c0_1] : memref<1x16x64xbf16, #tpu.memory_space<vmem>>, vector<1x16x64xbf16>
    %1 = vector.shape_cast %0 : vector<1x16x64xbf16> to vector<16x64xbf16>
    %cst = arith.constant 0.000000e+00 : bf16
    %2 = vector.broadcast %cst : bf16 to vector<16x8xbf16>
    %cst_2 = arith.constant 0.000000e+00 : bf16
    %3 = vector.broadcast %cst_2 : bf16 to vector<16x8xbf16>
    %4 = vector.extract_strided_slice %1 {offsets = [0, 0], sizes = [16, 56], strides = [1, 1]} : vector<16x64xbf16> to vector<16x56xbf16>
    %5 = tpu.concatenate %2, %4 in 1 : vector<16x8xbf16>, vector<16x56xbf16> -> vector<16x64xbf16>
    %6 = vector.extract_strided_slice %1 {offsets = [0, 8], sizes = [16, 56], strides = [1, 1]} : vector<16x64xbf16> to vector<16x56xbf16>
    %7 = tpu.concatenate %6, %3 in 1 : vector<16x56xbf16>, vector<16x8xbf16> -> vector<16x64xbf16>
    %8 = tpu.concatenate %5, %1, %7 in 0 : vector<16x64xbf16>, vector<16x64xbf16>, vector<16x64xbf16> -> vector<48x64xbf16>
    %c0_3 = arith.constant 0 : index
    %c0_4 = arith.constant 0 : index
    %c0_5 = arith.constant 0 : index
    %9 = vector.load %arg3[%c0_3, %c0_4, %c0_5] : memref<3x16x48xbf16, #tpu.memory_space<vmem>>, vector<1x16x48xbf16>
    %10 = vector.shape_cast %9 : vector<1x16x48xbf16> to vector<16x48xbf16>
    %cst_6 = arith.constant dense<0.000000e+00> : vector<16x64xf32>
    %11 = tpu.matmul %10, %8, %cst_6 {dimension_numbers = #tpu.dot_dimension_numbers<[1], [0], [0], [1], [0, 0, 1, 1], [], []>} : vector<16x48xbf16>, vector<48x64xbf16>, vector<16x64xf32> -> vector<16x64xf32>
    %c1 = arith.constant 1 : index
    %c0_7 = arith.constant 0 : index
    %c0_8 = arith.constant 0 : index
    %12 = vector.load %arg3[%c1, %c0_7, %c0_8] : memref<3x16x48xbf16, #tpu.memory_space<vmem>>, vector<1x16x48xbf16>
    %13 = vector.shape_cast %12 : vector<1x16x48xbf16> to vector<16x48xbf16>
    %cst_9 = arith.constant dense<0.000000e+00> : vector<16x64xf32>
    %14 = tpu.matmul %13, %8, %cst_9 {dimension_numbers = #tpu.dot_dimension_numbers<[1], [0], [0], [1], [0, 0, 1, 1], [], []>} : vector<16x48xbf16>, vector<48x64xbf16>, vector<16x64xf32> -> vector<16x64xf32>
    %c2 = arith.constant 2 : index
    %c0_10 = arith.constant 0 : index
    %c0_11 = arith.constant 0 : index
    %15 = vector.load %arg3[%c2, %c0_10, %c0_11] : memref<3x16x48xbf16, #tpu.memory_space<vmem>>, vector<1x16x48xbf16>
    %16 = vector.shape_cast %15 : vector<1x16x48xbf16> to vector<16x48xbf16>
    %cst_12 = arith.constant dense<0.000000e+00> : vector<16x64xf32>
    %17 = tpu.matmul %16, %8, %cst_12 {dimension_numbers = #tpu.dot_dimension_numbers<[1], [0], [0], [1], [0, 0, 1, 1], [], []>} : vector<16x48xbf16>, vector<48x64xbf16>, vector<16x64xf32> -> vector<16x64xf32>
    %18 = tpu.iota {dimensions = array<i32: 1>} : vector<1x64xi32>
    %c8_i32 = arith.constant 8 : i32
    %c0_i32 = arith.constant 0 : i32
    %19 = arith.cmpi eq, %c8_i32, %c0_i32 : i32
    %c1_i32 = arith.constant 1 : i32
    %20 = arith.select %19, %c1_i32, %c8_i32 : i32
    %21 = vector.broadcast %20 : i32 to vector<1x64xi32>
    %22 = arith.remsi %18, %21 : vector<1x64xi32>
    %c0_i32_13 = arith.constant 0 : i32
    %23 = vector.broadcast %c0_i32_13 : i32 to vector<1x64xi32>
    %24 = arith.cmpi ne, %22, %23 : vector<1x64xi32>
    %c0_i32_14 = arith.constant 0 : i32
    %25 = vector.broadcast %c0_i32_14 : i32 to vector<1x64xi32>
    %26 = arith.cmpi slt, %22, %25 : vector<1x64xi32>
    %c0_i32_15 = arith.constant 0 : i32
    %27 = arith.cmpi slt, %20, %c0_i32_15 : i32
    %28 = vector.broadcast %27 : i1 to vector<1x64xi1>
    %29 = vector.broadcast %28 : vector<1x64xi1> to vector<1x64xi1>
    %30 = arith.xori %26, %29 : vector<1x64xi1>
    %31 = arith.andi %30, %24 : vector<1x64xi1>
    %32 = vector.broadcast %20 : i32 to vector<1x64xi32>
    %33 = arith.addi %22, %32 : vector<1x64xi32>
    %34 = arith.select %31, %33, %22 : vector<1x64xi1>, vector<1x64xi32>
    %cst_16 = arith.constant 0.000000e+00 : f32
    %35 = vector.broadcast %cst_16 : f32 to vector<16x1xf32>
    %36 = vector.extract_strided_slice %11 {offsets = [0, 0], sizes = [16, 63], strides = [1, 1]} : vector<16x64xf32> to vector<16x63xf32>
    %37 = tpu.concatenate %35, %36 in 1 : vector<16x1xf32>, vector<16x63xf32> -> vector<16x64xf32>
    %38 = vector.extract_strided_slice %17 {offsets = [0, 1], sizes = [16, 63], strides = [1, 1]} : vector<16x64xf32> to vector<16x63xf32>
    %39 = tpu.concatenate %38, %35 in 1 : vector<16x63xf32>, vector<16x1xf32> -> vector<16x64xf32>
    %c1_i32_17 = arith.constant 1 : i32
    %40 = vector.broadcast %c1_i32_17 : i32 to vector<1x64xi32>
    %41 = arith.cmpi sge, %34, %40 : vector<1x64xi32>
    %cst_18 = arith.constant 0.000000e+00 : f32
    %42 = vector.shape_cast %41 : vector<1x64xi1> to vector<1x64xi1>
    %43 = vector.broadcast %42 : vector<1x64xi1> to vector<16x64xi1>
    %44 = vector.broadcast %cst_18 : f32 to vector<16x64xf32>
    %45 = arith.select %43, %37, %44 : vector<16x64xi1>, vector<16x64xf32>
    %46 = arith.addf %14, %45 : vector<16x64xf32>
    %c7_i32 = arith.constant 7 : i32
    %47 = vector.broadcast %c7_i32 : i32 to vector<1x64xi32>
    %48 = arith.cmpi slt, %34, %47 : vector<1x64xi32>
    %cst_19 = arith.constant 0.000000e+00 : f32
    %49 = vector.shape_cast %48 : vector<1x64xi1> to vector<1x64xi1>
    %50 = vector.broadcast %49 : vector<1x64xi1> to vector<16x64xi1>
    %51 = vector.broadcast %cst_19 : f32 to vector<16x64xf32>
    %52 = arith.select %50, %39, %51 : vector<16x64xi1>, vector<16x64xf32>
    %53 = arith.addf %46, %52 : vector<16x64xf32>
    %54 = arith.truncf %53 : vector<16x64xf32> to vector<16x64xbf16>
    %c0_20 = arith.constant 0 : index
    %c0_21 = arith.constant 0 : index
    %c0_22 = arith.constant 0 : index
    %55 = vector.load %arg4[%c0_20, %c0_21, %c0_22] : memref<1x16x64xbf16, #tpu.memory_space<vmem>>, vector<1x16x64xbf16>
    %56 = vector.shape_cast %55 : vector<1x16x64xbf16> to vector<16x64xbf16>
    %57 = vector.shape_cast %54 : vector<16x64xbf16> to vector<1x16x64xbf16>
    tpu.vector_store %arg4[%c0_20, %c0_21, %c0_22], %57 {strides = array<i32>} : memref<1x16x64xbf16, #tpu.memory_space<vmem>>, vector<1x16x64xbf16>,
    %cst_23 = arith.constant dense<0.000000e+00> : vector<16xf32>
    %58 = vector.multi_reduction <add>, %53, %cst_23 [1] : vector<16x64xf32> to vector<16xf32>
    %59 = vector.shape_cast %58 : vector<16xf32> to vector<16x1xf32>
    %60 = arith.mulf %53, %53 : vector<16x64xf32>
    %cst_24 = arith.constant dense<0.000000e+00> : vector<16xf32>
    %61 = vector.multi_reduction <add>, %60, %cst_24 [1] : vector<16x64xf32> to vector<16xf32>
    %62 = vector.shape_cast %61 : vector<16xf32> to vector<16x1xf32>
    %63 = tpu.concatenate %59, %62 in 1 : vector<16x1xf32>, vector<16x1xf32> -> vector<16x2xf32>
    %c0_25 = arith.constant 0 : index
    %c0_26 = arith.constant 0 : index
    %c0_27 = arith.constant 0 : index
    %c0_28 = arith.constant 0 : index
    %64 = vector.load %arg5[%c0_25, %c0_26, %c0_27, %c0_28] : memref<1x1x16x2xf32, #tpu.memory_space<vmem>>, vector<1x1x16x2xf32>
    %65 = vector.shape_cast %64 : vector<1x1x16x2xf32> to vector<16x2xf32>
    %66 = vector.shape_cast %63 : vector<16x2xf32> to vector<1x1x16x2xf32>
    tpu.vector_store %arg5[%c0_25, %c0_26, %c0_27, %c0_28], %66 {strides = array<i32>} : memref<1x1x16x2xf32, #tpu.memory_space<vmem>>, vector<1x1x16x2xf32>,
    return
  }
  func.func @transform_0(%arg0: i32, %arg1: i32) -> (i32, i32, i32) {
    %c0_i32 = arith.constant 0 : i32
    %c0_i32_0 = arith.constant 0 : i32
    return %arg0, %c0_i32, %arg1 : i32, i32, i32
  }
  func.func @transform_1(%arg0: i32, %arg1: i32) -> (i32, i32, i32) {
    %c0_i32 = arith.constant 0 : i32
    %c0_i32_0 = arith.constant 0 : i32
    %c0_i32_1 = arith.constant 0 : i32
    %c0_i32_2 = arith.constant 0 : i32
    return %c0_i32, %c0_i32_0, %c0_i32_1 : i32, i32, i32
  }
  func.func @transform_2(%arg0: i32, %arg1: i32) -> (i32, i32, i32) {
    %c0_i32 = arith.constant 0 : i32
    %c0_i32_0 = arith.constant 0 : i32
    return %arg0, %c0_i32, %arg1 : i32, i32, i32
  }
  func.func @transform_3(%arg0: i32, %arg1: i32) -> (i32, i32, i32, i32) {
    %c0_i32 = arith.constant 0 : i32
    %c0_i32_0 = arith.constant 0 : i32
    %c0_i32_1 = arith.constant 0 : i32
    return %arg0, %arg1, %c0_i32, %c0_i32_0 : i32, i32, i32, i32
  }
}

module attributes {stable_mosaic.version = 11 : i64} {
  func.func @_conv_stats_kernel(%arg0: i32, %arg1: i32, %arg2: memref<1x16x16xbf16, #tpu.memory_space<vmem>>, %arg3: memref<3x16x48xbf16, #tpu.memory_space<vmem>>, %arg4: memref<1x16x16xbf16, #tpu.memory_space<vmem>>, %arg5: memref<1x1x16x2xf32, #tpu.memory_space<vmem>>) attributes {dimension_semantics = [#tpu.dimension_semantics<parallel>, #tpu.dimension_semantics<parallel>], iteration_bounds = array<i64: 2, 1>, scalar_prefetch = 0 : i64, scratch_operands = 0 : i64, tpu.core_type = #tpu.core_type<tc>, window_params = [{transform_indices = @transform_0, window_bounds = array<i64: 1, 16, 16>}, {pipeline_mode = #tpu.pipeline_mode<synchronous>, transform_indices = @transform_1, window_bounds = array<i64: 3, 16, 48>}, {transform_indices = @transform_2, window_bounds = array<i64: 1, 16, 16>}, {transform_indices = @transform_3, window_bounds = array<i64: 1, 1, 16, 2>}]} {
    %c0 = arith.constant 0 : index
    %c0_0 = arith.constant 0 : index
    %c0_1 = arith.constant 0 : index
    %0 = vector.load %arg2[%c0, %c0_0, %c0_1] : memref<1x16x16xbf16, #tpu.memory_space<vmem>>, vector<1x16x16xbf16>
    %1 = vector.shape_cast %0 : vector<1x16x16xbf16> to vector<16x16xbf16>
    %cst = arith.constant 0.000000e+00 : bf16
    %2 = vector.broadcast %cst : bf16 to vector<16x4xbf16>
    %cst_2 = arith.constant 0.000000e+00 : bf16
    %3 = vector.broadcast %cst_2 : bf16 to vector<16x4xbf16>
    %4 = vector.extract_strided_slice %1 {offsets = [0, 0], sizes = [16, 12], strides = [1, 1]} : vector<16x16xbf16> to vector<16x12xbf16>
    %5 = tpu.concatenate %2, %4 in 1 : vector<16x4xbf16>, vector<16x12xbf16> -> vector<16x16xbf16>
    %6 = vector.extract_strided_slice %1 {offsets = [0, 4], sizes = [16, 12], strides = [1, 1]} : vector<16x16xbf16> to vector<16x12xbf16>
    %7 = tpu.concatenate %6, %3 in 1 : vector<16x12xbf16>, vector<16x4xbf16> -> vector<16x16xbf16>
    %8 = tpu.concatenate %5, %1, %7 in 0 : vector<16x16xbf16>, vector<16x16xbf16>, vector<16x16xbf16> -> vector<48x16xbf16>
    %c0_3 = arith.constant 0 : index
    %c0_4 = arith.constant 0 : index
    %c0_5 = arith.constant 0 : index
    %9 = vector.load %arg3[%c0_3, %c0_4, %c0_5] : memref<3x16x48xbf16, #tpu.memory_space<vmem>>, vector<1x16x48xbf16>
    %10 = vector.shape_cast %9 : vector<1x16x48xbf16> to vector<16x48xbf16>
    %cst_6 = arith.constant dense<0.000000e+00> : vector<16x16xf32>
    %11 = tpu.matmul %10, %8, %cst_6 {dimension_numbers = #tpu.dot_dimension_numbers<[1], [0], [0], [1], [0, 0, 1, 1], [], []>} : vector<16x48xbf16>, vector<48x16xbf16>, vector<16x16xf32> -> vector<16x16xf32>
    %c1 = arith.constant 1 : index
    %c0_7 = arith.constant 0 : index
    %c0_8 = arith.constant 0 : index
    %12 = vector.load %arg3[%c1, %c0_7, %c0_8] : memref<3x16x48xbf16, #tpu.memory_space<vmem>>, vector<1x16x48xbf16>
    %13 = vector.shape_cast %12 : vector<1x16x48xbf16> to vector<16x48xbf16>
    %cst_9 = arith.constant dense<0.000000e+00> : vector<16x16xf32>
    %14 = tpu.matmul %13, %8, %cst_9 {dimension_numbers = #tpu.dot_dimension_numbers<[1], [0], [0], [1], [0, 0, 1, 1], [], []>} : vector<16x48xbf16>, vector<48x16xbf16>, vector<16x16xf32> -> vector<16x16xf32>
    %c2 = arith.constant 2 : index
    %c0_10 = arith.constant 0 : index
    %c0_11 = arith.constant 0 : index
    %15 = vector.load %arg3[%c2, %c0_10, %c0_11] : memref<3x16x48xbf16, #tpu.memory_space<vmem>>, vector<1x16x48xbf16>
    %16 = vector.shape_cast %15 : vector<1x16x48xbf16> to vector<16x48xbf16>
    %cst_12 = arith.constant dense<0.000000e+00> : vector<16x16xf32>
    %17 = tpu.matmul %16, %8, %cst_12 {dimension_numbers = #tpu.dot_dimension_numbers<[1], [0], [0], [1], [0, 0, 1, 1], [], []>} : vector<16x48xbf16>, vector<48x16xbf16>, vector<16x16xf32> -> vector<16x16xf32>
    %18 = tpu.iota {dimensions = array<i32: 1>} : vector<1x16xi32>
    %c4_i32 = arith.constant 4 : i32
    %c0_i32 = arith.constant 0 : i32
    %19 = arith.cmpi eq, %c4_i32, %c0_i32 : i32
    %c1_i32 = arith.constant 1 : i32
    %20 = arith.select %19, %c1_i32, %c4_i32 : i32
    %21 = vector.broadcast %20 : i32 to vector<1x16xi32>
    %22 = arith.remsi %18, %21 : vector<1x16xi32>
    %c0_i32_13 = arith.constant 0 : i32
    %23 = vector.broadcast %c0_i32_13 : i32 to vector<1x16xi32>
    %24 = arith.cmpi ne, %22, %23 : vector<1x16xi32>
    %c0_i32_14 = arith.constant 0 : i32
    %25 = vector.broadcast %c0_i32_14 : i32 to vector<1x16xi32>
    %26 = arith.cmpi slt, %22, %25 : vector<1x16xi32>
    %c0_i32_15 = arith.constant 0 : i32
    %27 = arith.cmpi slt, %20, %c0_i32_15 : i32
    %28 = vector.broadcast %27 : i1 to vector<1x16xi1>
    %29 = vector.broadcast %28 : vector<1x16xi1> to vector<1x16xi1>
    %30 = arith.xori %26, %29 : vector<1x16xi1>
    %31 = arith.andi %30, %24 : vector<1x16xi1>
    %32 = vector.broadcast %20 : i32 to vector<1x16xi32>
    %33 = arith.addi %22, %32 : vector<1x16xi32>
    %34 = arith.select %31, %33, %22 : vector<1x16xi1>, vector<1x16xi32>
    %cst_16 = arith.constant 0.000000e+00 : f32
    %35 = vector.broadcast %cst_16 : f32 to vector<16x1xf32>
    %36 = vector.extract_strided_slice %11 {offsets = [0, 0], sizes = [16, 15], strides = [1, 1]} : vector<16x16xf32> to vector<16x15xf32>
    %37 = tpu.concatenate %35, %36 in 1 : vector<16x1xf32>, vector<16x15xf32> -> vector<16x16xf32>
    %38 = vector.extract_strided_slice %17 {offsets = [0, 1], sizes = [16, 15], strides = [1, 1]} : vector<16x16xf32> to vector<16x15xf32>
    %39 = tpu.concatenate %38, %35 in 1 : vector<16x15xf32>, vector<16x1xf32> -> vector<16x16xf32>
    %c1_i32_17 = arith.constant 1 : i32
    %40 = vector.broadcast %c1_i32_17 : i32 to vector<1x16xi32>
    %41 = arith.cmpi sge, %34, %40 : vector<1x16xi32>
    %cst_18 = arith.constant 0.000000e+00 : f32
    %42 = vector.shape_cast %41 : vector<1x16xi1> to vector<1x16xi1>
    %43 = vector.broadcast %42 : vector<1x16xi1> to vector<16x16xi1>
    %44 = vector.broadcast %cst_18 : f32 to vector<16x16xf32>
    %45 = arith.select %43, %37, %44 : vector<16x16xi1>, vector<16x16xf32>
    %46 = arith.addf %14, %45 : vector<16x16xf32>
    %c3_i32 = arith.constant 3 : i32
    %47 = vector.broadcast %c3_i32 : i32 to vector<1x16xi32>
    %48 = arith.cmpi slt, %34, %47 : vector<1x16xi32>
    %cst_19 = arith.constant 0.000000e+00 : f32
    %49 = vector.shape_cast %48 : vector<1x16xi1> to vector<1x16xi1>
    %50 = vector.broadcast %49 : vector<1x16xi1> to vector<16x16xi1>
    %51 = vector.broadcast %cst_19 : f32 to vector<16x16xf32>
    %52 = arith.select %50, %39, %51 : vector<16x16xi1>, vector<16x16xf32>
    %53 = arith.addf %46, %52 : vector<16x16xf32>
    %54 = arith.truncf %53 : vector<16x16xf32> to vector<16x16xbf16>
    %c0_20 = arith.constant 0 : index
    %c0_21 = arith.constant 0 : index
    %c0_22 = arith.constant 0 : index
    %55 = vector.load %arg4[%c0_20, %c0_21, %c0_22] : memref<1x16x16xbf16, #tpu.memory_space<vmem>>, vector<1x16x16xbf16>
    %56 = vector.shape_cast %55 : vector<1x16x16xbf16> to vector<16x16xbf16>
    %57 = vector.shape_cast %54 : vector<16x16xbf16> to vector<1x16x16xbf16>
    tpu.vector_store %arg4[%c0_20, %c0_21, %c0_22], %57 {strides = array<i32>} : memref<1x16x16xbf16, #tpu.memory_space<vmem>>, vector<1x16x16xbf16>,
    %cst_23 = arith.constant dense<0.000000e+00> : vector<16xf32>
    %58 = vector.multi_reduction <add>, %53, %cst_23 [1] : vector<16x16xf32> to vector<16xf32>
    %59 = vector.shape_cast %58 : vector<16xf32> to vector<16x1xf32>
    %60 = arith.mulf %53, %53 : vector<16x16xf32>
    %cst_24 = arith.constant dense<0.000000e+00> : vector<16xf32>
    %61 = vector.multi_reduction <add>, %60, %cst_24 [1] : vector<16x16xf32> to vector<16xf32>
    %62 = vector.shape_cast %61 : vector<16xf32> to vector<16x1xf32>
    %63 = tpu.concatenate %59, %62 in 1 : vector<16x1xf32>, vector<16x1xf32> -> vector<16x2xf32>
    %c0_25 = arith.constant 0 : index
    %c0_26 = arith.constant 0 : index
    %c0_27 = arith.constant 0 : index
    %c0_28 = arith.constant 0 : index
    %64 = vector.load %arg5[%c0_25, %c0_26, %c0_27, %c0_28] : memref<1x1x16x2xf32, #tpu.memory_space<vmem>>, vector<1x1x16x2xf32>
    %65 = vector.shape_cast %64 : vector<1x1x16x2xf32> to vector<16x2xf32>
    %66 = vector.shape_cast %63 : vector<16x2xf32> to vector<1x1x16x2xf32>
    tpu.vector_store %arg5[%c0_25, %c0_26, %c0_27, %c0_28], %66 {strides = array<i32>} : memref<1x1x16x2xf32, #tpu.memory_space<vmem>>, vector<1x1x16x2xf32>,
    return
  }
  func.func @transform_0(%arg0: i32, %arg1: i32) -> (i32, i32, i32) {
    %c0_i32 = arith.constant 0 : i32
    %c0_i32_0 = arith.constant 0 : i32
    return %arg0, %c0_i32, %arg1 : i32, i32, i32
  }
  func.func @transform_1(%arg0: i32, %arg1: i32) -> (i32, i32, i32) {
    %c0_i32 = arith.constant 0 : i32
    %c0_i32_0 = arith.constant 0 : i32
    %c0_i32_1 = arith.constant 0 : i32
    %c0_i32_2 = arith.constant 0 : i32
    return %c0_i32, %c0_i32_0, %c0_i32_1 : i32, i32, i32
  }
  func.func @transform_2(%arg0: i32, %arg1: i32) -> (i32, i32, i32) {
    %c0_i32 = arith.constant 0 : i32
    %c0_i32_0 = arith.constant 0 : i32
    return %arg0, %c0_i32, %arg1 : i32, i32, i32
  }
  func.func @transform_3(%arg0: i32, %arg1: i32) -> (i32, i32, i32, i32) {
    %c0_i32 = arith.constant 0 : i32
    %c0_i32_0 = arith.constant 0 : i32
    %c0_i32_1 = arith.constant 0 : i32
    return %arg0, %arg1, %c0_i32, %c0_i32_0 : i32, i32, i32, i32
  }
}

module attributes {stable_mosaic.version = 11 : i64} {
  func.func @_apply_kernel(%arg0: i32, %arg1: i32, %arg2: memref<1x16x16xbf16, #tpu.memory_space<vmem>>, %arg3: memref<16x2xf32, #tpu.memory_space<vmem>>, %arg4: memref<1x16x16xbf16, #tpu.memory_space<vmem>>) attributes {dimension_semantics = [#tpu.dimension_semantics<parallel>, #tpu.dimension_semantics<parallel>], iteration_bounds = array<i64: 2, 1>, scalar_prefetch = 0 : i64, scratch_operands = 0 : i64, tpu.core_type = #tpu.core_type<tc>, window_params = [{transform_indices = @transform_0, window_bounds = array<i64: 1, 16, 16>}, {pipeline_mode = #tpu.pipeline_mode<synchronous>, transform_indices = @transform_1, window_bounds = array<i64: 16, 2>}, {transform_indices = @transform_2, window_bounds = array<i64: 1, 16, 16>}]} {
    %c0 = arith.constant 0 : index
    %c0_0 = arith.constant 0 : index
    %0 = vector.load %arg3[%c0, %c0_0] : memref<16x2xf32, #tpu.memory_space<vmem>>, vector<16x2xf32>
    %c0_1 = arith.constant 0 : index
    %c0_2 = arith.constant 0 : index
    %c0_3 = arith.constant 0 : index
    %1 = vector.load %arg2[%c0_1, %c0_2, %c0_3] : memref<1x16x16xbf16, #tpu.memory_space<vmem>>, vector<1x16x16xbf16>
    %2 = vector.shape_cast %1 : vector<1x16x16xbf16> to vector<16x16xbf16>
    %3 = arith.extf %2 : vector<16x16xbf16> to vector<16x16xf32>
    %4 = vector.extract_strided_slice %0 {offsets = [0, 0], sizes = [16, 1], strides = [1, 1]} : vector<16x2xf32> to vector<16x1xf32>
    %5 = vector.broadcast %4 : vector<16x1xf32> to vector<16x16xf32>
    %6 = arith.mulf %3, %5 : vector<16x16xf32>
    %7 = vector.extract_strided_slice %0 {offsets = [0, 1], sizes = [16, 1], strides = [1, 1]} : vector<16x2xf32> to vector<16x1xf32>
    %8 = vector.broadcast %7 : vector<16x1xf32> to vector<16x16xf32>
    %9 = arith.addf %6, %8 : vector<16x16xf32>
    %cst = arith.constant 0.000000e+00 : f32
    %10 = vector.broadcast %cst : f32 to vector<16x16xf32>
    %11 = arith.maximumf %9, %10 : vector<16x16xf32>
    %12 = arith.truncf %11 : vector<16x16xf32> to vector<16x16xbf16>
    %c0_4 = arith.constant 0 : index
    %c0_5 = arith.constant 0 : index
    %c0_6 = arith.constant 0 : index
    %13 = vector.load %arg4[%c0_4, %c0_5, %c0_6] : memref<1x16x16xbf16, #tpu.memory_space<vmem>>, vector<1x16x16xbf16>
    %14 = vector.shape_cast %13 : vector<1x16x16xbf16> to vector<16x16xbf16>
    %15 = vector.shape_cast %12 : vector<16x16xbf16> to vector<1x16x16xbf16>
    tpu.vector_store %arg4[%c0_4, %c0_5, %c0_6], %15 {strides = array<i32>} : memref<1x16x16xbf16, #tpu.memory_space<vmem>>, vector<1x16x16xbf16>,
    return
  }
  func.func @transform_0(%arg0: i32, %arg1: i32) -> (i32, i32, i32) {
    %c0_i32 = arith.constant 0 : i32
    %c0_i32_0 = arith.constant 0 : i32
    return %arg0, %c0_i32, %arg1 : i32, i32, i32
  }
  func.func @transform_1(%arg0: i32, %arg1: i32) -> (i32, i32) {
    %c0_i32 = arith.constant 0 : i32
    %c0_i32_0 = arith.constant 0 : i32
    %c0_i32_1 = arith.constant 0 : i32
    return %c0_i32, %c0_i32_0 : i32, i32
  }
  func.func @transform_2(%arg0: i32, %arg1: i32) -> (i32, i32, i32) {
    %c0_i32 = arith.constant 0 : i32
    %c0_i32_0 = arith.constant 0 : i32
    return %arg0, %c0_i32, %arg1 : i32, i32, i32
  }
}

module attributes {stable_mosaic.version = 11 : i64} {
  func.func @_conv_stats_kernel(%arg0: i32, %arg1: i32, %arg2: memref<1x16x4xbf16, #tpu.memory_space<vmem>>, %arg3: memref<3x16x48xbf16, #tpu.memory_space<vmem>>, %arg4: memref<1x16x4xbf16, #tpu.memory_space<vmem>>, %arg5: memref<1x1x16x2xf32, #tpu.memory_space<vmem>>) attributes {dimension_semantics = [#tpu.dimension_semantics<parallel>, #tpu.dimension_semantics<parallel>], iteration_bounds = array<i64: 2, 1>, scalar_prefetch = 0 : i64, scratch_operands = 0 : i64, tpu.core_type = #tpu.core_type<tc>, window_params = [{transform_indices = @transform_0, window_bounds = array<i64: 1, 16, 4>}, {pipeline_mode = #tpu.pipeline_mode<synchronous>, transform_indices = @transform_1, window_bounds = array<i64: 3, 16, 48>}, {transform_indices = @transform_2, window_bounds = array<i64: 1, 16, 4>}, {transform_indices = @transform_3, window_bounds = array<i64: 1, 1, 16, 2>}]} {
    %c0 = arith.constant 0 : index
    %c0_0 = arith.constant 0 : index
    %c0_1 = arith.constant 0 : index
    %0 = vector.load %arg2[%c0, %c0_0, %c0_1] : memref<1x16x4xbf16, #tpu.memory_space<vmem>>, vector<1x16x4xbf16>
    %1 = vector.shape_cast %0 : vector<1x16x4xbf16> to vector<16x4xbf16>
    %cst = arith.constant 0.000000e+00 : bf16
    %2 = vector.broadcast %cst : bf16 to vector<16x2xbf16>
    %cst_2 = arith.constant 0.000000e+00 : bf16
    %3 = vector.broadcast %cst_2 : bf16 to vector<16x2xbf16>
    %4 = vector.extract_strided_slice %1 {offsets = [0, 0], sizes = [16, 2], strides = [1, 1]} : vector<16x4xbf16> to vector<16x2xbf16>
    %5 = tpu.concatenate %2, %4 in 1 : vector<16x2xbf16>, vector<16x2xbf16> -> vector<16x4xbf16>
    %6 = vector.extract_strided_slice %1 {offsets = [0, 2], sizes = [16, 2], strides = [1, 1]} : vector<16x4xbf16> to vector<16x2xbf16>
    %7 = tpu.concatenate %6, %3 in 1 : vector<16x2xbf16>, vector<16x2xbf16> -> vector<16x4xbf16>
    %8 = tpu.concatenate %5, %1, %7 in 0 : vector<16x4xbf16>, vector<16x4xbf16>, vector<16x4xbf16> -> vector<48x4xbf16>
    %c0_3 = arith.constant 0 : index
    %c0_4 = arith.constant 0 : index
    %c0_5 = arith.constant 0 : index
    %9 = vector.load %arg3[%c0_3, %c0_4, %c0_5] : memref<3x16x48xbf16, #tpu.memory_space<vmem>>, vector<1x16x48xbf16>
    %10 = vector.shape_cast %9 : vector<1x16x48xbf16> to vector<16x48xbf16>
    %cst_6 = arith.constant dense<0.000000e+00> : vector<16x4xf32>
    %11 = tpu.matmul %10, %8, %cst_6 {dimension_numbers = #tpu.dot_dimension_numbers<[1], [0], [0], [1], [0, 0, 1, 1], [], []>} : vector<16x48xbf16>, vector<48x4xbf16>, vector<16x4xf32> -> vector<16x4xf32>
    %c1 = arith.constant 1 : index
    %c0_7 = arith.constant 0 : index
    %c0_8 = arith.constant 0 : index
    %12 = vector.load %arg3[%c1, %c0_7, %c0_8] : memref<3x16x48xbf16, #tpu.memory_space<vmem>>, vector<1x16x48xbf16>
    %13 = vector.shape_cast %12 : vector<1x16x48xbf16> to vector<16x48xbf16>
    %cst_9 = arith.constant dense<0.000000e+00> : vector<16x4xf32>
    %14 = tpu.matmul %13, %8, %cst_9 {dimension_numbers = #tpu.dot_dimension_numbers<[1], [0], [0], [1], [0, 0, 1, 1], [], []>} : vector<16x48xbf16>, vector<48x4xbf16>, vector<16x4xf32> -> vector<16x4xf32>
    %c2 = arith.constant 2 : index
    %c0_10 = arith.constant 0 : index
    %c0_11 = arith.constant 0 : index
    %15 = vector.load %arg3[%c2, %c0_10, %c0_11] : memref<3x16x48xbf16, #tpu.memory_space<vmem>>, vector<1x16x48xbf16>
    %16 = vector.shape_cast %15 : vector<1x16x48xbf16> to vector<16x48xbf16>
    %cst_12 = arith.constant dense<0.000000e+00> : vector<16x4xf32>
    %17 = tpu.matmul %16, %8, %cst_12 {dimension_numbers = #tpu.dot_dimension_numbers<[1], [0], [0], [1], [0, 0, 1, 1], [], []>} : vector<16x48xbf16>, vector<48x4xbf16>, vector<16x4xf32> -> vector<16x4xf32>
    %18 = tpu.iota {dimensions = array<i32: 1>} : vector<1x4xi32>
    %c2_i32 = arith.constant 2 : i32
    %c0_i32 = arith.constant 0 : i32
    %19 = arith.cmpi eq, %c2_i32, %c0_i32 : i32
    %c1_i32 = arith.constant 1 : i32
    %20 = arith.select %19, %c1_i32, %c2_i32 : i32
    %21 = vector.broadcast %20 : i32 to vector<1x4xi32>
    %22 = arith.remsi %18, %21 : vector<1x4xi32>
    %c0_i32_13 = arith.constant 0 : i32
    %23 = vector.broadcast %c0_i32_13 : i32 to vector<1x4xi32>
    %24 = arith.cmpi ne, %22, %23 : vector<1x4xi32>
    %c0_i32_14 = arith.constant 0 : i32
    %25 = vector.broadcast %c0_i32_14 : i32 to vector<1x4xi32>
    %26 = arith.cmpi slt, %22, %25 : vector<1x4xi32>
    %c0_i32_15 = arith.constant 0 : i32
    %27 = arith.cmpi slt, %20, %c0_i32_15 : i32
    %28 = vector.broadcast %27 : i1 to vector<1x4xi1>
    %29 = vector.broadcast %28 : vector<1x4xi1> to vector<1x4xi1>
    %30 = arith.xori %26, %29 : vector<1x4xi1>
    %31 = arith.andi %30, %24 : vector<1x4xi1>
    %32 = vector.broadcast %20 : i32 to vector<1x4xi32>
    %33 = arith.addi %22, %32 : vector<1x4xi32>
    %34 = arith.select %31, %33, %22 : vector<1x4xi1>, vector<1x4xi32>
    %cst_16 = arith.constant 0.000000e+00 : f32
    %35 = vector.broadcast %cst_16 : f32 to vector<16x1xf32>
    %36 = vector.extract_strided_slice %11 {offsets = [0, 0], sizes = [16, 3], strides = [1, 1]} : vector<16x4xf32> to vector<16x3xf32>
    %37 = tpu.concatenate %35, %36 in 1 : vector<16x1xf32>, vector<16x3xf32> -> vector<16x4xf32>
    %38 = vector.extract_strided_slice %17 {offsets = [0, 1], sizes = [16, 3], strides = [1, 1]} : vector<16x4xf32> to vector<16x3xf32>
    %39 = tpu.concatenate %38, %35 in 1 : vector<16x3xf32>, vector<16x1xf32> -> vector<16x4xf32>
    %c1_i32_17 = arith.constant 1 : i32
    %40 = vector.broadcast %c1_i32_17 : i32 to vector<1x4xi32>
    %41 = arith.cmpi sge, %34, %40 : vector<1x4xi32>
    %cst_18 = arith.constant 0.000000e+00 : f32
    %42 = vector.shape_cast %41 : vector<1x4xi1> to vector<1x4xi1>
    %43 = vector.broadcast %42 : vector<1x4xi1> to vector<16x4xi1>
    %44 = vector.broadcast %cst_18 : f32 to vector<16x4xf32>
    %45 = arith.select %43, %37, %44 : vector<16x4xi1>, vector<16x4xf32>
    %46 = arith.addf %14, %45 : vector<16x4xf32>
    %c1_i32_19 = arith.constant 1 : i32
    %47 = vector.broadcast %c1_i32_19 : i32 to vector<1x4xi32>
    %48 = arith.cmpi slt, %34, %47 : vector<1x4xi32>
    %cst_20 = arith.constant 0.000000e+00 : f32
    %49 = vector.shape_cast %48 : vector<1x4xi1> to vector<1x4xi1>
    %50 = vector.broadcast %49 : vector<1x4xi1> to vector<16x4xi1>
    %51 = vector.broadcast %cst_20 : f32 to vector<16x4xf32>
    %52 = arith.select %50, %39, %51 : vector<16x4xi1>, vector<16x4xf32>
    %53 = arith.addf %46, %52 : vector<16x4xf32>
    %54 = arith.truncf %53 : vector<16x4xf32> to vector<16x4xbf16>
    %c0_21 = arith.constant 0 : index
    %c0_22 = arith.constant 0 : index
    %c0_23 = arith.constant 0 : index
    %55 = vector.load %arg4[%c0_21, %c0_22, %c0_23] : memref<1x16x4xbf16, #tpu.memory_space<vmem>>, vector<1x16x4xbf16>
    %56 = vector.shape_cast %55 : vector<1x16x4xbf16> to vector<16x4xbf16>
    %57 = vector.shape_cast %54 : vector<16x4xbf16> to vector<1x16x4xbf16>
    tpu.vector_store %arg4[%c0_21, %c0_22, %c0_23], %57 {strides = array<i32>} : memref<1x16x4xbf16, #tpu.memory_space<vmem>>, vector<1x16x4xbf16>,
    %cst_24 = arith.constant dense<0.000000e+00> : vector<16xf32>
    %58 = vector.multi_reduction <add>, %53, %cst_24 [1] : vector<16x4xf32> to vector<16xf32>
    %59 = vector.shape_cast %58 : vector<16xf32> to vector<16x1xf32>
    %60 = arith.mulf %53, %53 : vector<16x4xf32>
    %cst_25 = arith.constant dense<0.000000e+00> : vector<16xf32>
    %61 = vector.multi_reduction <add>, %60, %cst_25 [1] : vector<16x4xf32> to vector<16xf32>
    %62 = vector.shape_cast %61 : vector<16xf32> to vector<16x1xf32>
    %63 = tpu.concatenate %59, %62 in 1 : vector<16x1xf32>, vector<16x1xf32> -> vector<16x2xf32>
    %c0_26 = arith.constant 0 : index
    %c0_27 = arith.constant 0 : index
    %c0_28 = arith.constant 0 : index
    %c0_29 = arith.constant 0 : index
    %64 = vector.load %arg5[%c0_26, %c0_27, %c0_28, %c0_29] : memref<1x1x16x2xf32, #tpu.memory_space<vmem>>, vector<1x1x16x2xf32>
    %65 = vector.shape_cast %64 : vector<1x1x16x2xf32> to vector<16x2xf32>
    %66 = vector.shape_cast %63 : vector<16x2xf32> to vector<1x1x16x2xf32>
    tpu.vector_store %arg5[%c0_26, %c0_27, %c0_28, %c0_29], %66 {strides = array<i32>} : memref<1x1x16x2xf32, #tpu.memory_space<vmem>>, vector<1x1x16x2xf32>,
    return
  }
  func.func @transform_0(%arg0: i32, %arg1: i32) -> (i32, i32, i32) {
    %c0_i32 = arith.constant 0 : i32
    %c0_i32_0 = arith.constant 0 : i32
    return %arg0, %c0_i32, %arg1 : i32, i32, i32
  }
  func.func @transform_1(%arg0: i32, %arg1: i32) -> (i32, i32, i32) {
    %c0_i32 = arith.constant 0 : i32
    %c0_i32_0 = arith.constant 0 : i32
    %c0_i32_1 = arith.constant 0 : i32
    %c0_i32_2 = arith.constant 0 : i32
    return %c0_i32, %c0_i32_0, %c0_i32_1 : i32, i32, i32
  }
  func.func @transform_2(%arg0: i32, %arg1: i32) -> (i32, i32, i32) {
    %c0_i32 = arith.constant 0 : i32
    %c0_i32_0 = arith.constant 0 : i32
    return %arg0, %c0_i32, %arg1 : i32, i32, i32
  }
  func.func @transform_3(%arg0: i32, %arg1: i32) -> (i32, i32, i32, i32) {
    %c0_i32 = arith.constant 0 : i32
    %c0_i32_0 = arith.constant 0 : i32
    %c0_i32_1 = arith.constant 0 : i32
    return %arg0, %arg1, %c0_i32, %c0_i32_0 : i32, i32, i32, i32
  }
}

module attributes {stable_mosaic.version = 11 : i64} {
  func.func @_apply_kernel(%arg0: i32, %arg1: i32, %arg2: memref<1x16x4xbf16, #tpu.memory_space<vmem>>, %arg3: memref<16x2xf32, #tpu.memory_space<vmem>>, %arg4: memref<1x16x4xbf16, #tpu.memory_space<vmem>>) attributes {dimension_semantics = [#tpu.dimension_semantics<parallel>, #tpu.dimension_semantics<parallel>], iteration_bounds = array<i64: 2, 1>, scalar_prefetch = 0 : i64, scratch_operands = 0 : i64, tpu.core_type = #tpu.core_type<tc>, window_params = [{transform_indices = @transform_0, window_bounds = array<i64: 1, 16, 4>}, {pipeline_mode = #tpu.pipeline_mode<synchronous>, transform_indices = @transform_1, window_bounds = array<i64: 16, 2>}, {transform_indices = @transform_2, window_bounds = array<i64: 1, 16, 4>}]} {
    %c0 = arith.constant 0 : index
    %c0_0 = arith.constant 0 : index
    %0 = vector.load %arg3[%c0, %c0_0] : memref<16x2xf32, #tpu.memory_space<vmem>>, vector<16x2xf32>
    %c0_1 = arith.constant 0 : index
    %c0_2 = arith.constant 0 : index
    %c0_3 = arith.constant 0 : index
    %1 = vector.load %arg2[%c0_1, %c0_2, %c0_3] : memref<1x16x4xbf16, #tpu.memory_space<vmem>>, vector<1x16x4xbf16>
    %2 = vector.shape_cast %1 : vector<1x16x4xbf16> to vector<16x4xbf16>
    %3 = arith.extf %2 : vector<16x4xbf16> to vector<16x4xf32>
    %4 = vector.extract_strided_slice %0 {offsets = [0, 0], sizes = [16, 1], strides = [1, 1]} : vector<16x2xf32> to vector<16x1xf32>
    %5 = vector.broadcast %4 : vector<16x1xf32> to vector<16x4xf32>
    %6 = arith.mulf %3, %5 : vector<16x4xf32>
    %7 = vector.extract_strided_slice %0 {offsets = [0, 1], sizes = [16, 1], strides = [1, 1]} : vector<16x2xf32> to vector<16x1xf32>
    %8 = vector.broadcast %7 : vector<16x1xf32> to vector<16x4xf32>
    %9 = arith.addf %6, %8 : vector<16x4xf32>
    %cst = arith.constant 0.000000e+00 : f32
    %10 = vector.broadcast %cst : f32 to vector<16x4xf32>
    %11 = arith.maximumf %9, %10 : vector<16x4xf32>
    %12 = arith.truncf %11 : vector<16x4xf32> to vector<16x4xbf16>
    %c0_4 = arith.constant 0 : index
    %c0_5 = arith.constant 0 : index
    %c0_6 = arith.constant 0 : index
    %13 = vector.load %arg4[%c0_4, %c0_5, %c0_6] : memref<1x16x4xbf16, #tpu.memory_space<vmem>>, vector<1x16x4xbf16>
    %14 = vector.shape_cast %13 : vector<1x16x4xbf16> to vector<16x4xbf16>
    %15 = vector.shape_cast %12 : vector<16x4xbf16> to vector<1x16x4xbf16>
    tpu.vector_store %arg4[%c0_4, %c0_5, %c0_6], %15 {strides = array<i32>} : memref<1x16x4xbf16, #tpu.memory_space<vmem>>, vector<1x16x4xbf16>,
    return
  }
  func.func @transform_0(%arg0: i32, %arg1: i32) -> (i32, i32, i32) {
    %c0_i32 = arith.constant 0 : i32
    %c0_i32_0 = arith.constant 0 : i32
    return %arg0, %c0_i32, %arg1 : i32, i32, i32
  }
  func.func @transform_1(%arg0: i32, %arg1: i32) -> (i32, i32) {
    %c0_i32 = arith.constant 0 : i32
    %c0_i32_0 = arith.constant 0 : i32
    %c0_i32_1 = arith.constant 0 : i32
    return %c0_i32, %c0_i32_0 : i32, i32
  }
  func.func @transform_2(%arg0: i32, %arg1: i32) -> (i32, i32, i32) {
    %c0_i32 = arith.constant 0 : i32
    %c0_i32_0 = arith.constant 0 : i32
    return %arg0, %c0_i32, %arg1 : i32, i32, i32
  }
}

module attributes {stable_mosaic.version = 11 : i64} {
  func.func @_conv_stats_kernel(%arg0: i32, %arg1: i32, %arg2: memref<1x16x4xbf16, #tpu.memory_space<vmem>>, %arg3: memref<3x16x48xbf16, #tpu.memory_space<vmem>>, %arg4: memref<1x16x4xbf16, #tpu.memory_space<vmem>>, %arg5: memref<1x1x16x2xf32, #tpu.memory_space<vmem>>) attributes {dimension_semantics = [#tpu.dimension_semantics<parallel>, #tpu.dimension_semantics<parallel>], iteration_bounds = array<i64: 2, 1>, scalar_prefetch = 0 : i64, scratch_operands = 0 : i64, tpu.core_type = #tpu.core_type<tc>, window_params = [{transform_indices = @transform_0, window_bounds = array<i64: 1, 16, 4>}, {pipeline_mode = #tpu.pipeline_mode<synchronous>, transform_indices = @transform_1, window_bounds = array<i64: 3, 16, 48>}, {transform_indices = @transform_2, window_bounds = array<i64: 1, 16, 4>}, {transform_indices = @transform_3, window_bounds = array<i64: 1, 1, 16, 2>}]} {
    %c0 = arith.constant 0 : index
    %c0_0 = arith.constant 0 : index
    %c0_1 = arith.constant 0 : index
    %0 = vector.load %arg2[%c0, %c0_0, %c0_1] : memref<1x16x4xbf16, #tpu.memory_space<vmem>>, vector<1x16x4xbf16>
    %1 = vector.shape_cast %0 : vector<1x16x4xbf16> to vector<16x4xbf16>
    %cst = arith.constant 0.000000e+00 : bf16
    %2 = vector.broadcast %cst : bf16 to vector<16x4xbf16>
    %cst_2 = arith.constant 0.000000e+00 : bf16
    %3 = vector.broadcast %cst_2 : bf16 to vector<16x4xbf16>
    %4 = tpu.concatenate %2, %1, %3 in 0 : vector<16x4xbf16>, vector<16x4xbf16>, vector<16x4xbf16> -> vector<48x4xbf16>
    %c0_3 = arith.constant 0 : index
    %c0_4 = arith.constant 0 : index
    %c0_5 = arith.constant 0 : index
    %5 = vector.load %arg3[%c0_3, %c0_4, %c0_5] : memref<3x16x48xbf16, #tpu.memory_space<vmem>>, vector<1x16x48xbf16>
    %6 = vector.shape_cast %5 : vector<1x16x48xbf16> to vector<16x48xbf16>
    %cst_6 = arith.constant dense<0.000000e+00> : vector<16x4xf32>
    %7 = tpu.matmul %6, %4, %cst_6 {dimension_numbers = #tpu.dot_dimension_numbers<[1], [0], [0], [1], [0, 0, 1, 1], [], []>} : vector<16x48xbf16>, vector<48x4xbf16>, vector<16x4xf32> -> vector<16x4xf32>
    %c1 = arith.constant 1 : index
    %c0_7 = arith.constant 0 : index
    %c0_8 = arith.constant 0 : index
    %8 = vector.load %arg3[%c1, %c0_7, %c0_8] : memref<3x16x48xbf16, #tpu.memory_space<vmem>>, vector<1x16x48xbf16>
    %9 = vector.shape_cast %8 : vector<1x16x48xbf16> to vector<16x48xbf16>
    %cst_9 = arith.constant dense<0.000000e+00> : vector<16x4xf32>
    %10 = tpu.matmul %9, %4, %cst_9 {dimension_numbers = #tpu.dot_dimension_numbers<[1], [0], [0], [1], [0, 0, 1, 1], [], []>} : vector<16x48xbf16>, vector<48x4xbf16>, vector<16x4xf32> -> vector<16x4xf32>
    %c2 = arith.constant 2 : index
    %c0_10 = arith.constant 0 : index
    %c0_11 = arith.constant 0 : index
    %11 = vector.load %arg3[%c2, %c0_10, %c0_11] : memref<3x16x48xbf16, #tpu.memory_space<vmem>>, vector<1x16x48xbf16>
    %12 = vector.shape_cast %11 : vector<1x16x48xbf16> to vector<16x48xbf16>
    %cst_12 = arith.constant dense<0.000000e+00> : vector<16x4xf32>
    %13 = tpu.matmul %12, %4, %cst_12 {dimension_numbers = #tpu.dot_dimension_numbers<[1], [0], [0], [1], [0, 0, 1, 1], [], []>} : vector<16x48xbf16>, vector<48x4xbf16>, vector<16x4xf32> -> vector<16x4xf32>
    %14 = tpu.iota {dimensions = array<i32: 1>} : vector<1x4xi32>
    %c2_i32 = arith.constant 2 : i32
    %c0_i32 = arith.constant 0 : i32
    %15 = arith.cmpi eq, %c2_i32, %c0_i32 : i32
    %c1_i32 = arith.constant 1 : i32
    %16 = arith.select %15, %c1_i32, %c2_i32 : i32
    %17 = vector.broadcast %16 : i32 to vector<1x4xi32>
    %18 = arith.remsi %14, %17 : vector<1x4xi32>
    %c0_i32_13 = arith.constant 0 : i32
    %19 = vector.broadcast %c0_i32_13 : i32 to vector<1x4xi32>
    %20 = arith.cmpi ne, %18, %19 : vector<1x4xi32>
    %c0_i32_14 = arith.constant 0 : i32
    %21 = vector.broadcast %c0_i32_14 : i32 to vector<1x4xi32>
    %22 = arith.cmpi slt, %18, %21 : vector<1x4xi32>
    %c0_i32_15 = arith.constant 0 : i32
    %23 = arith.cmpi slt, %16, %c0_i32_15 : i32
    %24 = vector.broadcast %23 : i1 to vector<1x4xi1>
    %25 = vector.broadcast %24 : vector<1x4xi1> to vector<1x4xi1>
    %26 = arith.xori %22, %25 : vector<1x4xi1>
    %27 = arith.andi %26, %20 : vector<1x4xi1>
    %28 = vector.broadcast %16 : i32 to vector<1x4xi32>
    %29 = arith.addi %18, %28 : vector<1x4xi32>
    %30 = arith.select %27, %29, %18 : vector<1x4xi1>, vector<1x4xi32>
    %cst_16 = arith.constant 0.000000e+00 : f32
    %31 = vector.broadcast %cst_16 : f32 to vector<16x2xf32>
    %32 = vector.extract_strided_slice %7 {offsets = [0, 0], sizes = [16, 2], strides = [1, 1]} : vector<16x4xf32> to vector<16x2xf32>
    %33 = tpu.concatenate %31, %32 in 1 : vector<16x2xf32>, vector<16x2xf32> -> vector<16x4xf32>
    %34 = vector.extract_strided_slice %13 {offsets = [0, 2], sizes = [16, 2], strides = [1, 1]} : vector<16x4xf32> to vector<16x2xf32>
    %35 = tpu.concatenate %34, %31 in 1 : vector<16x2xf32>, vector<16x2xf32> -> vector<16x4xf32>
    %c2_i32_17 = arith.constant 2 : i32
    %36 = vector.broadcast %c2_i32_17 : i32 to vector<1x4xi32>
    %37 = arith.cmpi sge, %30, %36 : vector<1x4xi32>
    %cst_18 = arith.constant 0.000000e+00 : f32
    %38 = vector.shape_cast %37 : vector<1x4xi1> to vector<1x4xi1>
    %39 = vector.broadcast %38 : vector<1x4xi1> to vector<16x4xi1>
    %40 = vector.broadcast %cst_18 : f32 to vector<16x4xf32>
    %41 = arith.select %39, %33, %40 : vector<16x4xi1>, vector<16x4xf32>
    %42 = arith.addf %10, %41 : vector<16x4xf32>
    %c0_i32_19 = arith.constant 0 : i32
    %43 = vector.broadcast %c0_i32_19 : i32 to vector<1x4xi32>
    %44 = arith.cmpi slt, %30, %43 : vector<1x4xi32>
    %cst_20 = arith.constant 0.000000e+00 : f32
    %45 = vector.shape_cast %44 : vector<1x4xi1> to vector<1x4xi1>
    %46 = vector.broadcast %45 : vector<1x4xi1> to vector<16x4xi1>
    %47 = vector.broadcast %cst_20 : f32 to vector<16x4xf32>
    %48 = arith.select %46, %35, %47 : vector<16x4xi1>, vector<16x4xf32>
    %49 = arith.addf %42, %48 : vector<16x4xf32>
    %50 = arith.truncf %49 : vector<16x4xf32> to vector<16x4xbf16>
    %c0_21 = arith.constant 0 : index
    %c0_22 = arith.constant 0 : index
    %c0_23 = arith.constant 0 : index
    %51 = vector.load %arg4[%c0_21, %c0_22, %c0_23] : memref<1x16x4xbf16, #tpu.memory_space<vmem>>, vector<1x16x4xbf16>
    %52 = vector.shape_cast %51 : vector<1x16x4xbf16> to vector<16x4xbf16>
    %53 = vector.shape_cast %50 : vector<16x4xbf16> to vector<1x16x4xbf16>
    tpu.vector_store %arg4[%c0_21, %c0_22, %c0_23], %53 {strides = array<i32>} : memref<1x16x4xbf16, #tpu.memory_space<vmem>>, vector<1x16x4xbf16>,
    %cst_24 = arith.constant dense<0.000000e+00> : vector<16xf32>
    %54 = vector.multi_reduction <add>, %49, %cst_24 [1] : vector<16x4xf32> to vector<16xf32>
    %55 = vector.shape_cast %54 : vector<16xf32> to vector<16x1xf32>
    %56 = arith.mulf %49, %49 : vector<16x4xf32>
    %cst_25 = arith.constant dense<0.000000e+00> : vector<16xf32>
    %57 = vector.multi_reduction <add>, %56, %cst_25 [1] : vector<16x4xf32> to vector<16xf32>
    %58 = vector.shape_cast %57 : vector<16xf32> to vector<16x1xf32>
    %59 = tpu.concatenate %55, %58 in 1 : vector<16x1xf32>, vector<16x1xf32> -> vector<16x2xf32>
    %c0_26 = arith.constant 0 : index
    %c0_27 = arith.constant 0 : index
    %c0_28 = arith.constant 0 : index
    %c0_29 = arith.constant 0 : index
    %60 = vector.load %arg5[%c0_26, %c0_27, %c0_28, %c0_29] : memref<1x1x16x2xf32, #tpu.memory_space<vmem>>, vector<1x1x16x2xf32>
    %61 = vector.shape_cast %60 : vector<1x1x16x2xf32> to vector<16x2xf32>
    %62 = vector.shape_cast %59 : vector<16x2xf32> to vector<1x1x16x2xf32>
    tpu.vector_store %arg5[%c0_26, %c0_27, %c0_28, %c0_29], %62 {strides = array<i32>} : memref<1x1x16x2xf32, #tpu.memory_space<vmem>>, vector<1x1x16x2xf32>,
    return
  }
  func.func @transform_0(%arg0: i32, %arg1: i32) -> (i32, i32, i32) {
    %c0_i32 = arith.constant 0 : i32
    %c0_i32_0 = arith.constant 0 : i32
    return %arg0, %c0_i32, %arg1 : i32, i32, i32
  }
  func.func @transform_1(%arg0: i32, %arg1: i32) -> (i32, i32, i32) {
    %c0_i32 = arith.constant 0 : i32
    %c0_i32_0 = arith.constant 0 : i32
    %c0_i32_1 = arith.constant 0 : i32
    %c0_i32_2 = arith.constant 0 : i32
    return %c0_i32, %c0_i32_0, %c0_i32_1 : i32, i32, i32
  }
  func.func @transform_2(%arg0: i32, %arg1: i32) -> (i32, i32, i32) {
    %c0_i32 = arith.constant 0 : i32
    %c0_i32_0 = arith.constant 0 : i32
    return %arg0, %c0_i32, %arg1 : i32, i32, i32
  }
  func.func @transform_3(%arg0: i32, %arg1: i32) -> (i32, i32, i32, i32) {
    %c0_i32 = arith.constant 0 : i32
    %c0_i32_0 = arith.constant 0 : i32
    %c0_i32_1 = arith.constant 0 : i32
    return %arg0, %arg1, %c0_i32, %c0_i32_0 : i32, i32, i32, i32
  }
}

module attributes {stable_mosaic.version = 11 : i64} {
  func.func @_conv_stats_kernel(%arg0: i32, %arg1: i32, %arg2: memref<1x16x4xbf16, #tpu.memory_space<vmem>>, %arg3: memref<1x16x4xbf16, #tpu.memory_space<vmem>>, %arg4: memref<3x16x96xbf16, #tpu.memory_space<vmem>>, %arg5: memref<1x16x4xbf16, #tpu.memory_space<vmem>>, %arg6: memref<1x1x16x2xf32, #tpu.memory_space<vmem>>) attributes {dimension_semantics = [#tpu.dimension_semantics<parallel>, #tpu.dimension_semantics<parallel>], iteration_bounds = array<i64: 2, 1>, scalar_prefetch = 0 : i64, scratch_operands = 0 : i64, tpu.core_type = #tpu.core_type<tc>, window_params = [{transform_indices = @transform_0, window_bounds = array<i64: 1, 16, 4>}, {transform_indices = @transform_1, window_bounds = array<i64: 1, 16, 4>}, {pipeline_mode = #tpu.pipeline_mode<synchronous>, transform_indices = @transform_2, window_bounds = array<i64: 3, 16, 96>}, {transform_indices = @transform_3, window_bounds = array<i64: 1, 16, 4>}, {transform_indices = @transform_4, window_bounds = array<i64: 1, 1, 16, 2>}]} {
    %c0 = arith.constant 0 : index
    %c0_0 = arith.constant 0 : index
    %c0_1 = arith.constant 0 : index
    %0 = vector.load %arg2[%c0, %c0_0, %c0_1] : memref<1x16x4xbf16, #tpu.memory_space<vmem>>, vector<1x16x4xbf16>
    %1 = vector.shape_cast %0 : vector<1x16x4xbf16> to vector<16x4xbf16>
    %cst = arith.constant 0.000000e+00 : bf16
    %2 = vector.broadcast %cst : bf16 to vector<16x2xbf16>
    %cst_2 = arith.constant 0.000000e+00 : bf16
    %3 = vector.broadcast %cst_2 : bf16 to vector<16x2xbf16>
    %4 = vector.extract_strided_slice %1 {offsets = [0, 0], sizes = [16, 2], strides = [1, 1]} : vector<16x4xbf16> to vector<16x2xbf16>
    %5 = tpu.concatenate %2, %4 in 1 : vector<16x2xbf16>, vector<16x2xbf16> -> vector<16x4xbf16>
    %6 = vector.extract_strided_slice %1 {offsets = [0, 2], sizes = [16, 2], strides = [1, 1]} : vector<16x4xbf16> to vector<16x2xbf16>
    %7 = tpu.concatenate %6, %3 in 1 : vector<16x2xbf16>, vector<16x2xbf16> -> vector<16x4xbf16>
    %c0_3 = arith.constant 0 : index
    %c0_4 = arith.constant 0 : index
    %c0_5 = arith.constant 0 : index
    %8 = vector.load %arg3[%c0_3, %c0_4, %c0_5] : memref<1x16x4xbf16, #tpu.memory_space<vmem>>, vector<1x16x4xbf16>
    %9 = vector.shape_cast %8 : vector<1x16x4xbf16> to vector<16x4xbf16>
    %cst_6 = arith.constant 0.000000e+00 : bf16
    %10 = vector.broadcast %cst_6 : bf16 to vector<16x2xbf16>
    %cst_7 = arith.constant 0.000000e+00 : bf16
    %11 = vector.broadcast %cst_7 : bf16 to vector<16x2xbf16>
    %12 = vector.extract_strided_slice %9 {offsets = [0, 0], sizes = [16, 2], strides = [1, 1]} : vector<16x4xbf16> to vector<16x2xbf16>
    %13 = tpu.concatenate %10, %12 in 1 : vector<16x2xbf16>, vector<16x2xbf16> -> vector<16x4xbf16>
    %14 = vector.extract_strided_slice %9 {offsets = [0, 2], sizes = [16, 2], strides = [1, 1]} : vector<16x4xbf16> to vector<16x2xbf16>
    %15 = tpu.concatenate %14, %11 in 1 : vector<16x2xbf16>, vector<16x2xbf16> -> vector<16x4xbf16>
    %16 = tpu.concatenate %5, %1, %7, %13, %9, %15 in 0 : vector<16x4xbf16>, vector<16x4xbf16>, vector<16x4xbf16>, vector<16x4xbf16>, vector<16x4xbf16>, vector<16x4xbf16> -> vector<96x4xbf16>
    %c0_8 = arith.constant 0 : index
    %c0_9 = arith.constant 0 : index
    %c0_10 = arith.constant 0 : index
    %17 = vector.load %arg4[%c0_8, %c0_9, %c0_10] : memref<3x16x96xbf16, #tpu.memory_space<vmem>>, vector<1x16x96xbf16>
    %18 = vector.shape_cast %17 : vector<1x16x96xbf16> to vector<16x96xbf16>
    %cst_11 = arith.constant dense<0.000000e+00> : vector<16x4xf32>
    %19 = tpu.matmul %18, %16, %cst_11 {dimension_numbers = #tpu.dot_dimension_numbers<[1], [0], [0], [1], [0, 0, 1, 1], [], []>} : vector<16x96xbf16>, vector<96x4xbf16>, vector<16x4xf32> -> vector<16x4xf32>
    %c1 = arith.constant 1 : index
    %c0_12 = arith.constant 0 : index
    %c0_13 = arith.constant 0 : index
    %20 = vector.load %arg4[%c1, %c0_12, %c0_13] : memref<3x16x96xbf16, #tpu.memory_space<vmem>>, vector<1x16x96xbf16>
    %21 = vector.shape_cast %20 : vector<1x16x96xbf16> to vector<16x96xbf16>
    %cst_14 = arith.constant dense<0.000000e+00> : vector<16x4xf32>
    %22 = tpu.matmul %21, %16, %cst_14 {dimension_numbers = #tpu.dot_dimension_numbers<[1], [0], [0], [1], [0, 0, 1, 1], [], []>} : vector<16x96xbf16>, vector<96x4xbf16>, vector<16x4xf32> -> vector<16x4xf32>
    %c2 = arith.constant 2 : index
    %c0_15 = arith.constant 0 : index
    %c0_16 = arith.constant 0 : index
    %23 = vector.load %arg4[%c2, %c0_15, %c0_16] : memref<3x16x96xbf16, #tpu.memory_space<vmem>>, vector<1x16x96xbf16>
    %24 = vector.shape_cast %23 : vector<1x16x96xbf16> to vector<16x96xbf16>
    %cst_17 = arith.constant dense<0.000000e+00> : vector<16x4xf32>
    %25 = tpu.matmul %24, %16, %cst_17 {dimension_numbers = #tpu.dot_dimension_numbers<[1], [0], [0], [1], [0, 0, 1, 1], [], []>} : vector<16x96xbf16>, vector<96x4xbf16>, vector<16x4xf32> -> vector<16x4xf32>
    %26 = tpu.iota {dimensions = array<i32: 1>} : vector<1x4xi32>
    %c2_i32 = arith.constant 2 : i32
    %c0_i32 = arith.constant 0 : i32
    %27 = arith.cmpi eq, %c2_i32, %c0_i32 : i32
    %c1_i32 = arith.constant 1 : i32
    %28 = arith.select %27, %c1_i32, %c2_i32 : i32
    %29 = vector.broadcast %28 : i32 to vector<1x4xi32>
    %30 = arith.remsi %26, %29 : vector<1x4xi32>
    %c0_i32_18 = arith.constant 0 : i32
    %31 = vector.broadcast %c0_i32_18 : i32 to vector<1x4xi32>
    %32 = arith.cmpi ne, %30, %31 : vector<1x4xi32>
    %c0_i32_19 = arith.constant 0 : i32
    %33 = vector.broadcast %c0_i32_19 : i32 to vector<1x4xi32>
    %34 = arith.cmpi slt, %30, %33 : vector<1x4xi32>
    %c0_i32_20 = arith.constant 0 : i32
    %35 = arith.cmpi slt, %28, %c0_i32_20 : i32
    %36 = vector.broadcast %35 : i1 to vector<1x4xi1>
    %37 = vector.broadcast %36 : vector<1x4xi1> to vector<1x4xi1>
    %38 = arith.xori %34, %37 : vector<1x4xi1>
    %39 = arith.andi %38, %32 : vector<1x4xi1>
    %40 = vector.broadcast %28 : i32 to vector<1x4xi32>
    %41 = arith.addi %30, %40 : vector<1x4xi32>
    %42 = arith.select %39, %41, %30 : vector<1x4xi1>, vector<1x4xi32>
    %cst_21 = arith.constant 0.000000e+00 : f32
    %43 = vector.broadcast %cst_21 : f32 to vector<16x1xf32>
    %44 = vector.extract_strided_slice %19 {offsets = [0, 0], sizes = [16, 3], strides = [1, 1]} : vector<16x4xf32> to vector<16x3xf32>
    %45 = tpu.concatenate %43, %44 in 1 : vector<16x1xf32>, vector<16x3xf32> -> vector<16x4xf32>
    %46 = vector.extract_strided_slice %25 {offsets = [0, 1], sizes = [16, 3], strides = [1, 1]} : vector<16x4xf32> to vector<16x3xf32>
    %47 = tpu.concatenate %46, %43 in 1 : vector<16x3xf32>, vector<16x1xf32> -> vector<16x4xf32>
    %c1_i32_22 = arith.constant 1 : i32
    %48 = vector.broadcast %c1_i32_22 : i32 to vector<1x4xi32>
    %49 = arith.cmpi sge, %42, %48 : vector<1x4xi32>
    %cst_23 = arith.constant 0.000000e+00 : f32
    %50 = vector.shape_cast %49 : vector<1x4xi1> to vector<1x4xi1>
    %51 = vector.broadcast %50 : vector<1x4xi1> to vector<16x4xi1>
    %52 = vector.broadcast %cst_23 : f32 to vector<16x4xf32>
    %53 = arith.select %51, %45, %52 : vector<16x4xi1>, vector<16x4xf32>
    %54 = arith.addf %22, %53 : vector<16x4xf32>
    %c1_i32_24 = arith.constant 1 : i32
    %55 = vector.broadcast %c1_i32_24 : i32 to vector<1x4xi32>
    %56 = arith.cmpi slt, %42, %55 : vector<1x4xi32>
    %cst_25 = arith.constant 0.000000e+00 : f32
    %57 = vector.shape_cast %56 : vector<1x4xi1> to vector<1x4xi1>
    %58 = vector.broadcast %57 : vector<1x4xi1> to vector<16x4xi1>
    %59 = vector.broadcast %cst_25 : f32 to vector<16x4xf32>
    %60 = arith.select %58, %47, %59 : vector<16x4xi1>, vector<16x4xf32>
    %61 = arith.addf %54, %60 : vector<16x4xf32>
    %62 = arith.truncf %61 : vector<16x4xf32> to vector<16x4xbf16>
    %c0_26 = arith.constant 0 : index
    %c0_27 = arith.constant 0 : index
    %c0_28 = arith.constant 0 : index
    %63 = vector.load %arg5[%c0_26, %c0_27, %c0_28] : memref<1x16x4xbf16, #tpu.memory_space<vmem>>, vector<1x16x4xbf16>
    %64 = vector.shape_cast %63 : vector<1x16x4xbf16> to vector<16x4xbf16>
    %65 = vector.shape_cast %62 : vector<16x4xbf16> to vector<1x16x4xbf16>
    tpu.vector_store %arg5[%c0_26, %c0_27, %c0_28], %65 {strides = array<i32>} : memref<1x16x4xbf16, #tpu.memory_space<vmem>>, vector<1x16x4xbf16>,
    %cst_29 = arith.constant dense<0.000000e+00> : vector<16xf32>
    %66 = vector.multi_reduction <add>, %61, %cst_29 [1] : vector<16x4xf32> to vector<16xf32>
    %67 = vector.shape_cast %66 : vector<16xf32> to vector<16x1xf32>
    %68 = arith.mulf %61, %61 : vector<16x4xf32>
    %cst_30 = arith.constant dense<0.000000e+00> : vector<16xf32>
    %69 = vector.multi_reduction <add>, %68, %cst_30 [1] : vector<16x4xf32> to vector<16xf32>
    %70 = vector.shape_cast %69 : vector<16xf32> to vector<16x1xf32>
    %71 = tpu.concatenate %67, %70 in 1 : vector<16x1xf32>, vector<16x1xf32> -> vector<16x2xf32>
    %c0_31 = arith.constant 0 : index
    %c0_32 = arith.constant 0 : index
    %c0_33 = arith.constant 0 : index
    %c0_34 = arith.constant 0 : index
    %72 = vector.load %arg6[%c0_31, %c0_32, %c0_33, %c0_34] : memref<1x1x16x2xf32, #tpu.memory_space<vmem>>, vector<1x1x16x2xf32>
    %73 = vector.shape_cast %72 : vector<1x1x16x2xf32> to vector<16x2xf32>
    %74 = vector.shape_cast %71 : vector<16x2xf32> to vector<1x1x16x2xf32>
    tpu.vector_store %arg6[%c0_31, %c0_32, %c0_33, %c0_34], %74 {strides = array<i32>} : memref<1x1x16x2xf32, #tpu.memory_space<vmem>>, vector<1x1x16x2xf32>,
    return
  }
  func.func @transform_0(%arg0: i32, %arg1: i32) -> (i32, i32, i32) {
    %c0_i32 = arith.constant 0 : i32
    %c0_i32_0 = arith.constant 0 : i32
    return %arg0, %c0_i32, %arg1 : i32, i32, i32
  }
  func.func @transform_1(%arg0: i32, %arg1: i32) -> (i32, i32, i32) {
    %c0_i32 = arith.constant 0 : i32
    %c0_i32_0 = arith.constant 0 : i32
    return %arg0, %c0_i32, %arg1 : i32, i32, i32
  }
  func.func @transform_2(%arg0: i32, %arg1: i32) -> (i32, i32, i32) {
    %c0_i32 = arith.constant 0 : i32
    %c0_i32_0 = arith.constant 0 : i32
    %c0_i32_1 = arith.constant 0 : i32
    %c0_i32_2 = arith.constant 0 : i32
    return %c0_i32, %c0_i32_0, %c0_i32_1 : i32, i32, i32
  }
  func.func @transform_3(%arg0: i32, %arg1: i32) -> (i32, i32, i32) {
    %c0_i32 = arith.constant 0 : i32
    %c0_i32_0 = arith.constant 0 : i32
    return %arg0, %c0_i32, %arg1 : i32, i32, i32
  }
  func.func @transform_4(%arg0: i32, %arg1: i32) -> (i32, i32, i32, i32) {
    %c0_i32 = arith.constant 0 : i32
    %c0_i32_0 = arith.constant 0 : i32
    %c0_i32_1 = arith.constant 0 : i32
    return %arg0, %arg1, %c0_i32, %c0_i32_0 : i32, i32, i32, i32
  }
}

module attributes {stable_mosaic.version = 11 : i64} {
  func.func @_conv_stats_kernel(%arg0: i32, %arg1: i32, %arg2: memref<1x16x64xbf16, #tpu.memory_space<vmem>>, %arg3: memref<1x16x64xbf16, #tpu.memory_space<vmem>>, %arg4: memref<3x16x96xbf16, #tpu.memory_space<vmem>>, %arg5: memref<1x16x64xbf16, #tpu.memory_space<vmem>>, %arg6: memref<1x1x16x2xf32, #tpu.memory_space<vmem>>) attributes {dimension_semantics = [#tpu.dimension_semantics<parallel>, #tpu.dimension_semantics<parallel>], iteration_bounds = array<i64: 2, 1>, scalar_prefetch = 0 : i64, scratch_operands = 0 : i64, tpu.core_type = #tpu.core_type<tc>, window_params = [{transform_indices = @transform_0, window_bounds = array<i64: 1, 16, 64>}, {transform_indices = @transform_1, window_bounds = array<i64: 1, 16, 64>}, {pipeline_mode = #tpu.pipeline_mode<synchronous>, transform_indices = @transform_2, window_bounds = array<i64: 3, 16, 96>}, {transform_indices = @transform_3, window_bounds = array<i64: 1, 16, 64>}, {transform_indices = @transform_4, window_bounds = array<i64: 1, 1, 16, 2>}]} {
    %c0 = arith.constant 0 : index
    %c0_0 = arith.constant 0 : index
    %c0_1 = arith.constant 0 : index
    %0 = vector.load %arg2[%c0, %c0_0, %c0_1] : memref<1x16x64xbf16, #tpu.memory_space<vmem>>, vector<1x16x64xbf16>
    %1 = vector.shape_cast %0 : vector<1x16x64xbf16> to vector<16x64xbf16>
    %cst = arith.constant 0.000000e+00 : bf16
    %2 = vector.broadcast %cst : bf16 to vector<16x8xbf16>
    %cst_2 = arith.constant 0.000000e+00 : bf16
    %3 = vector.broadcast %cst_2 : bf16 to vector<16x8xbf16>
    %4 = vector.extract_strided_slice %1 {offsets = [0, 0], sizes = [16, 56], strides = [1, 1]} : vector<16x64xbf16> to vector<16x56xbf16>
    %5 = tpu.concatenate %2, %4 in 1 : vector<16x8xbf16>, vector<16x56xbf16> -> vector<16x64xbf16>
    %6 = vector.extract_strided_slice %1 {offsets = [0, 8], sizes = [16, 56], strides = [1, 1]} : vector<16x64xbf16> to vector<16x56xbf16>
    %7 = tpu.concatenate %6, %3 in 1 : vector<16x56xbf16>, vector<16x8xbf16> -> vector<16x64xbf16>
    %c0_3 = arith.constant 0 : index
    %c0_4 = arith.constant 0 : index
    %c0_5 = arith.constant 0 : index
    %8 = vector.load %arg3[%c0_3, %c0_4, %c0_5] : memref<1x16x64xbf16, #tpu.memory_space<vmem>>, vector<1x16x64xbf16>
    %9 = vector.shape_cast %8 : vector<1x16x64xbf16> to vector<16x64xbf16>
    %cst_6 = arith.constant 0.000000e+00 : bf16
    %10 = vector.broadcast %cst_6 : bf16 to vector<16x8xbf16>
    %cst_7 = arith.constant 0.000000e+00 : bf16
    %11 = vector.broadcast %cst_7 : bf16 to vector<16x8xbf16>
    %12 = vector.extract_strided_slice %9 {offsets = [0, 0], sizes = [16, 56], strides = [1, 1]} : vector<16x64xbf16> to vector<16x56xbf16>
    %13 = tpu.concatenate %10, %12 in 1 : vector<16x8xbf16>, vector<16x56xbf16> -> vector<16x64xbf16>
    %14 = vector.extract_strided_slice %9 {offsets = [0, 8], sizes = [16, 56], strides = [1, 1]} : vector<16x64xbf16> to vector<16x56xbf16>
    %15 = tpu.concatenate %14, %11 in 1 : vector<16x56xbf16>, vector<16x8xbf16> -> vector<16x64xbf16>
    %16 = tpu.concatenate %5, %1, %7, %13, %9, %15 in 0 : vector<16x64xbf16>, vector<16x64xbf16>, vector<16x64xbf16>, vector<16x64xbf16>, vector<16x64xbf16>, vector<16x64xbf16> -> vector<96x64xbf16>
    %c0_8 = arith.constant 0 : index
    %c0_9 = arith.constant 0 : index
    %c0_10 = arith.constant 0 : index
    %17 = vector.load %arg4[%c0_8, %c0_9, %c0_10] : memref<3x16x96xbf16, #tpu.memory_space<vmem>>, vector<1x16x96xbf16>
    %18 = vector.shape_cast %17 : vector<1x16x96xbf16> to vector<16x96xbf16>
    %cst_11 = arith.constant dense<0.000000e+00> : vector<16x64xf32>
    %19 = tpu.matmul %18, %16, %cst_11 {dimension_numbers = #tpu.dot_dimension_numbers<[1], [0], [0], [1], [0, 0, 1, 1], [], []>} : vector<16x96xbf16>, vector<96x64xbf16>, vector<16x64xf32> -> vector<16x64xf32>
    %c1 = arith.constant 1 : index
    %c0_12 = arith.constant 0 : index
    %c0_13 = arith.constant 0 : index
    %20 = vector.load %arg4[%c1, %c0_12, %c0_13] : memref<3x16x96xbf16, #tpu.memory_space<vmem>>, vector<1x16x96xbf16>
    %21 = vector.shape_cast %20 : vector<1x16x96xbf16> to vector<16x96xbf16>
    %cst_14 = arith.constant dense<0.000000e+00> : vector<16x64xf32>
    %22 = tpu.matmul %21, %16, %cst_14 {dimension_numbers = #tpu.dot_dimension_numbers<[1], [0], [0], [1], [0, 0, 1, 1], [], []>} : vector<16x96xbf16>, vector<96x64xbf16>, vector<16x64xf32> -> vector<16x64xf32>
    %c2 = arith.constant 2 : index
    %c0_15 = arith.constant 0 : index
    %c0_16 = arith.constant 0 : index
    %23 = vector.load %arg4[%c2, %c0_15, %c0_16] : memref<3x16x96xbf16, #tpu.memory_space<vmem>>, vector<1x16x96xbf16>
    %24 = vector.shape_cast %23 : vector<1x16x96xbf16> to vector<16x96xbf16>
    %cst_17 = arith.constant dense<0.000000e+00> : vector<16x64xf32>
    %25 = tpu.matmul %24, %16, %cst_17 {dimension_numbers = #tpu.dot_dimension_numbers<[1], [0], [0], [1], [0, 0, 1, 1], [], []>} : vector<16x96xbf16>, vector<96x64xbf16>, vector<16x64xf32> -> vector<16x64xf32>
    %26 = tpu.iota {dimensions = array<i32: 1>} : vector<1x64xi32>
    %c8_i32 = arith.constant 8 : i32
    %c0_i32 = arith.constant 0 : i32
    %27 = arith.cmpi eq, %c8_i32, %c0_i32 : i32
    %c1_i32 = arith.constant 1 : i32
    %28 = arith.select %27, %c1_i32, %c8_i32 : i32
    %29 = vector.broadcast %28 : i32 to vector<1x64xi32>
    %30 = arith.remsi %26, %29 : vector<1x64xi32>
    %c0_i32_18 = arith.constant 0 : i32
    %31 = vector.broadcast %c0_i32_18 : i32 to vector<1x64xi32>
    %32 = arith.cmpi ne, %30, %31 : vector<1x64xi32>
    %c0_i32_19 = arith.constant 0 : i32
    %33 = vector.broadcast %c0_i32_19 : i32 to vector<1x64xi32>
    %34 = arith.cmpi slt, %30, %33 : vector<1x64xi32>
    %c0_i32_20 = arith.constant 0 : i32
    %35 = arith.cmpi slt, %28, %c0_i32_20 : i32
    %36 = vector.broadcast %35 : i1 to vector<1x64xi1>
    %37 = vector.broadcast %36 : vector<1x64xi1> to vector<1x64xi1>
    %38 = arith.xori %34, %37 : vector<1x64xi1>
    %39 = arith.andi %38, %32 : vector<1x64xi1>
    %40 = vector.broadcast %28 : i32 to vector<1x64xi32>
    %41 = arith.addi %30, %40 : vector<1x64xi32>
    %42 = arith.select %39, %41, %30 : vector<1x64xi1>, vector<1x64xi32>
    %cst_21 = arith.constant 0.000000e+00 : f32
    %43 = vector.broadcast %cst_21 : f32 to vector<16x1xf32>
    %44 = vector.extract_strided_slice %19 {offsets = [0, 0], sizes = [16, 63], strides = [1, 1]} : vector<16x64xf32> to vector<16x63xf32>
    %45 = tpu.concatenate %43, %44 in 1 : vector<16x1xf32>, vector<16x63xf32> -> vector<16x64xf32>
    %46 = vector.extract_strided_slice %25 {offsets = [0, 1], sizes = [16, 63], strides = [1, 1]} : vector<16x64xf32> to vector<16x63xf32>
    %47 = tpu.concatenate %46, %43 in 1 : vector<16x63xf32>, vector<16x1xf32> -> vector<16x64xf32>
    %c1_i32_22 = arith.constant 1 : i32
    %48 = vector.broadcast %c1_i32_22 : i32 to vector<1x64xi32>
    %49 = arith.cmpi sge, %42, %48 : vector<1x64xi32>
    %cst_23 = arith.constant 0.000000e+00 : f32
    %50 = vector.shape_cast %49 : vector<1x64xi1> to vector<1x64xi1>
    %51 = vector.broadcast %50 : vector<1x64xi1> to vector<16x64xi1>
    %52 = vector.broadcast %cst_23 : f32 to vector<16x64xf32>
    %53 = arith.select %51, %45, %52 : vector<16x64xi1>, vector<16x64xf32>
    %54 = arith.addf %22, %53 : vector<16x64xf32>
    %c7_i32 = arith.constant 7 : i32
    %55 = vector.broadcast %c7_i32 : i32 to vector<1x64xi32>
    %56 = arith.cmpi slt, %42, %55 : vector<1x64xi32>
    %cst_24 = arith.constant 0.000000e+00 : f32
    %57 = vector.shape_cast %56 : vector<1x64xi1> to vector<1x64xi1>
    %58 = vector.broadcast %57 : vector<1x64xi1> to vector<16x64xi1>
    %59 = vector.broadcast %cst_24 : f32 to vector<16x64xf32>
    %60 = arith.select %58, %47, %59 : vector<16x64xi1>, vector<16x64xf32>
    %61 = arith.addf %54, %60 : vector<16x64xf32>
    %62 = arith.truncf %61 : vector<16x64xf32> to vector<16x64xbf16>
    %c0_25 = arith.constant 0 : index
    %c0_26 = arith.constant 0 : index
    %c0_27 = arith.constant 0 : index
    %63 = vector.load %arg5[%c0_25, %c0_26, %c0_27] : memref<1x16x64xbf16, #tpu.memory_space<vmem>>, vector<1x16x64xbf16>
    %64 = vector.shape_cast %63 : vector<1x16x64xbf16> to vector<16x64xbf16>
    %65 = vector.shape_cast %62 : vector<16x64xbf16> to vector<1x16x64xbf16>
    tpu.vector_store %arg5[%c0_25, %c0_26, %c0_27], %65 {strides = array<i32>} : memref<1x16x64xbf16, #tpu.memory_space<vmem>>, vector<1x16x64xbf16>,
    %cst_28 = arith.constant dense<0.000000e+00> : vector<16xf32>
    %66 = vector.multi_reduction <add>, %61, %cst_28 [1] : vector<16x64xf32> to vector<16xf32>
    %67 = vector.shape_cast %66 : vector<16xf32> to vector<16x1xf32>
    %68 = arith.mulf %61, %61 : vector<16x64xf32>
    %cst_29 = arith.constant dense<0.000000e+00> : vector<16xf32>
    %69 = vector.multi_reduction <add>, %68, %cst_29 [1] : vector<16x64xf32> to vector<16xf32>
    %70 = vector.shape_cast %69 : vector<16xf32> to vector<16x1xf32>
    %71 = tpu.concatenate %67, %70 in 1 : vector<16x1xf32>, vector<16x1xf32> -> vector<16x2xf32>
    %c0_30 = arith.constant 0 : index
    %c0_31 = arith.constant 0 : index
    %c0_32 = arith.constant 0 : index
    %c0_33 = arith.constant 0 : index
    %72 = vector.load %arg6[%c0_30, %c0_31, %c0_32, %c0_33] : memref<1x1x16x2xf32, #tpu.memory_space<vmem>>, vector<1x1x16x2xf32>
    %73 = vector.shape_cast %72 : vector<1x1x16x2xf32> to vector<16x2xf32>
    %74 = vector.shape_cast %71 : vector<16x2xf32> to vector<1x1x16x2xf32>
    tpu.vector_store %arg6[%c0_30, %c0_31, %c0_32, %c0_33], %74 {strides = array<i32>} : memref<1x1x16x2xf32, #tpu.memory_space<vmem>>, vector<1x1x16x2xf32>,
    return
  }
  func.func @transform_0(%arg0: i32, %arg1: i32) -> (i32, i32, i32) {
    %c0_i32 = arith.constant 0 : i32
    %c0_i32_0 = arith.constant 0 : i32
    return %arg0, %c0_i32, %arg1 : i32, i32, i32
  }
  func.func @transform_1(%arg0: i32, %arg1: i32) -> (i32, i32, i32) {
    %c0_i32 = arith.constant 0 : i32
    %c0_i32_0 = arith.constant 0 : i32
    return %arg0, %c0_i32, %arg1 : i32, i32, i32
  }
  func.func @transform_2(%arg0: i32, %arg1: i32) -> (i32, i32, i32) {
    %c0_i32 = arith.constant 0 : i32
    %c0_i32_0 = arith.constant 0 : i32
    %c0_i32_1 = arith.constant 0 : i32
    %c0_i32_2 = arith.constant 0 : i32
    return %c0_i32, %c0_i32_0, %c0_i32_1 : i32, i32, i32
  }
  func.func @transform_3(%arg0: i32, %arg1: i32) -> (i32, i32, i32) {
    %c0_i32 = arith.constant 0 : i32
    %c0_i32_0 = arith.constant 0 : i32
    return %arg0, %c0_i32, %arg1 : i32, i32, i32
  }
  func.func @transform_4(%arg0: i32, %arg1: i32) -> (i32, i32, i32, i32) {
    %c0_i32 = arith.constant 0 : i32
    %c0_i32_0 = arith.constant 0 : i32
    %c0_i32_1 = arith.constant 0 : i32
    return %arg0, %arg1, %c0_i32, %c0_i32_0 : i32, i32, i32, i32
  }
}

module attributes {stable_mosaic.version = 11 : i64} {
  func.func @_conv_stats_kernel(%arg0: i32, %arg1: i32, %arg2: memref<1x16x16xbf16, #tpu.memory_space<vmem>>, %arg3: memref<1x16x16xbf16, #tpu.memory_space<vmem>>, %arg4: memref<3x16x96xbf16, #tpu.memory_space<vmem>>, %arg5: memref<1x16x16xbf16, #tpu.memory_space<vmem>>, %arg6: memref<1x1x16x2xf32, #tpu.memory_space<vmem>>) attributes {dimension_semantics = [#tpu.dimension_semantics<parallel>, #tpu.dimension_semantics<parallel>], iteration_bounds = array<i64: 2, 1>, scalar_prefetch = 0 : i64, scratch_operands = 0 : i64, tpu.core_type = #tpu.core_type<tc>, window_params = [{transform_indices = @transform_0, window_bounds = array<i64: 1, 16, 16>}, {transform_indices = @transform_1, window_bounds = array<i64: 1, 16, 16>}, {pipeline_mode = #tpu.pipeline_mode<synchronous>, transform_indices = @transform_2, window_bounds = array<i64: 3, 16, 96>}, {transform_indices = @transform_3, window_bounds = array<i64: 1, 16, 16>}, {transform_indices = @transform_4, window_bounds = array<i64: 1, 1, 16, 2>}]} {
    %c0 = arith.constant 0 : index
    %c0_0 = arith.constant 0 : index
    %c0_1 = arith.constant 0 : index
    %0 = vector.load %arg2[%c0, %c0_0, %c0_1] : memref<1x16x16xbf16, #tpu.memory_space<vmem>>, vector<1x16x16xbf16>
    %1 = vector.shape_cast %0 : vector<1x16x16xbf16> to vector<16x16xbf16>
    %cst = arith.constant 0.000000e+00 : bf16
    %2 = vector.broadcast %cst : bf16 to vector<16x4xbf16>
    %cst_2 = arith.constant 0.000000e+00 : bf16
    %3 = vector.broadcast %cst_2 : bf16 to vector<16x4xbf16>
    %4 = vector.extract_strided_slice %1 {offsets = [0, 0], sizes = [16, 12], strides = [1, 1]} : vector<16x16xbf16> to vector<16x12xbf16>
    %5 = tpu.concatenate %2, %4 in 1 : vector<16x4xbf16>, vector<16x12xbf16> -> vector<16x16xbf16>
    %6 = vector.extract_strided_slice %1 {offsets = [0, 4], sizes = [16, 12], strides = [1, 1]} : vector<16x16xbf16> to vector<16x12xbf16>
    %7 = tpu.concatenate %6, %3 in 1 : vector<16x12xbf16>, vector<16x4xbf16> -> vector<16x16xbf16>
    %c0_3 = arith.constant 0 : index
    %c0_4 = arith.constant 0 : index
    %c0_5 = arith.constant 0 : index
    %8 = vector.load %arg3[%c0_3, %c0_4, %c0_5] : memref<1x16x16xbf16, #tpu.memory_space<vmem>>, vector<1x16x16xbf16>
    %9 = vector.shape_cast %8 : vector<1x16x16xbf16> to vector<16x16xbf16>
    %cst_6 = arith.constant 0.000000e+00 : bf16
    %10 = vector.broadcast %cst_6 : bf16 to vector<16x4xbf16>
    %cst_7 = arith.constant 0.000000e+00 : bf16
    %11 = vector.broadcast %cst_7 : bf16 to vector<16x4xbf16>
    %12 = vector.extract_strided_slice %9 {offsets = [0, 0], sizes = [16, 12], strides = [1, 1]} : vector<16x16xbf16> to vector<16x12xbf16>
    %13 = tpu.concatenate %10, %12 in 1 : vector<16x4xbf16>, vector<16x12xbf16> -> vector<16x16xbf16>
    %14 = vector.extract_strided_slice %9 {offsets = [0, 4], sizes = [16, 12], strides = [1, 1]} : vector<16x16xbf16> to vector<16x12xbf16>
    %15 = tpu.concatenate %14, %11 in 1 : vector<16x12xbf16>, vector<16x4xbf16> -> vector<16x16xbf16>
    %16 = tpu.concatenate %5, %1, %7, %13, %9, %15 in 0 : vector<16x16xbf16>, vector<16x16xbf16>, vector<16x16xbf16>, vector<16x16xbf16>, vector<16x16xbf16>, vector<16x16xbf16> -> vector<96x16xbf16>
    %c0_8 = arith.constant 0 : index
    %c0_9 = arith.constant 0 : index
    %c0_10 = arith.constant 0 : index
    %17 = vector.load %arg4[%c0_8, %c0_9, %c0_10] : memref<3x16x96xbf16, #tpu.memory_space<vmem>>, vector<1x16x96xbf16>
    %18 = vector.shape_cast %17 : vector<1x16x96xbf16> to vector<16x96xbf16>
    %cst_11 = arith.constant dense<0.000000e+00> : vector<16x16xf32>
    %19 = tpu.matmul %18, %16, %cst_11 {dimension_numbers = #tpu.dot_dimension_numbers<[1], [0], [0], [1], [0, 0, 1, 1], [], []>} : vector<16x96xbf16>, vector<96x16xbf16>, vector<16x16xf32> -> vector<16x16xf32>
    %c1 = arith.constant 1 : index
    %c0_12 = arith.constant 0 : index
    %c0_13 = arith.constant 0 : index
    %20 = vector.load %arg4[%c1, %c0_12, %c0_13] : memref<3x16x96xbf16, #tpu.memory_space<vmem>>, vector<1x16x96xbf16>
    %21 = vector.shape_cast %20 : vector<1x16x96xbf16> to vector<16x96xbf16>
    %cst_14 = arith.constant dense<0.000000e+00> : vector<16x16xf32>
    %22 = tpu.matmul %21, %16, %cst_14 {dimension_numbers = #tpu.dot_dimension_numbers<[1], [0], [0], [1], [0, 0, 1, 1], [], []>} : vector<16x96xbf16>, vector<96x16xbf16>, vector<16x16xf32> -> vector<16x16xf32>
    %c2 = arith.constant 2 : index
    %c0_15 = arith.constant 0 : index
    %c0_16 = arith.constant 0 : index
    %23 = vector.load %arg4[%c2, %c0_15, %c0_16] : memref<3x16x96xbf16, #tpu.memory_space<vmem>>, vector<1x16x96xbf16>
    %24 = vector.shape_cast %23 : vector<1x16x96xbf16> to vector<16x96xbf16>
    %cst_17 = arith.constant dense<0.000000e+00> : vector<16x16xf32>
    %25 = tpu.matmul %24, %16, %cst_17 {dimension_numbers = #tpu.dot_dimension_numbers<[1], [0], [0], [1], [0, 0, 1, 1], [], []>} : vector<16x96xbf16>, vector<96x16xbf16>, vector<16x16xf32> -> vector<16x16xf32>
    %26 = tpu.iota {dimensions = array<i32: 1>} : vector<1x16xi32>
    %c4_i32 = arith.constant 4 : i32
    %c0_i32 = arith.constant 0 : i32
    %27 = arith.cmpi eq, %c4_i32, %c0_i32 : i32
    %c1_i32 = arith.constant 1 : i32
    %28 = arith.select %27, %c1_i32, %c4_i32 : i32
    %29 = vector.broadcast %28 : i32 to vector<1x16xi32>
    %30 = arith.remsi %26, %29 : vector<1x16xi32>
    %c0_i32_18 = arith.constant 0 : i32
    %31 = vector.broadcast %c0_i32_18 : i32 to vector<1x16xi32>
    %32 = arith.cmpi ne, %30, %31 : vector<1x16xi32>
    %c0_i32_19 = arith.constant 0 : i32
    %33 = vector.broadcast %c0_i32_19 : i32 to vector<1x16xi32>
    %34 = arith.cmpi slt, %30, %33 : vector<1x16xi32>
    %c0_i32_20 = arith.constant 0 : i32
    %35 = arith.cmpi slt, %28, %c0_i32_20 : i32
    %36 = vector.broadcast %35 : i1 to vector<1x16xi1>
    %37 = vector.broadcast %36 : vector<1x16xi1> to vector<1x16xi1>
    %38 = arith.xori %34, %37 : vector<1x16xi1>
    %39 = arith.andi %38, %32 : vector<1x16xi1>
    %40 = vector.broadcast %28 : i32 to vector<1x16xi32>
    %41 = arith.addi %30, %40 : vector<1x16xi32>
    %42 = arith.select %39, %41, %30 : vector<1x16xi1>, vector<1x16xi32>
    %cst_21 = arith.constant 0.000000e+00 : f32
    %43 = vector.broadcast %cst_21 : f32 to vector<16x1xf32>
    %44 = vector.extract_strided_slice %19 {offsets = [0, 0], sizes = [16, 15], strides = [1, 1]} : vector<16x16xf32> to vector<16x15xf32>
    %45 = tpu.concatenate %43, %44 in 1 : vector<16x1xf32>, vector<16x15xf32> -> vector<16x16xf32>
    %46 = vector.extract_strided_slice %25 {offsets = [0, 1], sizes = [16, 15], strides = [1, 1]} : vector<16x16xf32> to vector<16x15xf32>
    %47 = tpu.concatenate %46, %43 in 1 : vector<16x15xf32>, vector<16x1xf32> -> vector<16x16xf32>
    %c1_i32_22 = arith.constant 1 : i32
    %48 = vector.broadcast %c1_i32_22 : i32 to vector<1x16xi32>
    %49 = arith.cmpi sge, %42, %48 : vector<1x16xi32>
    %cst_23 = arith.constant 0.000000e+00 : f32
    %50 = vector.shape_cast %49 : vector<1x16xi1> to vector<1x16xi1>
    %51 = vector.broadcast %50 : vector<1x16xi1> to vector<16x16xi1>
    %52 = vector.broadcast %cst_23 : f32 to vector<16x16xf32>
    %53 = arith.select %51, %45, %52 : vector<16x16xi1>, vector<16x16xf32>
    %54 = arith.addf %22, %53 : vector<16x16xf32>
    %c3_i32 = arith.constant 3 : i32
    %55 = vector.broadcast %c3_i32 : i32 to vector<1x16xi32>
    %56 = arith.cmpi slt, %42, %55 : vector<1x16xi32>
    %cst_24 = arith.constant 0.000000e+00 : f32
    %57 = vector.shape_cast %56 : vector<1x16xi1> to vector<1x16xi1>
    %58 = vector.broadcast %57 : vector<1x16xi1> to vector<16x16xi1>
    %59 = vector.broadcast %cst_24 : f32 to vector<16x16xf32>
    %60 = arith.select %58, %47, %59 : vector<16x16xi1>, vector<16x16xf32>
    %61 = arith.addf %54, %60 : vector<16x16xf32>
    %62 = arith.truncf %61 : vector<16x16xf32> to vector<16x16xbf16>
    %c0_25 = arith.constant 0 : index
    %c0_26 = arith.constant 0 : index
    %c0_27 = arith.constant 0 : index
    %63 = vector.load %arg5[%c0_25, %c0_26, %c0_27] : memref<1x16x16xbf16, #tpu.memory_space<vmem>>, vector<1x16x16xbf16>
    %64 = vector.shape_cast %63 : vector<1x16x16xbf16> to vector<16x16xbf16>
    %65 = vector.shape_cast %62 : vector<16x16xbf16> to vector<1x16x16xbf16>
    tpu.vector_store %arg5[%c0_25, %c0_26, %c0_27], %65 {strides = array<i32>} : memref<1x16x16xbf16, #tpu.memory_space<vmem>>, vector<1x16x16xbf16>,
    %cst_28 = arith.constant dense<0.000000e+00> : vector<16xf32>
    %66 = vector.multi_reduction <add>, %61, %cst_28 [1] : vector<16x16xf32> to vector<16xf32>
    %67 = vector.shape_cast %66 : vector<16xf32> to vector<16x1xf32>
    %68 = arith.mulf %61, %61 : vector<16x16xf32>
    %cst_29 = arith.constant dense<0.000000e+00> : vector<16xf32>
    %69 = vector.multi_reduction <add>, %68, %cst_29 [1] : vector<16x16xf32> to vector<16xf32>
    %70 = vector.shape_cast %69 : vector<16xf32> to vector<16x1xf32>
    %71 = tpu.concatenate %67, %70 in 1 : vector<16x1xf32>, vector<16x1xf32> -> vector<16x2xf32>
    %c0_30 = arith.constant 0 : index
    %c0_31 = arith.constant 0 : index
    %c0_32 = arith.constant 0 : index
    %c0_33 = arith.constant 0 : index
    %72 = vector.load %arg6[%c0_30, %c0_31, %c0_32, %c0_33] : memref<1x1x16x2xf32, #tpu.memory_space<vmem>>, vector<1x1x16x2xf32>
    %73 = vector.shape_cast %72 : vector<1x1x16x2xf32> to vector<16x2xf32>
    %74 = vector.shape_cast %71 : vector<16x2xf32> to vector<1x1x16x2xf32>
    tpu.vector_store %arg6[%c0_30, %c0_31, %c0_32, %c0_33], %74 {strides = array<i32>} : memref<1x1x16x2xf32, #tpu.memory_space<vmem>>, vector<1x1x16x2xf32>,
    return
  }
  func.func @transform_0(%arg0: i32, %arg1: i32) -> (i32, i32, i32) {
    %c0_i32 = arith.constant 0 : i32
    %c0_i32_0 = arith.constant 0 : i32
    return %arg0, %c0_i32, %arg1 : i32, i32, i32
  }
  func.func @transform_1(%arg0: i32, %arg1: i32) -> (i32, i32, i32) {
    %c0_i32 = arith.constant 0 : i32
    %c0_i32_0 = arith.constant 0 : i32
    return %arg0, %c0_i32, %arg1 : i32, i32, i32
  }
  func.func @transform_2(%arg0: i32, %arg1: i32) -> (i32, i32, i32) {
    %c0_i32 = arith.constant 0 : i32
    %c0_i32_0 = arith.constant 0 : i32
    %c0_i32_1 = arith.constant 0 : i32
    %c0_i32_2 = arith.constant 0 : i32
    return %c0_i32, %c0_i32_0, %c0_i32_1 : i32, i32, i32
  }
  func.func @transform_3(%arg0: i32, %arg1: i32) -> (i32, i32, i32) {
    %c0_i32 = arith.constant 0 : i32
    %c0_i32_0 = arith.constant 0 : i32
    return %arg0, %c0_i32, %arg1 : i32, i32, i32
  }
  func.func @transform_4(%arg0: i32, %arg1: i32) -> (i32, i32, i32, i32) {
    %c0_i32 = arith.constant 0 : i32
    %c0_i32_0 = arith.constant 0 : i32
    %c0_i32_1 = arith.constant 0 : i32
    return %arg0, %arg1, %c0_i32, %c0_i32_0 : i32, i32, i32, i32
  }
}

module attributes {stable_mosaic.version = 11 : i64} {
  func.func @_conv_stats_kernel(%arg0: i32, %arg1: i32, %arg2: memref<1x16x256xbf16, #tpu.memory_space<vmem>>, %arg3: memref<1x16x256xbf16, #tpu.memory_space<vmem>>, %arg4: memref<3x16x96xbf16, #tpu.memory_space<vmem>>, %arg5: memref<1x16x256xbf16, #tpu.memory_space<vmem>>, %arg6: memref<1x1x16x2xf32, #tpu.memory_space<vmem>>) attributes {dimension_semantics = [#tpu.dimension_semantics<parallel>, #tpu.dimension_semantics<parallel>], iteration_bounds = array<i64: 2, 1>, scalar_prefetch = 0 : i64, scratch_operands = 0 : i64, tpu.core_type = #tpu.core_type<tc>, window_params = [{transform_indices = @transform_0, window_bounds = array<i64: 1, 16, 256>}, {transform_indices = @transform_1, window_bounds = array<i64: 1, 16, 256>}, {pipeline_mode = #tpu.pipeline_mode<synchronous>, transform_indices = @transform_2, window_bounds = array<i64: 3, 16, 96>}, {transform_indices = @transform_3, window_bounds = array<i64: 1, 16, 256>}, {transform_indices = @transform_4, window_bounds = array<i64: 1, 1, 16, 2>}]} {
    %c0 = arith.constant 0 : index
    %c0_0 = arith.constant 0 : index
    %c0_1 = arith.constant 0 : index
    %0 = vector.load %arg2[%c0, %c0_0, %c0_1] : memref<1x16x256xbf16, #tpu.memory_space<vmem>>, vector<1x16x256xbf16>
    %1 = vector.shape_cast %0 : vector<1x16x256xbf16> to vector<16x256xbf16>
    %cst = arith.constant 0.000000e+00 : bf16
    %2 = vector.broadcast %cst : bf16 to vector<16x16xbf16>
    %cst_2 = arith.constant 0.000000e+00 : bf16
    %3 = vector.broadcast %cst_2 : bf16 to vector<16x16xbf16>
    %4 = vector.extract_strided_slice %1 {offsets = [0, 0], sizes = [16, 240], strides = [1, 1]} : vector<16x256xbf16> to vector<16x240xbf16>
    %5 = tpu.concatenate %2, %4 in 1 : vector<16x16xbf16>, vector<16x240xbf16> -> vector<16x256xbf16>
    %6 = vector.extract_strided_slice %1 {offsets = [0, 16], sizes = [16, 240], strides = [1, 1]} : vector<16x256xbf16> to vector<16x240xbf16>
    %7 = tpu.concatenate %6, %3 in 1 : vector<16x240xbf16>, vector<16x16xbf16> -> vector<16x256xbf16>
    %c0_3 = arith.constant 0 : index
    %c0_4 = arith.constant 0 : index
    %c0_5 = arith.constant 0 : index
    %8 = vector.load %arg3[%c0_3, %c0_4, %c0_5] : memref<1x16x256xbf16, #tpu.memory_space<vmem>>, vector<1x16x256xbf16>
    %9 = vector.shape_cast %8 : vector<1x16x256xbf16> to vector<16x256xbf16>
    %cst_6 = arith.constant 0.000000e+00 : bf16
    %10 = vector.broadcast %cst_6 : bf16 to vector<16x16xbf16>
    %cst_7 = arith.constant 0.000000e+00 : bf16
    %11 = vector.broadcast %cst_7 : bf16 to vector<16x16xbf16>
    %12 = vector.extract_strided_slice %9 {offsets = [0, 0], sizes = [16, 240], strides = [1, 1]} : vector<16x256xbf16> to vector<16x240xbf16>
    %13 = tpu.concatenate %10, %12 in 1 : vector<16x16xbf16>, vector<16x240xbf16> -> vector<16x256xbf16>
    %14 = vector.extract_strided_slice %9 {offsets = [0, 16], sizes = [16, 240], strides = [1, 1]} : vector<16x256xbf16> to vector<16x240xbf16>
    %15 = tpu.concatenate %14, %11 in 1 : vector<16x240xbf16>, vector<16x16xbf16> -> vector<16x256xbf16>
    %16 = tpu.concatenate %5, %1, %7, %13, %9, %15 in 0 : vector<16x256xbf16>, vector<16x256xbf16>, vector<16x256xbf16>, vector<16x256xbf16>, vector<16x256xbf16>, vector<16x256xbf16> -> vector<96x256xbf16>
    %c0_8 = arith.constant 0 : index
    %c0_9 = arith.constant 0 : index
    %c0_10 = arith.constant 0 : index
    %17 = vector.load %arg4[%c0_8, %c0_9, %c0_10] : memref<3x16x96xbf16, #tpu.memory_space<vmem>>, vector<1x16x96xbf16>
    %18 = vector.shape_cast %17 : vector<1x16x96xbf16> to vector<16x96xbf16>
    %cst_11 = arith.constant dense<0.000000e+00> : vector<16x256xf32>
    %19 = tpu.matmul %18, %16, %cst_11 {dimension_numbers = #tpu.dot_dimension_numbers<[1], [0], [0], [1], [0, 0, 1, 1], [], []>} : vector<16x96xbf16>, vector<96x256xbf16>, vector<16x256xf32> -> vector<16x256xf32>
    %c1 = arith.constant 1 : index
    %c0_12 = arith.constant 0 : index
    %c0_13 = arith.constant 0 : index
    %20 = vector.load %arg4[%c1, %c0_12, %c0_13] : memref<3x16x96xbf16, #tpu.memory_space<vmem>>, vector<1x16x96xbf16>
    %21 = vector.shape_cast %20 : vector<1x16x96xbf16> to vector<16x96xbf16>
    %cst_14 = arith.constant dense<0.000000e+00> : vector<16x256xf32>
    %22 = tpu.matmul %21, %16, %cst_14 {dimension_numbers = #tpu.dot_dimension_numbers<[1], [0], [0], [1], [0, 0, 1, 1], [], []>} : vector<16x96xbf16>, vector<96x256xbf16>, vector<16x256xf32> -> vector<16x256xf32>
    %c2 = arith.constant 2 : index
    %c0_15 = arith.constant 0 : index
    %c0_16 = arith.constant 0 : index
    %23 = vector.load %arg4[%c2, %c0_15, %c0_16] : memref<3x16x96xbf16, #tpu.memory_space<vmem>>, vector<1x16x96xbf16>
    %24 = vector.shape_cast %23 : vector<1x16x96xbf16> to vector<16x96xbf16>
    %cst_17 = arith.constant dense<0.000000e+00> : vector<16x256xf32>
    %25 = tpu.matmul %24, %16, %cst_17 {dimension_numbers = #tpu.dot_dimension_numbers<[1], [0], [0], [1], [0, 0, 1, 1], [], []>} : vector<16x96xbf16>, vector<96x256xbf16>, vector<16x256xf32> -> vector<16x256xf32>
    %26 = tpu.iota {dimensions = array<i32: 1>} : vector<1x256xi32>
    %c16_i32 = arith.constant 16 : i32
    %c0_i32 = arith.constant 0 : i32
    %27 = arith.cmpi eq, %c16_i32, %c0_i32 : i32
    %c1_i32 = arith.constant 1 : i32
    %28 = arith.select %27, %c1_i32, %c16_i32 : i32
    %29 = vector.broadcast %28 : i32 to vector<1x256xi32>
    %30 = arith.remsi %26, %29 : vector<1x256xi32>
    %c0_i32_18 = arith.constant 0 : i32
    %31 = vector.broadcast %c0_i32_18 : i32 to vector<1x256xi32>
    %32 = arith.cmpi ne, %30, %31 : vector<1x256xi32>
    %c0_i32_19 = arith.constant 0 : i32
    %33 = vector.broadcast %c0_i32_19 : i32 to vector<1x256xi32>
    %34 = arith.cmpi slt, %30, %33 : vector<1x256xi32>
    %c0_i32_20 = arith.constant 0 : i32
    %35 = arith.cmpi slt, %28, %c0_i32_20 : i32
    %36 = vector.broadcast %35 : i1 to vector<1x256xi1>
    %37 = vector.broadcast %36 : vector<1x256xi1> to vector<1x256xi1>
    %38 = arith.xori %34, %37 : vector<1x256xi1>
    %39 = arith.andi %38, %32 : vector<1x256xi1>
    %40 = vector.broadcast %28 : i32 to vector<1x256xi32>
    %41 = arith.addi %30, %40 : vector<1x256xi32>
    %42 = arith.select %39, %41, %30 : vector<1x256xi1>, vector<1x256xi32>
    %cst_21 = arith.constant 0.000000e+00 : f32
    %43 = vector.broadcast %cst_21 : f32 to vector<16x1xf32>
    %44 = vector.extract_strided_slice %19 {offsets = [0, 0], sizes = [16, 255], strides = [1, 1]} : vector<16x256xf32> to vector<16x255xf32>
    %45 = tpu.concatenate %43, %44 in 1 : vector<16x1xf32>, vector<16x255xf32> -> vector<16x256xf32>
    %46 = vector.extract_strided_slice %25 {offsets = [0, 1], sizes = [16, 255], strides = [1, 1]} : vector<16x256xf32> to vector<16x255xf32>
    %47 = tpu.concatenate %46, %43 in 1 : vector<16x255xf32>, vector<16x1xf32> -> vector<16x256xf32>
    %c1_i32_22 = arith.constant 1 : i32
    %48 = vector.broadcast %c1_i32_22 : i32 to vector<1x256xi32>
    %49 = arith.cmpi sge, %42, %48 : vector<1x256xi32>
    %cst_23 = arith.constant 0.000000e+00 : f32
    %50 = vector.shape_cast %49 : vector<1x256xi1> to vector<1x256xi1>
    %51 = vector.broadcast %50 : vector<1x256xi1> to vector<16x256xi1>
    %52 = vector.broadcast %cst_23 : f32 to vector<16x256xf32>
    %53 = arith.select %51, %45, %52 : vector<16x256xi1>, vector<16x256xf32>
    %54 = arith.addf %22, %53 : vector<16x256xf32>
    %c15_i32 = arith.constant 15 : i32
    %55 = vector.broadcast %c15_i32 : i32 to vector<1x256xi32>
    %56 = arith.cmpi slt, %42, %55 : vector<1x256xi32>
    %cst_24 = arith.constant 0.000000e+00 : f32
    %57 = vector.shape_cast %56 : vector<1x256xi1> to vector<1x256xi1>
    %58 = vector.broadcast %57 : vector<1x256xi1> to vector<16x256xi1>
    %59 = vector.broadcast %cst_24 : f32 to vector<16x256xf32>
    %60 = arith.select %58, %47, %59 : vector<16x256xi1>, vector<16x256xf32>
    %61 = arith.addf %54, %60 : vector<16x256xf32>
    %62 = arith.truncf %61 : vector<16x256xf32> to vector<16x256xbf16>
    %c0_25 = arith.constant 0 : index
    %c0_26 = arith.constant 0 : index
    %c0_27 = arith.constant 0 : index
    %63 = vector.load %arg5[%c0_25, %c0_26, %c0_27] : memref<1x16x256xbf16, #tpu.memory_space<vmem>>, vector<1x16x256xbf16>
    %64 = vector.shape_cast %63 : vector<1x16x256xbf16> to vector<16x256xbf16>
    %65 = vector.shape_cast %62 : vector<16x256xbf16> to vector<1x16x256xbf16>
    tpu.vector_store %arg5[%c0_25, %c0_26, %c0_27], %65 {strides = array<i32>} : memref<1x16x256xbf16, #tpu.memory_space<vmem>>, vector<1x16x256xbf16>,
    %cst_28 = arith.constant dense<0.000000e+00> : vector<16xf32>
    %66 = vector.multi_reduction <add>, %61, %cst_28 [1] : vector<16x256xf32> to vector<16xf32>
    %67 = vector.shape_cast %66 : vector<16xf32> to vector<16x1xf32>
    %68 = arith.mulf %61, %61 : vector<16x256xf32>
    %cst_29 = arith.constant dense<0.000000e+00> : vector<16xf32>
    %69 = vector.multi_reduction <add>, %68, %cst_29 [1] : vector<16x256xf32> to vector<16xf32>
    %70 = vector.shape_cast %69 : vector<16xf32> to vector<16x1xf32>
    %71 = tpu.concatenate %67, %70 in 1 : vector<16x1xf32>, vector<16x1xf32> -> vector<16x2xf32>
    %c0_30 = arith.constant 0 : index
    %c0_31 = arith.constant 0 : index
    %c0_32 = arith.constant 0 : index
    %c0_33 = arith.constant 0 : index
    %72 = vector.load %arg6[%c0_30, %c0_31, %c0_32, %c0_33] : memref<1x1x16x2xf32, #tpu.memory_space<vmem>>, vector<1x1x16x2xf32>
    %73 = vector.shape_cast %72 : vector<1x1x16x2xf32> to vector<16x2xf32>
    %74 = vector.shape_cast %71 : vector<16x2xf32> to vector<1x1x16x2xf32>
    tpu.vector_store %arg6[%c0_30, %c0_31, %c0_32, %c0_33], %74 {strides = array<i32>} : memref<1x1x16x2xf32, #tpu.memory_space<vmem>>, vector<1x1x16x2xf32>,
    return
  }
  func.func @transform_0(%arg0: i32, %arg1: i32) -> (i32, i32, i32) {
    %c0_i32 = arith.constant 0 : i32
    %c0_i32_0 = arith.constant 0 : i32
    return %arg0, %c0_i32, %arg1 : i32, i32, i32
  }
  func.func @transform_1(%arg0: i32, %arg1: i32) -> (i32, i32, i32) {
    %c0_i32 = arith.constant 0 : i32
    %c0_i32_0 = arith.constant 0 : i32
    return %arg0, %c0_i32, %arg1 : i32, i32, i32
  }
  func.func @transform_2(%arg0: i32, %arg1: i32) -> (i32, i32, i32) {
    %c0_i32 = arith.constant 0 : i32
    %c0_i32_0 = arith.constant 0 : i32
    %c0_i32_1 = arith.constant 0 : i32
    %c0_i32_2 = arith.constant 0 : i32
    return %c0_i32, %c0_i32_0, %c0_i32_1 : i32, i32, i32
  }
  func.func @transform_3(%arg0: i32, %arg1: i32) -> (i32, i32, i32) {
    %c0_i32 = arith.constant 0 : i32
    %c0_i32_0 = arith.constant 0 : i32
    return %arg0, %c0_i32, %arg1 : i32, i32, i32
  }
  func.func @transform_4(%arg0: i32, %arg1: i32) -> (i32, i32, i32, i32) {
    %c0_i32 = arith.constant 0 : i32
    %c0_i32_0 = arith.constant 0 : i32
    %c0_i32_1 = arith.constant 0 : i32
    return %arg0, %arg1, %c0_i32, %c0_i32_0 : i32, i32, i32, i32
  }
}

module attributes {stable_mosaic.version = 11 : i64} {
  func.func @_apply_kernel(%arg0: i32, %arg1: i32, %arg2: memref<1x16x256xbf16, #tpu.memory_space<vmem>>, %arg3: memref<16x2xf32, #tpu.memory_space<vmem>>, %arg4: memref<1x16x256xbf16, #tpu.memory_space<vmem>>, %arg5: memref<1x16x256xbf16, #tpu.memory_space<vmem>>) attributes {dimension_semantics = [#tpu.dimension_semantics<parallel>, #tpu.dimension_semantics<parallel>], iteration_bounds = array<i64: 2, 1>, scalar_prefetch = 0 : i64, scratch_operands = 0 : i64, tpu.core_type = #tpu.core_type<tc>, window_params = [{transform_indices = @transform_0, window_bounds = array<i64: 1, 16, 256>}, {pipeline_mode = #tpu.pipeline_mode<synchronous>, transform_indices = @transform_1, window_bounds = array<i64: 16, 2>}, {transform_indices = @transform_2, window_bounds = array<i64: 1, 16, 256>}, {transform_indices = @transform_3, window_bounds = array<i64: 1, 16, 256>}]} {
    %c0 = arith.constant 0 : index
    %c0_0 = arith.constant 0 : index
    %0 = vector.load %arg3[%c0, %c0_0] : memref<16x2xf32, #tpu.memory_space<vmem>>, vector<16x2xf32>
    %c0_1 = arith.constant 0 : index
    %c0_2 = arith.constant 0 : index
    %c0_3 = arith.constant 0 : index
    %1 = vector.load %arg2[%c0_1, %c0_2, %c0_3] : memref<1x16x256xbf16, #tpu.memory_space<vmem>>, vector<1x16x256xbf16>
    %2 = vector.shape_cast %1 : vector<1x16x256xbf16> to vector<16x256xbf16>
    %3 = arith.extf %2 : vector<16x256xbf16> to vector<16x256xf32>
    %4 = vector.extract_strided_slice %0 {offsets = [0, 0], sizes = [16, 1], strides = [1, 1]} : vector<16x2xf32> to vector<16x1xf32>
    %5 = vector.broadcast %4 : vector<16x1xf32> to vector<16x256xf32>
    %6 = arith.mulf %3, %5 : vector<16x256xf32>
    %7 = vector.extract_strided_slice %0 {offsets = [0, 1], sizes = [16, 1], strides = [1, 1]} : vector<16x2xf32> to vector<16x1xf32>
    %8 = vector.broadcast %7 : vector<16x1xf32> to vector<16x256xf32>
    %9 = arith.addf %6, %8 : vector<16x256xf32>
    %cst = arith.constant 0.000000e+00 : f32
    %10 = vector.broadcast %cst : f32 to vector<16x256xf32>
    %11 = arith.maximumf %9, %10 : vector<16x256xf32>
    %c0_4 = arith.constant 0 : index
    %c0_5 = arith.constant 0 : index
    %c0_6 = arith.constant 0 : index
    %12 = vector.load %arg4[%c0_4, %c0_5, %c0_6] : memref<1x16x256xbf16, #tpu.memory_space<vmem>>, vector<1x16x256xbf16>
    %13 = vector.shape_cast %12 : vector<1x16x256xbf16> to vector<16x256xbf16>
    %14 = arith.extf %13 : vector<16x256xbf16> to vector<16x256xf32>
    %15 = arith.addf %11, %14 : vector<16x256xf32>
    %16 = arith.truncf %15 : vector<16x256xf32> to vector<16x256xbf16>
    %c0_7 = arith.constant 0 : index
    %c0_8 = arith.constant 0 : index
    %c0_9 = arith.constant 0 : index
    %17 = vector.load %arg5[%c0_7, %c0_8, %c0_9] : memref<1x16x256xbf16, #tpu.memory_space<vmem>>, vector<1x16x256xbf16>
    %18 = vector.shape_cast %17 : vector<1x16x256xbf16> to vector<16x256xbf16>
    %19 = vector.shape_cast %16 : vector<16x256xbf16> to vector<1x16x256xbf16>
    tpu.vector_store %arg5[%c0_7, %c0_8, %c0_9], %19 {strides = array<i32>} : memref<1x16x256xbf16, #tpu.memory_space<vmem>>, vector<1x16x256xbf16>,
    return
  }
  func.func @transform_0(%arg0: i32, %arg1: i32) -> (i32, i32, i32) {
    %c0_i32 = arith.constant 0 : i32
    %c0_i32_0 = arith.constant 0 : i32
    return %arg0, %c0_i32, %arg1 : i32, i32, i32
  }
  func.func @transform_1(%arg0: i32, %arg1: i32) -> (i32, i32) {
    %c0_i32 = arith.constant 0 : i32
    %c0_i32_0 = arith.constant 0 : i32
    %c0_i32_1 = arith.constant 0 : i32
    return %c0_i32, %c0_i32_0 : i32, i32
  }
  func.func @transform_2(%arg0: i32, %arg1: i32) -> (i32, i32, i32) {
    %c0_i32 = arith.constant 0 : i32
    %c0_i32_0 = arith.constant 0 : i32
    return %arg0, %c0_i32, %arg1 : i32, i32, i32
  }
  func.func @transform_3(%arg0: i32, %arg1: i32) -> (i32, i32, i32) {
    %c0_i32 = arith.constant 0 : i32
    %c0_i32_0 = arith.constant 0 : i32
    return %arg0, %c0_i32, %arg1 : i32, i32, i32
  }
}

</mosaic_0001>

<llo_original>
// kernel: rsu5_forward.21
$region0: #{rsu5_forward.21}
  #allocation0 [shape = 'u32[]', space=smem, size = 0x4, offset = 0x4, fixed_abs, tag = 'smem constant byte address 0x4 - core index']
  #allocation1 [shape = 'u32[144,128]{1,0:T(1,128)}', space=vmem, size = 0x12000, scoped, tag = 'internal scratch']
  %s0 = inlined_call_operand.vmem [shape: bf16[2,16,256], index: 0, kind: input, shape index: {}]
  %s1 = inlined_call_operand.vmem [shape: f32[16,2], index: 1, kind: input, shape index: {}]
  %s2 = inlined_call_operand.vmem [shape: bf16[2,16,256], index: 2, kind: output, shape index: {}]
  %s3 = sld [smem:[#allocation0]]
  $region41: #{rsu5_forward.21} parent=0
    _
  %s5 = ssub.s32 1, %s3
  %s6 = scalar_select 0, %s5, %s3
  loop: start=0, step=1, limit=4
  $region2: #{rsu5_forward.21} parent=0 // loop_pre_header
    _
  $region3: #{rsu5_forward.21} parent=0 // loop_header
    %s8 = sphi 0, %s12
    %p9 = scmp.ge.s32.totalorder %s8, 4
    %s15 = sphi 0, %s27
    %s16 = sphi 0, %s23
    %s17 = sphi 0, %s15
    %s18 = sphi 0, %s16
    %s19 = sphi 0, %s17
    %s20 = sphi 0, %s18
    %s32 = sphi 0, %s34
    %s35 = sphi 0, %s32
    %s36 = sphi 0, %s35
    %s52 = sphi 0, %s36
    %s56 = sphi 0, %s56
    %s58 = sphi 0, %s56
    %s59 = sphi 0, %s58
    %s73 = sphi 0, %s59
    %s81 = sphi 0, %s83
    %s84 = sphi 0, %s81
    %s85 = sphi 0, %s84
    %s101 = sphi 0, %s85
  $region4: #{rsu5_forward.21} parent=0 // loop_header_branch
    %11 = sbr.rel (%p9) target = $region8
  $region5: #{rsu5_forward.21} parent=0 // loop_body
    %s13 = ssub.s32 %s8, 1
    %s14 = ssub.s32 %s8, 2
    %s21 = sadd.s32 1, %s16
    %p22 = scmp.ge.s32.totalorder %s21, 1
    %s23 = scalar_select %p22, 0, %s21
    %s24 = sadd.s32 1, %s15
    %s25 = scalar_select %p22, %s24, %s15
    %p26 = scmp.ge.s32.totalorder %s25, 2
    %s27 = scalar_select %p26, 0, %s25
    %s28 = ssub.s32 %s15, %s27
    %s29 = ssub.s32 %s16, %s23
    %s30 = sor.u32 %s28, %s29
    %p31 = scmp.eq.s32.totalorder %s30, 0
    %s33 = sadd.s32 %s32, 1
    %s34 = scalar_select %p31, %s32, %s33
    %p37 = pneg %p31
    %p38 = scmp.eq.s32.totalorder %s8, 1
    %p39 = por %p37, %p38
    %p40 = scmp.ne.s32.totalorder %s32, %s35
    %p41 = scmp.eq.s32.totalorder %s8, 0
    %p42 = por %p40, %p41
    %p43 = scmp.ne.s32.totalorder %s32, %s35
    %p44 = scmp.eq.s32.totalorder %s13, 1
    %p45 = por %p43, %p44
    %p46 = scmp.ne.s32.totalorder %s35, %s36
    %p47 = scmp.eq.s32.totalorder %s13, 0
    %p48 = por %p46, %p47
    %p49 = scmp.ne.s32.totalorder %s35, %s36
    %p50 = scmp.eq.s32.totalorder %s14, 1
    %p51 = por %p49, %p50
    %p53 = scmp.ne.s32.totalorder %s36, %s52
    %p54 = scmp.eq.s32.totalorder %s14, 0
    %p55 = por %p53, %p54
    %s57 = sadd.s32 %s56, 1
    %p60 = scmp.eq.s32.totalorder %s8, 1
    %p61 = scmp.ne.s32.totalorder %s56, %s58
    %p62 = scmp.eq.s32.totalorder %s8, 0
    %p63 = por %p61, %p62
    %p64 = scmp.ne.s32.totalorder %s56, %s58
    %p65 = scmp.eq.s32.totalorder %s13, 1
    %p66 = por %p64, %p65
    %p67 = scmp.ne.s32.totalorder %s58, %s59
    %p68 = scmp.eq.s32.totalorder %s13, 0
    %p69 = por %p67, %p68
    %p70 = scmp.ne.s32.totalorder %s58, %s59
    %p71 = scmp.eq.s32.totalorder %s14, 1
    %p72 = por %p70, %p71
    %p74 = scmp.ne.s32.totalorder %s59, %s73
    %p75 = scmp.eq.s32.totalorder %s14, 0
    %p76 = por %p74, %p75
    %s77 = ssub.s32 %s15, %s27
    %s78 = ssub.s32 %s16, %s23
    %s79 = sor.u32 %s77, %s78
    %p80 = scmp.eq.s32.totalorder %s79, 0
    %s82 = sadd.s32 %s81, 1
    %s83 = scalar_select %p80, %s81, %s82
    %p86 = pneg %p80
    %p87 = scmp.eq.s32.totalorder %s8, 1
    %p88 = por %p86, %p87
    %p89 = scmp.ne.s32.totalorder %s81, %s84
    %p90 = scmp.eq.s32.totalorder %s8, 0
    %p91 = por %p89, %p90
    %p92 = scmp.ne.s32.totalorder %s81, %s84
    %p93 = scmp.eq.s32.totalorder %s13, 1
    %p94 = por %p92, %p93
    %p95 = scmp.ne.s32.totalorder %s84, %s85
    %p96 = scmp.eq.s32.totalorder %s13, 0
    %p97 = por %p95, %p96
    %p98 = scmp.ne.s32.totalorder %s84, %s85
    %p99 = scmp.eq.s32.totalorder %s14, 1
    %p100 = por %p98, %p99
    %p102 = scmp.ne.s32.totalorder %s85, %s101
    %p103 = scmp.eq.s32.totalorder %s14, 0
    %p104 = por %p102, %p103
    %p105 = scmp.le.s32.totalorder 1, %s8
    %p106 = scmp.lt.s32.totalorder %s8, 3
    %p107 = pnand %p105, %p106
    %p108 = pneg %p107
    // Predicated region
    $region9: #{rsu5_forward.21} parent=5 // pred_check
      _
    $region10: #{rsu5_forward.21} parent=5 // pred_check_branch
      %110 = sbr.rel (%p107) target = $region12
    $region11: #{rsu5_forward.21} parent=5 // pred_region
      %s111 = ssub.s32 %s8, 1
      // Predicated region
      $region13: #{rsu5_forward.21} parent=11 // pred_check
        %p112 = pneg %p69
      $region14: #{rsu5_forward.21} parent=11 // pred_check_branch
        %114 = sbr.rel (%p112) target = $region16
      $region15: #{rsu5_forward.21} parent=11 // pred_region
        _
      $region16: #{rsu5_forward.21} parent=11 // pred_fallthru
        _
    $region12: #{rsu5_forward.21} parent=5 // pred_fallthru
      _
    %p115 = scmp.lt.s32.totalorder %s8, 2
    // Predicated region
    $region17: #{rsu5_forward.21} parent=5 // pred_check
      %p116 = pneg %p115
    $region18: #{rsu5_forward.21} parent=5 // pred_check_branch
      %118 = sbr.rel (%p116) target = $region20
    $region19: #{rsu5_forward.21} parent=5 // pred_region
      // Predicated region
      $region21: #{rsu5_forward.21} parent=19 // pred_check
        %p119 = pneg %p42
      $region22: #{rsu5_forward.21} parent=19 // pred_check_branch
        %121 = sbr.rel (%p119) target = $region24
      $region23: #{rsu5_forward.21} parent=19 // pred_region
        %s122 = smul.u32 2, %s16
        %p123 = scmp.lt.s32.totalorder %s15, 1
        %s124 = scalar_select %p123, %s15, 1
        %p125 = scmp.lt.s32.totalorder %s122, 1
        %s126 = scalar_select %p125, %s122, 1
        %s127 = smul.addr %s124, 4
        %s128 = sadd.s32 %s126, %s127
        %s129 = smul.addr %s128, 4
        %s130 = scalar_lea.vmem %s0, %s129
        %s131 = smul.u32 2, %s16
      $region24: #{rsu5_forward.21} parent=19 // pred_fallthru
        _
    $region20: #{rsu5_forward.21} parent=5 // pred_fallthru
      _
    %p132 = scmp.le.s32.totalorder 1, %s8
    %p133 = scmp.lt.s32.totalorder %s8, 3
    %p134 = pnand %p132, %p133
    %p135 = pneg %p134
    // Predicated region
    $region25: #{rsu5_forward.21} parent=5 // pred_check
      _
    $region26: #{rsu5_forward.21} parent=5 // pred_check_branch
      %137 = sbr.rel (%p134) target = $region28
    $region27: #{rsu5_forward.21} parent=5 // pred_region
      %s138 = ssub.s32 %s8, 1
      %s139 = smul.u32 2, %s18
      %p140 = scmp.lt.s32.totalorder %s17, 1
      %s141 = scalar_select %p140, %s17, 1
      %p142 = scmp.lt.s32.totalorder %s139, 1
      %s143 = scalar_select %p142, %s139, 1
      %s144 = smul.addr %s141, 4
      %s145 = sadd.s32 %s143, %s144
      %s146 = smul.addr %s145, 4
      %s147 = scalar_lea.vmem %s0, %s146
      %p148 = pneg %p48
      %p149 = pneg %p45
      %p150 = pneg %p69
      %p151 = pneg %p66
      %p152 = pneg %p97
      %p153 = pneg %p94
      %s154 = smul.u32 2, %s18
      %p155 = scmp.lt.s32.totalorder %s17, 1
      %s156 = scalar_select %p155, %s17, 1
      %p157 = scmp.lt.s32.totalorder %s154, 1
      %s158 = scalar_select %p157, %s154, 1
      %s159 = smul.addr %s156, 4
      %s160 = sadd.s32 %s158, %s159
      %s161 = smul.addr %s160, 4
      %s162 = scalar_lea.vmem %s2, %s161
      %s163 = smul.u32 2, %s18
      %p164 = scmp.lt.s32.totalorder %s17, 1
      %s165 = scalar_select %p164, %s17, 1
      %p166 = scmp.lt.s32.totalorder %s163, 1
      %s167 = scalar_select %p166, %s163, 1
      %s168 = smul.addr %s165, 4
      %s169 = sadd.s32 %s167, %s168
      %s170 = smul.addr %s169, 4
      %s171 = scalar_lea.vmem %s0, %s170
      %s172 = smul.u32 2, %s18
      %s173 = smul.u32 2, %s18
      %p174 = scmp.lt.s32.totalorder %s17, 1
      %s175 = scalar_select %p174, %s17, 1
      %p176 = scmp.lt.s32.totalorder %s173, 1
      %s177 = scalar_select %p176, %s173, 1
      %s178 = smul.addr %s175, 4
      %s179 = sadd.s32 %s177, %s178
      %s180 = smul.addr %s179, 4
      %s181 = scalar_lea.vmem %s2, %s180
      %s182 = smul.u32 2, %s18
      %v183 = vld [vmem:[%s1] sm:$0xff]
      %v184 = vld [vmem:[%s1 + $0x8] sm:$0xff]
      %v185 = vld [vmem:[%s171] sm:$0xff]
      %v186 = vld [vmem:[%s171 + $0x8] sm:$0xff]
      %v187 = vunpack.c.l.bf16 %v185
      %v188 = vunpack.c.h.bf16 %v185
      %v189 = vunpack.c.l.bf16 %v186
      %v190 = vunpack.c.h.bf16 %v186
      %192 = vset.pattern.permute.xlu0 0
      %193 = vperm.xlu0 %192, %v183
      %v194 = vpop.permute.xlu0 %193
      %197 = vset.pattern.permute.xlu0 0
      %198 = vperm.xlu0 %197, %v184
      %v199 = vpop.permute.xlu0 %198
      %v201 = vmul.f32 %v187, %v194
      %v202 = vmul.f32 %v188, %v194
      %v203 = vmul.f32 %v189, %v199
      %v204 = vmul.f32 %v190, %v199
      %205 = vset.pattern.permute.xlu0 1
      %206 = vperm.xlu0 %205, %v183
      %v207 = vpop.permute.xlu0 %206
      %209 = vset.pattern.permute.xlu0 1
      %210 = vperm.xlu0 %209, %v184
      %v211 = vpop.permute.xlu0 %210
      %v213 = vadd.f32 %v201, %v207
      %v214 = vadd.f32 %v202, %v207
      %v215 = vadd.f32 %v203, %v211
      %v216 = vadd.f32 %v204, %v211
      %v217 = vmax.f32 %v213, 0.0
      %v218 = vmax.f32 %v214, 0.0
      %v219 = vmax.f32 %v215, 0.0
      %v220 = vmax.f32 %v216, 0.0
      %v221 = vpack.c.bf16 %v219, %v217
      %v222 = vpack.c.bf16 %v220, %v218
      %v225 = vunpack.c.l.b16 %v221
      %v226 = vunpack.c.l.b16 %v222
      %v227 = vunpack.c.h.b16 %v221
      %v228 = vunpack.c.h.b16 %v222
      %v229 = vpack.c.b16 %v226, %v225
      %v230 = vpack.c.b16 %v228, %v227
      %233 = vst [vmem:[%s181] sm:$0xff] %v229
      %234 = vst [vmem:[%s181 + $0x8] sm:$0xff] %v230
      %s235 = smul.u32 2, %s18
      %p236 = scmp.lt.s32.totalorder %s17, 1
      %s237 = scalar_select %p236, %s17, 1
      %p238 = scmp.lt.s32.totalorder %s235, 1
      %s239 = scalar_select %p238, %s235, 1
      %s240 = smul.addr %s237, 4
      %s241 = sadd.s32 %s239, %s240
      %s242 = smul.addr %s241, 4
      %s243 = scalar_lea.vmem %s2, %s242
      // Predicated region
      $region29: #{rsu5_forward.21} parent=27 // pred_check
        %p244 = pneg %p94
      $region30: #{rsu5_forward.21} parent=27 // pred_check_branch
        %246 = sbr.rel (%p244) target = $region32
      $region31: #{rsu5_forward.21} parent=27 // pred_region
        %s247 = smul.u32 2, %s18
      $region32: #{rsu5_forward.21} parent=27 // pred_fallthru
        _
    $region28: #{rsu5_forward.21} parent=5 // pred_fallthru
      _
    %p248 = scmp.le.s32.totalorder 2, %s8
    // Predicated region
    $region33: #{rsu5_forward.21} parent=5 // pred_check
      %p249 = pneg %p248
    $region34: #{rsu5_forward.21} parent=5 // pred_check_branch
      %251 = sbr.rel (%p249) target = $region36
    $region35: #{rsu5_forward.21} parent=5 // pred_region
      %s252 = ssub.s32 %s8, 2
      // Predicated region
      $region37: #{rsu5_forward.21} parent=35 // pred_check
        %p253 = pneg %p100
      $region38: #{rsu5_forward.21} parent=35 // pred_check_branch
        %255 = sbr.rel (%p253) target = $region40
      $region39: #{rsu5_forward.21} parent=35 // pred_region
        %s256 = smul.u32 2, %s20
        %p257 = scmp.lt.s32.totalorder %s19, 1
        %s258 = scalar_select %p257, %s19, 1
        %p259 = scmp.lt.s32.totalorder %s256, 1
        %s260 = scalar_select %p259, %s256, 1
        %s261 = smul.addr %s258, 4
        %s262 = sadd.s32 %s260, %s261
        %s263 = smul.addr %s262, 4
        %s264 = scalar_lea.vmem %s2, %s263
      $region40: #{rsu5_forward.21} parent=35 // pred_fallthru
        _
    $region36: #{rsu5_forward.21} parent=5 // pred_fallthru
      _
  $region6: #{rsu5_forward.21} parent=0 // loop_footer
    %s12 = sadd.s32 1, %s8
  $region7: #{rsu5_forward.21} parent=0 // loop_footer_branch
    %7 = sbr.rel target = $region3
  $region8: #{rsu5_forward.21} parent=0 // loop_exit
    _

// kernel: rsu5_forward.20
$region0: #{rsu5_forward.20}
  #allocation0 [shape = 'u32[]', space=smem, size = 0x4, offset = 0x4, fixed_abs, tag = 'smem constant byte address 0x4 - core index']
  #allocation1 [shape = 'u32[144,128]{1,0:T(1,128)}', space=vmem, size = 0x12000, scoped, tag = 'internal scratch']
  %s0 = inlined_call_operand.vmem [shape: bf16[2,16,256], index: 0, kind: input, shape index: {}]
  %s1 = inlined_call_operand.vmem [shape: bf16[3,16,48], index: 1, kind: input, shape index: {}]
  %s2 = inlined_call_operand.vmem [shape: bf16[2,16,256], index: 2, kind: output, shape index: {0}]
  %s3 = inlined_call_operand.vmem [shape: f32[2,1,16,2], index: 3, kind: output, shape index: {1}]
  %4 = xla_tuple %s2, %s3
  %s5 = sld [smem:[#allocation0]]
  $region49: #{rsu5_forward.20} parent=0
    _
  %s7 = ssub.s32 1, %s5
  %s8 = scalar_select 0, %s7, %s5
  loop: start=0, step=1, limit=4
  $region2: #{rsu5_forward.20} parent=0 // loop_pre_header
    _
  $region3: #{rsu5_forward.20} parent=0 // loop_header
    %s10 = sphi 0, %s14
    %p11 = scmp.ge.s32.totalorder %s10, 4
    %s17 = sphi 0, %s29
    %s18 = sphi 0, %s25
    %s19 = sphi 0, %s17
    %s20 = sphi 0, %s18
    %s21 = sphi 0, %s19
    %s22 = sphi 0, %s20
    %s34 = sphi 0, %s36
    %s37 = sphi 0, %s34
    %s38 = sphi 0, %s37
    %s54 = sphi 0, %s38
    %s58 = sphi 0, %s58
    %s60 = sphi 0, %s58
    %s61 = sphi 0, %s60
    %s75 = sphi 0, %s61
    %s83 = sphi 0, %s85
    %s86 = sphi 0, %s83
    %s87 = sphi 0, %s86
    %s103 = sphi 0, %s87
    %s111 = sphi 0, %s113
    %s114 = sphi 0, %s111
    %s115 = sphi 0, %s114
    %s131 = sphi 0, %s115
  $region4: #{rsu5_forward.20} parent=0 // loop_header_branch
    %13 = sbr.rel (%p11) target = $region8
  $region5: #{rsu5_forward.20} parent=0 // loop_body
    %s15 = ssub.s32 %s10, 1
    %s16 = ssub.s32 %s10, 2
    %s23 = sadd.s32 1, %s18
    %p24 = scmp.ge.s32.totalorder %s23, 1
    %s25 = scalar_select %p24, 0, %s23
    %s26 = sadd.s32 1, %s17
    %s27 = scalar_select %p24, %s26, %s17
    %p28 = scmp.ge.s32.totalorder %s27, 2
    %s29 = scalar_select %p28, 0, %s27
    %s30 = ssub.s32 %s17, %s29
    %s31 = ssub.s32 %s18, %s25
    %s32 = sor.u32 %s30, %s31
    %p33 = scmp.eq.s32.totalorder %s32, 0
    %s35 = sadd.s32 %s34, 1
    %s36 = scalar_select %p33, %s34, %s35
    %p39 = pneg %p33
    %p40 = scmp.eq.s32.totalorder %s10, 1
    %p41 = por %p39, %p40
    %p42 = scmp.ne.s32.totalorder %s34, %s37
    %p43 = scmp.eq.s32.totalorder %s10, 0
    %p44 = por %p42, %p43
    %p45 = scmp.ne.s32.totalorder %s34, %s37
    %p46 = scmp.eq.s32.totalorder %s15, 1
    %p47 = por %p45, %p46
    %p48 = scmp.ne.s32.totalorder %s37, %s38
    %p49 = scmp.eq.s32.totalorder %s15, 0
    %p50 = por %p48, %p49
    %p51 = scmp.ne.s32.totalorder %s37, %s38
    %p52 = scmp.eq.s32.totalorder %s16, 1
    %p53 = por %p51, %p52
    %p55 = scmp.ne.s32.totalorder %s38, %s54
    %p56 = scmp.eq.s32.totalorder %s16, 0
    %p57 = por %p55, %p56
    %s59 = sadd.s32 %s58, 1
    %p62 = scmp.eq.s32.totalorder %s10, 1
    %p63 = scmp.ne.s32.totalorder %s58, %s60
    %p64 = scmp.eq.s32.totalorder %s10, 0
    %p65 = por %p63, %p64
    %p66 = scmp.ne.s32.totalorder %s58, %s60
    %p67 = scmp.eq.s32.totalorder %s15, 1
    %p68 = por %p66, %p67
    %p69 = scmp.ne.s32.totalorder %s60, %s61
    %p70 = scmp.eq.s32.totalorder %s15, 0
    %p71 = por %p69, %p70
    %p72 = scmp.ne.s32.totalorder %s60, %s61
    %p73 = scmp.eq.s32.totalorder %s16, 1
    %p74 = por %p72, %p73
    %p76 = scmp.ne.s32.totalorder %s61, %s75
    %p77 = scmp.eq.s32.totalorder %s16, 0
    %p78 = por %p76, %p77
    %s79 = ssub.s32 %s17, %s29
    %s80 = ssub.s32 %s18, %s25
    %s81 = sor.u32 %s79, %s80
    %p82 = scmp.eq.s32.totalorder %s81, 0
    %s84 = sadd.s32 %s83, 1
    %s85 = scalar_select %p82, %s83, %s84
    %p88 = pneg %p82
    %p89 = scmp.eq.s32.totalorder %s10, 1
    %p90 = por %p88, %p89
    %p91 = scmp.ne.s32.totalorder %s83, %s86
    %p92 = scmp.eq.s32.totalorder %s10, 0
    %p93 = por %p91, %p92
    %p94 = scmp.ne.s32.totalorder %s83, %s86
    %p95 = scmp.eq.s32.totalorder %s15, 1
    %p96 = por %p94, %p95
    %p97 = scmp.ne.s32.totalorder %s86, %s87
    %p98 = scmp.eq.s32.totalorder %s15, 0
    %p99 = por %p97, %p98
    %p100 = scmp.ne.s32.totalorder %s86, %s87
    %p101 = scmp.eq.s32.totalorder %s16, 1
    %p102 = por %p100, %p101
    %p104 = scmp.ne.s32.totalorder %s87, %s103
    %p105 = scmp.eq.s32.totalorder %s16, 0
    %p106 = por %p104, %p105
    %s107 = ssub.s32 %s17, %s29
    %s108 = ssub.s32 %s18, %s25
    %s109 = sor.u32 %s107, %s108
    %p110 = scmp.eq.s32.totalorder %s109, 0
    %s112 = sadd.s32 %s111, 1
    %s113 = scalar_select %p110, %s111, %s112
    %p116 = pneg %p110
    %p117 = scmp.eq.s32.totalorder %s10, 1
    %p118 = por %p116, %p117
    %p119 = scmp.ne.s32.totalorder %s111, %s114
    %p120 = scmp.eq.s32.totalorder %s10, 0
    %p121 = por %p119, %p120
    %p122 = scmp.ne.s32.totalorder %s111, %s114
    %p123 = scmp.eq.s32.totalorder %s15, 1
    %p124 = por %p122, %p123
    %p125 = scmp.ne.s32.totalorder %s114, %s115
    %p126 = scmp.eq.s32.totalorder %s15, 0
    %p127 = por %p125, %p126
    %p128 = scmp.ne.s32.totalorder %s114, %s115
    %p129 = scmp.eq.s32.totalorder %s16, 1
    %p130 = por %p128, %p129
    %p132 = scmp.ne.s32.totalorder %s115, %s131
    %p133 = scmp.eq.s32.totalorder %s16, 0
    %p134 = por %p132, %p133
    %p135 = scmp.le.s32.totalorder 1, %s10
    %p136 = scmp.lt.s32.totalorder %s10, 3
    %p137 = pnand %p135, %p136
    %p138 = pneg %p137
    // Predicated region
    $region9: #{rsu5_forward.20} parent=5 // pred_check
      _
    $region10: #{rsu5_forward.20} parent=5 // pred_check_branch
      %140 = sbr.rel (%p137) target = $region12
    $region11: #{rsu5_forward.20} parent=5 // pred_region
      %s141 = ssub.s32 %s10, 1
      // Predicated region
      $region13: #{rsu5_forward.20} parent=11 // pred_check
        %p142 = pneg %p71
      $region14: #{rsu5_forward.20} parent=11 // pred_check_branch
        %144 = sbr.rel (%p142) target = $region16
      $region15: #{rsu5_forward.20} parent=11 // pred_region
        _
      $region16: #{rsu5_forward.20} parent=11 // pred_fallthru
        _
    $region12: #{rsu5_forward.20} parent=5 // pred_fallthru
      _
    %p145 = scmp.lt.s32.totalorder %s10, 2
    // Predicated region
    $region17: #{rsu5_forward.20} parent=5 // pred_check
      %p146 = pneg %p145
    $region18: #{rsu5_forward.20} parent=5 // pred_check_branch
      %148 = sbr.rel (%p146) target = $region20
    $region19: #{rsu5_forward.20} parent=5 // pred_region
      // Predicated region
      $region21: #{rsu5_forward.20} parent=19 // pred_check
        %p149 = pneg %p44
      $region22: #{rsu5_forward.20} parent=19 // pred_check_branch
        %151 = sbr.rel (%p149) target = $region24
      $region23: #{rsu5_forward.20} parent=19 // pred_region
        %s152 = smul.u32 2, %s18
        %p153 = scmp.lt.s32.totalorder %s17, 1
        %s154 = scalar_select %p153, %s17, 1
        %p155 = scmp.lt.s32.totalorder %s152, 1
        %s156 = scalar_select %p155, %s152, 1
        %s157 = smul.addr %s154, 4
        %s158 = sadd.s32 %s156, %s157
        %s159 = smul.addr %s158, 4
        %s160 = scalar_lea.vmem %s0, %s159
        %s161 = smul.u32 2, %s18
      $region24: #{rsu5_forward.20} parent=19 // pred_fallthru
        _
    $region20: #{rsu5_forward.20} parent=5 // pred_fallthru
      _
    %p162 = scmp.le.s32.totalorder 1, %s10
    %p163 = scmp.lt.s32.totalorder %s10, 3
    %p164 = pnand %p162, %p163
    %p165 = pneg %p164
    // Predicated region
    $region25: #{rsu5_forward.20} parent=5 // pred_check
      _
    $region26: #{rsu5_forward.20} parent=5 // pred_check_branch
      %167 = sbr.rel (%p164) target = $region28
    $region27: #{rsu5_forward.20} parent=5 // pred_region
      %s168 = ssub.s32 %s10, 1
      %s169 = smul.u32 2, %s20
      %p170 = scmp.lt.s32.totalorder %s19, 1
      %s171 = scalar_select %p170, %s19, 1
      %p172 = scmp.lt.s32.totalorder %s169, 1
      %s173 = scalar_select %p172, %s169, 1
      %s174 = smul.addr %s171, 4
      %s175 = sadd.s32 %s173, %s174
      %s176 = smul.addr %s175, 4
      %s177 = scalar_lea.vmem %s0, %s176
      %p178 = pneg %p50
      %p179 = pneg %p47
      %p180 = pneg %p71
      %p181 = pneg %p68
      %p182 = pneg %p99
      %p183 = pneg %p96
      %s184 = smul.u32 2, %s20
      %p185 = scmp.lt.s32.totalorder %s19, 1
      %s186 = scalar_select %p185, %s19, 1
      %p187 = scmp.lt.s32.totalorder %s184, 1
      %s188 = scalar_select %p187, %s184, 1
      %s189 = smul.addr %s186, 4
      %s190 = sadd.s32 %s188, %s189
      %s191 = smul.addr %s190, 4
      %s192 = scalar_lea.vmem %s2, %s191
      %p193 = pneg %p127
      %p194 = pneg %p124
      %p195 = scmp.lt.s32.totalorder %s19, 1
      %s196 = scalar_select %p195, %s19, 1
      %p197 = scmp.lt.s32.totalorder %s20, 0
      %s198 = scalar_select %p197, %s20, 0
      %s199 = smul.addr %s198, 2
      %s200 = smul.addr %s196, 2
      %s201 = sadd.s32 %s199, %s200
      %s202 = smul.addr %s201, 8
      %s203 = scalar_lea.vmem %s3, %s202
      %s204 = smul.u32 2, %s20
      %p205 = scmp.lt.s32.totalorder %s19, 1
      %s206 = scalar_select %p205, %s19, 1
      %p207 = scmp.lt.s32.totalorder %s204, 1
      %s208 = scalar_select %p207, %s204, 1
      %s209 = smul.addr %s206, 4
      %s210 = sadd.s32 %s208, %s209
      %s211 = smul.addr %s210, 4
      %s212 = scalar_lea.vmem %s0, %s211
      %s213 = smul.u32 2, %s20
      %s214 = smul.u32 2, %s20
      %p215 = scmp.lt.s32.totalorder %s19, 1
      %s216 = scalar_select %p215, %s19, 1
      %p217 = scmp.lt.s32.totalorder %s214, 1
      %s218 = scalar_select %p217, %s214, 1
      %s219 = smul.addr %s216, 4
      %s220 = sadd.s32 %s218, %s219
      %s221 = smul.addr %s220, 4
      %s222 = scalar_lea.vmem %s2, %s221
      %s223 = smul.u32 2, %s20
      %p224 = scmp.lt.s32.totalorder %s19, 1
      %s225 = scalar_select %p224, %s19, 1
      %p226 = scmp.lt.s32.totalorder %s20, 0
      %s227 = scalar_select %p226, %s20, 0
      %s228 = smul.addr %s227, 2
      %s229 = smul.addr %s225, 2
      %s230 = sadd.s32 %s228, %s229
      %s231 = smul.addr %s230, 8
      %s232 = scalar_lea.vmem %s3, %s231
      %v234 = vld [vmem:[%s212] sm:$0xff]
      %v235 = vld [vmem:[%s212 + $0x8] sm:$0xff]
      %v238 = vunpack.c.l.b16 %v234
      %v239 = vunpack.c.h.b16 %v234
      %v240 = vunpack.c.l.b16 %v235
      %v241 = vunpack.c.h.b16 %v235
      %v242 = vpack.c.b16 %v240, %v238
      %v243 = vpack.c.b16 %v241, %v239
      %244 = vrot.lane.b32.xlu0 %v242, 16
      %v245 = vpop.permute.xlu0 %244
      %246 = vrot.lane.b32.xlu0 %v243, 16
      %v247 = vpop.permute.xlu0 %246
      %vm248 = vcmask 130048
      %v249 = vsel %vm248, %v245, %v247
      %vm251 = vcmask 130048
      %v254 = vsel %vm251, 0, %v245
      %256 = vrot.lane.b32.xlu0 %v242, 112
      %v257 = vpop.permute.xlu0 %256
      %258 = vrot.lane.b32.xlu0 %v243, 112
      %v259 = vpop.permute.xlu0 %258
      %vm260 = vcmask 916480
      %v261 = vsel %vm260, %v257, %v259
      %vm263 = vcmask 916480
      %v265 = vsel %vm263, %v259, 0
      %v269 = vld [vmem:[%s1] sm:$0xf]
      %v270 = vld [vmem:[%s1 + $0x4] sm:$0xf]
      %v273 = vunpack.c.l.b16 %v269
      %v274 = vunpack.c.l.b16 %v270
      %v275 = vpack.c.b16 %v274, %v273
      %vm276 = vcmask 392192
      %v278 = vsel %vm276, %v275, 0
      %280 = vmatprep.subr.bf16.mxu0 %v249
      %281 = vmatpush1.bf16.msra.mxu0 %v254
      %282 = vmatprep.subr.bf16.mxu0 %v243
      %283 = vmatpush1.bf16.msra.mxu0 %v242
      %284 = vmatprep.subr.bf16.mxu0 %v265
      %285 = vmatpush1.bf16.msra.mxu0 %v261
      %286 = vmatprep.subr.bf16.mxu0 0
      %287 = vmatpush1.bf16.msra.mxu0 0
      %288 = vmatprep.subr.bf16.mxu0 0
      %289 = vmatpush1.bf16.msra.mxu0 0
      %290 = vmatprep.subr.bf16.mxu0 0
      %291 = vmatpush1.bf16.msra.mxu0 0
      %292 = vmatprep.subr.bf16.mxu0 0
      %293 = vmatpush1.bf16.msra.mxu0 0
      %294 = vmatprep.subr.bf16.mxu0 0
      %295 = vmatpush1.bf16.msra.mxu0 0
      %296 = vmatprep.subr.bf16.mxu0 0
      %297 = vmatpush1.bf16.msra.mxu0 0
      %298 = vmatprep.subr.bf16.mxu0 0
      %299 = vmatpush1.bf16.msra.mxu0 0
      %300 = vmatprep.subr.bf16.mxu0 0
      %301 = vmatpush1.bf16.msra.mxu0 0
      %302 = vmatprep.subr.bf16.mxu0 0
      %303 = vmatpush1.bf16.msra.mxu0 0
      %304 = vmatprep.subr.bf16.mxu0 0
      %305 = vmatpush1.bf16.msra.mxu0 0
      %306 = vmatprep.subr.bf16.mxu0 0
      %307 = vmatpush1.bf16.msra.mxu0 0
      %308 = vmatprep.subr.bf16.mxu0 0
      %309 = vmatpush1.bf16.msra.mxu0 0
      %310 = vmatprep.subr.bf16.mxu0 0
      %311 = vmatpush1.bf16.msra.mxu0 0
      %312 = vmatprep.mubr.bf16.mxu0 0
      %313 = vmatmul.mubr.bf16.gmra.mrb[0].mxu0 %v278
      %v314 = vpop.f32.mrb[0].mxu0
      %v315 = vadd.f32 0.0, %v314
      %v316 = vpop.f32.mrb[0].mxu0
      %v317 = vadd.f32 0.0, %v316
      %v318 = vpop.f32.mrb[0].mxu0
      %v319 = vadd.f32 0.0, %v318
      %v320 = vpop.f32.mrb[0].mxu0
      %v321 = vadd.f32 0.0, %v320
      %322 = vdwg.mxu0
      %s323 = scalar_lea.vmem %s1, 8
      %v324 = vld [vmem:[%s323] sm:$0xf]
      %v325 = vld [vmem:[%s323 + $0x4] sm:$0xf]
      %s326 = scalar_lea.vmem %s1, 16
      %v327 = vld [vmem:[%s326] sm:$0xf]
      %v328 = vld [vmem:[%s326 + $0x4] sm:$0xf]
      %v331 = vunpack.c.l.b16 %v327
      %v332 = vunpack.c.l.b16 %v328
      %v333 = vpack.c.b16 %v332, %v331
      %v335 = vsel %vm276, %v333, 0
      %337 = vmatprep.subr.bf16.mxu0 %v249
      %338 = vmatpush1.bf16.msra.mxu0 %v254
      %339 = vmatprep.subr.bf16.mxu0 %v243
      %340 = vmatpush1.bf16.msra.mxu0 %v242
      %341 = vmatprep.subr.bf16.mxu0 %v265
      %342 = vmatpush1.bf16.msra.mxu0 %v261
      %343 = vmatprep.subr.bf16.mxu0 0
      %344 = vmatpush1.bf16.msra.mxu0 0
      %345 = vmatprep.subr.bf16.mxu0 0
      %346 = vmatpush1.bf16.msra.mxu0 0
      %347 = vmatprep.subr.bf16.mxu0 0
      %348 = vmatpush1.bf16.msra.mxu0 0
      %349 = vmatprep.subr.bf16.mxu0 0
      %350 = vmatpush1.bf16.msra.mxu0 0
      %351 = vmatprep.subr.bf16.mxu0 0
      %352 = vmatpush1.bf16.msra.mxu0 0
      %353 = vmatprep.subr.bf16.mxu0 0
      %354 = vmatpush1.bf16.msra.mxu0 0
      %355 = vmatprep.subr.bf16.mxu0 0
      %356 = vmatpush1.bf16.msra.mxu0 0
      %357 = vmatprep.subr.bf16.mxu0 0
      %358 = vmatpush1.bf16.msra.mxu0 0
      %359 = vmatprep.subr.bf16.mxu0 0
      %360 = vmatpush1.bf16.msra.mxu0 0
      %361 = vmatprep.subr.bf16.mxu0 0
      %362 = vmatpush1.bf16.msra.mxu0 0
      %363 = vmatprep.subr.bf16.mxu0 0
      %364 = vmatpush1.bf16.msra.mxu0 0
      %365 = vmatprep.subr.bf16.mxu0 0
      %366 = vmatpush1.bf16.msra.mxu0 0
      %367 = vmatprep.subr.bf16.mxu0 0
      %368 = vmatpush1.bf16.msra.mxu0 0
      %369 = vmatprep.mubr.bf16.mxu0 0
      %370 = vmatmul.mubr.bf16.gmra.mrb[0].mxu0 %v335
      %v371 = vpop.f32.mrb[0].mxu0
      %v372 = vadd.f32 0.0, %v371
      %v373 = vpop.f32.mrb[0].mxu0
      %v374 = vadd.f32 0.0, %v373
      %v375 = vpop.f32.mrb[0].mxu0
      %v376 = vadd.f32 0.0, %v375
      %v377 = vpop.f32.mrb[0].mxu0
      %v378 = vadd.f32 0.0, %v377
      %379 = vdwg.mxu0
      %v380 = vlaneseq
      %v381 = vand.u32 %v380, 127
      %v382 = vadd.s32 %v381, 128
      %vm383 = vcmp.lt.s32.totalorder %v381, 0
      %v384 = vsub.s32 0, %v381
      %v385 = vsel %vm383, %v384, %v381
      %v386 = vshrl.u32 %v385, 4
      %v387 = vand.u32 %v385, 15
      %v388 = vsub.s32 0, %v387
      %v389 = vsel %vm383, %v388, %v387
      %vm390 = vcmp.lt.s32.totalorder %v382, 0
      %v391 = vsub.s32 0, %v382
      %v392 = vsel %vm390, %v391, %v382
      %v393 = vshrl.u32 %v392, 4
      %v394 = vand.u32 %v392, 15
      %v395 = vsub.s32 0, %v394
      %v396 = vsel %vm390, %v395, %v394
      %vm397 = vcmp.ne.s32.totalorder %v389, 0
      %vm398 = vcmp.ne.s32.totalorder %v396, 0
      %vm399 = vcmp.lt.s32.totalorder %v389, 0
      %vm400 = vcmp.lt.s32.totalorder %v396, 0
      %vm401 = vmand %vm399, %vm397
      %vm402 = vmand %vm400, %vm398
      %v403 = vadd.s32 %v389, 16
      %v404 = vadd.s32 %v396, 16
      %v405 = vsel %vm401, %v403, %v389
      %v406 = vsel %vm402, %v404, %v396
      %411 = vrot.lane.b32.xlu0 %v315, 1
      %v412 = vpop.permute.xlu0 %411
      %413 = vrot.lane.b32.xlu0 %v317, 1
      %v414 = vpop.permute.xlu0 %413
      %415 = vrot.lane.b32.xlu0 %v319, 1
      %v416 = vpop.permute.xlu0 %415
      %417 = vrot.lane.b32.xlu0 %v321, 1
      %v418 = vpop.permute.xlu0 %417
      %vm419 = vcmask 7168
      %v420 = vsel %vm419, %v412, %v414
      %v421 = vsel %vm419, %v416, %v418
      %v426 = vsel %vm419, 0.0, %v412
      %v427 = vsel %vm419, 0.0, %v416
      %432 = vrot.lane.b32.xlu0 %v372, 127
      %v433 = vpop.permute.xlu0 %432
      %434 = vrot.lane.b32.xlu0 %v374, 127
      %v435 = vpop.permute.xlu0 %434
      %436 = vrot.lane.b32.xlu0 %v376, 127
      %v437 = vpop.permute.xlu0 %436
      %438 = vrot.lane.b32.xlu0 %v378, 127
      %v439 = vpop.permute.xlu0 %438
      %vm440 = vcmask 1039360
      %v441 = vsel %vm440, %v433, %v435
      %v442 = vsel %vm440, %v437, %v439
      %v447 = vsel %vm440, %v435, 0.0
      %v448 = vsel %vm440, %v439, 0.0
      %vm449 = vcmp.ge.s32.totalorder %v405, 1
      %vm450 = vcmp.ge.s32.totalorder %v406, 1
      %v451 = vsel %vm449, 1, 0
      %v452 = vsel %vm450, 1, 0
      %vm453 = vcmp.eq.s32.totalorder %v451, 1
      %vm454 = vcmp.eq.s32.totalorder %v452, 1
      %v455 = vsel %vm453, %v426, 0.0
      %v456 = vsel %vm454, %v420, 0.0
      %v457 = vsel %vm453, %v427, 0.0
      %v458 = vsel %vm454, %v421, 0.0
      %v461 = vunpack.c.l.b16 %v324
      %v462 = vunpack.c.l.b16 %v325
      %v463 = vpack.c.b16 %v462, %v461
      %v465 = vsel %vm276, %v463, 0
      %467 = vmatprep.subr.bf16.mxu0 %v249
      %468 = vmatpush1.bf16.msra.mxu0 %v254
      %469 = vmatprep.subr.bf16.mxu0 %v243
      %470 = vmatpush1.bf16.msra.mxu0 %v242
      %471 = vmatprep.subr.bf16.mxu0 %v265
      %472 = vmatpush1.bf16.msra.mxu0 %v261
      %473 = vmatprep.subr.bf16.mxu0 0
      %474 = vmatpush1.bf16.msra.mxu0 0
      %475 = vmatprep.subr.bf16.mxu0 0
      %476 = vmatpush1.bf16.msra.mxu0 0
      %477 = vmatprep.subr.bf16.mxu0 0
      %478 = vmatpush1.bf16.msra.mxu0 0
      %479 = vmatprep.subr.bf16.mxu0 0
      %480 = vmatpush1.bf16.msra.mxu0 0
      %481 = vmatprep.subr.bf16.mxu0 0
      %482 = vmatpush1.bf16.msra.mxu0 0
      %483 = vmatprep.subr.bf16.mxu0 0
      %484 = vmatpush1.bf16.msra.mxu0 0
      %485 = vmatprep.subr.bf16.mxu0 0
      %486 = vmatpush1.bf16.msra.mxu0 0
      %487 = vmatprep.subr.bf16.mxu0 0
      %488 = vmatpush1.bf16.msra.mxu0 0
      %489 = vmatprep.subr.bf16.mxu0 0
      %490 = vmatpush1.bf16.msra.mxu0 0
      %491 = vmatprep.subr.bf16.mxu0 0
      %492 = vmatpush1.bf16.msra.mxu0 0
      %493 = vmatprep.subr.bf16.mxu0 0
      %494 = vmatpush1.bf16.msra.mxu0 0
      %495 = vmatprep.subr.bf16.mxu0 0
      %496 = vmatpush1.bf16.msra.mxu0 0
      %497 = vmatprep.subr.bf16.mxu0 0
      %498 = vmatpush1.bf16.msra.mxu0 0
      %499 = vmatprep.mubr.bf16.mxu0 0
      %500 = vmatmul.mubr.bf16.gmra.mrb[0].mxu0 %v465
      %v501 = vpop.f32.mrb[0].mxu0
      %v502 = vadd.f32 %v455, %v501
      %v503 = vpop.f32.mrb[0].mxu0
      %v504 = vadd.f32 %v456, %v503
      %v505 = vpop.f32.mrb[0].mxu0
      %v506 = vadd.f32 %v457, %v505
      %v507 = vpop.f32.mrb[0].mxu0
      %v508 = vadd.f32 %v458, %v507
      %509 = vdwg.mxu0
      %vm510 = vcmp.lt.s32.totalorder %v405, 15
      %vm511 = vcmp.lt.s32.totalorder %v406, 15
      %v512 = vsel %vm510, 1, 0
      %v513 = vsel %vm511, 1, 0
      %vm514 = vcmp.eq.s32.totalorder %v512, 1
      %vm515 = vcmp.eq.s32.totalorder %v513, 1
      %v516 = vsel %vm514, %v441, 0.0
      %v517 = vsel %vm515, %v447, 0.0
      %v518 = vsel %vm514, %v442, 0.0
      %v519 = vsel %vm515, %v448, 0.0
      %v520 = vadd.f32 %v502, %v516
      %v521 = vadd.f32 %v504, %v517
      %v522 = vadd.f32 %v506, %v518
      %v523 = vadd.f32 %v508, %v519
      %v524 = vpack.c.bf16 %v522, %v520
      %v525 = vpack.c.bf16 %v523, %v521
      %v528 = vunpack.c.l.b16 %v524
      %v529 = vunpack.c.l.b16 %v525
      %v530 = vunpack.c.h.b16 %v524
      %v531 = vunpack.c.h.b16 %v525
      %v532 = vpack.c.b16 %v529, %v528
      %v533 = vpack.c.b16 %v531, %v530
      %536 = vst [vmem:[%s222] sm:$0xff] %v532
      %537 = vst [vmem:[%s222 + $0x8] sm:$0xff] %v533
      %v538 = vadd.f32 %v520, %v521
      %539 = vadd.xlane.f32.xlu0 %v538
      %v540 = vpop.xlane.xlu0 %539
      %v541 = vadd.f32 %v522, %v523
      %542 = vadd.xlane.f32.xlu0 %v541
      %v543 = vpop.xlane.xlu0 %542
      %v544 = vmul.f32 %v520, %v520
      %v545 = vmul.f32 %v521, %v521
      %v546 = vmul.f32 %v522, %v522
      %v547 = vmul.f32 %v523, %v523
      %v548 = vadd.f32 %v544, %v545
      %549 = vadd.xlane.f32.xlu0 %v548
      %v550 = vpop.xlane.xlu0 %549
      %v551 = vadd.f32 %v546, %v547
      %552 = vadd.xlane.f32.xlu0 %v551
      %v553 = vpop.xlane.xlu0 %552
      %v554 = vsel %vm419, %v540, %v550
      %v555 = vsel %vm419, %v543, %v553
      %vm556 = vcmask 15360
      %557 = vst.msk [vmem:[%s232] sm:$0xff] %vm556, %v554
      %558 = vst.msk [vmem:[%s232 + $0x8] sm:$0xff] %vm556, %v555
      %s559 = smul.u32 2, %s20
      %p560 = scmp.lt.s32.totalorder %s19, 1
      %s561 = scalar_select %p560, %s19, 1
      %p562 = scmp.lt.s32.totalorder %s559, 1
      %s563 = scalar_select %p562, %s559, 1
      %s564 = smul.addr %s561, 4
      %s565 = sadd.s32 %s563, %s564
      %s566 = smul.addr %s565, 4
      %s567 = scalar_lea.vmem %s2, %s566
      %p568 = scmp.lt.s32.totalorder %s19, 1
      %s569 = scalar_select %p568, %s19, 1
      %p570 = scmp.lt.s32.totalorder %s20, 0
      %s571 = scalar_select %p570, %s20, 0
      %s572 = smul.addr %s571, 2
      %s573 = smul.addr %s569, 2
      %s574 = sadd.s32 %s572, %s573
      %s575 = smul.addr %s574, 8
      %s576 = scalar_lea.vmem %s3, %s575
      // Predicated region
      $region29: #{rsu5_forward.20} parent=27 // pred_check
        %p577 = pneg %p96
      $region30: #{rsu5_forward.20} parent=27 // pred_check_branch
        %579 = sbr.rel (%p577) target = $region32
      $region31: #{rsu5_forward.20} parent=27 // pred_region
        %s580 = smul.u32 2, %s20
      $region32: #{rsu5_forward.20} parent=27 // pred_fallthru
        _
      // Predicated region
      $region33: #{rsu5_forward.20} parent=27 // pred_check
        %p581 = pneg %p124
      $region34: #{rsu5_forward.20} parent=27 // pred_check_branch
        %583 = sbr.rel (%p581) target = $region36
      $region35: #{rsu5_forward.20} parent=27 // pred_region
        _
      $region36: #{rsu5_forward.20} parent=27 // pred_fallthru
        _
    $region28: #{rsu5_forward.20} parent=5 // pred_fallthru
      _
    %p584 = scmp.le.s32.totalorder 2, %s10
    // Predicated region
    $region37: #{rsu5_forward.20} parent=5 // pred_check
      %p585 = pneg %p584
    $region38: #{rsu5_forward.20} parent=5 // pred_check_branch
      %587 = sbr.rel (%p585) target = $region40
    $region39: #{rsu5_forward.20} parent=5 // pred_region
      %s588 = ssub.s32 %s10, 2
      // Predicated region
      $region41: #{rsu5_forward.20} parent=39 // pred_check
        %p589 = pneg %p102
      $region42: #{rsu5_forward.20} parent=39 // pred_check_branch
        %591 = sbr.rel (%p589) target = $region44
      $region43: #{rsu5_forward.20} parent=39 // pred_region
        %s592 = smul.u32 2, %s22
        %p593 = scmp.lt.s32.totalorder %s21, 1
        %s594 = scalar_select %p593, %s21, 1
        %p595 = scmp.lt.s32.totalorder %s592, 1
        %s596 = scalar_select %p595, %s592, 1
        %s597 = smul.addr %s594, 4
        %s598 = sadd.s32 %s596, %s597
        %s599 = smul.addr %s598, 4
        %s600 = scalar_lea.vmem %s2, %s599
      $region44: #{rsu5_forward.20} parent=39 // pred_fallthru
        _
      // Predicated region
      $region45: #{rsu5_forward.20} parent=39 // pred_check
        %p601 = pneg %p130
      $region46: #{rsu5_forward.20} parent=39 // pred_check_branch
        %603 = sbr.rel (%p601) target = $region48
      $region47: #{rsu5_forward.20} parent=39 // pred_region
        %p604 = scmp.lt.s32.totalorder %s21, 1
        %s605 = scalar_select %p604, %s21, 1
        %p606 = scmp.lt.s32.totalorder %s22, 0
        %s607 = scalar_select %p606, %s22, 0
        %s608 = smul.addr %s607, 2
        %s609 = smul.addr %s605, 2
        %s610 = sadd.s32 %s608, %s609
        %s611 = smul.addr %s610, 8
        %s612 = scalar_lea.vmem %s3, %s611
      $region48: #{rsu5_forward.20} parent=39 // pred_fallthru
        _
    $region40: #{rsu5_forward.20} parent=5 // pred_fallthru
      _
  $region6: #{rsu5_forward.20} parent=0 // loop_footer
    %s14 = sadd.s32 1, %s10
  $region7: #{rsu5_forward.20} parent=0 // loop_footer_branch
    %9 = sbr.rel target = $region3
  $region8: #{rsu5_forward.20} parent=0 // loop_exit
    _

// kernel: rsu5_forward.25
$region0: #{rsu5_forward.25}
  #allocation0 [shape = 'u32[]', space=smem, size = 0x4, offset = 0x4, fixed_abs, tag = 'smem constant byte address 0x4 - core index']
  #allocation1 [shape = 'u32[144,128]{1,0:T(1,128)}', space=vmem, size = 0x12000, scoped, tag = 'internal scratch']
  %s0 = inlined_call_operand.vmem [shape: bf16[2,16,64], index: 0, kind: input, shape index: {}]
  %s1 = inlined_call_operand.vmem [shape: f32[16,2], index: 1, kind: input, shape index: {}]
  %s2 = inlined_call_operand.vmem [shape: bf16[2,16,64], index: 2, kind: output, shape index: {}]
  %s3 = sld [smem:[#allocation0]]
  $region41: #{rsu5_forward.25} parent=0
    _
  %s5 = ssub.s32 1, %s3
  %s6 = scalar_select 0, %s5, %s3
  loop: start=0, step=1, limit=4
  $region2: #{rsu5_forward.25} parent=0 // loop_pre_header
    _
  $region3: #{rsu5_forward.25} parent=0 // loop_header
    %s8 = sphi 0, %s12
    %p9 = scmp.ge.s32.totalorder %s8, 4
    %s15 = sphi 0, %s27
    %s16 = sphi 0, %s23
    %s17 = sphi 0, %s15
    %s18 = sphi 0, %s16
    %s19 = sphi 0, %s17
    %s20 = sphi 0, %s18
    %s32 = sphi 0, %s34
    %s35 = sphi 0, %s32
    %s36 = sphi 0, %s35
    %s52 = sphi 0, %s36
    %s56 = sphi 0, %s56
    %s58 = sphi 0, %s56
    %s59 = sphi 0, %s58
    %s73 = sphi 0, %s59
    %s81 = sphi 0, %s83
    %s84 = sphi 0, %s81
    %s85 = sphi 0, %s84
    %s101 = sphi 0, %s85
  $region4: #{rsu5_forward.25} parent=0 // loop_header_branch
    %11 = sbr.rel (%p9) target = $region8
  $region5: #{rsu5_forward.25} parent=0 // loop_body
    %s13 = ssub.s32 %s8, 1
    %s14 = ssub.s32 %s8, 2
    %s21 = sadd.s32 1, %s16
    %p22 = scmp.ge.s32.totalorder %s21, 1
    %s23 = scalar_select %p22, 0, %s21
    %s24 = sadd.s32 1, %s15
    %s25 = scalar_select %p22, %s24, %s15
    %p26 = scmp.ge.s32.totalorder %s25, 2
    %s27 = scalar_select %p26, 0, %s25
    %s28 = ssub.s32 %s15, %s27
    %s29 = ssub.s32 %s16, %s23
    %s30 = sor.u32 %s28, %s29
    %p31 = scmp.eq.s32.totalorder %s30, 0
    %s33 = sadd.s32 %s32, 1
    %s34 = scalar_select %p31, %s32, %s33
    %p37 = pneg %p31
    %p38 = scmp.eq.s32.totalorder %s8, 1
    %p39 = por %p37, %p38
    %p40 = scmp.ne.s32.totalorder %s32, %s35
    %p41 = scmp.eq.s32.totalorder %s8, 0
    %p42 = por %p40, %p41
    %p43 = scmp.ne.s32.totalorder %s32, %s35
    %p44 = scmp.eq.s32.totalorder %s13, 1
    %p45 = por %p43, %p44
    %p46 = scmp.ne.s32.totalorder %s35, %s36
    %p47 = scmp.eq.s32.totalorder %s13, 0
    %p48 = por %p46, %p47
    %p49 = scmp.ne.s32.totalorder %s35, %s36
    %p50 = scmp.eq.s32.totalorder %s14, 1
    %p51 = por %p49, %p50
    %p53 = scmp.ne.s32.totalorder %s36, %s52
    %p54 = scmp.eq.s32.totalorder %s14, 0
    %p55 = por %p53, %p54
    %s57 = sadd.s32 %s56, 1
    %p60 = scmp.eq.s32.totalorder %s8, 1
    %p61 = scmp.ne.s32.totalorder %s56, %s58
    %p62 = scmp.eq.s32.totalorder %s8, 0
    %p63 = por %p61, %p62
    %p64 = scmp.ne.s32.totalorder %s56, %s58
    %p65 = scmp.eq.s32.totalorder %s13, 1
    %p66 = por %p64, %p65
    %p67 = scmp.ne.s32.totalorder %s58, %s59
    %p68 = scmp.eq.s32.totalorder %s13, 0
    %p69 = por %p67, %p68
    %p70 = scmp.ne.s32.totalorder %s58, %s59
    %p71 = scmp.eq.s32.totalorder %s14, 1
    %p72 = por %p70, %p71
    %p74 = scmp.ne.s32.totalorder %s59, %s73
    %p75 = scmp.eq.s32.totalorder %s14, 0
    %p76 = por %p74, %p75
    %s77 = ssub.s32 %s15, %s27
    %s78 = ssub.s32 %s16, %s23
    %s79 = sor.u32 %s77, %s78
    %p80 = scmp.eq.s32.totalorder %s79, 0
    %s82 = sadd.s32 %s81, 1
    %s83 = scalar_select %p80, %s81, %s82
    %p86 = pneg %p80
    %p87 = scmp.eq.s32.totalorder %s8, 1
    %p88 = por %p86, %p87
    %p89 = scmp.ne.s32.totalorder %s81, %s84
    %p90 = scmp.eq.s32.totalorder %s8, 0
    %p91 = por %p89, %p90
    %p92 = scmp.ne.s32.totalorder %s81, %s84
    %p93 = scmp.eq.s32.totalorder %s13, 1
    %p94 = por %p92, %p93
    %p95 = scmp.ne.s32.totalorder %s84, %s85
    %p96 = scmp.eq.s32.totalorder %s13, 0
    %p97 = por %p95, %p96
    %p98 = scmp.ne.s32.totalorder %s84, %s85
    %p99 = scmp.eq.s32.totalorder %s14, 1
    %p100 = por %p98, %p99
    %p102 = scmp.ne.s32.totalorder %s85, %s101
    %p103 = scmp.eq.s32.totalorder %s14, 0
    %p104 = por %p102, %p103
    %p105 = scmp.le.s32.totalorder 1, %s8
    %p106 = scmp.lt.s32.totalorder %s8, 3
    %p107 = pnand %p105, %p106
    %p108 = pneg %p107
    // Predicated region
    $region9: #{rsu5_forward.25} parent=5 // pred_check
      _
    $region10: #{rsu5_forward.25} parent=5 // pred_check_branch
      %110 = sbr.rel (%p107) target = $region12
    $region11: #{rsu5_forward.25} parent=5 // pred_region
      %s111 = ssub.s32 %s8, 1
      // Predicated region
      $region13: #{rsu5_forward.25} parent=11 // pred_check
        %p112 = pneg %p69
      $region14: #{rsu5_forward.25} parent=11 // pred_check_branch
        %114 = sbr.rel (%p112) target = $region16
      $region15: #{rsu5_forward.25} parent=11 // pred_region
        _
      $region16: #{rsu5_forward.25} parent=11 // pred_fallthru
        _
    $region12: #{rsu5_forward.25} parent=5 // pred_fallthru
      _
    %p115 = scmp.lt.s32.totalorder %s8, 2
    // Predicated region
    $region17: #{rsu5_forward.25} parent=5 // pred_check
      %p116 = pneg %p115
    $region18: #{rsu5_forward.25} parent=5 // pred_check_branch
      %118 = sbr.rel (%p116) target = $region20
    $region19: #{rsu5_forward.25} parent=5 // pred_region
      // Predicated region
      $region21: #{rsu5_forward.25} parent=19 // pred_check
        %p119 = pneg %p42
      $region22: #{rsu5_forward.25} parent=19 // pred_check_branch
        %121 = sbr.rel (%p119) target = $region24
      $region23: #{rsu5_forward.25} parent=19 // pred_region
        %p122 = scmp.lt.s32.totalorder %s15, 1
        %s123 = scalar_select %p122, %s15, 1
        %p124 = scmp.lt.s32.totalorder %s16, 0
        %s125 = scalar_select %p124, %s16, 0
        %s126 = smul.addr %s123, 2
        %s127 = sadd.s32 %s125, %s126
        %s128 = smul.addr %s127, 4
        %s129 = scalar_lea.vmem %s0, %s128
      $region24: #{rsu5_forward.25} parent=19 // pred_fallthru
        _
    $region20: #{rsu5_forward.25} parent=5 // pred_fallthru
      _
    %p130 = scmp.le.s32.totalorder 1, %s8
    %p131 = scmp.lt.s32.totalorder %s8, 3
    %p132 = pnand %p130, %p131
    %p133 = pneg %p132
    // Predicated region
    $region25: #{rsu5_forward.25} parent=5 // pred_check
      _
    $region26: #{rsu5_forward.25} parent=5 // pred_check_branch
      %135 = sbr.rel (%p132) target = $region28
    $region27: #{rsu5_forward.25} parent=5 // pred_region
      %s136 = ssub.s32 %s8, 1
      %p137 = scmp.lt.s32.totalorder %s17, 1
      %s138 = scalar_select %p137, %s17, 1
      %p139 = scmp.lt.s32.totalorder %s18, 0
      %s140 = scalar_select %p139, %s18, 0
      %s141 = smul.addr %s138, 2
      %s142 = sadd.s32 %s140, %s141
      %s143 = smul.addr %s142, 4
      %s144 = scalar_lea.vmem %s0, %s143
      %p145 = pneg %p48
      %p146 = pneg %p45
      %p147 = pneg %p69
      %p148 = pneg %p66
      %p149 = pneg %p97
      %p150 = pneg %p94
      %p151 = scmp.lt.s32.totalorder %s17, 1
      %s152 = scalar_select %p151, %s17, 1
      %p153 = scmp.lt.s32.totalorder %s18, 0
      %s154 = scalar_select %p153, %s18, 0
      %s155 = smul.addr %s152, 2
      %s156 = sadd.s32 %s154, %s155
      %s157 = smul.addr %s156, 4
      %s158 = scalar_lea.vmem %s2, %s157
      %p159 = scmp.lt.s32.totalorder %s17, 1
      %s160 = scalar_select %p159, %s17, 1
      %p161 = scmp.lt.s32.totalorder %s18, 0
      %s162 = scalar_select %p161, %s18, 0
      %s163 = smul.addr %s160, 2
      %s164 = sadd.s32 %s162, %s163
      %s165 = smul.addr %s164, 4
      %s166 = scalar_lea.vmem %s0, %s165
      %p167 = scmp.lt.s32.totalorder %s17, 1
      %s168 = scalar_select %p167, %s17, 1
      %p169 = scmp.lt.s32.totalorder %s18, 0
      %s170 = scalar_select %p169, %s18, 0
      %s171 = smul.addr %s168, 2
      %s172 = sadd.s32 %s170, %s171
      %s173 = smul.addr %s172, 4
      %s174 = scalar_lea.vmem %s2, %s173
      %v175 = vld [vmem:[%s1] sm:$0xff]
      %v176 = vld [vmem:[%s1 + $0x8] sm:$0xff]
      %v177 = vld [vmem:[%s166] sm:$0xf]
      %v178 = vld [vmem:[%s166 + $0x4] sm:$0xf]
      %v179 = vunpack.c.l.bf16 %v177
      %v180 = vunpack.c.l.bf16 %v178
      %182 = vset.pattern.permute.xlu0 0
      %183 = vperm.xlu0 %182, %v175
      %v184 = vpop.permute.xlu0 %183
      %187 = vset.pattern.permute.xlu0 0
      %188 = vperm.xlu0 %187, %v176
      %v189 = vpop.permute.xlu0 %188
      %v191 = vmul.f32 %v179, %v184
      %v192 = vmul.f32 %v180, %v189
      %193 = vset.pattern.permute.xlu0 1
      %194 = vperm.xlu0 %193, %v175
      %v195 = vpop.permute.xlu0 %194
      %197 = vset.pattern.permute.xlu0 1
      %198 = vperm.xlu0 %197, %v176
      %v199 = vpop.permute.xlu0 %198
      %v201 = vadd.f32 %v191, %v195
      %v202 = vadd.f32 %v192, %v199
      %v203 = vmax.f32 %v201, 0.0
      %v204 = vmax.f32 %v202, 0.0
      %v205 = vpack.c.bf16 %v204, %v203
      %v207 = vunpack.c.l.b16 %v205
      %v208 = vunpack.c.h.b16 %v205
      %v209 = vpack.c.b16 %v207, %v207
      %v210 = vpack.c.b16 %v208, %v208
      %vm213 = vcmask 519168
      %214 = vst.msk [vmem:[%s174] sm:$0xf] %vm213, %v209
      %215 = vst.msk [vmem:[%s174 + $0x4] sm:$0xf] %vm213, %v210
      %p216 = scmp.lt.s32.totalorder %s17, 1
      %s217 = scalar_select %p216, %s17, 1
      %p218 = scmp.lt.s32.totalorder %s18, 0
      %s219 = scalar_select %p218, %s18, 0
      %s220 = smul.addr %s217, 2
      %s221 = sadd.s32 %s219, %s220
      %s222 = smul.addr %s221, 4
      %s223 = scalar_lea.vmem %s2, %s222
      // Predicated region
      $region29: #{rsu5_forward.25} parent=27 // pred_check
        %p224 = pneg %p94
      $region30: #{rsu5_forward.25} parent=27 // pred_check_branch
        %226 = sbr.rel (%p224) target = $region32
      $region31: #{rsu5_forward.25} parent=27 // pred_region
        _
      $region32: #{rsu5_forward.25} parent=27 // pred_fallthru
        _
    $region28: #{rsu5_forward.25} parent=5 // pred_fallthru
      _
    %p227 = scmp.le.s32.totalorder 2, %s8
    // Predicated region
    $region33: #{rsu5_forward.25} parent=5 // pred_check
      %p228 = pneg %p227
    $region34: #{rsu5_forward.25} parent=5 // pred_check_branch
      %230 = sbr.rel (%p228) target = $region36
    $region35: #{rsu5_forward.25} parent=5 // pred_region
      %s231 = ssub.s32 %s8, 2
      // Predicated region
      $region37: #{rsu5_forward.25} parent=35 // pred_check
        %p232 = pneg %p100
      $region38: #{rsu5_forward.25} parent=35 // pred_check_branch
        %234 = sbr.rel (%p232) target = $region40
      $region39: #{rsu5_forward.25} parent=35 // pred_region
        %p235 = scmp.lt.s32.totalorder %s19, 1
        %s236 = scalar_select %p235, %s19, 1
        %p237 = scmp.lt.s32.totalorder %s20, 0
        %s238 = scalar_select %p237, %s20, 0
        %s239 = smul.addr %s236, 2
        %s240 = sadd.s32 %s238, %s239
        %s241 = smul.addr %s240, 4
        %s242 = scalar_lea.vmem %s2, %s241
      $region40: #{rsu5_forward.25} parent=35 // pred_fallthru
        _
    $region36: #{rsu5_forward.25} parent=5 // pred_fallthru
      _
  $region6: #{rsu5_forward.25} parent=0 // loop_footer
    %s12 = sadd.s32 1, %s8
  $region7: #{rsu5_forward.25} parent=0 // loop_footer_branch
    %7 = sbr.rel target = $region3
  $region8: #{rsu5_forward.25} parent=0 // loop_exit
    _

// kernel: rsu5_forward.24
$region0: #{rsu5_forward.24}
  #allocation0 [shape = 'u32[]', space=smem, size = 0x4, offset = 0x4, fixed_abs, tag = 'smem constant byte address 0x4 - core index']
  #allocation1 [shape = 'u32[144,128]{1,0:T(1,128)}', space=vmem, size = 0x12000, scoped, tag = 'internal scratch']
  %s0 = inlined_call_operand.vmem [shape: bf16[2,16,64], index: 0, kind: input, shape index: {}]
  %s1 = inlined_call_operand.vmem [shape: bf16[3,16,48], index: 1, kind: input, shape index: {}]
  %s2 = inlined_call_operand.vmem [shape: bf16[2,16,64], index: 2, kind: output, shape index: {0}]
  %s3 = inlined_call_operand.vmem [shape: f32[2,1,16,2], index: 3, kind: output, shape index: {1}]
  %4 = xla_tuple %s2, %s3
  %s5 = sld [smem:[#allocation0]]
  $region49: #{rsu5_forward.24} parent=0
    _
  %s7 = ssub.s32 1, %s5
  %s8 = scalar_select 0, %s7, %s5
  loop: start=0, step=1, limit=4
  $region2: #{rsu5_forward.24} parent=0 // loop_pre_header
    _
  $region3: #{rsu5_forward.24} parent=0 // loop_header
    %s10 = sphi 0, %s14
    %p11 = scmp.ge.s32.totalorder %s10, 4
    %s17 = sphi 0, %s29
    %s18 = sphi 0, %s25
    %s19 = sphi 0, %s17
    %s20 = sphi 0, %s18
    %s21 = sphi 0, %s19
    %s22 = sphi 0, %s20
    %s34 = sphi 0, %s36
    %s37 = sphi 0, %s34
    %s38 = sphi 0, %s37
    %s54 = sphi 0, %s38
    %s58 = sphi 0, %s58
    %s60 = sphi 0, %s58
    %s61 = sphi 0, %s60
    %s75 = sphi 0, %s61
    %s83 = sphi 0, %s85
    %s86 = sphi 0, %s83
    %s87 = sphi 0, %s86
    %s103 = sphi 0, %s87
    %s111 = sphi 0, %s113
    %s114 = sphi 0, %s111
    %s115 = sphi 0, %s114
    %s131 = sphi 0, %s115
  $region4: #{rsu5_forward.24} parent=0 // loop_header_branch
    %13 = sbr.rel (%p11) target = $region8
  $region5: #{rsu5_forward.24} parent=0 // loop_body
    %s15 = ssub.s32 %s10, 1
    %s16 = ssub.s32 %s10, 2
    %s23 = sadd.s32 1, %s18
    %p24 = scmp.ge.s32.totalorder %s23, 1
    %s25 = scalar_select %p24, 0, %s23
    %s26 = sadd.s32 1, %s17
    %s27 = scalar_select %p24, %s26, %s17
    %p28 = scmp.ge.s32.totalorder %s27, 2
    %s29 = scalar_select %p28, 0, %s27
    %s30 = ssub.s32 %s17, %s29
    %s31 = ssub.s32 %s18, %s25
    %s32 = sor.u32 %s30, %s31
    %p33 = scmp.eq.s32.totalorder %s32, 0
    %s35 = sadd.s32 %s34, 1
    %s36 = scalar_select %p33, %s34, %s35
    %p39 = pneg %p33
    %p40 = scmp.eq.s32.totalorder %s10, 1
    %p41 = por %p39, %p40
    %p42 = scmp.ne.s32.totalorder %s34, %s37
    %p43 = scmp.eq.s32.totalorder %s10, 0
    %p44 = por %p42, %p43
    %p45 = scmp.ne.s32.totalorder %s34, %s37
    %p46 = scmp.eq.s32.totalorder %s15, 1
    %p47 = por %p45, %p46
    %p48 = scmp.ne.s32.totalorder %s37, %s38
    %p49 = scmp.eq.s32.totalorder %s15, 0
    %p50 = por %p48, %p49
    %p51 = scmp.ne.s32.totalorder %s37, %s38
    %p52 = scmp.eq.s32.totalorder %s16, 1
    %p53 = por %p51, %p52
    %p55 = scmp.ne.s32.totalorder %s38, %s54
    %p56 = scmp.eq.s32.totalorder %s16, 0
    %p57 = por %p55, %p56
    %s59 = sadd.s32 %s58, 1
    %p62 = scmp.eq.s32.totalorder %s10, 1
    %p63 = scmp.ne.s32.totalorder %s58, %s60
    %p64 = scmp.eq.s32.totalorder %s10, 0
    %p65 = por %p63, %p64
    %p66 = scmp.ne.s32.totalorder %s58, %s60
    %p67 = scmp.eq.s32.totalorder %s15, 1
    %p68 = por %p66, %p67
    %p69 = scmp.ne.s32.totalorder %s60, %s61
    %p70 = scmp.eq.s32.totalorder %s15, 0
    %p71 = por %p69, %p70
    %p72 = scmp.ne.s32.totalorder %s60, %s61
    %p73 = scmp.eq.s32.totalorder %s16, 1
    %p74 = por %p72, %p73
    %p76 = scmp.ne.s32.totalorder %s61, %s75
    %p77 = scmp.eq.s32.totalorder %s16, 0
    %p78 = por %p76, %p77
    %s79 = ssub.s32 %s17, %s29
    %s80 = ssub.s32 %s18, %s25
    %s81 = sor.u32 %s79, %s80
    %p82 = scmp.eq.s32.totalorder %s81, 0
    %s84 = sadd.s32 %s83, 1
    %s85 = scalar_select %p82, %s83, %s84
    %p88 = pneg %p82
    %p89 = scmp.eq.s32.totalorder %s10, 1
    %p90 = por %p88, %p89
    %p91 = scmp.ne.s32.totalorder %s83, %s86
    %p92 = scmp.eq.s32.totalorder %s10, 0
    %p93 = por %p91, %p92
    %p94 = scmp.ne.s32.totalorder %s83, %s86
    %p95 = scmp.eq.s32.totalorder %s15, 1
    %p96 = por %p94, %p95
    %p97 = scmp.ne.s32.totalorder %s86, %s87
    %p98 = scmp.eq.s32.totalorder %s15, 0
    %p99 = por %p97, %p98
    %p100 = scmp.ne.s32.totalorder %s86, %s87
    %p101 = scmp.eq.s32.totalorder %s16, 1
    %p102 = por %p100, %p101
    %p104 = scmp.ne.s32.totalorder %s87, %s103
    %p105 = scmp.eq.s32.totalorder %s16, 0
    %p106 = por %p104, %p105
    %s107 = ssub.s32 %s17, %s29
    %s108 = ssub.s32 %s18, %s25
    %s109 = sor.u32 %s107, %s108
    %p110 = scmp.eq.s32.totalorder %s109, 0
    %s112 = sadd.s32 %s111, 1
    %s113 = scalar_select %p110, %s111, %s112
    %p116 = pneg %p110
    %p117 = scmp.eq.s32.totalorder %s10, 1
    %p118 = por %p116, %p117
    %p119 = scmp.ne.s32.totalorder %s111, %s114
    %p120 = scmp.eq.s32.totalorder %s10, 0
    %p121 = por %p119, %p120
    %p122 = scmp.ne.s32.totalorder %s111, %s114
    %p123 = scmp.eq.s32.totalorder %s15, 1
    %p124 = por %p122, %p123
    %p125 = scmp.ne.s32.totalorder %s114, %s115
    %p126 = scmp.eq.s32.totalorder %s15, 0
    %p127 = por %p125, %p126
    %p128 = scmp.ne.s32.totalorder %s114, %s115
    %p129 = scmp.eq.s32.totalorder %s16, 1
    %p130 = por %p128, %p129
    %p132 = scmp.ne.s32.totalorder %s115, %s131
    %p133 = scmp.eq.s32.totalorder %s16, 0
    %p134 = por %p132, %p133
    %p135 = scmp.le.s32.totalorder 1, %s10
    %p136 = scmp.lt.s32.totalorder %s10, 3
    %p137 = pnand %p135, %p136
    %p138 = pneg %p137
    // Predicated region
    $region9: #{rsu5_forward.24} parent=5 // pred_check
      _
    $region10: #{rsu5_forward.24} parent=5 // pred_check_branch
      %140 = sbr.rel (%p137) target = $region12
    $region11: #{rsu5_forward.24} parent=5 // pred_region
      %s141 = ssub.s32 %s10, 1
      // Predicated region
      $region13: #{rsu5_forward.24} parent=11 // pred_check
        %p142 = pneg %p71
      $region14: #{rsu5_forward.24} parent=11 // pred_check_branch
        %144 = sbr.rel (%p142) target = $region16
      $region15: #{rsu5_forward.24} parent=11 // pred_region
        _
      $region16: #{rsu5_forward.24} parent=11 // pred_fallthru
        _
    $region12: #{rsu5_forward.24} parent=5 // pred_fallthru
      _
    %p145 = scmp.lt.s32.totalorder %s10, 2
    // Predicated region
    $region17: #{rsu5_forward.24} parent=5 // pred_check
      %p146 = pneg %p145
    $region18: #{rsu5_forward.24} parent=5 // pred_check_branch
      %148 = sbr.rel (%p146) target = $region20
    $region19: #{rsu5_forward.24} parent=5 // pred_region
      // Predicated region
      $region21: #{rsu5_forward.24} parent=19 // pred_check
        %p149 = pneg %p44
      $region22: #{rsu5_forward.24} parent=19 // pred_check_branch
        %151 = sbr.rel (%p149) target = $region24
      $region23: #{rsu5_forward.24} parent=19 // pred_region
        %p152 = scmp.lt.s32.totalorder %s17, 1
        %s153 = scalar_select %p152, %s17, 1
        %p154 = scmp.lt.s32.totalorder %s18, 0
        %s155 = scalar_select %p154, %s18, 0
        %s156 = smul.addr %s153, 2
        %s157 = sadd.s32 %s155, %s156
        %s158 = smul.addr %s157, 4
        %s159 = scalar_lea.vmem %s0, %s158
      $region24: #{rsu5_forward.24} parent=19 // pred_fallthru
        _
    $region20: #{rsu5_forward.24} parent=5 // pred_fallthru
      _
    %p160 = scmp.le.s32.totalorder 1, %s10
    %p161 = scmp.lt.s32.totalorder %s10, 3
    %p162 = pnand %p160, %p161
    %p163 = pneg %p162
    // Predicated region
    $region25: #{rsu5_forward.24} parent=5 // pred_check
      _
    $region26: #{rsu5_forward.24} parent=5 // pred_check_branch
      %165 = sbr.rel (%p162) target = $region28
    $region27: #{rsu5_forward.24} parent=5 // pred_region
      %s166 = ssub.s32 %s10, 1
      %p167 = scmp.lt.s32.totalorder %s19, 1
      %s168 = scalar_select %p167, %s19, 1
      %p169 = scmp.lt.s32.totalorder %s20, 0
      %s170 = scalar_select %p169, %s20, 0
      %s171 = smul.addr %s168, 2
      %s172 = sadd.s32 %s170, %s171
      %s173 = smul.addr %s172, 4
      %s174 = scalar_lea.vmem %s0, %s173
      %p175 = pneg %p50
      %p176 = pneg %p47
      %p177 = pneg %p71
      %p178 = pneg %p68
      %p179 = pneg %p99
      %p180 = pneg %p96
      %p181 = scmp.lt.s32.totalorder %s19, 1
      %s182 = scalar_select %p181, %s19, 1
      %p183 = scmp.lt.s32.totalorder %s20, 0
      %s184 = scalar_select %p183, %s20, 0
      %s185 = smul.addr %s182, 2
      %s186 = sadd.s32 %s184, %s185
      %s187 = smul.addr %s186, 4
      %s188 = scalar_lea.vmem %s2, %s187
      %p189 = pneg %p127
      %p190 = pneg %p124
      %p191 = scmp.lt.s32.totalorder %s19, 1
      %s192 = scalar_select %p191, %s19, 1
      %p193 = scmp.lt.s32.totalorder %s20, 0
      %s194 = scalar_select %p193, %s20, 0
      %s195 = smul.addr %s194, 2
      %s196 = smul.addr %s192, 2
      %s197 = sadd.s32 %s195, %s196
      %s198 = smul.addr %s197, 8
      %s199 = scalar_lea.vmem %s3, %s198
      %p200 = scmp.lt.s32.totalorder %s19, 1
      %s201 = scalar_select %p200, %s19, 1
      %p202 = scmp.lt.s32.totalorder %s20, 0
      %s203 = scalar_select %p202, %s20, 0
      %s204 = smul.addr %s201, 2
      %s205 = sadd.s32 %s203, %s204
      %s206 = smul.addr %s205, 4
      %s207 = scalar_lea.vmem %s0, %s206
      %p208 = scmp.lt.s32.totalorder %s19, 1
      %s209 = scalar_select %p208, %s19, 1
      %p210 = scmp.lt.s32.totalorder %s20, 0
      %s211 = scalar_select %p210, %s20, 0
      %s212 = smul.addr %s209, 2
      %s213 = sadd.s32 %s211, %s212
      %s214 = smul.addr %s213, 4
      %s215 = scalar_lea.vmem %s2, %s214
      %p216 = scmp.lt.s32.totalorder %s19, 1
      %s217 = scalar_select %p216, %s19, 1
      %p218 = scmp.lt.s32.totalorder %s20, 0
      %s219 = scalar_select %p218, %s20, 0
      %s220 = smul.addr %s219, 2
      %s221 = smul.addr %s217, 2
      %s222 = sadd.s32 %s220, %s221
      %s223 = smul.addr %s222, 8
      %s224 = scalar_lea.vmem %s3, %s223
      %v226 = vld [vmem:[%s207] sm:$0xf]
      %v227 = vld [vmem:[%s207 + $0x4] sm:$0xf]
      %v230 = vunpack.c.l.b16 %v226
      %v231 = vunpack.c.l.b16 %v227
      %v232 = vpack.c.b16 %v231, %v230
      %233 = vrot.lane.b32.xlu0 %v232, 8
      %v234 = vpop.permute.xlu0 %233
      %vm235 = vcmask 64512
      %v238 = vsel %vm235, 0, %v234
      %240 = vrot.lane.b32.xlu0 %v232, 120
      %v241 = vpop.permute.xlu0 %240
      %vm242 = vcmask 457728
      %v244 = vsel %vm242, %v241, 0
      %v247 = vld [vmem:[%s1] sm:$0xf]
      %v248 = vld [vmem:[%s1 + $0x4] sm:$0xf]
      %v251 = vunpack.c.l.b16 %v247
      %v252 = vunpack.c.l.b16 %v248
      %v253 = vpack.c.b16 %v252, %v251
      %vm254 = vcmask 392192
      %v256 = vsel %vm254, %v253, 0
      %258 = vmatprep.subr.bf16.mxu0 0
      %259 = vmatpush1.bf16.msra.mxu0 %v238
      %260 = vmatprep.subr.bf16.mxu0 0
      %261 = vmatpush1.bf16.msra.mxu0 %v232
      %262 = vmatprep.subr.bf16.mxu0 0
      %263 = vmatpush1.bf16.msra.mxu0 %v244
      %264 = vmatprep.subr.bf16.mxu0 0
      %265 = vmatpush1.bf16.msra.mxu0 0
      %266 = vmatprep.subr.bf16.mxu0 0
      %267 = vmatpush1.bf16.msra.mxu0 0
      %268 = vmatprep.subr.bf16.mxu0 0
      %269 = vmatpush1.bf16.msra.mxu0 0
      %270 = vmatprep.subr.bf16.mxu0 0
      %271 = vmatpush1.bf16.msra.mxu0 0
      %272 = vmatprep.subr.bf16.mxu0 0
      %273 = vmatpush1.bf16.msra.mxu0 0
      %274 = vmatprep.subr.bf16.mxu0 0
      %275 = vmatpush1.bf16.msra.mxu0 0
      %276 = vmatprep.subr.bf16.mxu0 0
      %277 = vmatpush1.bf16.msra.mxu0 0
      %278 = vmatprep.subr.bf16.mxu0 0
      %279 = vmatpush1.bf16.msra.mxu0 0
      %280 = vmatprep.subr.bf16.mxu0 0
      %281 = vmatpush1.bf16.msra.mxu0 0
      %282 = vmatprep.subr.bf16.mxu0 0
      %283 = vmatpush1.bf16.msra.mxu0 0
      %284 = vmatprep.subr.bf16.mxu0 0
      %285 = vmatpush1.bf16.msra.mxu0 0
      %286 = vmatprep.subr.bf16.mxu0 0
      %287 = vmatpush1.bf16.msra.mxu0 0
      %288 = vmatprep.subr.bf16.mxu0 0
      %289 = vmatpush1.bf16.msra.mxu0 0
      %290 = vmatprep.mubr.bf16.mxu0 0
      %291 = vmatmul.mubr.bf16.gmra.mrb[0].mxu0 %v256
      %v292 = vpop.f32.mrb[0].mxu0
      %v293 = vadd.f32 0.0, %v292
      %v294 = vpop.f32.mrb[0].mxu0
      %v295 = vpop.f32.mrb[0].mxu0
      %v296 = vadd.f32 0.0, %v295
      %v297 = vpop.f32.mrb[0].mxu0
      %298 = vdwg.mxu0
      %s299 = scalar_lea.vmem %s1, 8
      %v300 = vld [vmem:[%s299] sm:$0xf]
      %v301 = vld [vmem:[%s299 + $0x4] sm:$0xf]
      %s302 = scalar_lea.vmem %s1, 16
      %v303 = vld [vmem:[%s302] sm:$0xf]
      %v304 = vld [vmem:[%s302 + $0x4] sm:$0xf]
      %v307 = vunpack.c.l.b16 %v303
      %v308 = vunpack.c.l.b16 %v304
      %v309 = vpack.c.b16 %v308, %v307
      %v311 = vsel %vm254, %v309, 0
      %313 = vmatprep.subr.bf16.mxu0 0
      %314 = vmatpush1.bf16.msra.mxu0 %v238
      %315 = vmatprep.subr.bf16.mxu0 0
      %316 = vmatpush1.bf16.msra.mxu0 %v232
      %317 = vmatprep.subr.bf16.mxu0 0
      %318 = vmatpush1.bf16.msra.mxu0 %v244
      %319 = vmatprep.subr.bf16.mxu0 0
      %320 = vmatpush1.bf16.msra.mxu0 0
      %321 = vmatprep.subr.bf16.mxu0 0
      %322 = vmatpush1.bf16.msra.mxu0 0
      %323 = vmatprep.subr.bf16.mxu0 0
      %324 = vmatpush1.bf16.msra.mxu0 0
      %325 = vmatprep.subr.bf16.mxu0 0
      %326 = vmatpush1.bf16.msra.mxu0 0
      %327 = vmatprep.subr.bf16.mxu0 0
      %328 = vmatpush1.bf16.msra.mxu0 0
      %329 = vmatprep.subr.bf16.mxu0 0
      %330 = vmatpush1.bf16.msra.mxu0 0
      %331 = vmatprep.subr.bf16.mxu0 0
      %332 = vmatpush1.bf16.msra.mxu0 0
      %333 = vmatprep.subr.bf16.mxu0 0
      %334 = vmatpush1.bf16.msra.mxu0 0
      %335 = vmatprep.subr.bf16.mxu0 0
      %336 = vmatpush1.bf16.msra.mxu0 0
      %337 = vmatprep.subr.bf16.mxu0 0
      %338 = vmatpush1.bf16.msra.mxu0 0
      %339 = vmatprep.subr.bf16.mxu0 0
      %340 = vmatpush1.bf16.msra.mxu0 0
      %341 = vmatprep.subr.bf16.mxu0 0
      %342 = vmatpush1.bf16.msra.mxu0 0
      %343 = vmatprep.subr.bf16.mxu0 0
      %344 = vmatpush1.bf16.msra.mxu0 0
      %345 = vmatprep.mubr.bf16.mxu0 0
      %346 = vmatmul.mubr.bf16.gmra.mrb[0].mxu0 %v311
      %v347 = vpop.f32.mrb[0].mxu0
      %v348 = vadd.f32 0.0, %v347
      %v349 = vpop.f32.mrb[0].mxu0
      %v350 = vpop.f32.mrb[0].mxu0
      %v351 = vadd.f32 0.0, %v350
      %v352 = vpop.f32.mrb[0].mxu0
      %353 = vdwg.mxu0
      %v354 = vlaneseq
      %v355 = vand.u32 %v354, 127
      %vm356 = vcmp.lt.s32.totalorder %v355, 0
      %v357 = vsub.s32 0, %v355
      %v358 = vsel %vm356, %v357, %v355
      %v359 = vshrl.u32 %v358, 3
      %v360 = vand.u32 %v358, 7
      %v361 = vsub.s32 0, %v360
      %v362 = vsel %vm356, %v361, %v360
      %vm363 = vcmp.ne.s32.totalorder %v362, 0
      %vm364 = vcmp.lt.s32.totalorder %v362, 0
      %vm365 = vmand %vm364, %vm363
      %v366 = vadd.s32 %v362, 8
      %v367 = vsel %vm365, %v366, %v362
      %370 = vrot.lane.b32.xlu0 %v293, 1
      %v371 = vpop.permute.xlu0 %370
      %372 = vrot.lane.b32.xlu0 %v296, 1
      %v373 = vpop.permute.xlu0 %372
      %vm376 = vcmask 7168
      %v377 = vsel %vm376, 0.0, %v371
      %v378 = vsel %vm376, 0.0, %v373
      %381 = vrot.lane.b32.xlu0 %v348, 127
      %v382 = vpop.permute.xlu0 %381
      %383 = vrot.lane.b32.xlu0 %v351, 127
      %v384 = vpop.permute.xlu0 %383
      %vm387 = vcmask 515072
      %v388 = vsel %vm387, %v382, 0.0
      %v389 = vsel %vm387, %v384, 0.0
      %vm390 = vcmp.ge.s32.totalorder %v367, 1
      %v391 = vsel %vm390, 1, 0
      %vm392 = vcmp.eq.s32.totalorder %v391, 1
      %v393 = vsel %vm392, %v377, 0.0
      %v394 = vsel %vm392, %v378, 0.0
      %v397 = vunpack.c.l.b16 %v300
      %v398 = vunpack.c.l.b16 %v301
      %v399 = vpack.c.b16 %v398, %v397
      %v401 = vsel %vm254, %v399, 0
      %403 = vmatprep.subr.bf16.mxu0 0
      %404 = vmatpush1.bf16.msra.mxu0 %v238
      %405 = vmatprep.subr.bf16.mxu0 0
      %406 = vmatpush1.bf16.msra.mxu0 %v232
      %407 = vmatprep.subr.bf16.mxu0 0
      %408 = vmatpush1.bf16.msra.mxu0 %v244
      %409 = vmatprep.subr.bf16.mxu0 0
      %410 = vmatpush1.bf16.msra.mxu0 0
      %411 = vmatprep.subr.bf16.mxu0 0
      %412 = vmatpush1.bf16.msra.mxu0 0
      %413 = vmatprep.subr.bf16.mxu0 0
      %414 = vmatpush1.bf16.msra.mxu0 0
      %415 = vmatprep.subr.bf16.mxu0 0
      %416 = vmatpush1.bf16.msra.mxu0 0
      %417 = vmatprep.subr.bf16.mxu0 0
      %418 = vmatpush1.bf16.msra.mxu0 0
      %419 = vmatprep.subr.bf16.mxu0 0
      %420 = vmatpush1.bf16.msra.mxu0 0
      %421 = vmatprep.subr.bf16.mxu0 0
      %422 = vmatpush1.bf16.msra.mxu0 0
      %423 = vmatprep.subr.bf16.mxu0 0
      %424 = vmatpush1.bf16.msra.mxu0 0
      %425 = vmatprep.subr.bf16.mxu0 0
      %426 = vmatpush1.bf16.msra.mxu0 0
      %427 = vmatprep.subr.bf16.mxu0 0
      %428 = vmatpush1.bf16.msra.mxu0 0
      %429 = vmatprep.subr.bf16.mxu0 0
      %430 = vmatpush1.bf16.msra.mxu0 0
      %431 = vmatprep.subr.bf16.mxu0 0
      %432 = vmatpush1.bf16.msra.mxu0 0
      %433 = vmatprep.subr.bf16.mxu0 0
      %434 = vmatpush1.bf16.msra.mxu0 0
      %435 = vmatprep.mubr.bf16.mxu0 0
      %436 = vmatmul.mubr.bf16.gmra.mrb[0].mxu0 %v401
      %v437 = vpop.f32.mrb[0].mxu0
      %v438 = vadd.f32 %v393, %v437
      %v439 = vpop.f32.mrb[0].mxu0
      %v440 = vpop.f32.mrb[0].mxu0
      %v441 = vadd.f32 %v394, %v440
      %v442 = vpop.f32.mrb[0].mxu0
      %443 = vdwg.mxu0
      %vm444 = vcmp.lt.s32.totalorder %v367, 7
      %v445 = vsel %vm444, 1, 0
      %vm446 = vcmp.eq.s32.totalorder %v445, 1
      %v447 = vsel %vm446, %v388, 0.0
      %v448 = vsel %vm446, %v389, 0.0
      %v449 = vadd.f32 %v438, %v447
      %v450 = vadd.f32 %v441, %v448
      %v451 = vpack.c.bf16 %v450, %v449
      %v453 = vunpack.c.l.b16 %v451
      %v454 = vunpack.c.h.b16 %v451
      %v455 = vpack.c.b16 %v453, %v453
      %v456 = vpack.c.b16 %v454, %v454
      %vm459 = vcmask 519168
      %460 = vst.msk [vmem:[%s215] sm:$0xf] %vm459, %v455
      %461 = vst.msk [vmem:[%s215 + $0x4] sm:$0xf] %vm459, %v456
      %vm462 = vcmask 523264
      %v463 = vsel %vm462, %v449, 0.0
      %464 = vadd.xlane.f32.xlu0 %v463
      %v465 = vpop.xlane.xlu0 %464
      %v466 = vsel %vm462, %v450, 0.0
      %467 = vadd.xlane.f32.xlu0 %v466
      %v468 = vpop.xlane.xlu0 %467
      %v469 = vmul.f32 %v449, %v449
      %v470 = vmul.f32 %v450, %v450
      %v471 = vsel %vm462, %v469, 0.0
      %472 = vadd.xlane.f32.xlu0 %v471
      %v473 = vpop.xlane.xlu0 %472
      %v474 = vsel %vm462, %v470, 0.0
      %475 = vadd.xlane.f32.xlu0 %v474
      %v476 = vpop.xlane.xlu0 %475
      %v477 = vsel %vm376, %v465, %v473
      %v478 = vsel %vm376, %v468, %v476
      %vm479 = vcmask 15360
      %480 = vst.msk [vmem:[%s224] sm:$0xff] %vm479, %v477
      %481 = vst.msk [vmem:[%s224 + $0x8] sm:$0xff] %vm479, %v478
      %p482 = scmp.lt.s32.totalorder %s19, 1
      %s483 = scalar_select %p482, %s19, 1
      %p484 = scmp.lt.s32.totalorder %s20, 0
      %s485 = scalar_select %p484, %s20, 0
      %s486 = smul.addr %s483, 2
      %s487 = sadd.s32 %s485, %s486
      %s488 = smul.addr %s487, 4
      %s489 = scalar_lea.vmem %s2, %s488
      %p490 = scmp.lt.s32.totalorder %s19, 1
      %s491 = scalar_select %p490, %s19, 1
      %p492 = scmp.lt.s32.totalorder %s20, 0
      %s493 = scalar_select %p492, %s20, 0
      %s494 = smul.addr %s493, 2
      %s495 = smul.addr %s491, 2
      %s496 = sadd.s32 %s494, %s495
      %s497 = smul.addr %s496, 8
      %s498 = scalar_lea.vmem %s3, %s497
      // Predicated region
      $region29: #{rsu5_forward.24} parent=27 // pred_check
        %p499 = pneg %p96
      $region30: #{rsu5_forward.24} parent=27 // pred_check_branch
        %501 = sbr.rel (%p499) target = $region32
      $region31: #{rsu5_forward.24} parent=27 // pred_region
        _
      $region32: #{rsu5_forward.24} parent=27 // pred_fallthru
        _
      // Predicated region
      $region33: #{rsu5_forward.24} parent=27 // pred_check
        %p502 = pneg %p124
      $region34: #{rsu5_forward.24} parent=27 // pred_check_branch
        %504 = sbr.rel (%p502) target = $region36
      $region35: #{rsu5_forward.24} parent=27 // pred_region
        _
      $region36: #{rsu5_forward.24} parent=27 // pred_fallthru
        _
    $region28: #{rsu5_forward.24} parent=5 // pred_fallthru
      _
    %p505 = scmp.le.s32.totalorder 2, %s10
    // Predicated region
    $region37: #{rsu5_forward.24} parent=5 // pred_check
      %p506 = pneg %p505
    $region38: #{rsu5_forward.24} parent=5 // pred_check_branch
      %508 = sbr.rel (%p506) target = $region40
    $region39: #{rsu5_forward.24} parent=5 // pred_region
      %s509 = ssub.s32 %s10, 2
      // Predicated region
      $region41: #{rsu5_forward.24} parent=39 // pred_check
        %p510 = pneg %p102
      $region42: #{rsu5_forward.24} parent=39 // pred_check_branch
        %512 = sbr.rel (%p510) target = $region44
      $region43: #{rsu5_forward.24} parent=39 // pred_region
        %p513 = scmp.lt.s32.totalorder %s21, 1
        %s514 = scalar_select %p513, %s21, 1
        %p515 = scmp.lt.s32.totalorder %s22, 0
        %s516 = scalar_select %p515, %s22, 0
        %s517 = smul.addr %s514, 2
        %s518 = sadd.s32 %s516, %s517
        %s519 = smul.addr %s518, 4
        %s520 = scalar_lea.vmem %s2, %s519
      $region44: #{rsu5_forward.24} parent=39 // pred_fallthru
        _
      // Predicated region
      $region45: #{rsu5_forward.24} parent=39 // pred_check
        %p521 = pneg %p130
      $region46: #{rsu5_forward.24} parent=39 // pred_check_branch
        %523 = sbr.rel (%p521) target = $region48
      $region47: #{rsu5_forward.24} parent=39 // pred_region
        %p524 = scmp.lt.s32.totalorder %s21, 1
        %s525 = scalar_select %p524, %s21, 1
        %p526 = scmp.lt.s32.totalorder %s22, 0
        %s527 = scalar_select %p526, %s22, 0
        %s528 = smul.addr %s527, 2
        %s529 = smul.addr %s525, 2
        %s530 = sadd.s32 %s528, %s529
        %s531 = smul.addr %s530, 8
        %s532 = scalar_lea.vmem %s3, %s531
      $region48: #{rsu5_forward.24} parent=39 // pred_fallthru
        _
    $region40: #{rsu5_forward.24} parent=5 // pred_fallthru
      _
  $region6: #{rsu5_forward.24} parent=0 // loop_footer
    %s14 = sadd.s32 1, %s10
  $region7: #{rsu5_forward.24} parent=0 // loop_footer_branch
    %9 = sbr.rel target = $region3
  $region8: #{rsu5_forward.24} parent=0 // loop_exit
    _

// kernel: rsu5_forward.26
$region0: #{rsu5_forward.26}
  #allocation0 [shape = 'u32[]', space=smem, size = 0x4, offset = 0x4, fixed_abs, tag = 'smem constant byte address 0x4 - core index']
  #allocation1 [shape = 'u32[144,128]{1,0:T(1,128)}', space=vmem, size = 0x12000, scoped, tag = 'internal scratch']
  %s0 = inlined_call_operand.vmem [shape: bf16[2,16,16], index: 0, kind: input, shape index: {}]
  %s1 = inlined_call_operand.vmem [shape: bf16[3,16,48], index: 1, kind: input, shape index: {}]
  %s2 = inlined_call_operand.vmem [shape: bf16[2,16,16], index: 2, kind: output, shape index: {0}]
  %s3 = inlined_call_operand.vmem [shape: f32[2,1,16,2], index: 3, kind: output, shape index: {1}]
  %4 = xla_tuple %s2, %s3
  %s5 = sld [smem:[#allocation0]]
  $region49: #{rsu5_forward.26} parent=0
    _
  %s7 = ssub.s32 1, %s5
  %s8 = scalar_select 0, %s7, %s5
  loop: start=0, step=1, limit=4
  $region2: #{rsu5_forward.26} parent=0 // loop_pre_header
    _
  $region3: #{rsu5_forward.26} parent=0 // loop_header
    %s10 = sphi 0, %s14
    %p11 = scmp.ge.s32.totalorder %s10, 4
    %s17 = sphi 0, %s29
    %s18 = sphi 0, %s25
    %s19 = sphi 0, %s17
    %s20 = sphi 0, %s18
    %s21 = sphi 0, %s19
    %s22 = sphi 0, %s20
    %s34 = sphi 0, %s36
    %s37 = sphi 0, %s34
    %s38 = sphi 0, %s37
    %s54 = sphi 0, %s38
    %s58 = sphi 0, %s58
    %s60 = sphi 0, %s58
    %s61 = sphi 0, %s60
    %s75 = sphi 0, %s61
    %s83 = sphi 0, %s85
    %s86 = sphi 0, %s83
    %s87 = sphi 0, %s86
    %s103 = sphi 0, %s87
    %s111 = sphi 0, %s113
    %s114 = sphi 0, %s111
    %s115 = sphi 0, %s114
    %s131 = sphi 0, %s115
  $region4: #{rsu5_forward.26} parent=0 // loop_header_branch
    %13 = sbr.rel (%p11) target = $region8
  $region5: #{rsu5_forward.26} parent=0 // loop_body
    %s15 = ssub.s32 %s10, 1
    %s16 = ssub.s32 %s10, 2
    %s23 = sadd.s32 1, %s18
    %p24 = scmp.ge.s32.totalorder %s23, 1
    %s25 = scalar_select %p24, 0, %s23
    %s26 = sadd.s32 1, %s17
    %s27 = scalar_select %p24, %s26, %s17
    %p28 = scmp.ge.s32.totalorder %s27, 2
    %s29 = scalar_select %p28, 0, %s27
    %s30 = ssub.s32 %s17, %s29
    %s31 = ssub.s32 %s18, %s25
    %s32 = sor.u32 %s30, %s31
    %p33 = scmp.eq.s32.totalorder %s32, 0
    %s35 = sadd.s32 %s34, 1
    %s36 = scalar_select %p33, %s34, %s35
    %p39 = pneg %p33
    %p40 = scmp.eq.s32.totalorder %s10, 1
    %p41 = por %p39, %p40
    %p42 = scmp.ne.s32.totalorder %s34, %s37
    %p43 = scmp.eq.s32.totalorder %s10, 0
    %p44 = por %p42, %p43
    %p45 = scmp.ne.s32.totalorder %s34, %s37
    %p46 = scmp.eq.s32.totalorder %s15, 1
    %p47 = por %p45, %p46
    %p48 = scmp.ne.s32.totalorder %s37, %s38
    %p49 = scmp.eq.s32.totalorder %s15, 0
    %p50 = por %p48, %p49
    %p51 = scmp.ne.s32.totalorder %s37, %s38
    %p52 = scmp.eq.s32.totalorder %s16, 1
    %p53 = por %p51, %p52
    %p55 = scmp.ne.s32.totalorder %s38, %s54
    %p56 = scmp.eq.s32.totalorder %s16, 0
    %p57 = por %p55, %p56
    %s59 = sadd.s32 %s58, 1
    %p62 = scmp.eq.s32.totalorder %s10, 1
    %p63 = scmp.ne.s32.totalorder %s58, %s60
    %p64 = scmp.eq.s32.totalorder %s10, 0
    %p65 = por %p63, %p64
    %p66 = scmp.ne.s32.totalorder %s58, %s60
    %p67 = scmp.eq.s32.totalorder %s15, 1
    %p68 = por %p66, %p67
    %p69 = scmp.ne.s32.totalorder %s60, %s61
    %p70 = scmp.eq.s32.totalorder %s15, 0
    %p71 = por %p69, %p70
    %p72 = scmp.ne.s32.totalorder %s60, %s61
    %p73 = scmp.eq.s32.totalorder %s16, 1
    %p74 = por %p72, %p73
    %p76 = scmp.ne.s32.totalorder %s61, %s75
    %p77 = scmp.eq.s32.totalorder %s16, 0
    %p78 = por %p76, %p77
    %s79 = ssub.s32 %s17, %s29
    %s80 = ssub.s32 %s18, %s25
    %s81 = sor.u32 %s79, %s80
    %p82 = scmp.eq.s32.totalorder %s81, 0
    %s84 = sadd.s32 %s83, 1
    %s85 = scalar_select %p82, %s83, %s84
    %p88 = pneg %p82
    %p89 = scmp.eq.s32.totalorder %s10, 1
    %p90 = por %p88, %p89
    %p91 = scmp.ne.s32.totalorder %s83, %s86
    %p92 = scmp.eq.s32.totalorder %s10, 0
    %p93 = por %p91, %p92
    %p94 = scmp.ne.s32.totalorder %s83, %s86
    %p95 = scmp.eq.s32.totalorder %s15, 1
    %p96 = por %p94, %p95
    %p97 = scmp.ne.s32.totalorder %s86, %s87
    %p98 = scmp.eq.s32.totalorder %s15, 0
    %p99 = por %p97, %p98
    %p100 = scmp.ne.s32.totalorder %s86, %s87
    %p101 = scmp.eq.s32.totalorder %s16, 1
    %p102 = por %p100, %p101
    %p104 = scmp.ne.s32.totalorder %s87, %s103
    %p105 = scmp.eq.s32.totalorder %s16, 0
    %p106 = por %p104, %p105
    %s107 = ssub.s32 %s17, %s29
    %s108 = ssub.s32 %s18, %s25
    %s109 = sor.u32 %s107, %s108
    %p110 = scmp.eq.s32.totalorder %s109, 0
    %s112 = sadd.s32 %s111, 1
    %s113 = scalar_select %p110, %s111, %s112
    %p116 = pneg %p110
    %p117 = scmp.eq.s32.totalorder %s10, 1
    %p118 = por %p116, %p117
    %p119 = scmp.ne.s32.totalorder %s111, %s114
    %p120 = scmp.eq.s32.totalorder %s10, 0
    %p121 = por %p119, %p120
    %p122 = scmp.ne.s32.totalorder %s111, %s114
    %p123 = scmp.eq.s32.totalorder %s15, 1
    %p124 = por %p122, %p123
    %p125 = scmp.ne.s32.totalorder %s114, %s115
    %p126 = scmp.eq.s32.totalorder %s15, 0
    %p127 = por %p125, %p126
    %p128 = scmp.ne.s32.totalorder %s114, %s115
    %p129 = scmp.eq.s32.totalorder %s16, 1
    %p130 = por %p128, %p129
    %p132 = scmp.ne.s32.totalorder %s115, %s131
    %p133 = scmp.eq.s32.totalorder %s16, 0
    %p134 = por %p132, %p133
    %p135 = scmp.le.s32.totalorder 1, %s10
    %p136 = scmp.lt.s32.totalorder %s10, 3
    %p137 = pnand %p135, %p136
    %p138 = pneg %p137
    // Predicated region
    $region9: #{rsu5_forward.26} parent=5 // pred_check
      _
    $region10: #{rsu5_forward.26} parent=5 // pred_check_branch
      %140 = sbr.rel (%p137) target = $region12
    $region11: #{rsu5_forward.26} parent=5 // pred_region
      %s141 = ssub.s32 %s10, 1
      // Predicated region
      $region13: #{rsu5_forward.26} parent=11 // pred_check
        %p142 = pneg %p71
      $region14: #{rsu5_forward.26} parent=11 // pred_check_branch
        %144 = sbr.rel (%p142) target = $region16
      $region15: #{rsu5_forward.26} parent=11 // pred_region
        _
      $region16: #{rsu5_forward.26} parent=11 // pred_fallthru
        _
    $region12: #{rsu5_forward.26} parent=5 // pred_fallthru
      _
    %p145 = scmp.lt.s32.totalorder %s10, 2
    // Predicated region
    $region17: #{rsu5_forward.26} parent=5 // pred_check
      %p146 = pneg %p145
    $region18: #{rsu5_forward.26} parent=5 // pred_check_branch
      %148 = sbr.rel (%p146) target = $region20
    $region19: #{rsu5_forward.26} parent=5 // pred_region
      // Predicated region
      $region21: #{rsu5_forward.26} parent=19 // pred_check
        %p149 = pneg %p44
      $region22: #{rsu5_forward.26} parent=19 // pred_check_branch
        %151 = sbr.rel (%p149) target = $region24
      $region23: #{rsu5_forward.26} parent=19 // pred_region
        %p152 = scmp.lt.s32.totalorder %s17, 1
        %s153 = scalar_select %p152, %s17, 1
        %p154 = scmp.lt.s32.totalorder %s18, 0
        %s155 = scalar_select %p154, %s18, 0
        %s156 = smul.addr %s153, 2
        %s157 = sadd.s32 %s155, %s156
        %s158 = smul.addr %s157, 4
        %s159 = scalar_lea.vmem %s0, %s158
      $region24: #{rsu5_forward.26} parent=19 // pred_fallthru
        _
    $region20: #{rsu5_forward.26} parent=5 // pred_fallthru
      _
    %p160 = scmp.le.s32.totalorder 1, %s10
    %p161 = scmp.lt.s32.totalorder %s10, 3
    %p162 = pnand %p160, %p161
    %p163 = pneg %p162
    // Predicated region
    $region25: #{rsu5_forward.26} parent=5 // pred_check
      _
    $region26: #{rsu5_forward.26} parent=5 // pred_check_branch
      %165 = sbr.rel (%p162) target = $region28
    $region27: #{rsu5_forward.26} parent=5 // pred_region
      %s166 = ssub.s32 %s10, 1
      %p167 = scmp.lt.s32.totalorder %s19, 1
      %s168 = scalar_select %p167, %s19, 1
      %p169 = scmp.lt.s32.totalorder %s20, 0
      %s170 = scalar_select %p169, %s20, 0
      %s171 = smul.addr %s168, 2
      %s172 = sadd.s32 %s170, %s171
      %s173 = smul.addr %s172, 4
      %s174 = scalar_lea.vmem %s0, %s173
      %p175 = pneg %p50
      %p176 = pneg %p47
      %p177 = pneg %p71
      %p178 = pneg %p68
      %p179 = pneg %p99
      %p180 = pneg %p96
      %p181 = scmp.lt.s32.totalorder %s19, 1
      %s182 = scalar_select %p181, %s19, 1
      %p183 = scmp.lt.s32.totalorder %s20, 0
      %s184 = scalar_select %p183, %s20, 0
      %s185 = smul.addr %s182, 2
      %s186 = sadd.s32 %s184, %s185
      %s187 = smul.addr %s186, 4
      %s188 = scalar_lea.vmem %s2, %s187
      %p189 = pneg %p127
      %p190 = pneg %p124
      %p191 = scmp.lt.s32.totalorder %s19, 1
      %s192 = scalar_select %p191, %s19, 1
      %p193 = scmp.lt.s32.totalorder %s20, 0
      %s194 = scalar_select %p193, %s20, 0
      %s195 = smul.addr %s194, 2
      %s196 = smul.addr %s192, 2
      %s197 = sadd.s32 %s195, %s196
      %s198 = smul.addr %s197, 8
      %s199 = scalar_lea.vmem %s3, %s198
      %p200 = scmp.lt.s32.totalorder %s19, 1
      %s201 = scalar_select %p200, %s19, 1
      %p202 = scmp.lt.s32.totalorder %s20, 0
      %s203 = scalar_select %p202, %s20, 0
      %s204 = smul.addr %s201, 2
      %s205 = sadd.s32 %s203, %s204
      %s206 = smul.addr %s205, 4
      %s207 = scalar_lea.vmem %s0, %s206
      %p208 = scmp.lt.s32.totalorder %s19, 1
      %s209 = scalar_select %p208, %s19, 1
      %p210 = scmp.lt.s32.totalorder %s20, 0
      %s211 = scalar_select %p210, %s20, 0
      %s212 = smul.addr %s209, 2
      %s213 = sadd.s32 %s211, %s212
      %s214 = smul.addr %s213, 4
      %s215 = scalar_lea.vmem %s2, %s214
      %p216 = scmp.lt.s32.totalorder %s19, 1
      %s217 = scalar_select %p216, %s19, 1
      %p218 = scmp.lt.s32.totalorder %s20, 0
      %s219 = scalar_select %p218, %s20, 0
      %s220 = smul.addr %s219, 2
      %s221 = smul.addr %s217, 2
      %s222 = sadd.s32 %s220, %s221
      %s223 = smul.addr %s222, 8
      %s224 = scalar_lea.vmem %s3, %s223
      %v226 = vld [vmem:[%s207] sm:$0xf]
      %v227 = vld [vmem:[%s207 + $0x4] sm:$0xf]
      %v230 = vunpack.c.l.b16 %v226
      %v231 = vunpack.c.l.b16 %v227
      %v232 = vpack.c.b16 %v231, %v230
      %233 = vrot.lane.b32.xlu0 %v232, 4
      %v234 = vpop.permute.xlu0 %233
      %vm235 = vcmask 31744
      %v238 = vsel %vm235, 0, %v234
      %240 = vrot.lane.b32.xlu0 %v232, 124
      %v241 = vpop.permute.xlu0 %240
      %vm242 = vcmask 97280
      %v244 = vsel %vm242, %v241, 0
      %v247 = vld [vmem:[%s1] sm:$0xf]
      %v248 = vld [vmem:[%s1 + $0x4] sm:$0xf]
      %v251 = vunpack.c.l.b16 %v247
      %v252 = vunpack.c.l.b16 %v248
      %v253 = vpack.c.b16 %v252, %v251
      %vm254 = vcmask 392192
      %v256 = vsel %vm254, %v253, 0
      %258 = vmatprep.subr.bf16.mxu0 0
      %259 = vmatpush1.bf16.msra.mxu0 %v238
      %260 = vmatprep.subr.bf16.mxu0 0
      %261 = vmatpush1.bf16.msra.mxu0 %v232
      %262 = vmatprep.subr.bf16.mxu0 0
      %263 = vmatpush1.bf16.msra.mxu0 %v244
      %264 = vmatprep.subr.bf16.mxu0 0
      %265 = vmatpush1.bf16.msra.mxu0 0
      %266 = vmatprep.subr.bf16.mxu0 0
      %267 = vmatpush1.bf16.msra.mxu0 0
      %268 = vmatprep.subr.bf16.mxu0 0
      %269 = vmatpush1.bf16.msra.mxu0 0
      %270 = vmatprep.subr.bf16.mxu0 0
      %271 = vmatpush1.bf16.msra.mxu0 0
      %272 = vmatprep.subr.bf16.mxu0 0
      %273 = vmatpush1.bf16.msra.mxu0 0
      %274 = vmatprep.subr.bf16.mxu0 0
      %275 = vmatpush1.bf16.msra.mxu0 0
      %276 = vmatprep.subr.bf16.mxu0 0
      %277 = vmatpush1.bf16.msra.mxu0 0
      %278 = vmatprep.subr.bf16.mxu0 0
      %279 = vmatpush1.bf16.msra.mxu0 0
      %280 = vmatprep.subr.bf16.mxu0 0
      %281 = vmatpush1.bf16.msra.mxu0 0
      %282 = vmatprep.subr.bf16.mxu0 0
      %283 = vmatpush1.bf16.msra.mxu0 0
      %284 = vmatprep.subr.bf16.mxu0 0
      %285 = vmatpush1.bf16.msra.mxu0 0
      %286 = vmatprep.subr.bf16.mxu0 0
      %287 = vmatpush1.bf16.msra.mxu0 0
      %288 = vmatprep.subr.bf16.mxu0 0
      %289 = vmatpush1.bf16.msra.mxu0 0
      %290 = vmatprep.mubr.bf16.mxu0 0
      %291 = vmatmul.mubr.bf16.gmra.mrb[0].mxu0 %v256
      %v292 = vpop.f32.mrb[0].mxu0
      %v293 = vadd.f32 0.0, %v292
      %v294 = vpop.f32.mrb[0].mxu0
      %v295 = vpop.f32.mrb[0].mxu0
      %v296 = vadd.f32 0.0, %v295
      %v297 = vpop.f32.mrb[0].mxu0
      %298 = vdwg.mxu0
      %s299 = scalar_lea.vmem %s1, 8
      %v300 = vld [vmem:[%s299] sm:$0xf]
      %v301 = vld [vmem:[%s299 + $0x4] sm:$0xf]
      %s302 = scalar_lea.vmem %s1, 16
      %v303 = vld [vmem:[%s302] sm:$0xf]
      %v304 = vld [vmem:[%s302 + $0x4] sm:$0xf]
      %v307 = vunpack.c.l.b16 %v303
      %v308 = vunpack.c.l.b16 %v304
      %v309 = vpack.c.b16 %v308, %v307
      %v311 = vsel %vm254, %v309, 0
      %313 = vmatprep.subr.bf16.mxu0 0
      %314 = vmatpush1.bf16.msra.mxu0 %v238
      %315 = vmatprep.subr.bf16.mxu0 0
      %316 = vmatpush1.bf16.msra.mxu0 %v232
      %317 = vmatprep.subr.bf16.mxu0 0
      %318 = vmatpush1.bf16.msra.mxu0 %v244
      %319 = vmatprep.subr.bf16.mxu0 0
      %320 = vmatpush1.bf16.msra.mxu0 0
      %321 = vmatprep.subr.bf16.mxu0 0
      %322 = vmatpush1.bf16.msra.mxu0 0
      %323 = vmatprep.subr.bf16.mxu0 0
      %324 = vmatpush1.bf16.msra.mxu0 0
      %325 = vmatprep.subr.bf16.mxu0 0
      %326 = vmatpush1.bf16.msra.mxu0 0
      %327 = vmatprep.subr.bf16.mxu0 0
      %328 = vmatpush1.bf16.msra.mxu0 0
      %329 = vmatprep.subr.bf16.mxu0 0
      %330 = vmatpush1.bf16.msra.mxu0 0
      %331 = vmatprep.subr.bf16.mxu0 0
      %332 = vmatpush1.bf16.msra.mxu0 0
      %333 = vmatprep.subr.bf16.mxu0 0
      %334 = vmatpush1.bf16.msra.mxu0 0
      %335 = vmatprep.subr.bf16.mxu0 0
      %336 = vmatpush1.bf16.msra.mxu0 0
      %337 = vmatprep.subr.bf16.mxu0 0
      %338 = vmatpush1.bf16.msra.mxu0 0
      %339 = vmatprep.subr.bf16.mxu0 0
      %340 = vmatpush1.bf16.msra.mxu0 0
      %341 = vmatprep.subr.bf16.mxu0 0
      %342 = vmatpush1.bf16.msra.mxu0 0
      %343 = vmatprep.subr.bf16.mxu0 0
      %344 = vmatpush1.bf16.msra.mxu0 0
      %345 = vmatprep.mubr.bf16.mxu0 0
      %346 = vmatmul.mubr.bf16.gmra.mrb[0].mxu0 %v311
      %v347 = vpop.f32.mrb[0].mxu0
      %v348 = vadd.f32 0.0, %v347
      %v349 = vpop.f32.mrb[0].mxu0
      %v350 = vpop.f32.mrb[0].mxu0
      %v351 = vadd.f32 0.0, %v350
      %v352 = vpop.f32.mrb[0].mxu0
      %353 = vdwg.mxu0
      %v354 = vlaneseq
      %v355 = vand.u32 %v354, 127
      %vm356 = vcmp.lt.s32.totalorder %v355, 0
      %v357 = vsub.s32 0, %v355
      %v358 = vsel %vm356, %v357, %v355
      %v359 = vshrl.u32 %v358, 2
      %v360 = vand.u32 %v358, 3
      %v361 = vsub.s32 0, %v360
      %v362 = vsel %vm356, %v361, %v360
      %vm363 = vcmp.ne.s32.totalorder %v362, 0
      %vm364 = vcmp.lt.s32.totalorder %v362, 0
      %vm365 = vmand %vm364, %vm363
      %v366 = vadd.s32 %v362, 4
      %v367 = vsel %vm365, %v366, %v362
      %370 = vrot.lane.b32.xlu0 %v293, 1
      %v371 = vpop.permute.xlu0 %370
      %372 = vrot.lane.b32.xlu0 %v296, 1
      %v373 = vpop.permute.xlu0 %372
      %vm376 = vcmask 7168
      %v377 = vsel %vm376, 0.0, %v371
      %v378 = vsel %vm376, 0.0, %v373
      %381 = vrot.lane.b32.xlu0 %v348, 127
      %v382 = vpop.permute.xlu0 %381
      %383 = vrot.lane.b32.xlu0 %v351, 127
      %v384 = vpop.permute.xlu0 %383
      %vm387 = vcmask 121856
      %v388 = vsel %vm387, %v382, 0.0
      %v389 = vsel %vm387, %v384, 0.0
      %vm390 = vcmp.ge.s32.totalorder %v367, 1
      %v391 = vsel %vm390, 1, 0
      %vm392 = vcmp.eq.s32.totalorder %v391, 1
      %v393 = vsel %vm392, %v377, 0.0
      %v394 = vsel %vm392, %v378, 0.0
      %v397 = vunpack.c.l.b16 %v300
      %v398 = vunpack.c.l.b16 %v301
      %v399 = vpack.c.b16 %v398, %v397
      %v401 = vsel %vm254, %v399, 0
      %403 = vmatprep.subr.bf16.mxu0 0
      %404 = vmatpush1.bf16.msra.mxu0 %v238
      %405 = vmatprep.subr.bf16.mxu0 0
      %406 = vmatpush1.bf16.msra.mxu0 %v232
      %407 = vmatprep.subr.bf16.mxu0 0
      %408 = vmatpush1.bf16.msra.mxu0 %v244
      %409 = vmatprep.subr.bf16.mxu0 0
      %410 = vmatpush1.bf16.msra.mxu0 0
      %411 = vmatprep.subr.bf16.mxu0 0
      %412 = vmatpush1.bf16.msra.mxu0 0
      %413 = vmatprep.subr.bf16.mxu0 0
      %414 = vmatpush1.bf16.msra.mxu0 0
      %415 = vmatprep.subr.bf16.mxu0 0
      %416 = vmatpush1.bf16.msra.mxu0 0
      %417 = vmatprep.subr.bf16.mxu0 0
      %418 = vmatpush1.bf16.msra.mxu0 0
      %419 = vmatprep.subr.bf16.mxu0 0
      %420 = vmatpush1.bf16.msra.mxu0 0
      %421 = vmatprep.subr.bf16.mxu0 0
      %422 = vmatpush1.bf16.msra.mxu0 0
      %423 = vmatprep.subr.bf16.mxu0 0
      %424 = vmatpush1.bf16.msra.mxu0 0
      %425 = vmatprep.subr.bf16.mxu0 0
      %426 = vmatpush1.bf16.msra.mxu0 0
      %427 = vmatprep.subr.bf16.mxu0 0
      %428 = vmatpush1.bf16.msra.mxu0 0
      %429 = vmatprep.subr.bf16.mxu0 0
      %430 = vmatpush1.bf16.msra.mxu0 0
      %431 = vmatprep.subr.bf16.mxu0 0
      %432 = vmatpush1.bf16.msra.mxu0 0
      %433 = vmatprep.subr.bf16.mxu0 0
      %434 = vmatpush1.bf16.msra.mxu0 0
      %435 = vmatprep.mubr.bf16.mxu0 0
      %436 = vmatmul.mubr.bf16.gmra.mrb[0].mxu0 %v401
      %v437 = vpop.f32.mrb[0].mxu0
      %v438 = vadd.f32 %v393, %v437
      %v439 = vpop.f32.mrb[0].mxu0
      %v440 = vpop.f32.mrb[0].mxu0
      %v441 = vadd.f32 %v394, %v440
      %v442 = vpop.f32.mrb[0].mxu0
      %443 = vdwg.mxu0
      %vm444 = vcmp.lt.s32.totalorder %v367, 3
      %v445 = vsel %vm444, 1, 0
      %vm446 = vcmp.eq.s32.totalorder %v445, 1
      %v447 = vsel %vm446, %v388, 0.0
      %v448 = vsel %vm446, %v389, 0.0
      %v449 = vadd.f32 %v438, %v447
      %v450 = vadd.f32 %v441, %v448
      %v451 = vpack.c.bf16 %v450, %v449
      %v453 = vunpack.c.l.b16 %v451
      %v454 = vunpack.c.h.b16 %v451
      %v455 = vpack.c.b16 %v453, %v453
      %v456 = vpack.c.b16 %v454, %v454
      %vm459 = vcmask 125952
      %460 = vst.msk [vmem:[%s215] sm:$0xf] %vm459, %v455
      %461 = vst.msk [vmem:[%s215 + $0x4] sm:$0xf] %vm459, %v456
      %vm462 = vcmask 130048
      %v463 = vsel %vm462, %v449, 0.0
      %464 = vadd.xlane.f32.xlu0 %v463
      %v465 = vpop.xlane.xlu0 %464
      %v466 = vsel %vm462, %v450, 0.0
      %467 = vadd.xlane.f32.xlu0 %v466
      %v468 = vpop.xlane.xlu0 %467
      %v469 = vmul.f32 %v449, %v449
      %v470 = vmul.f32 %v450, %v450
      %v471 = vsel %vm462, %v469, 0.0
      %472 = vadd.xlane.f32.xlu0 %v471
      %v473 = vpop.xlane.xlu0 %472
      %v474 = vsel %vm462, %v470, 0.0
      %475 = vadd.xlane.f32.xlu0 %v474
      %v476 = vpop.xlane.xlu0 %475
      %v477 = vsel %vm376, %v465, %v473
      %v478 = vsel %vm376, %v468, %v476
      %vm479 = vcmask 15360
      %480 = vst.msk [vmem:[%s224] sm:$0xff] %vm479, %v477
      %481 = vst.msk [vmem:[%s224 + $0x8] sm:$0xff] %vm479, %v478
      %p482 = scmp.lt.s32.totalorder %s19, 1
      %s483 = scalar_select %p482, %s19, 1
      %p484 = scmp.lt.s32.totalorder %s20, 0
      %s485 = scalar_select %p484, %s20, 0
      %s486 = smul.addr %s483, 2
      %s487 = sadd.s32 %s485, %s486
      %s488 = smul.addr %s487, 4
      %s489 = scalar_lea.vmem %s2, %s488
      %p490 = scmp.lt.s32.totalorder %s19, 1
      %s491 = scalar_select %p490, %s19, 1
      %p492 = scmp.lt.s32.totalorder %s20, 0
      %s493 = scalar_select %p492, %s20, 0
      %s494 = smul.addr %s493, 2
      %s495 = smul.addr %s491, 2
      %s496 = sadd.s32 %s494, %s495
      %s497 = smul.addr %s496, 8
      %s498 = scalar_lea.vmem %s3, %s497
      // Predicated region
      $region29: #{rsu5_forward.26} parent=27 // pred_check
        %p499 = pneg %p96
      $region30: #{rsu5_forward.26} parent=27 // pred_check_branch
        %501 = sbr.rel (%p499) target = $region32
      $region31: #{rsu5_forward.26} parent=27 // pred_region
        _
      $region32: #{rsu5_forward.26} parent=27 // pred_fallthru
        _
      // Predicated region
      $region33: #{rsu5_forward.26} parent=27 // pred_check
        %p502 = pneg %p124
      $region34: #{rsu5_forward.26} parent=27 // pred_check_branch
        %504 = sbr.rel (%p502) target = $region36
      $region35: #{rsu5_forward.26} parent=27 // pred_region
        _
      $region36: #{rsu5_forward.26} parent=27 // pred_fallthru
        _
    $region28: #{rsu5_forward.26} parent=5 // pred_fallthru
      _
    %p505 = scmp.le.s32.totalorder 2, %s10
    // Predicated region
    $region37: #{rsu5_forward.26} parent=5 // pred_check
      %p506 = pneg %p505
    $region38: #{rsu5_forward.26} parent=5 // pred_check_branch
      %508 = sbr.rel (%p506) target = $region40
    $region39: #{rsu5_forward.26} parent=5 // pred_region
      %s509 = ssub.s32 %s10, 2
      // Predicated region
      $region41: #{rsu5_forward.26} parent=39 // pred_check
        %p510 = pneg %p102
      $region42: #{rsu5_forward.26} parent=39 // pred_check_branch
        %512 = sbr.rel (%p510) target = $region44
      $region43: #{rsu5_forward.26} parent=39 // pred_region
        %p513 = scmp.lt.s32.totalorder %s21, 1
        %s514 = scalar_select %p513, %s21, 1
        %p515 = scmp.lt.s32.totalorder %s22, 0
        %s516 = scalar_select %p515, %s22, 0
        %s517 = smul.addr %s514, 2
        %s518 = sadd.s32 %s516, %s517
        %s519 = smul.addr %s518, 4
        %s520 = scalar_lea.vmem %s2, %s519
      $region44: #{rsu5_forward.26} parent=39 // pred_fallthru
        _
      // Predicated region
      $region45: #{rsu5_forward.26} parent=39 // pred_check
        %p521 = pneg %p130
      $region46: #{rsu5_forward.26} parent=39 // pred_check_branch
        %523 = sbr.rel (%p521) target = $region48
      $region47: #{rsu5_forward.26} parent=39 // pred_region
        %p524 = scmp.lt.s32.totalorder %s21, 1
        %s525 = scalar_select %p524, %s21, 1
        %p526 = scmp.lt.s32.totalorder %s22, 0
        %s527 = scalar_select %p526, %s22, 0
        %s528 = smul.addr %s527, 2
        %s529 = smul.addr %s525, 2
        %s530 = sadd.s32 %s528, %s529
        %s531 = smul.addr %s530, 8
        %s532 = scalar_lea.vmem %s3, %s531
      $region48: #{rsu5_forward.26} parent=39 // pred_fallthru
        _
    $region40: #{rsu5_forward.26} parent=5 // pred_fallthru
      _
  $region6: #{rsu5_forward.26} parent=0 // loop_footer
    %s14 = sadd.s32 1, %s10
  $region7: #{rsu5_forward.26} parent=0 // loop_footer_branch
    %9 = sbr.rel target = $region3
  $region8: #{rsu5_forward.26} parent=0 // loop_exit
    _

// kernel: rsu5_forward.27
$region0: #{rsu5_forward.27}
  #allocation0 [shape = 'u32[]', space=smem, size = 0x4, offset = 0x4, fixed_abs, tag = 'smem constant byte address 0x4 - core index']
  #allocation1 [shape = 'u32[144,128]{1,0:T(1,128)}', space=vmem, size = 0x12000, scoped, tag = 'internal scratch']
  %s0 = inlined_call_operand.vmem [shape: bf16[2,16,16], index: 0, kind: input, shape index: {}]
  %s1 = inlined_call_operand.vmem [shape: f32[16,2], index: 1, kind: input, shape index: {}]
  %s2 = inlined_call_operand.vmem [shape: bf16[2,16,16], index: 2, kind: output, shape index: {}]
  %s3 = sld [smem:[#allocation0]]
  $region41: #{rsu5_forward.27} parent=0
    _
  %s5 = ssub.s32 1, %s3
  %s6 = scalar_select 0, %s5, %s3
  loop: start=0, step=1, limit=4
  $region2: #{rsu5_forward.27} parent=0 // loop_pre_header
    _
  $region3: #{rsu5_forward.27} parent=0 // loop_header
    %s8 = sphi 0, %s12
    %p9 = scmp.ge.s32.totalorder %s8, 4
    %s15 = sphi 0, %s27
    %s16 = sphi 0, %s23
    %s17 = sphi 0, %s15
    %s18 = sphi 0, %s16
    %s19 = sphi 0, %s17
    %s20 = sphi 0, %s18
    %s32 = sphi 0, %s34
    %s35 = sphi 0, %s32
    %s36 = sphi 0, %s35
    %s52 = sphi 0, %s36
    %s56 = sphi 0, %s56
    %s58 = sphi 0, %s56
    %s59 = sphi 0, %s58
    %s73 = sphi 0, %s59
    %s81 = sphi 0, %s83
    %s84 = sphi 0, %s81
    %s85 = sphi 0, %s84
    %s101 = sphi 0, %s85
  $region4: #{rsu5_forward.27} parent=0 // loop_header_branch
    %11 = sbr.rel (%p9) target = $region8
  $region5: #{rsu5_forward.27} parent=0 // loop_body
    %s13 = ssub.s32 %s8, 1
    %s14 = ssub.s32 %s8, 2
    %s21 = sadd.s32 1, %s16
    %p22 = scmp.ge.s32.totalorder %s21, 1
    %s23 = scalar_select %p22, 0, %s21
    %s24 = sadd.s32 1, %s15
    %s25 = scalar_select %p22, %s24, %s15
    %p26 = scmp.ge.s32.totalorder %s25, 2
    %s27 = scalar_select %p26, 0, %s25
    %s28 = ssub.s32 %s15, %s27
    %s29 = ssub.s32 %s16, %s23
    %s30 = sor.u32 %s28, %s29
    %p31 = scmp.eq.s32.totalorder %s30, 0
    %s33 = sadd.s32 %s32, 1
    %s34 = scalar_select %p31, %s32, %s33
    %p37 = pneg %p31
    %p38 = scmp.eq.s32.totalorder %s8, 1
    %p39 = por %p37, %p38
    %p40 = scmp.ne.s32.totalorder %s32, %s35
    %p41 = scmp.eq.s32.totalorder %s8, 0
    %p42 = por %p40, %p41
    %p43 = scmp.ne.s32.totalorder %s32, %s35
    %p44 = scmp.eq.s32.totalorder %s13, 1
    %p45 = por %p43, %p44
    %p46 = scmp.ne.s32.totalorder %s35, %s36
    %p47 = scmp.eq.s32.totalorder %s13, 0
    %p48 = por %p46, %p47
    %p49 = scmp.ne.s32.totalorder %s35, %s36
    %p50 = scmp.eq.s32.totalorder %s14, 1
    %p51 = por %p49, %p50
    %p53 = scmp.ne.s32.totalorder %s36, %s52
    %p54 = scmp.eq.s32.totalorder %s14, 0
    %p55 = por %p53, %p54
    %s57 = sadd.s32 %s56, 1
    %p60 = scmp.eq.s32.totalorder %s8, 1
    %p61 = scmp.ne.s32.totalorder %s56, %s58
    %p62 = scmp.eq.s32.totalorder %s8, 0
    %p63 = por %p61, %p62
    %p64 = scmp.ne.s32.totalorder %s56, %s58
    %p65 = scmp.eq.s32.totalorder %s13, 1
    %p66 = por %p64, %p65
    %p67 = scmp.ne.s32.totalorder %s58, %s59
    %p68 = scmp.eq.s32.totalorder %s13, 0
    %p69 = por %p67, %p68
    %p70 = scmp.ne.s32.totalorder %s58, %s59
    %p71 = scmp.eq.s32.totalorder %s14, 1
    %p72 = por %p70, %p71
    %p74 = scmp.ne.s32.totalorder %s59, %s73
    %p75 = scmp.eq.s32.totalorder %s14, 0
    %p76 = por %p74, %p75
    %s77 = ssub.s32 %s15, %s27
    %s78 = ssub.s32 %s16, %s23
    %s79 = sor.u32 %s77, %s78
    %p80 = scmp.eq.s32.totalorder %s79, 0
    %s82 = sadd.s32 %s81, 1
    %s83 = scalar_select %p80, %s81, %s82
    %p86 = pneg %p80
    %p87 = scmp.eq.s32.totalorder %s8, 1
    %p88 = por %p86, %p87
    %p89 = scmp.ne.s32.totalorder %s81, %s84
    %p90 = scmp.eq.s32.totalorder %s8, 0
    %p91 = por %p89, %p90
    %p92 = scmp.ne.s32.totalorder %s81, %s84
    %p93 = scmp.eq.s32.totalorder %s13, 1
    %p94 = por %p92, %p93
    %p95 = scmp.ne.s32.totalorder %s84, %s85
    %p96 = scmp.eq.s32.totalorder %s13, 0
    %p97 = por %p95, %p96
    %p98 = scmp.ne.s32.totalorder %s84, %s85
    %p99 = scmp.eq.s32.totalorder %s14, 1
    %p100 = por %p98, %p99
    %p102 = scmp.ne.s32.totalorder %s85, %s101
    %p103 = scmp.eq.s32.totalorder %s14, 0
    %p104 = por %p102, %p103
    %p105 = scmp.le.s32.totalorder 1, %s8
    %p106 = scmp.lt.s32.totalorder %s8, 3
    %p107 = pnand %p105, %p106
    %p108 = pneg %p107
    // Predicated region
    $region9: #{rsu5_forward.27} parent=5 // pred_check
      _
    $region10: #{rsu5_forward.27} parent=5 // pred_check_branch
      %110 = sbr.rel (%p107) target = $region12
    $region11: #{rsu5_forward.27} parent=5 // pred_region
      %s111 = ssub.s32 %s8, 1
      // Predicated region
      $region13: #{rsu5_forward.27} parent=11 // pred_check
        %p112 = pneg %p69
      $region14: #{rsu5_forward.27} parent=11 // pred_check_branch
        %114 = sbr.rel (%p112) target = $region16
      $region15: #{rsu5_forward.27} parent=11 // pred_region
        _
      $region16: #{rsu5_forward.27} parent=11 // pred_fallthru
        _
    $region12: #{rsu5_forward.27} parent=5 // pred_fallthru
      _
    %p115 = scmp.lt.s32.totalorder %s8, 2
    // Predicated region
    $region17: #{rsu5_forward.27} parent=5 // pred_check
      %p116 = pneg %p115
    $region18: #{rsu5_forward.27} parent=5 // pred_check_branch
      %118 = sbr.rel (%p116) target = $region20
    $region19: #{rsu5_forward.27} parent=5 // pred_region
      // Predicated region
      $region21: #{rsu5_forward.27} parent=19 // pred_check
        %p119 = pneg %p42
      $region22: #{rsu5_forward.27} parent=19 // pred_check_branch
        %121 = sbr.rel (%p119) target = $region24
      $region23: #{rsu5_forward.27} parent=19 // pred_region
        %p122 = scmp.lt.s32.totalorder %s15, 1
        %s123 = scalar_select %p122, %s15, 1
        %p124 = scmp.lt.s32.totalorder %s16, 0
        %s125 = scalar_select %p124, %s16, 0
        %s126 = smul.addr %s123, 2
        %s127 = sadd.s32 %s125, %s126
        %s128 = smul.addr %s127, 4
        %s129 = scalar_lea.vmem %s0, %s128
      $region24: #{rsu5_forward.27} parent=19 // pred_fallthru
        _
    $region20: #{rsu5_forward.27} parent=5 // pred_fallthru
      _
    %p130 = scmp.le.s32.totalorder 1, %s8
    %p131 = scmp.lt.s32.totalorder %s8, 3
    %p132 = pnand %p130, %p131
    %p133 = pneg %p132
    // Predicated region
    $region25: #{rsu5_forward.27} parent=5 // pred_check
      _
    $region26: #{rsu5_forward.27} parent=5 // pred_check_branch
      %135 = sbr.rel (%p132) target = $region28
    $region27: #{rsu5_forward.27} parent=5 // pred_region
      %s136 = ssub.s32 %s8, 1
      %p137 = scmp.lt.s32.totalorder %s17, 1
      %s138 = scalar_select %p137, %s17, 1
      %p139 = scmp.lt.s32.totalorder %s18, 0
      %s140 = scalar_select %p139, %s18, 0
      %s141 = smul.addr %s138, 2
      %s142 = sadd.s32 %s140, %s141
      %s143 = smul.addr %s142, 4
      %s144 = scalar_lea.vmem %s0, %s143
      %p145 = pneg %p48
      %p146 = pneg %p45
      %p147 = pneg %p69
      %p148 = pneg %p66
      %p149 = pneg %p97
      %p150 = pneg %p94
      %p151 = scmp.lt.s32.totalorder %s17, 1
      %s152 = scalar_select %p151, %s17, 1
      %p153 = scmp.lt.s32.totalorder %s18, 0
      %s154 = scalar_select %p153, %s18, 0
      %s155 = smul.addr %s152, 2
      %s156 = sadd.s32 %s154, %s155
      %s157 = smul.addr %s156, 4
      %s158 = scalar_lea.vmem %s2, %s157
      %p159 = scmp.lt.s32.totalorder %s17, 1
      %s160 = scalar_select %p159, %s17, 1
      %p161 = scmp.lt.s32.totalorder %s18, 0
      %s162 = scalar_select %p161, %s18, 0
      %s163 = smul.addr %s160, 2
      %s164 = sadd.s32 %s162, %s163
      %s165 = smul.addr %s164, 4
      %s166 = scalar_lea.vmem %s0, %s165
      %p167 = scmp.lt.s32.totalorder %s17, 1
      %s168 = scalar_select %p167, %s17, 1
      %p169 = scmp.lt.s32.totalorder %s18, 0
      %s170 = scalar_select %p169, %s18, 0
      %s171 = smul.addr %s168, 2
      %s172 = sadd.s32 %s170, %s171
      %s173 = smul.addr %s172, 4
      %s174 = scalar_lea.vmem %s2, %s173
      %v175 = vld [vmem:[%s1] sm:$0xff]
      %v176 = vld [vmem:[%s1 + $0x8] sm:$0xff]
      %v177 = vld [vmem:[%s166] sm:$0xf]
      %v178 = vld [vmem:[%s166 + $0x4] sm:$0xf]
      %v179 = vunpack.c.l.bf16 %v177
      %v180 = vunpack.c.l.bf16 %v178
      %182 = vset.pattern.permute.xlu0 0
      %183 = vperm.xlu0 %182, %v175
      %v184 = vpop.permute.xlu0 %183
      %187 = vset.pattern.permute.xlu0 0
      %188 = vperm.xlu0 %187, %v176
      %v189 = vpop.permute.xlu0 %188
      %v191 = vmul.f32 %v179, %v184
      %v192 = vmul.f32 %v180, %v189
      %193 = vset.pattern.permute.xlu0 1
      %194 = vperm.xlu0 %193, %v175
      %v195 = vpop.permute.xlu0 %194
      %197 = vset.pattern.permute.xlu0 1
      %198 = vperm.xlu0 %197, %v176
      %v199 = vpop.permute.xlu0 %198
      %v201 = vadd.f32 %v191, %v195
      %v202 = vadd.f32 %v192, %v199
      %v203 = vmax.f32 %v201, 0.0
      %v204 = vmax.f32 %v202, 0.0
      %v205 = vpack.c.bf16 %v204, %v203
      %v207 = vunpack.c.l.b16 %v205
      %v208 = vunpack.c.h.b16 %v205
      %v209 = vpack.c.b16 %v207, %v207
      %v210 = vpack.c.b16 %v208, %v208
      %vm213 = vcmask 125952
      %214 = vst.msk [vmem:[%s174] sm:$0xf] %vm213, %v209
      %215 = vst.msk [vmem:[%s174 + $0x4] sm:$0xf] %vm213, %v210
      %p216 = scmp.lt.s32.totalorder %s17, 1
      %s217 = scalar_select %p216, %s17, 1
      %p218 = scmp.lt.s32.totalorder %s18, 0
      %s219 = scalar_select %p218, %s18, 0
      %s220 = smul.addr %s217, 2
      %s221 = sadd.s32 %s219, %s220
      %s222 = smul.addr %s221, 4
      %s223 = scalar_lea.vmem %s2, %s222
      // Predicated region
      $region29: #{rsu5_forward.27} parent=27 // pred_check
        %p224 = pneg %p94
      $region30: #{rsu5_forward.27} parent=27 // pred_check_branch
        %226 = sbr.rel (%p224) target = $region32
      $region31: #{rsu5_forward.27} parent=27 // pred_region
        _
      $region32: #{rsu5_forward.27} parent=27 // pred_fallthru
        _
    $region28: #{rsu5_forward.27} parent=5 // pred_fallthru
      _
    %p227 = scmp.le.s32.totalorder 2, %s8
    // Predicated region
    $region33: #{rsu5_forward.27} parent=5 // pred_check
      %p228 = pneg %p227
    $region34: #{rsu5_forward.27} parent=5 // pred_check_branch
      %230 = sbr.rel (%p228) target = $region36
    $region35: #{rsu5_forward.27} parent=5 // pred_region
      %s231 = ssub.s32 %s8, 2
      // Predicated region
      $region37: #{rsu5_forward.27} parent=35 // pred_check
        %p232 = pneg %p100
      $region38: #{rsu5_forward.27} parent=35 // pred_check_branch
        %234 = sbr.rel (%p232) target = $region40
      $region39: #{rsu5_forward.27} parent=35 // pred_region
        %p235 = scmp.lt.s32.totalorder %s19, 1
        %s236 = scalar_select %p235, %s19, 1
        %p237 = scmp.lt.s32.totalorder %s20, 0
        %s238 = scalar_select %p237, %s20, 0
        %s239 = smul.addr %s236, 2
        %s240 = sadd.s32 %s238, %s239
        %s241 = smul.addr %s240, 4
        %s242 = scalar_lea.vmem %s2, %s241
      $region40: #{rsu5_forward.27} parent=35 // pred_fallthru
        _
    $region36: #{rsu5_forward.27} parent=5 // pred_fallthru
      _
  $region6: #{rsu5_forward.27} parent=0 // loop_footer
    %s12 = sadd.s32 1, %s8
  $region7: #{rsu5_forward.27} parent=0 // loop_footer_branch
    %7 = sbr.rel target = $region3
  $region8: #{rsu5_forward.27} parent=0 // loop_exit
    _

// kernel: rsu5_forward.28
$region0: #{rsu5_forward.28}
  #allocation0 [shape = 'u32[]', space=smem, size = 0x4, offset = 0x4, fixed_abs, tag = 'smem constant byte address 0x4 - core index']
  #allocation1 [shape = 'u32[144,128]{1,0:T(1,128)}', space=vmem, size = 0x12000, scoped, tag = 'internal scratch']
  %s0 = inlined_call_operand.vmem [shape: bf16[2,16,4], index: 0, kind: input, shape index: {}]
  %s1 = inlined_call_operand.vmem [shape: bf16[3,16,48], index: 1, kind: input, shape index: {}]
  %s2 = inlined_call_operand.vmem [shape: bf16[2,16,4], index: 2, kind: output, shape index: {0}]
  %s3 = inlined_call_operand.vmem [shape: f32[2,1,16,2], index: 3, kind: output, shape index: {1}]
  %4 = xla_tuple %s2, %s3
  %s5 = sld [smem:[#allocation0]]
  $region49: #{rsu5_forward.28} parent=0
    _
  %s7 = ssub.s32 1, %s5
  %s8 = scalar_select 0, %s7, %s5
  loop: start=0, step=1, limit=4
  $region2: #{rsu5_forward.28} parent=0 // loop_pre_header
    _
  $region3: #{rsu5_forward.28} parent=0 // loop_header
    %s10 = sphi 0, %s14
    %p11 = scmp.ge.s32.totalorder %s10, 4
    %s17 = sphi 0, %s29
    %s18 = sphi 0, %s25
    %s19 = sphi 0, %s17
    %s20 = sphi 0, %s18
    %s21 = sphi 0, %s19
    %s22 = sphi 0, %s20
    %s34 = sphi 0, %s36
    %s37 = sphi 0, %s34
    %s38 = sphi 0, %s37
    %s54 = sphi 0, %s38
    %s58 = sphi 0, %s58
    %s60 = sphi 0, %s58
    %s61 = sphi 0, %s60
    %s75 = sphi 0, %s61
    %s83 = sphi 0, %s85
    %s86 = sphi 0, %s83
    %s87 = sphi 0, %s86
    %s103 = sphi 0, %s87
    %s111 = sphi 0, %s113
    %s114 = sphi 0, %s111
    %s115 = sphi 0, %s114
    %s131 = sphi 0, %s115
  $region4: #{rsu5_forward.28} parent=0 // loop_header_branch
    %13 = sbr.rel (%p11) target = $region8
  $region5: #{rsu5_forward.28} parent=0 // loop_body
    %s15 = ssub.s32 %s10, 1
    %s16 = ssub.s32 %s10, 2
    %s23 = sadd.s32 1, %s18
    %p24 = scmp.ge.s32.totalorder %s23, 1
    %s25 = scalar_select %p24, 0, %s23
    %s26 = sadd.s32 1, %s17
    %s27 = scalar_select %p24, %s26, %s17
    %p28 = scmp.ge.s32.totalorder %s27, 2
    %s29 = scalar_select %p28, 0, %s27
    %s30 = ssub.s32 %s17, %s29
    %s31 = ssub.s32 %s18, %s25
    %s32 = sor.u32 %s30, %s31
    %p33 = scmp.eq.s32.totalorder %s32, 0
    %s35 = sadd.s32 %s34, 1
    %s36 = scalar_select %p33, %s34, %s35
    %p39 = pneg %p33
    %p40 = scmp.eq.s32.totalorder %s10, 1
    %p41 = por %p39, %p40
    %p42 = scmp.ne.s32.totalorder %s34, %s37
    %p43 = scmp.eq.s32.totalorder %s10, 0
    %p44 = por %p42, %p43
    %p45 = scmp.ne.s32.totalorder %s34, %s37
    %p46 = scmp.eq.s32.totalorder %s15, 1
    %p47 = por %p45, %p46
    %p48 = scmp.ne.s32.totalorder %s37, %s38
    %p49 = scmp.eq.s32.totalorder %s15, 0
    %p50 = por %p48, %p49
    %p51 = scmp.ne.s32.totalorder %s37, %s38
    %p52 = scmp.eq.s32.totalorder %s16, 1
    %p53 = por %p51, %p52
    %p55 = scmp.ne.s32.totalorder %s38, %s54
    %p56 = scmp.eq.s32.totalorder %s16, 0
    %p57 = por %p55, %p56
    %s59 = sadd.s32 %s58, 1
    %p62 = scmp.eq.s32.totalorder %s10, 1
    %p63 = scmp.ne.s32.totalorder %s58, %s60
    %p64 = scmp.eq.s32.totalorder %s10, 0
    %p65 = por %p63, %p64
    %p66 = scmp.ne.s32.totalorder %s58, %s60
    %p67 = scmp.eq.s32.totalorder %s15, 1
    %p68 = por %p66, %p67
    %p69 = scmp.ne.s32.totalorder %s60, %s61
    %p70 = scmp.eq.s32.totalorder %s15, 0
    %p71 = por %p69, %p70
    %p72 = scmp.ne.s32.totalorder %s60, %s61
    %p73 = scmp.eq.s32.totalorder %s16, 1
    %p74 = por %p72, %p73
    %p76 = scmp.ne.s32.totalorder %s61, %s75
    %p77 = scmp.eq.s32.totalorder %s16, 0
    %p78 = por %p76, %p77
    %s79 = ssub.s32 %s17, %s29
    %s80 = ssub.s32 %s18, %s25
    %s81 = sor.u32 %s79, %s80
    %p82 = scmp.eq.s32.totalorder %s81, 0
    %s84 = sadd.s32 %s83, 1
    %s85 = scalar_select %p82, %s83, %s84
    %p88 = pneg %p82
    %p89 = scmp.eq.s32.totalorder %s10, 1
    %p90 = por %p88, %p89
    %p91 = scmp.ne.s32.totalorder %s83, %s86
    %p92 = scmp.eq.s32.totalorder %s10, 0
    %p93 = por %p91, %p92
    %p94 = scmp.ne.s32.totalorder %s83, %s86
    %p95 = scmp.eq.s32.totalorder %s15, 1
    %p96 = por %p94, %p95
    %p97 = scmp.ne.s32.totalorder %s86, %s87
    %p98 = scmp.eq.s32.totalorder %s15, 0
    %p99 = por %p97, %p98
    %p100 = scmp.ne.s32.totalorder %s86, %s87
    %p101 = scmp.eq.s32.totalorder %s16, 1
    %p102 = por %p100, %p101
    %p104 = scmp.ne.s32.totalorder %s87, %s103
    %p105 = scmp.eq.s32.totalorder %s16, 0
    %p106 = por %p104, %p105
    %s107 = ssub.s32 %s17, %s29
    %s108 = ssub.s32 %s18, %s25
    %s109 = sor.u32 %s107, %s108
    %p110 = scmp.eq.s32.totalorder %s109, 0
    %s112 = sadd.s32 %s111, 1
    %s113 = scalar_select %p110, %s111, %s112
    %p116 = pneg %p110
    %p117 = scmp.eq.s32.totalorder %s10, 1
    %p118 = por %p116, %p117
    %p119 = scmp.ne.s32.totalorder %s111, %s114
    %p120 = scmp.eq.s32.totalorder %s10, 0
    %p121 = por %p119, %p120
    %p122 = scmp.ne.s32.totalorder %s111, %s114
    %p123 = scmp.eq.s32.totalorder %s15, 1
    %p124 = por %p122, %p123
    %p125 = scmp.ne.s32.totalorder %s114, %s115
    %p126 = scmp.eq.s32.totalorder %s15, 0
    %p127 = por %p125, %p126
    %p128 = scmp.ne.s32.totalorder %s114, %s115
    %p129 = scmp.eq.s32.totalorder %s16, 1
    %p130 = por %p128, %p129
    %p132 = scmp.ne.s32.totalorder %s115, %s131
    %p133 = scmp.eq.s32.totalorder %s16, 0
    %p134 = por %p132, %p133
    %p135 = scmp.le.s32.totalorder 1, %s10
    %p136 = scmp.lt.s32.totalorder %s10, 3
    %p137 = pnand %p135, %p136
    %p138 = pneg %p137
    // Predicated region
    $region9: #{rsu5_forward.28} parent=5 // pred_check
      _
    $region10: #{rsu5_forward.28} parent=5 // pred_check_branch
      %140 = sbr.rel (%p137) target = $region12
    $region11: #{rsu5_forward.28} parent=5 // pred_region
      %s141 = ssub.s32 %s10, 1
      // Predicated region
      $region13: #{rsu5_forward.28} parent=11 // pred_check
        %p142 = pneg %p71
      $region14: #{rsu5_forward.28} parent=11 // pred_check_branch
        %144 = sbr.rel (%p142) target = $region16
      $region15: #{rsu5_forward.28} parent=11 // pred_region
        _
      $region16: #{rsu5_forward.28} parent=11 // pred_fallthru
        _
    $region12: #{rsu5_forward.28} parent=5 // pred_fallthru
      _
    %p145 = scmp.lt.s32.totalorder %s10, 2
    // Predicated region
    $region17: #{rsu5_forward.28} parent=5 // pred_check
      %p146 = pneg %p145
    $region18: #{rsu5_forward.28} parent=5 // pred_check_branch
      %148 = sbr.rel (%p146) target = $region20
    $region19: #{rsu5_forward.28} parent=5 // pred_region
      // Predicated region
      $region21: #{rsu5_forward.28} parent=19 // pred_check
        %p149 = pneg %p44
      $region22: #{rsu5_forward.28} parent=19 // pred_check_branch
        %151 = sbr.rel (%p149) target = $region24
      $region23: #{rsu5_forward.28} parent=19 // pred_region
        %p152 = scmp.lt.s32.totalorder %s17, 1
        %s153 = scalar_select %p152, %s17, 1
        %p154 = scmp.lt.s32.totalorder %s18, 0
        %s155 = scalar_select %p154, %s18, 0
        %s156 = smul.addr %s153, 2
        %s157 = sadd.s32 %s155, %s156
        %s158 = smul.addr %s157, 4
        %s159 = scalar_lea.vmem %s0, %s158
      $region24: #{rsu5_forward.28} parent=19 // pred_fallthru
        _
    $region20: #{rsu5_forward.28} parent=5 // pred_fallthru
      _
    %p160 = scmp.le.s32.totalorder 1, %s10
    %p161 = scmp.lt.s32.totalorder %s10, 3
    %p162 = pnand %p160, %p161
    %p163 = pneg %p162
    // Predicated region
    $region25: #{rsu5_forward.28} parent=5 // pred_check
      _
    $region26: #{rsu5_forward.28} parent=5 // pred_check_branch
      %165 = sbr.rel (%p162) target = $region28
    $region27: #{rsu5_forward.28} parent=5 // pred_region
      %s166 = ssub.s32 %s10, 1
      %p167 = scmp.lt.s32.totalorder %s19, 1
      %s168 = scalar_select %p167, %s19, 1
      %p169 = scmp.lt.s32.totalorder %s20, 0
      %s170 = scalar_select %p169, %s20, 0
      %s171 = smul.addr %s168, 2
      %s172 = sadd.s32 %s170, %s171
      %s173 = smul.addr %s172, 4
      %s174 = scalar_lea.vmem %s0, %s173
      %p175 = pneg %p50
      %p176 = pneg %p47
      %p177 = pneg %p71
      %p178 = pneg %p68
      %p179 = pneg %p99
      %p180 = pneg %p96
      %p181 = scmp.lt.s32.totalorder %s19, 1
      %s182 = scalar_select %p181, %s19, 1
      %p183 = scmp.lt.s32.totalorder %s20, 0
      %s184 = scalar_select %p183, %s20, 0
      %s185 = smul.addr %s182, 2
      %s186 = sadd.s32 %s184, %s185
      %s187 = smul.addr %s186, 4
      %s188 = scalar_lea.vmem %s2, %s187
      %p189 = pneg %p127
      %p190 = pneg %p124
      %p191 = scmp.lt.s32.totalorder %s19, 1
      %s192 = scalar_select %p191, %s19, 1
      %p193 = scmp.lt.s32.totalorder %s20, 0
      %s194 = scalar_select %p193, %s20, 0
      %s195 = smul.addr %s194, 2
      %s196 = smul.addr %s192, 2
      %s197 = sadd.s32 %s195, %s196
      %s198 = smul.addr %s197, 8
      %s199 = scalar_lea.vmem %s3, %s198
      %p200 = scmp.lt.s32.totalorder %s19, 1
      %s201 = scalar_select %p200, %s19, 1
      %p202 = scmp.lt.s32.totalorder %s20, 0
      %s203 = scalar_select %p202, %s20, 0
      %s204 = smul.addr %s201, 2
      %s205 = sadd.s32 %s203, %s204
      %s206 = smul.addr %s205, 4
      %s207 = scalar_lea.vmem %s0, %s206
      %p208 = scmp.lt.s32.totalorder %s19, 1
      %s209 = scalar_select %p208, %s19, 1
      %p210 = scmp.lt.s32.totalorder %s20, 0
      %s211 = scalar_select %p210, %s20, 0
      %s212 = smul.addr %s209, 2
      %s213 = sadd.s32 %s211, %s212
      %s214 = smul.addr %s213, 4
      %s215 = scalar_lea.vmem %s2, %s214
      %p216 = scmp.lt.s32.totalorder %s19, 1
      %s217 = scalar_select %p216, %s19, 1
      %p218 = scmp.lt.s32.totalorder %s20, 0
      %s219 = scalar_select %p218, %s20, 0
      %s220 = smul.addr %s219, 2
      %s221 = smul.addr %s217, 2
      %s222 = sadd.s32 %s220, %s221
      %s223 = smul.addr %s222, 8
      %s224 = scalar_lea.vmem %s3, %s223
      %v226 = vld [vmem:[%s207] sm:$0xf]
      %v227 = vld [vmem:[%s207 + $0x4] sm:$0xf]
      %v230 = vunpack.c.l.b16 %v226
      %v231 = vunpack.c.l.b16 %v227
      %v232 = vpack.c.b16 %v231, %v230
      %233 = vrot.lane.b32.xlu0 %v232, 2
      %v234 = vpop.permute.xlu0 %233
      %vm235 = vcmask 15360
      %v238 = vsel %vm235, 0, %v234
      %240 = vrot.lane.b32.xlu0 %v232, 126
      %v241 = vpop.permute.xlu0 %240
      %v243 = vsel %vm235, %v241, 0
      %v246 = vld [vmem:[%s1] sm:$0xf]
      %v247 = vld [vmem:[%s1 + $0x4] sm:$0xf]
      %v250 = vunpack.c.l.b16 %v246
      %v251 = vunpack.c.l.b16 %v247
      %v252 = vpack.c.b16 %v251, %v250
      %vm253 = vcmask 392192
      %v255 = vsel %vm253, %v252, 0
      %257 = vmatprep.subr.bf16.mxu0 0
      %258 = vmatpush1.bf16.msra.mxu0 %v238
      %259 = vmatprep.subr.bf16.mxu0 0
      %260 = vmatpush1.bf16.msra.mxu0 %v232
      %261 = vmatprep.subr.bf16.mxu0 0
      %262 = vmatpush1.bf16.msra.mxu0 %v243
      %263 = vmatprep.subr.bf16.mxu0 0
      %264 = vmatpush1.bf16.msra.mxu0 0
      %265 = vmatprep.subr.bf16.mxu0 0
      %266 = vmatpush1.bf16.msra.mxu0 0
      %267 = vmatprep.subr.bf16.mxu0 0
      %268 = vmatpush1.bf16.msra.mxu0 0
      %269 = vmatprep.subr.bf16.mxu0 0
      %270 = vmatpush1.bf16.msra.mxu0 0
      %271 = vmatprep.subr.bf16.mxu0 0
      %272 = vmatpush1.bf16.msra.mxu0 0
      %273 = vmatprep.subr.bf16.mxu0 0
      %274 = vmatpush1.bf16.msra.mxu0 0
      %275 = vmatprep.subr.bf16.mxu0 0
      %276 = vmatpush1.bf16.msra.mxu0 0
      %277 = vmatprep.subr.bf16.mxu0 0
      %278 = vmatpush1.bf16.msra.mxu0 0
      %279 = vmatprep.subr.bf16.mxu0 0
      %280 = vmatpush1.bf16.msra.mxu0 0
      %281 = vmatprep.subr.bf16.mxu0 0
      %282 = vmatpush1.bf16.msra.mxu0 0
      %283 = vmatprep.subr.bf16.mxu0 0
      %284 = vmatpush1.bf16.msra.mxu0 0
      %285 = vmatprep.subr.bf16.mxu0 0
      %286 = vmatpush1.bf16.msra.mxu0 0
      %287 = vmatprep.subr.bf16.mxu0 0
      %288 = vmatpush1.bf16.msra.mxu0 0
      %289 = vmatprep.mubr.bf16.mxu0 0
      %290 = vmatmul.mubr.bf16.gmra.mrb[0].mxu0 %v255
      %v291 = vpop.f32.mrb[0].mxu0
      %v292 = vadd.f32 0.0, %v291
      %v293 = vpop.f32.mrb[0].mxu0
      %v294 = vpop.f32.mrb[0].mxu0
      %v295 = vadd.f32 0.0, %v294
      %v296 = vpop.f32.mrb[0].mxu0
      %297 = vdwg.mxu0
      %s298 = scalar_lea.vmem %s1, 8
      %v299 = vld [vmem:[%s298] sm:$0xf]
      %v300 = vld [vmem:[%s298 + $0x4] sm:$0xf]
      %s301 = scalar_lea.vmem %s1, 16
      %v302 = vld [vmem:[%s301] sm:$0xf]
      %v303 = vld [vmem:[%s301 + $0x4] sm:$0xf]
      %v306 = vunpack.c.l.b16 %v302
      %v307 = vunpack.c.l.b16 %v303
      %v308 = vpack.c.b16 %v307, %v306
      %v310 = vsel %vm253, %v308, 0
      %312 = vmatprep.subr.bf16.mxu0 0
      %313 = vmatpush1.bf16.msra.mxu0 %v238
      %314 = vmatprep.subr.bf16.mxu0 0
      %315 = vmatpush1.bf16.msra.mxu0 %v232
      %316 = vmatprep.subr.bf16.mxu0 0
      %317 = vmatpush1.bf16.msra.mxu0 %v243
      %318 = vmatprep.subr.bf16.mxu0 0
      %319 = vmatpush1.bf16.msra.mxu0 0
      %320 = vmatprep.subr.bf16.mxu0 0
      %321 = vmatpush1.bf16.msra.mxu0 0
      %322 = vmatprep.subr.bf16.mxu0 0
      %323 = vmatpush1.bf16.msra.mxu0 0
      %324 = vmatprep.subr.bf16.mxu0 0
      %325 = vmatpush1.bf16.msra.mxu0 0
      %326 = vmatprep.subr.bf16.mxu0 0
      %327 = vmatpush1.bf16.msra.mxu0 0
      %328 = vmatprep.subr.bf16.mxu0 0
      %329 = vmatpush1.bf16.msra.mxu0 0
      %330 = vmatprep.subr.bf16.mxu0 0
      %331 = vmatpush1.bf16.msra.mxu0 0
      %332 = vmatprep.subr.bf16.mxu0 0
      %333 = vmatpush1.bf16.msra.mxu0 0
      %334 = vmatprep.subr.bf16.mxu0 0
      %335 = vmatpush1.bf16.msra.mxu0 0
      %336 = vmatprep.subr.bf16.mxu0 0
      %337 = vmatpush1.bf16.msra.mxu0 0
      %338 = vmatprep.subr.bf16.mxu0 0
      %339 = vmatpush1.bf16.msra.mxu0 0
      %340 = vmatprep.subr.bf16.mxu0 0
      %341 = vmatpush1.bf16.msra.mxu0 0
      %342 = vmatprep.subr.bf16.mxu0 0
      %343 = vmatpush1.bf16.msra.mxu0 0
      %344 = vmatprep.mubr.bf16.mxu0 0
      %345 = vmatmul.mubr.bf16.gmra.mrb[0].mxu0 %v310
      %v346 = vpop.f32.mrb[0].mxu0
      %v347 = vadd.f32 0.0, %v346
      %v348 = vpop.f32.mrb[0].mxu0
      %v349 = vpop.f32.mrb[0].mxu0
      %v350 = vadd.f32 0.0, %v349
      %v351 = vpop.f32.mrb[0].mxu0
      %352 = vdwg.mxu0
      %v353 = vlaneseq
      %v354 = vand.u32 %v353, 127
      %vm355 = vcmp.lt.s32.totalorder %v354, 0
      %v356 = vsub.s32 0, %v354
      %v357 = vsel %vm355, %v356, %v354
      %v358 = vshrl.u32 %v357, 1
      %v359 = vand.u32 %v357, 1
      %v360 = vsub.s32 0, %v359
      %v361 = vsel %vm355, %v360, %v359
      %vm362 = vcmp.ne.s32.totalorder %v361, 0
      %vm363 = vcmp.lt.s32.totalorder %v361, 0
      %vm364 = vmand %vm363, %vm362
      %v365 = vadd.s32 %v361, 2
      %v366 = vsel %vm364, %v365, %v361
      %369 = vrot.lane.b32.xlu0 %v292, 1
      %v370 = vpop.permute.xlu0 %369
      %371 = vrot.lane.b32.xlu0 %v295, 1
      %v372 = vpop.permute.xlu0 %371
      %vm375 = vcmask 7168
      %v376 = vsel %vm375, 0.0, %v370
      %v377 = vsel %vm375, 0.0, %v372
      %380 = vrot.lane.b32.xlu0 %v347, 127
      %v381 = vpop.permute.xlu0 %380
      %382 = vrot.lane.b32.xlu0 %v350, 127
      %v383 = vpop.permute.xlu0 %382
      %vm386 = vcmask 23552
      %v387 = vsel %vm386, %v381, 0.0
      %v388 = vsel %vm386, %v383, 0.0
      %vm389 = vcmp.ge.s32.totalorder %v366, 1
      %v390 = vsel %vm389, 1, 0
      %vm391 = vcmp.eq.s32.totalorder %v390, 1
      %v392 = vsel %vm391, %v376, 0.0
      %v393 = vsel %vm391, %v377, 0.0
      %v396 = vunpack.c.l.b16 %v299
      %v397 = vunpack.c.l.b16 %v300
      %v398 = vpack.c.b16 %v397, %v396
      %v400 = vsel %vm253, %v398, 0
      %402 = vmatprep.subr.bf16.mxu0 0
      %403 = vmatpush1.bf16.msra.mxu0 %v238
      %404 = vmatprep.subr.bf16.mxu0 0
      %405 = vmatpush1.bf16.msra.mxu0 %v232
      %406 = vmatprep.subr.bf16.mxu0 0
      %407 = vmatpush1.bf16.msra.mxu0 %v243
      %408 = vmatprep.subr.bf16.mxu0 0
      %409 = vmatpush1.bf16.msra.mxu0 0
      %410 = vmatprep.subr.bf16.mxu0 0
      %411 = vmatpush1.bf16.msra.mxu0 0
      %412 = vmatprep.subr.bf16.mxu0 0
      %413 = vmatpush1.bf16.msra.mxu0 0
      %414 = vmatprep.subr.bf16.mxu0 0
      %415 = vmatpush1.bf16.msra.mxu0 0
      %416 = vmatprep.subr.bf16.mxu0 0
      %417 = vmatpush1.bf16.msra.mxu0 0
      %418 = vmatprep.subr.bf16.mxu0 0
      %419 = vmatpush1.bf16.msra.mxu0 0
      %420 = vmatprep.subr.bf16.mxu0 0
      %421 = vmatpush1.bf16.msra.mxu0 0
      %422 = vmatprep.subr.bf16.mxu0 0
      %423 = vmatpush1.bf16.msra.mxu0 0
      %424 = vmatprep.subr.bf16.mxu0 0
      %425 = vmatpush1.bf16.msra.mxu0 0
      %426 = vmatprep.subr.bf16.mxu0 0
      %427 = vmatpush1.bf16.msra.mxu0 0
      %428 = vmatprep.subr.bf16.mxu0 0
      %429 = vmatpush1.bf16.msra.mxu0 0
      %430 = vmatprep.subr.bf16.mxu0 0
      %431 = vmatpush1.bf16.msra.mxu0 0
      %432 = vmatprep.subr.bf16.mxu0 0
      %433 = vmatpush1.bf16.msra.mxu0 0
      %434 = vmatprep.mubr.bf16.mxu0 0
      %435 = vmatmul.mubr.bf16.gmra.mrb[0].mxu0 %v400
      %v436 = vpop.f32.mrb[0].mxu0
      %v437 = vadd.f32 %v392, %v436
      %v438 = vpop.f32.mrb[0].mxu0
      %v439 = vpop.f32.mrb[0].mxu0
      %v440 = vadd.f32 %v393, %v439
      %v441 = vpop.f32.mrb[0].mxu0
      %442 = vdwg.mxu0
      %vm443 = vcmp.lt.s32.totalorder %v366, 1
      %v444 = vsel %vm443, 1, 0
      %vm445 = vcmp.eq.s32.totalorder %v444, 1
      %v446 = vsel %vm445, %v387, 0.0
      %v447 = vsel %vm445, %v388, 0.0
      %v448 = vadd.f32 %v437, %v446
      %v449 = vadd.f32 %v440, %v447
      %v450 = vpack.c.bf16 %v449, %v448
      %v452 = vunpack.c.l.b16 %v450
      %v453 = vunpack.c.h.b16 %v450
      %v454 = vpack.c.b16 %v452, %v452
      %v455 = vpack.c.b16 %v453, %v453
      %vm458 = vcmask 27648
      %459 = vst.msk [vmem:[%s215] sm:$0xf] %vm458, %v454
      %460 = vst.msk [vmem:[%s215 + $0x4] sm:$0xf] %vm458, %v455
      %vm461 = vcmask 31744
      %v462 = vsel %vm461, %v448, 0.0
      %463 = vadd.xlane.f32.xlu0 %v462
      %v464 = vpop.xlane.xlu0 %463
      %v465 = vsel %vm461, %v449, 0.0
      %466 = vadd.xlane.f32.xlu0 %v465
      %v467 = vpop.xlane.xlu0 %466
      %v468 = vmul.f32 %v448, %v448
      %v469 = vmul.f32 %v449, %v449
      %v470 = vsel %vm461, %v468, 0.0
      %471 = vadd.xlane.f32.xlu0 %v470
      %v472 = vpop.xlane.xlu0 %471
      %v473 = vsel %vm461, %v469, 0.0
      %474 = vadd.xlane.f32.xlu0 %v473
      %v475 = vpop.xlane.xlu0 %474
      %v476 = vsel %vm375, %v464, %v472
      %v477 = vsel %vm375, %v467, %v475
      %478 = vst.msk [vmem:[%s224] sm:$0xff] %vm235, %v476
      %479 = vst.msk [vmem:[%s224 + $0x8] sm:$0xff] %vm235, %v477
      %p480 = scmp.lt.s32.totalorder %s19, 1
      %s481 = scalar_select %p480, %s19, 1
      %p482 = scmp.lt.s32.totalorder %s20, 0
      %s483 = scalar_select %p482, %s20, 0
      %s484 = smul.addr %s481, 2
      %s485 = sadd.s32 %s483, %s484
      %s486 = smul.addr %s485, 4
      %s487 = scalar_lea.vmem %s2, %s486
      %p488 = scmp.lt.s32.totalorder %s19, 1
      %s489 = scalar_select %p488, %s19, 1
      %p490 = scmp.lt.s32.totalorder %s20, 0
      %s491 = scalar_select %p490, %s20, 0
      %s492 = smul.addr %s491, 2
      %s493 = smul.addr %s489, 2
      %s494 = sadd.s32 %s492, %s493
      %s495 = smul.addr %s494, 8
      %s496 = scalar_lea.vmem %s3, %s495
      // Predicated region
      $region29: #{rsu5_forward.28} parent=27 // pred_check
        %p497 = pneg %p96
      $region30: #{rsu5_forward.28} parent=27 // pred_check_branch
        %499 = sbr.rel (%p497) target = $region32
      $region31: #{rsu5_forward.28} parent=27 // pred_region
        _
      $region32: #{rsu5_forward.28} parent=27 // pred_fallthru
        _
      // Predicated region
      $region33: #{rsu5_forward.28} parent=27 // pred_check
        %p500 = pneg %p124
      $region34: #{rsu5_forward.28} parent=27 // pred_check_branch
        %502 = sbr.rel (%p500) target = $region36
      $region35: #{rsu5_forward.28} parent=27 // pred_region
        _
      $region36: #{rsu5_forward.28} parent=27 // pred_fallthru
        _
    $region28: #{rsu5_forward.28} parent=5 // pred_fallthru
      _
    %p503 = scmp.le.s32.totalorder 2, %s10
    // Predicated region
    $region37: #{rsu5_forward.28} parent=5 // pred_check
      %p504 = pneg %p503
    $region38: #{rsu5_forward.28} parent=5 // pred_check_branch
      %506 = sbr.rel (%p504) target = $region40
    $region39: #{rsu5_forward.28} parent=5 // pred_region
      %s507 = ssub.s32 %s10, 2
      // Predicated region
      $region41: #{rsu5_forward.28} parent=39 // pred_check
        %p508 = pneg %p102
      $region42: #{rsu5_forward.28} parent=39 // pred_check_branch
        %510 = sbr.rel (%p508) target = $region44
      $region43: #{rsu5_forward.28} parent=39 // pred_region
        %p511 = scmp.lt.s32.totalorder %s21, 1
        %s512 = scalar_select %p511, %s21, 1
        %p513 = scmp.lt.s32.totalorder %s22, 0
        %s514 = scalar_select %p513, %s22, 0
        %s515 = smul.addr %s512, 2
        %s516 = sadd.s32 %s514, %s515
        %s517 = smul.addr %s516, 4
        %s518 = scalar_lea.vmem %s2, %s517
      $region44: #{rsu5_forward.28} parent=39 // pred_fallthru
        _
      // Predicated region
      $region45: #{rsu5_forward.28} parent=39 // pred_check
        %p519 = pneg %p130
      $region46: #{rsu5_forward.28} parent=39 // pred_check_branch
        %521 = sbr.rel (%p519) target = $region48
      $region47: #{rsu5_forward.28} parent=39 // pred_region
        %p522 = scmp.lt.s32.totalorder %s21, 1
        %s523 = scalar_select %p522, %s21, 1
        %p524 = scmp.lt.s32.totalorder %s22, 0
        %s525 = scalar_select %p524, %s22, 0
        %s526 = smul.addr %s525, 2
        %s527 = smul.addr %s523, 2
        %s528 = sadd.s32 %s526, %s527
        %s529 = smul.addr %s528, 8
        %s530 = scalar_lea.vmem %s3, %s529
      $region48: #{rsu5_forward.28} parent=39 // pred_fallthru
        _
    $region40: #{rsu5_forward.28} parent=5 // pred_fallthru
      _
  $region6: #{rsu5_forward.28} parent=0 // loop_footer
    %s14 = sadd.s32 1, %s10
  $region7: #{rsu5_forward.28} parent=0 // loop_footer_branch
    %9 = sbr.rel target = $region3
  $region8: #{rsu5_forward.28} parent=0 // loop_exit
    _

// kernel: rsu5_forward.29
$region0: #{rsu5_forward.29}
  #allocation0 [shape = 'u32[]', space=smem, size = 0x4, offset = 0x4, fixed_abs, tag = 'smem constant byte address 0x4 - core index']
  #allocation1 [shape = 'u32[144,128]{1,0:T(1,128)}', space=vmem, size = 0x12000, scoped, tag = 'internal scratch']
  %s0 = inlined_call_operand.vmem [shape: bf16[2,16,4], index: 0, kind: input, shape index: {}]
  %s1 = inlined_call_operand.vmem [shape: f32[16,2], index: 1, kind: input, shape index: {}]
  %s2 = inlined_call_operand.vmem [shape: bf16[2,16,4], index: 2, kind: output, shape index: {}]
  %s3 = sld [smem:[#allocation0]]
  $region41: #{rsu5_forward.29} parent=0
    _
  %s5 = ssub.s32 1, %s3
  %s6 = scalar_select 0, %s5, %s3
  loop: start=0, step=1, limit=4
  $region2: #{rsu5_forward.29} parent=0 // loop_pre_header
    _
  $region3: #{rsu5_forward.29} parent=0 // loop_header
    %s8 = sphi 0, %s12
    %p9 = scmp.ge.s32.totalorder %s8, 4
    %s15 = sphi 0, %s27
    %s16 = sphi 0, %s23
    %s17 = sphi 0, %s15
    %s18 = sphi 0, %s16
    %s19 = sphi 0, %s17
    %s20 = sphi 0, %s18
    %s32 = sphi 0, %s34
    %s35 = sphi 0, %s32
    %s36 = sphi 0, %s35
    %s52 = sphi 0, %s36
    %s56 = sphi 0, %s56
    %s58 = sphi 0, %s56
    %s59 = sphi 0, %s58
    %s73 = sphi 0, %s59
    %s81 = sphi 0, %s83
    %s84 = sphi 0, %s81
    %s85 = sphi 0, %s84
    %s101 = sphi 0, %s85
  $region4: #{rsu5_forward.29} parent=0 // loop_header_branch
    %11 = sbr.rel (%p9) target = $region8
  $region5: #{rsu5_forward.29} parent=0 // loop_body
    %s13 = ssub.s32 %s8, 1
    %s14 = ssub.s32 %s8, 2
    %s21 = sadd.s32 1, %s16
    %p22 = scmp.ge.s32.totalorder %s21, 1
    %s23 = scalar_select %p22, 0, %s21
    %s24 = sadd.s32 1, %s15
    %s25 = scalar_select %p22, %s24, %s15
    %p26 = scmp.ge.s32.totalorder %s25, 2
    %s27 = scalar_select %p26, 0, %s25
    %s28 = ssub.s32 %s15, %s27
    %s29 = ssub.s32 %s16, %s23
    %s30 = sor.u32 %s28, %s29
    %p31 = scmp.eq.s32.totalorder %s30, 0
    %s33 = sadd.s32 %s32, 1
    %s34 = scalar_select %p31, %s32, %s33
    %p37 = pneg %p31
    %p38 = scmp.eq.s32.totalorder %s8, 1
    %p39 = por %p37, %p38
    %p40 = scmp.ne.s32.totalorder %s32, %s35
    %p41 = scmp.eq.s32.totalorder %s8, 0
    %p42 = por %p40, %p41
    %p43 = scmp.ne.s32.totalorder %s32, %s35
    %p44 = scmp.eq.s32.totalorder %s13, 1
    %p45 = por %p43, %p44
    %p46 = scmp.ne.s32.totalorder %s35, %s36
    %p47 = scmp.eq.s32.totalorder %s13, 0
    %p48 = por %p46, %p47
    %p49 = scmp.ne.s32.totalorder %s35, %s36
    %p50 = scmp.eq.s32.totalorder %s14, 1
    %p51 = por %p49, %p50
    %p53 = scmp.ne.s32.totalorder %s36, %s52
    %p54 = scmp.eq.s32.totalorder %s14, 0
    %p55 = por %p53, %p54
    %s57 = sadd.s32 %s56, 1
    %p60 = scmp.eq.s32.totalorder %s8, 1
    %p61 = scmp.ne.s32.totalorder %s56, %s58
    %p62 = scmp.eq.s32.totalorder %s8, 0
    %p63 = por %p61, %p62
    %p64 = scmp.ne.s32.totalorder %s56, %s58
    %p65 = scmp.eq.s32.totalorder %s13, 1
    %p66 = por %p64, %p65
    %p67 = scmp.ne.s32.totalorder %s58, %s59
    %p68 = scmp.eq.s32.totalorder %s13, 0
    %p69 = por %p67, %p68
    %p70 = scmp.ne.s32.totalorder %s58, %s59
    %p71 = scmp.eq.s32.totalorder %s14, 1
    %p72 = por %p70, %p71
    %p74 = scmp.ne.s32.totalorder %s59, %s73
    %p75 = scmp.eq.s32.totalorder %s14, 0
    %p76 = por %p74, %p75
    %s77 = ssub.s32 %s15, %s27
    %s78 = ssub.s32 %s16, %s23
    %s79 = sor.u32 %s77, %s78
    %p80 = scmp.eq.s32.totalorder %s79, 0
    %s82 = sadd.s32 %s81, 1
    %s83 = scalar_select %p80, %s81, %s82
    %p86 = pneg %p80
    %p87 = scmp.eq.s32.totalorder %s8, 1
    %p88 = por %p86, %p87
    %p89 = scmp.ne.s32.totalorder %s81, %s84
    %p90 = scmp.eq.s32.totalorder %s8, 0
    %p91 = por %p89, %p90
    %p92 = scmp.ne.s32.totalorder %s81, %s84
    %p93 = scmp.eq.s32.totalorder %s13, 1
    %p94 = por %p92, %p93
    %p95 = scmp.ne.s32.totalorder %s84, %s85
    %p96 = scmp.eq.s32.totalorder %s13, 0
    %p97 = por %p95, %p96
    %p98 = scmp.ne.s32.totalorder %s84, %s85
    %p99 = scmp.eq.s32.totalorder %s14, 1
    %p100 = por %p98, %p99
    %p102 = scmp.ne.s32.totalorder %s85, %s101
    %p103 = scmp.eq.s32.totalorder %s14, 0
    %p104 = por %p102, %p103
    %p105 = scmp.le.s32.totalorder 1, %s8
    %p106 = scmp.lt.s32.totalorder %s8, 3
    %p107 = pnand %p105, %p106
    %p108 = pneg %p107
    // Predicated region
    $region9: #{rsu5_forward.29} parent=5 // pred_check
      _
    $region10: #{rsu5_forward.29} parent=5 // pred_check_branch
      %110 = sbr.rel (%p107) target = $region12
    $region11: #{rsu5_forward.29} parent=5 // pred_region
      %s111 = ssub.s32 %s8, 1
      // Predicated region
      $region13: #{rsu5_forward.29} parent=11 // pred_check
        %p112 = pneg %p69
      $region14: #{rsu5_forward.29} parent=11 // pred_check_branch
        %114 = sbr.rel (%p112) target = $region16
      $region15: #{rsu5_forward.29} parent=11 // pred_region
        _
      $region16: #{rsu5_forward.29} parent=11 // pred_fallthru
        _
    $region12: #{rsu5_forward.29} parent=5 // pred_fallthru
      _
    %p115 = scmp.lt.s32.totalorder %s8, 2
    // Predicated region
    $region17: #{rsu5_forward.29} parent=5 // pred_check
      %p116 = pneg %p115
    $region18: #{rsu5_forward.29} parent=5 // pred_check_branch
      %118 = sbr.rel (%p116) target = $region20
    $region19: #{rsu5_forward.29} parent=5 // pred_region
      // Predicated region
      $region21: #{rsu5_forward.29} parent=19 // pred_check
        %p119 = pneg %p42
      $region22: #{rsu5_forward.29} parent=19 // pred_check_branch
        %121 = sbr.rel (%p119) target = $region24
      $region23: #{rsu5_forward.29} parent=19 // pred_region
        %p122 = scmp.lt.s32.totalorder %s15, 1
        %s123 = scalar_select %p122, %s15, 1
        %p124 = scmp.lt.s32.totalorder %s16, 0
        %s125 = scalar_select %p124, %s16, 0
        %s126 = smul.addr %s123, 2
        %s127 = sadd.s32 %s125, %s126
        %s128 = smul.addr %s127, 4
        %s129 = scalar_lea.vmem %s0, %s128
      $region24: #{rsu5_forward.29} parent=19 // pred_fallthru
        _
    $region20: #{rsu5_forward.29} parent=5 // pred_fallthru
      _
    %p130 = scmp.le.s32.totalorder 1, %s8
    %p131 = scmp.lt.s32.totalorder %s8, 3
    %p132 = pnand %p130, %p131
    %p133 = pneg %p132
    // Predicated region
    $region25: #{rsu5_forward.29} parent=5 // pred_check
      _
    $region26: #{rsu5_forward.29} parent=5 // pred_check_branch
      %135 = sbr.rel (%p132) target = $region28
    $region27: #{rsu5_forward.29} parent=5 // pred_region
      %s136 = ssub.s32 %s8, 1
      %p137 = scmp.lt.s32.totalorder %s17, 1
      %s138 = scalar_select %p137, %s17, 1
      %p139 = scmp.lt.s32.totalorder %s18, 0
      %s140 = scalar_select %p139, %s18, 0
      %s141 = smul.addr %s138, 2
      %s142 = sadd.s32 %s140, %s141
      %s143 = smul.addr %s142, 4
      %s144 = scalar_lea.vmem %s0, %s143
      %p145 = pneg %p48
      %p146 = pneg %p45
      %p147 = pneg %p69
      %p148 = pneg %p66
      %p149 = pneg %p97
      %p150 = pneg %p94
      %p151 = scmp.lt.s32.totalorder %s17, 1
      %s152 = scalar_select %p151, %s17, 1
      %p153 = scmp.lt.s32.totalorder %s18, 0
      %s154 = scalar_select %p153, %s18, 0
      %s155 = smul.addr %s152, 2
      %s156 = sadd.s32 %s154, %s155
      %s157 = smul.addr %s156, 4
      %s158 = scalar_lea.vmem %s2, %s157
      %p159 = scmp.lt.s32.totalorder %s17, 1
      %s160 = scalar_select %p159, %s17, 1
      %p161 = scmp.lt.s32.totalorder %s18, 0
      %s162 = scalar_select %p161, %s18, 0
      %s163 = smul.addr %s160, 2
      %s164 = sadd.s32 %s162, %s163
      %s165 = smul.addr %s164, 4
      %s166 = scalar_lea.vmem %s0, %s165
      %p167 = scmp.lt.s32.totalorder %s17, 1
      %s168 = scalar_select %p167, %s17, 1
      %p169 = scmp.lt.s32.totalorder %s18, 0
      %s170 = scalar_select %p169, %s18, 0
      %s171 = smul.addr %s168, 2
      %s172 = sadd.s32 %s170, %s171
      %s173 = smul.addr %s172, 4
      %s174 = scalar_lea.vmem %s2, %s173
      %v175 = vld [vmem:[%s1] sm:$0xff]
      %v176 = vld [vmem:[%s1 + $0x8] sm:$0xff]
      %v177 = vld [vmem:[%s166] sm:$0xf]
      %v178 = vld [vmem:[%s166 + $0x4] sm:$0xf]
      %v179 = vunpack.c.l.bf16 %v177
      %v180 = vunpack.c.l.bf16 %v178
      %182 = vset.pattern.permute.xlu0 0
      %183 = vperm.xlu0 %182, %v175
      %v184 = vpop.permute.xlu0 %183
      %187 = vset.pattern.permute.xlu0 0
      %188 = vperm.xlu0 %187, %v176
      %v189 = vpop.permute.xlu0 %188
      %v191 = vmul.f32 %v179, %v184
      %v192 = vmul.f32 %v180, %v189
      %193 = vset.pattern.permute.xlu0 1
      %194 = vperm.xlu0 %193, %v175
      %v195 = vpop.permute.xlu0 %194
      %197 = vset.pattern.permute.xlu0 1
      %198 = vperm.xlu0 %197, %v176
      %v199 = vpop.permute.xlu0 %198
      %v201 = vadd.f32 %v191, %v195
      %v202 = vadd.f32 %v192, %v199
      %v203 = vmax.f32 %v201, 0.0
      %v204 = vmax.f32 %v202, 0.0
      %v205 = vpack.c.bf16 %v204, %v203
      %v207 = vunpack.c.l.b16 %v205
      %v208 = vunpack.c.h.b16 %v205
      %v209 = vpack.c.b16 %v207, %v207
      %v210 = vpack.c.b16 %v208, %v208
      %vm213 = vcmask 27648
      %214 = vst.msk [vmem:[%s174] sm:$0xf] %vm213, %v209
      %215 = vst.msk [vmem:[%s174 + $0x4] sm:$0xf] %vm213, %v210
      %p216 = scmp.lt.s32.totalorder %s17, 1
      %s217 = scalar_select %p216, %s17, 1
      %p218 = scmp.lt.s32.totalorder %s18, 0
      %s219 = scalar_select %p218, %s18, 0
      %s220 = smul.addr %s217, 2
      %s221 = sadd.s32 %s219, %s220
      %s222 = smul.addr %s221, 4
      %s223 = scalar_lea.vmem %s2, %s222
      // Predicated region
      $region29: #{rsu5_forward.29} parent=27 // pred_check
        %p224 = pneg %p94
      $region30: #{rsu5_forward.29} parent=27 // pred_check_branch
        %226 = sbr.rel (%p224) target = $region32
      $region31: #{rsu5_forward.29} parent=27 // pred_region
        _
      $region32: #{rsu5_forward.29} parent=27 // pred_fallthru
        _
    $region28: #{rsu5_forward.29} parent=5 // pred_fallthru
      _
    %p227 = scmp.le.s32.totalorder 2, %s8
    // Predicated region
    $region33: #{rsu5_forward.29} parent=5 // pred_check
      %p228 = pneg %p227
    $region34: #{rsu5_forward.29} parent=5 // pred_check_branch
      %230 = sbr.rel (%p228) target = $region36
    $region35: #{rsu5_forward.29} parent=5 // pred_region
      %s231 = ssub.s32 %s8, 2
      // Predicated region
      $region37: #{rsu5_forward.29} parent=35 // pred_check
        %p232 = pneg %p100
      $region38: #{rsu5_forward.29} parent=35 // pred_check_branch
        %234 = sbr.rel (%p232) target = $region40
      $region39: #{rsu5_forward.29} parent=35 // pred_region
        %p235 = scmp.lt.s32.totalorder %s19, 1
        %s236 = scalar_select %p235, %s19, 1
        %p237 = scmp.lt.s32.totalorder %s20, 0
        %s238 = scalar_select %p237, %s20, 0
        %s239 = smul.addr %s236, 2
        %s240 = sadd.s32 %s238, %s239
        %s241 = smul.addr %s240, 4
        %s242 = scalar_lea.vmem %s2, %s241
      $region40: #{rsu5_forward.29} parent=35 // pred_fallthru
        _
    $region36: #{rsu5_forward.29} parent=5 // pred_fallthru
      _
  $region6: #{rsu5_forward.29} parent=0 // loop_footer
    %s12 = sadd.s32 1, %s8
  $region7: #{rsu5_forward.29} parent=0 // loop_footer_branch
    %7 = sbr.rel target = $region3
  $region8: #{rsu5_forward.29} parent=0 // loop_exit
    _

// kernel: rsu5_forward.30
$region0: #{rsu5_forward.30}
  #allocation0 [shape = 'u32[]', space=smem, size = 0x4, offset = 0x4, fixed_abs, tag = 'smem constant byte address 0x4 - core index']
  #allocation1 [shape = 'u32[144,128]{1,0:T(1,128)}', space=vmem, size = 0x12000, scoped, tag = 'internal scratch']
  %s0 = inlined_call_operand.vmem [shape: bf16[2,16,4], index: 0, kind: input, shape index: {}]
  %s1 = inlined_call_operand.vmem [shape: bf16[3,16,48], index: 1, kind: input, shape index: {}]
  %s2 = inlined_call_operand.vmem [shape: bf16[2,16,4], index: 2, kind: output, shape index: {0}]
  %s3 = inlined_call_operand.vmem [shape: f32[2,1,16,2], index: 3, kind: output, shape index: {1}]
  %4 = xla_tuple %s2, %s3
  %s5 = sld [smem:[#allocation0]]
  $region49: #{rsu5_forward.30} parent=0
    _
  %s7 = ssub.s32 1, %s5
  %s8 = scalar_select 0, %s7, %s5
  loop: start=0, step=1, limit=4
  $region2: #{rsu5_forward.30} parent=0 // loop_pre_header
    _
  $region3: #{rsu5_forward.30} parent=0 // loop_header
    %s10 = sphi 0, %s14
    %p11 = scmp.ge.s32.totalorder %s10, 4
    %s17 = sphi 0, %s29
    %s18 = sphi 0, %s25
    %s19 = sphi 0, %s17
    %s20 = sphi 0, %s18
    %s21 = sphi 0, %s19
    %s22 = sphi 0, %s20
    %s34 = sphi 0, %s36
    %s37 = sphi 0, %s34
    %s38 = sphi 0, %s37
    %s54 = sphi 0, %s38
    %s58 = sphi 0, %s58
    %s60 = sphi 0, %s58
    %s61 = sphi 0, %s60
    %s75 = sphi 0, %s61
    %s83 = sphi 0, %s85
    %s86 = sphi 0, %s83
    %s87 = sphi 0, %s86
    %s103 = sphi 0, %s87
    %s111 = sphi 0, %s113
    %s114 = sphi 0, %s111
    %s115 = sphi 0, %s114
    %s131 = sphi 0, %s115
  $region4: #{rsu5_forward.30} parent=0 // loop_header_branch
    %13 = sbr.rel (%p11) target = $region8
  $region5: #{rsu5_forward.30} parent=0 // loop_body
    %s15 = ssub.s32 %s10, 1
    %s16 = ssub.s32 %s10, 2
    %s23 = sadd.s32 1, %s18
    %p24 = scmp.ge.s32.totalorder %s23, 1
    %s25 = scalar_select %p24, 0, %s23
    %s26 = sadd.s32 1, %s17
    %s27 = scalar_select %p24, %s26, %s17
    %p28 = scmp.ge.s32.totalorder %s27, 2
    %s29 = scalar_select %p28, 0, %s27
    %s30 = ssub.s32 %s17, %s29
    %s31 = ssub.s32 %s18, %s25
    %s32 = sor.u32 %s30, %s31
    %p33 = scmp.eq.s32.totalorder %s32, 0
    %s35 = sadd.s32 %s34, 1
    %s36 = scalar_select %p33, %s34, %s35
    %p39 = pneg %p33
    %p40 = scmp.eq.s32.totalorder %s10, 1
    %p41 = por %p39, %p40
    %p42 = scmp.ne.s32.totalorder %s34, %s37
    %p43 = scmp.eq.s32.totalorder %s10, 0
    %p44 = por %p42, %p43
    %p45 = scmp.ne.s32.totalorder %s34, %s37
    %p46 = scmp.eq.s32.totalorder %s15, 1
    %p47 = por %p45, %p46
    %p48 = scmp.ne.s32.totalorder %s37, %s38
    %p49 = scmp.eq.s32.totalorder %s15, 0
    %p50 = por %p48, %p49
    %p51 = scmp.ne.s32.totalorder %s37, %s38
    %p52 = scmp.eq.s32.totalorder %s16, 1
    %p53 = por %p51, %p52
    %p55 = scmp.ne.s32.totalorder %s38, %s54
    %p56 = scmp.eq.s32.totalorder %s16, 0
    %p57 = por %p55, %p56
    %s59 = sadd.s32 %s58, 1
    %p62 = scmp.eq.s32.totalorder %s10, 1
    %p63 = scmp.ne.s32.totalorder %s58, %s60
    %p64 = scmp.eq.s32.totalorder %s10, 0
    %p65 = por %p63, %p64
    %p66 = scmp.ne.s32.totalorder %s58, %s60
    %p67 = scmp.eq.s32.totalorder %s15, 1
    %p68 = por %p66, %p67
    %p69 = scmp.ne.s32.totalorder %s60, %s61
    %p70 = scmp.eq.s32.totalorder %s15, 0
    %p71 = por %p69, %p70
    %p72 = scmp.ne.s32.totalorder %s60, %s61
    %p73 = scmp.eq.s32.totalorder %s16, 1
    %p74 = por %p72, %p73
    %p76 = scmp.ne.s32.totalorder %s61, %s75
    %p77 = scmp.eq.s32.totalorder %s16, 0
    %p78 = por %p76, %p77
    %s79 = ssub.s32 %s17, %s29
    %s80 = ssub.s32 %s18, %s25
    %s81 = sor.u32 %s79, %s80
    %p82 = scmp.eq.s32.totalorder %s81, 0
    %s84 = sadd.s32 %s83, 1
    %s85 = scalar_select %p82, %s83, %s84
    %p88 = pneg %p82
    %p89 = scmp.eq.s32.totalorder %s10, 1
    %p90 = por %p88, %p89
    %p91 = scmp.ne.s32.totalorder %s83, %s86
    %p92 = scmp.eq.s32.totalorder %s10, 0
    %p93 = por %p91, %p92
    %p94 = scmp.ne.s32.totalorder %s83, %s86
    %p95 = scmp.eq.s32.totalorder %s15, 1
    %p96 = por %p94, %p95
    %p97 = scmp.ne.s32.totalorder %s86, %s87
    %p98 = scmp.eq.s32.totalorder %s15, 0
    %p99 = por %p97, %p98
    %p100 = scmp.ne.s32.totalorder %s86, %s87
    %p101 = scmp.eq.s32.totalorder %s16, 1
    %p102 = por %p100, %p101
    %p104 = scmp.ne.s32.totalorder %s87, %s103
    %p105 = scmp.eq.s32.totalorder %s16, 0
    %p106 = por %p104, %p105
    %s107 = ssub.s32 %s17, %s29
    %s108 = ssub.s32 %s18, %s25
    %s109 = sor.u32 %s107, %s108
    %p110 = scmp.eq.s32.totalorder %s109, 0
    %s112 = sadd.s32 %s111, 1
    %s113 = scalar_select %p110, %s111, %s112
    %p116 = pneg %p110
    %p117 = scmp.eq.s32.totalorder %s10, 1
    %p118 = por %p116, %p117
    %p119 = scmp.ne.s32.totalorder %s111, %s114
    %p120 = scmp.eq.s32.totalorder %s10, 0
    %p121 = por %p119, %p120
    %p122 = scmp.ne.s32.totalorder %s111, %s114
    %p123 = scmp.eq.s32.totalorder %s15, 1
    %p124 = por %p122, %p123
    %p125 = scmp.ne.s32.totalorder %s114, %s115
    %p126 = scmp.eq.s32.totalorder %s15, 0
    %p127 = por %p125, %p126
    %p128 = scmp.ne.s32.totalorder %s114, %s115
    %p129 = scmp.eq.s32.totalorder %s16, 1
    %p130 = por %p128, %p129
    %p132 = scmp.ne.s32.totalorder %s115, %s131
    %p133 = scmp.eq.s32.totalorder %s16, 0
    %p134 = por %p132, %p133
    %p135 = scmp.le.s32.totalorder 1, %s10
    %p136 = scmp.lt.s32.totalorder %s10, 3
    %p137 = pnand %p135, %p136
    %p138 = pneg %p137
    // Predicated region
    $region9: #{rsu5_forward.30} parent=5 // pred_check
      _
    $region10: #{rsu5_forward.30} parent=5 // pred_check_branch
      %140 = sbr.rel (%p137) target = $region12
    $region11: #{rsu5_forward.30} parent=5 // pred_region
      %s141 = ssub.s32 %s10, 1
      // Predicated region
      $region13: #{rsu5_forward.30} parent=11 // pred_check
        %p142 = pneg %p71
      $region14: #{rsu5_forward.30} parent=11 // pred_check_branch
        %144 = sbr.rel (%p142) target = $region16
      $region15: #{rsu5_forward.30} parent=11 // pred_region
        _
      $region16: #{rsu5_forward.30} parent=11 // pred_fallthru
        _
    $region12: #{rsu5_forward.30} parent=5 // pred_fallthru
      _
    %p145 = scmp.lt.s32.totalorder %s10, 2
    // Predicated region
    $region17: #{rsu5_forward.30} parent=5 // pred_check
      %p146 = pneg %p145
    $region18: #{rsu5_forward.30} parent=5 // pred_check_branch
      %148 = sbr.rel (%p146) target = $region20
    $region19: #{rsu5_forward.30} parent=5 // pred_region
      // Predicated region
      $region21: #{rsu5_forward.30} parent=19 // pred_check
        %p149 = pneg %p44
      $region22: #{rsu5_forward.30} parent=19 // pred_check_branch
        %151 = sbr.rel (%p149) target = $region24
      $region23: #{rsu5_forward.30} parent=19 // pred_region
        %p152 = scmp.lt.s32.totalorder %s17, 1
        %s153 = scalar_select %p152, %s17, 1
        %p154 = scmp.lt.s32.totalorder %s18, 0
        %s155 = scalar_select %p154, %s18, 0
        %s156 = smul.addr %s153, 2
        %s157 = sadd.s32 %s155, %s156
        %s158 = smul.addr %s157, 4
        %s159 = scalar_lea.vmem %s0, %s158
      $region24: #{rsu5_forward.30} parent=19 // pred_fallthru
        _
    $region20: #{rsu5_forward.30} parent=5 // pred_fallthru
      _
    %p160 = scmp.le.s32.totalorder 1, %s10
    %p161 = scmp.lt.s32.totalorder %s10, 3
    %p162 = pnand %p160, %p161
    %p163 = pneg %p162
    // Predicated region
    $region25: #{rsu5_forward.30} parent=5 // pred_check
      _
    $region26: #{rsu5_forward.30} parent=5 // pred_check_branch
      %165 = sbr.rel (%p162) target = $region28
    $region27: #{rsu5_forward.30} parent=5 // pred_region
      %s166 = ssub.s32 %s10, 1
      %p167 = scmp.lt.s32.totalorder %s19, 1
      %s168 = scalar_select %p167, %s19, 1
      %p169 = scmp.lt.s32.totalorder %s20, 0
      %s170 = scalar_select %p169, %s20, 0
      %s171 = smul.addr %s168, 2
      %s172 = sadd.s32 %s170, %s171
      %s173 = smul.addr %s172, 4
      %s174 = scalar_lea.vmem %s0, %s173
      %p175 = pneg %p50
      %p176 = pneg %p47
      %p177 = pneg %p71
      %p178 = pneg %p68
      %p179 = pneg %p99
      %p180 = pneg %p96
      %p181 = scmp.lt.s32.totalorder %s19, 1
      %s182 = scalar_select %p181, %s19, 1
      %p183 = scmp.lt.s32.totalorder %s20, 0
      %s184 = scalar_select %p183, %s20, 0
      %s185 = smul.addr %s182, 2
      %s186 = sadd.s32 %s184, %s185
      %s187 = smul.addr %s186, 4
      %s188 = scalar_lea.vmem %s2, %s187
      %p189 = pneg %p127
      %p190 = pneg %p124
      %p191 = scmp.lt.s32.totalorder %s19, 1
      %s192 = scalar_select %p191, %s19, 1
      %p193 = scmp.lt.s32.totalorder %s20, 0
      %s194 = scalar_select %p193, %s20, 0
      %s195 = smul.addr %s194, 2
      %s196 = smul.addr %s192, 2
      %s197 = sadd.s32 %s195, %s196
      %s198 = smul.addr %s197, 8
      %s199 = scalar_lea.vmem %s3, %s198
      %p200 = scmp.lt.s32.totalorder %s19, 1
      %s201 = scalar_select %p200, %s19, 1
      %p202 = scmp.lt.s32.totalorder %s20, 0
      %s203 = scalar_select %p202, %s20, 0
      %s204 = smul.addr %s201, 2
      %s205 = sadd.s32 %s203, %s204
      %s206 = smul.addr %s205, 4
      %s207 = scalar_lea.vmem %s0, %s206
      %p208 = scmp.lt.s32.totalorder %s19, 1
      %s209 = scalar_select %p208, %s19, 1
      %p210 = scmp.lt.s32.totalorder %s20, 0
      %s211 = scalar_select %p210, %s20, 0
      %s212 = smul.addr %s209, 2
      %s213 = sadd.s32 %s211, %s212
      %s214 = smul.addr %s213, 4
      %s215 = scalar_lea.vmem %s2, %s214
      %p216 = scmp.lt.s32.totalorder %s19, 1
      %s217 = scalar_select %p216, %s19, 1
      %p218 = scmp.lt.s32.totalorder %s20, 0
      %s219 = scalar_select %p218, %s20, 0
      %s220 = smul.addr %s219, 2
      %s221 = smul.addr %s217, 2
      %s222 = sadd.s32 %s220, %s221
      %s223 = smul.addr %s222, 8
      %s224 = scalar_lea.vmem %s3, %s223
      %v226 = vld [vmem:[%s207] sm:$0xf]
      %v227 = vld [vmem:[%s207 + $0x4] sm:$0xf]
      %v230 = vunpack.c.l.b16 %v226
      %v231 = vunpack.c.l.b16 %v227
      %v232 = vpack.c.b16 %v231, %v230
      %v234 = vld [vmem:[%s1] sm:$0xf]
      %v235 = vld [vmem:[%s1 + $0x4] sm:$0xf]
      %v238 = vunpack.c.l.b16 %v234
      %v239 = vunpack.c.l.b16 %v235
      %v240 = vpack.c.b16 %v239, %v238
      %vm241 = vcmask 392192
      %v243 = vsel %vm241, %v240, 0
      %245 = vmatprep.subr.bf16.mxu0 0
      %246 = vmatpush1.bf16.msra.mxu0 0
      %247 = vmatprep.subr.bf16.mxu0 0
      %248 = vmatpush1.bf16.msra.mxu0 %v232
      %249 = vmatprep.subr.bf16.mxu0 0
      %250 = vmatpush1.bf16.msra.mxu0 0
      %251 = vmatprep.subr.bf16.mxu0 0
      %252 = vmatpush1.bf16.msra.mxu0 0
      %253 = vmatprep.subr.bf16.mxu0 0
      %254 = vmatpush1.bf16.msra.mxu0 0
      %255 = vmatprep.subr.bf16.mxu0 0
      %256 = vmatpush1.bf16.msra.mxu0 0
      %257 = vmatprep.subr.bf16.mxu0 0
      %258 = vmatpush1.bf16.msra.mxu0 0
      %259 = vmatprep.subr.bf16.mxu0 0
      %260 = vmatpush1.bf16.msra.mxu0 0
      %261 = vmatprep.subr.bf16.mxu0 0
      %262 = vmatpush1.bf16.msra.mxu0 0
      %263 = vmatprep.subr.bf16.mxu0 0
      %264 = vmatpush1.bf16.msra.mxu0 0
      %265 = vmatprep.subr.bf16.mxu0 0
      %266 = vmatpush1.bf16.msra.mxu0 0
      %267 = vmatprep.subr.bf16.mxu0 0
      %268 = vmatpush1.bf16.msra.mxu0 0
      %269 = vmatprep.subr.bf16.mxu0 0
      %270 = vmatpush1.bf16.msra.mxu0 0
      %271 = vmatprep.subr.bf16.mxu0 0
      %272 = vmatpush1.bf16.msra.mxu0 0
      %273 = vmatprep.subr.bf16.mxu0 0
      %274 = vmatpush1.bf16.msra.mxu0 0
      %275 = vmatprep.subr.bf16.mxu0 0
      %276 = vmatpush1.bf16.msra.mxu0 0
      %277 = vmatprep.mubr.bf16.mxu0 0
      %278 = vmatmul.mubr.bf16.gmra.mrb[0].mxu0 %v243
      %v279 = vpop.f32.mrb[0].mxu0
      %v280 = vadd.f32 0.0, %v279
      %v281 = vpop.f32.mrb[0].mxu0
      %v282 = vpop.f32.mrb[0].mxu0
      %v283 = vadd.f32 0.0, %v282
      %v284 = vpop.f32.mrb[0].mxu0
      %285 = vdwg.mxu0
      %s286 = scalar_lea.vmem %s1, 8
      %v287 = vld [vmem:[%s286] sm:$0xf]
      %v288 = vld [vmem:[%s286 + $0x4] sm:$0xf]
      %s289 = scalar_lea.vmem %s1, 16
      %v290 = vld [vmem:[%s289] sm:$0xf]
      %v291 = vld [vmem:[%s289 + $0x4] sm:$0xf]
      %v294 = vunpack.c.l.b16 %v290
      %v295 = vunpack.c.l.b16 %v291
      %v296 = vpack.c.b16 %v295, %v294
      %v298 = vsel %vm241, %v296, 0
      %300 = vmatprep.subr.bf16.mxu0 0
      %301 = vmatpush1.bf16.msra.mxu0 0
      %302 = vmatprep.subr.bf16.mxu0 0
      %303 = vmatpush1.bf16.msra.mxu0 %v232
      %304 = vmatprep.subr.bf16.mxu0 0
      %305 = vmatpush1.bf16.msra.mxu0 0
      %306 = vmatprep.subr.bf16.mxu0 0
      %307 = vmatpush1.bf16.msra.mxu0 0
      %308 = vmatprep.subr.bf16.mxu0 0
      %309 = vmatpush1.bf16.msra.mxu0 0
      %310 = vmatprep.subr.bf16.mxu0 0
      %311 = vmatpush1.bf16.msra.mxu0 0
      %312 = vmatprep.subr.bf16.mxu0 0
      %313 = vmatpush1.bf16.msra.mxu0 0
      %314 = vmatprep.subr.bf16.mxu0 0
      %315 = vmatpush1.bf16.msra.mxu0 0
      %316 = vmatprep.subr.bf16.mxu0 0
      %317 = vmatpush1.bf16.msra.mxu0 0
      %318 = vmatprep.subr.bf16.mxu0 0
      %319 = vmatpush1.bf16.msra.mxu0 0
      %320 = vmatprep.subr.bf16.mxu0 0
      %321 = vmatpush1.bf16.msra.mxu0 0
      %322 = vmatprep.subr.bf16.mxu0 0
      %323 = vmatpush1.bf16.msra.mxu0 0
      %324 = vmatprep.subr.bf16.mxu0 0
      %325 = vmatpush1.bf16.msra.mxu0 0
      %326 = vmatprep.subr.bf16.mxu0 0
      %327 = vmatpush1.bf16.msra.mxu0 0
      %328 = vmatprep.subr.bf16.mxu0 0
      %329 = vmatpush1.bf16.msra.mxu0 0
      %330 = vmatprep.subr.bf16.mxu0 0
      %331 = vmatpush1.bf16.msra.mxu0 0
      %332 = vmatprep.mubr.bf16.mxu0 0
      %333 = vmatmul.mubr.bf16.gmra.mrb[0].mxu0 %v298
      %v334 = vpop.f32.mrb[0].mxu0
      %v335 = vadd.f32 0.0, %v334
      %v336 = vpop.f32.mrb[0].mxu0
      %v337 = vpop.f32.mrb[0].mxu0
      %v338 = vadd.f32 0.0, %v337
      %v339 = vpop.f32.mrb[0].mxu0
      %340 = vdwg.mxu0
      %v341 = vlaneseq
      %v342 = vand.u32 %v341, 127
      %vm343 = vcmp.lt.s32.totalorder %v342, 0
      %v344 = vsub.s32 0, %v342
      %v345 = vsel %vm343, %v344, %v342
      %v346 = vshrl.u32 %v345, 1
      %v347 = vand.u32 %v345, 1
      %v348 = vsub.s32 0, %v347
      %v349 = vsel %vm343, %v348, %v347
      %vm350 = vcmp.ne.s32.totalorder %v349, 0
      %vm351 = vcmp.lt.s32.totalorder %v349, 0
      %vm352 = vmand %vm351, %vm350
      %v353 = vadd.s32 %v349, 2
      %v354 = vsel %vm352, %v353, %v349
      %357 = vrot.lane.b32.xlu0 %v280, 2
      %v358 = vpop.permute.xlu0 %357
      %359 = vrot.lane.b32.xlu0 %v283, 2
      %v360 = vpop.permute.xlu0 %359
      %vm363 = vcmask 15360
      %v364 = vsel %vm363, 0.0, %v358
      %v365 = vsel %vm363, 0.0, %v360
      %368 = vrot.lane.b32.xlu0 %v335, 126
      %v369 = vpop.permute.xlu0 %368
      %370 = vrot.lane.b32.xlu0 %v338, 126
      %v371 = vpop.permute.xlu0 %370
      %v374 = vsel %vm363, %v369, 0.0
      %v375 = vsel %vm363, %v371, 0.0
      %vm376 = vcmp.ge.s32.totalorder %v354, 2
      %v377 = vsel %vm376, 1, 0
      %vm378 = vcmp.eq.s32.totalorder %v377, 1
      %v379 = vsel %vm378, %v364, 0.0
      %v380 = vsel %vm378, %v365, 0.0
      %v383 = vunpack.c.l.b16 %v287
      %v384 = vunpack.c.l.b16 %v288
      %v385 = vpack.c.b16 %v384, %v383
      %v387 = vsel %vm241, %v385, 0
      %389 = vmatprep.subr.bf16.mxu0 0
      %390 = vmatpush1.bf16.msra.mxu0 0
      %391 = vmatprep.subr.bf16.mxu0 0
      %392 = vmatpush1.bf16.msra.mxu0 %v232
      %393 = vmatprep.subr.bf16.mxu0 0
      %394 = vmatpush1.bf16.msra.mxu0 0
      %395 = vmatprep.subr.bf16.mxu0 0
      %396 = vmatpush1.bf16.msra.mxu0 0
      %397 = vmatprep.subr.bf16.mxu0 0
      %398 = vmatpush1.bf16.msra.mxu0 0
      %399 = vmatprep.subr.bf16.mxu0 0
      %400 = vmatpush1.bf16.msra.mxu0 0
      %401 = vmatprep.subr.bf16.mxu0 0
      %402 = vmatpush1.bf16.msra.mxu0 0
      %403 = vmatprep.subr.bf16.mxu0 0
      %404 = vmatpush1.bf16.msra.mxu0 0
      %405 = vmatprep.subr.bf16.mxu0 0
      %406 = vmatpush1.bf16.msra.mxu0 0
      %407 = vmatprep.subr.bf16.mxu0 0
      %408 = vmatpush1.bf16.msra.mxu0 0
      %409 = vmatprep.subr.bf16.mxu0 0
      %410 = vmatpush1.bf16.msra.mxu0 0
      %411 = vmatprep.subr.bf16.mxu0 0
      %412 = vmatpush1.bf16.msra.mxu0 0
      %413 = vmatprep.subr.bf16.mxu0 0
      %414 = vmatpush1.bf16.msra.mxu0 0
      %415 = vmatprep.subr.bf16.mxu0 0
      %416 = vmatpush1.bf16.msra.mxu0 0
      %417 = vmatprep.subr.bf16.mxu0 0
      %418 = vmatpush1.bf16.msra.mxu0 0
      %419 = vmatprep.subr.bf16.mxu0 0
      %420 = vmatpush1.bf16.msra.mxu0 0
      %421 = vmatprep.mubr.bf16.mxu0 0
      %422 = vmatmul.mubr.bf16.gmra.mrb[0].mxu0 %v387
      %v423 = vpop.f32.mrb[0].mxu0
      %v424 = vadd.f32 %v379, %v423
      %v425 = vpop.f32.mrb[0].mxu0
      %v426 = vpop.f32.mrb[0].mxu0
      %v427 = vadd.f32 %v380, %v426
      %v428 = vpop.f32.mrb[0].mxu0
      %429 = vdwg.mxu0
      %vm430 = vcmp.lt.s32.totalorder %v354, 0
      %v431 = vsel %vm430, 1, 0
      %vm432 = vcmp.eq.s32.totalorder %v431, 1
      %v433 = vsel %vm432, %v374, 0.0
      %v434 = vsel %vm432, %v375, 0.0
      %v435 = vadd.f32 %v424, %v433
      %v436 = vadd.f32 %v427, %v434
      %v437 = vpack.c.bf16 %v436, %v435
      %v439 = vunpack.c.l.b16 %v437
      %v440 = vunpack.c.h.b16 %v437
      %v441 = vpack.c.b16 %v439, %v439
      %v442 = vpack.c.b16 %v440, %v440
      %vm445 = vcmask 27648
      %446 = vst.msk [vmem:[%s215] sm:$0xf] %vm445, %v441
      %447 = vst.msk [vmem:[%s215 + $0x4] sm:$0xf] %vm445, %v442
      %vm448 = vcmask 31744
      %v449 = vsel %vm448, %v435, 0.0
      %450 = vadd.xlane.f32.xlu0 %v449
      %v451 = vpop.xlane.xlu0 %450
      %v452 = vsel %vm448, %v436, 0.0
      %453 = vadd.xlane.f32.xlu0 %v452
      %v454 = vpop.xlane.xlu0 %453
      %v455 = vmul.f32 %v435, %v435
      %v456 = vmul.f32 %v436, %v436
      %v457 = vsel %vm448, %v455, 0.0
      %458 = vadd.xlane.f32.xlu0 %v457
      %v459 = vpop.xlane.xlu0 %458
      %v460 = vsel %vm448, %v456, 0.0
      %461 = vadd.xlane.f32.xlu0 %v460
      %v462 = vpop.xlane.xlu0 %461
      %vm463 = vcmask 7168
      %v464 = vsel %vm463, %v451, %v459
      %v465 = vsel %vm463, %v454, %v462
      %466 = vst.msk [vmem:[%s224] sm:$0xff] %vm363, %v464
      %467 = vst.msk [vmem:[%s224 + $0x8] sm:$0xff] %vm363, %v465
      %p468 = scmp.lt.s32.totalorder %s19, 1
      %s469 = scalar_select %p468, %s19, 1
      %p470 = scmp.lt.s32.totalorder %s20, 0
      %s471 = scalar_select %p470, %s20, 0
      %s472 = smul.addr %s469, 2
      %s473 = sadd.s32 %s471, %s472
      %s474 = smul.addr %s473, 4
      %s475 = scalar_lea.vmem %s2, %s474
      %p476 = scmp.lt.s32.totalorder %s19, 1
      %s477 = scalar_select %p476, %s19, 1
      %p478 = scmp.lt.s32.totalorder %s20, 0
      %s479 = scalar_select %p478, %s20, 0
      %s480 = smul.addr %s479, 2
      %s481 = smul.addr %s477, 2
      %s482 = sadd.s32 %s480, %s481
      %s483 = smul.addr %s482, 8
      %s484 = scalar_lea.vmem %s3, %s483
      // Predicated region
      $region29: #{rsu5_forward.30} parent=27 // pred_check
        %p485 = pneg %p96
      $region30: #{rsu5_forward.30} parent=27 // pred_check_branch
        %487 = sbr.rel (%p485) target = $region32
      $region31: #{rsu5_forward.30} parent=27 // pred_region
        _
      $region32: #{rsu5_forward.30} parent=27 // pred_fallthru
        _
      // Predicated region
      $region33: #{rsu5_forward.30} parent=27 // pred_check
        %p488 = pneg %p124
      $region34: #{rsu5_forward.30} parent=27 // pred_check_branch
        %490 = sbr.rel (%p488) target = $region36
      $region35: #{rsu5_forward.30} parent=27 // pred_region
        _
      $region36: #{rsu5_forward.30} parent=27 // pred_fallthru
        _
    $region28: #{rsu5_forward.30} parent=5 // pred_fallthru
      _
    %p491 = scmp.le.s32.totalorder 2, %s10
    // Predicated region
    $region37: #{rsu5_forward.30} parent=5 // pred_check
      %p492 = pneg %p491
    $region38: #{rsu5_forward.30} parent=5 // pred_check_branch
      %494 = sbr.rel (%p492) target = $region40
    $region39: #{rsu5_forward.30} parent=5 // pred_region
      %s495 = ssub.s32 %s10, 2
      // Predicated region
      $region41: #{rsu5_forward.30} parent=39 // pred_check
        %p496 = pneg %p102
      $region42: #{rsu5_forward.30} parent=39 // pred_check_branch
        %498 = sbr.rel (%p496) target = $region44
      $region43: #{rsu5_forward.30} parent=39 // pred_region
        %p499 = scmp.lt.s32.totalorder %s21, 1
        %s500 = scalar_select %p499, %s21, 1
        %p501 = scmp.lt.s32.totalorder %s22, 0
        %s502 = scalar_select %p501, %s22, 0
        %s503 = smul.addr %s500, 2
        %s504 = sadd.s32 %s502, %s503
        %s505 = smul.addr %s504, 4
        %s506 = scalar_lea.vmem %s2, %s505
      $region44: #{rsu5_forward.30} parent=39 // pred_fallthru
        _
      // Predicated region
      $region45: #{rsu5_forward.30} parent=39 // pred_check
        %p507 = pneg %p130
      $region46: #{rsu5_forward.30} parent=39 // pred_check_branch
        %509 = sbr.rel (%p507) target = $region48
      $region47: #{rsu5_forward.30} parent=39 // pred_region
        %p510 = scmp.lt.s32.totalorder %s21, 1
        %s511 = scalar_select %p510, %s21, 1
        %p512 = scmp.lt.s32.totalorder %s22, 0
        %s513 = scalar_select %p512, %s22, 0
        %s514 = smul.addr %s513, 2
        %s515 = smul.addr %s511, 2
        %s516 = sadd.s32 %s514, %s515
        %s517 = smul.addr %s516, 8
        %s518 = scalar_lea.vmem %s3, %s517
      $region48: #{rsu5_forward.30} parent=39 // pred_fallthru
        _
    $region40: #{rsu5_forward.30} parent=5 // pred_fallthru
      _
  $region6: #{rsu5_forward.30} parent=0 // loop_footer
    %s14 = sadd.s32 1, %s10
  $region7: #{rsu5_forward.30} parent=0 // loop_footer_branch
    %9 = sbr.rel target = $region3
  $region8: #{rsu5_forward.30} parent=0 // loop_exit
    _

// kernel: rsu5_forward.32
$region0: #{rsu5_forward.32}
  #allocation0 [shape = 'u32[]', space=smem, size = 0x4, offset = 0x4, fixed_abs, tag = 'smem constant byte address 0x4 - core index']
  #allocation1 [shape = 'u32[144,128]{1,0:T(1,128)}', space=vmem, size = 0x12000, scoped, tag = 'internal scratch']
  %s0 = inlined_call_operand.vmem [shape: bf16[2,16,4], index: 0, kind: input, shape index: {}]
  %s1 = inlined_call_operand.vmem [shape: bf16[2,16,4], index: 1, kind: input, shape index: {}]
  %s2 = inlined_call_operand.vmem [shape: bf16[3,16,96], index: 2, kind: input, shape index: {}]
  %s3 = inlined_call_operand.vmem [shape: bf16[2,16,4], index: 3, kind: output, shape index: {0}]
  %s4 = inlined_call_operand.vmem [shape: f32[2,1,16,2], index: 4, kind: output, shape index: {1}]
  %5 = xla_tuple %s3, %s4
  %s6 = sld [smem:[#allocation0]]
  $region53: #{rsu5_forward.32} parent=0
    _
  %s8 = ssub.s32 1, %s6
  %s9 = scalar_select 0, %s8, %s6
  loop: start=0, step=1, limit=4
  $region2: #{rsu5_forward.32} parent=0 // loop_pre_header
    _
  $region3: #{rsu5_forward.32} parent=0 // loop_header
    %s11 = sphi 0, %s15
    %p12 = scmp.ge.s32.totalorder %s11, 4
    %s18 = sphi 0, %s30
    %s19 = sphi 0, %s26
    %s20 = sphi 0, %s18
    %s21 = sphi 0, %s19
    %s22 = sphi 0, %s20
    %s23 = sphi 0, %s21
    %s35 = sphi 0, %s37
    %s38 = sphi 0, %s35
    %s39 = sphi 0, %s38
    %s55 = sphi 0, %s39
    %s63 = sphi 0, %s65
    %s66 = sphi 0, %s63
    %s67 = sphi 0, %s66
    %s83 = sphi 0, %s67
    %s87 = sphi 0, %s87
    %s89 = sphi 0, %s87
    %s90 = sphi 0, %s89
    %s104 = sphi 0, %s90
    %s112 = sphi 0, %s114
    %s115 = sphi 0, %s112
    %s116 = sphi 0, %s115
    %s132 = sphi 0, %s116
    %s140 = sphi 0, %s142
    %s143 = sphi 0, %s140
    %s144 = sphi 0, %s143
    %s160 = sphi 0, %s144
  $region4: #{rsu5_forward.32} parent=0 // loop_header_branch
    %14 = sbr.rel (%p12) target = $region8
  $region5: #{rsu5_forward.32} parent=0 // loop_body
    %s16 = ssub.s32 %s11, 1
    %s17 = ssub.s32 %s11, 2
    %s24 = sadd.s32 1, %s19
    %p25 = scmp.ge.s32.totalorder %s24, 1
    %s26 = scalar_select %p25, 0, %s24
    %s27 = sadd.s32 1, %s18
    %s28 = scalar_select %p25, %s27, %s18
    %p29 = scmp.ge.s32.totalorder %s28, 2
    %s30 = scalar_select %p29, 0, %s28
    %s31 = ssub.s32 %s18, %s30
    %s32 = ssub.s32 %s19, %s26
    %s33 = sor.u32 %s31, %s32
    %p34 = scmp.eq.s32.totalorder %s33, 0
    %s36 = sadd.s32 %s35, 1
    %s37 = scalar_select %p34, %s35, %s36
    %p40 = pneg %p34
    %p41 = scmp.eq.s32.totalorder %s11, 1
    %p42 = por %p40, %p41
    %p43 = scmp.ne.s32.totalorder %s35, %s38
    %p44 = scmp.eq.s32.totalorder %s11, 0
    %p45 = por %p43, %p44
    %p46 = scmp.ne.s32.totalorder %s35, %s38
    %p47 = scmp.eq.s32.totalorder %s16, 1
    %p48 = por %p46, %p47
    %p49 = scmp.ne.s32.totalorder %s38, %s39
    %p50 = scmp.eq.s32.totalorder %s16, 0
    %p51 = por %p49, %p50
    %p52 = scmp.ne.s32.totalorder %s38, %s39
    %p53 = scmp.eq.s32.totalorder %s17, 1
    %p54 = por %p52, %p53
    %p56 = scmp.ne.s32.totalorder %s39, %s55
    %p57 = scmp.eq.s32.totalorder %s17, 0
    %p58 = por %p56, %p57
    %s59 = ssub.s32 %s18, %s30
    %s60 = ssub.s32 %s19, %s26
    %s61 = sor.u32 %s59, %s60
    %p62 = scmp.eq.s32.totalorder %s61, 0
    %s64 = sadd.s32 %s63, 1
    %s65 = scalar_select %p62, %s63, %s64
    %p68 = pneg %p62
    %p69 = scmp.eq.s32.totalorder %s11, 1
    %p70 = por %p68, %p69
    %p71 = scmp.ne.s32.totalorder %s63, %s66
    %p72 = scmp.eq.s32.totalorder %s11, 0
    %p73 = por %p71, %p72
    %p74 = scmp.ne.s32.totalorder %s63, %s66
    %p75 = scmp.eq.s32.totalorder %s16, 1
    %p76 = por %p74, %p75
    %p77 = scmp.ne.s32.totalorder %s66, %s67
    %p78 = scmp.eq.s32.totalorder %s16, 0
    %p79 = por %p77, %p78
    %p80 = scmp.ne.s32.totalorder %s66, %s67
    %p81 = scmp.eq.s32.totalorder %s17, 1
    %p82 = por %p80, %p81
    %p84 = scmp.ne.s32.totalorder %s67, %s83
    %p85 = scmp.eq.s32.totalorder %s17, 0
    %p86 = por %p84, %p85
    %s88 = sadd.s32 %s87, 1
    %p91 = scmp.eq.s32.totalorder %s11, 1
    %p92 = scmp.ne.s32.totalorder %s87, %s89
    %p93 = scmp.eq.s32.totalorder %s11, 0
    %p94 = por %p92, %p93
    %p95 = scmp.ne.s32.totalorder %s87, %s89
    %p96 = scmp.eq.s32.totalorder %s16, 1
    %p97 = por %p95, %p96
    %p98 = scmp.ne.s32.totalorder %s89, %s90
    %p99 = scmp.eq.s32.totalorder %s16, 0
    %p100 = por %p98, %p99
    %p101 = scmp.ne.s32.totalorder %s89, %s90
    %p102 = scmp.eq.s32.totalorder %s17, 1
    %p103 = por %p101, %p102
    %p105 = scmp.ne.s32.totalorder %s90, %s104
    %p106 = scmp.eq.s32.totalorder %s17, 0
    %p107 = por %p105, %p106
    %s108 = ssub.s32 %s18, %s30
    %s109 = ssub.s32 %s19, %s26
    %s110 = sor.u32 %s108, %s109
    %p111 = scmp.eq.s32.totalorder %s110, 0
    %s113 = sadd.s32 %s112, 1
    %s114 = scalar_select %p111, %s112, %s113
    %p117 = pneg %p111
    %p118 = scmp.eq.s32.totalorder %s11, 1
    %p119 = por %p117, %p118
    %p120 = scmp.ne.s32.totalorder %s112, %s115
    %p121 = scmp.eq.s32.totalorder %s11, 0
    %p122 = por %p120, %p121
    %p123 = scmp.ne.s32.totalorder %s112, %s115
    %p124 = scmp.eq.s32.totalorder %s16, 1
    %p125 = por %p123, %p124
    %p126 = scmp.ne.s32.totalorder %s115, %s116
    %p127 = scmp.eq.s32.totalorder %s16, 0
    %p128 = por %p126, %p127
    %p129 = scmp.ne.s32.totalorder %s115, %s116
    %p130 = scmp.eq.s32.totalorder %s17, 1
    %p131 = por %p129, %p130
    %p133 = scmp.ne.s32.totalorder %s116, %s132
    %p134 = scmp.eq.s32.totalorder %s17, 0
    %p135 = por %p133, %p134
    %s136 = ssub.s32 %s18, %s30
    %s137 = ssub.s32 %s19, %s26
    %s138 = sor.u32 %s136, %s137
    %p139 = scmp.eq.s32.totalorder %s138, 0
    %s141 = sadd.s32 %s140, 1
    %s142 = scalar_select %p139, %s140, %s141
    %p145 = pneg %p139
    %p146 = scmp.eq.s32.totalorder %s11, 1
    %p147 = por %p145, %p146
    %p148 = scmp.ne.s32.totalorder %s140, %s143
    %p149 = scmp.eq.s32.totalorder %s11, 0
    %p150 = por %p148, %p149
    %p151 = scmp.ne.s32.totalorder %s140, %s143
    %p152 = scmp.eq.s32.totalorder %s16, 1
    %p153 = por %p151, %p152
    %p154 = scmp.ne.s32.totalorder %s143, %s144
    %p155 = scmp.eq.s32.totalorder %s16, 0
    %p156 = por %p154, %p155
    %p157 = scmp.ne.s32.totalorder %s143, %s144
    %p158 = scmp.eq.s32.totalorder %s17, 1
    %p159 = por %p157, %p158
    %p161 = scmp.ne.s32.totalorder %s144, %s160
    %p162 = scmp.eq.s32.totalorder %s17, 0
    %p163 = por %p161, %p162
    %p164 = scmp.le.s32.totalorder 1, %s11
    %p165 = scmp.lt.s32.totalorder %s11, 3
    %p166 = pnand %p164, %p165
    %p167 = pneg %p166
    // Predicated region
    $region9: #{rsu5_forward.32} parent=5 // pred_check
      _
    $region10: #{rsu5_forward.32} parent=5 // pred_check_branch
      %169 = sbr.rel (%p166) target = $region12
    $region11: #{rsu5_forward.32} parent=5 // pred_region
      %s170 = ssub.s32 %s11, 1
      // Predicated region
      $region13: #{rsu5_forward.32} parent=11 // pred_check
        %p171 = pneg %p100
      $region14: #{rsu5_forward.32} parent=11 // pred_check_branch
        %173 = sbr.rel (%p171) target = $region16
      $region15: #{rsu5_forward.32} parent=11 // pred_region
        _
      $region16: #{rsu5_forward.32} parent=11 // pred_fallthru
        _
    $region12: #{rsu5_forward.32} parent=5 // pred_fallthru
      _
    %p174 = scmp.lt.s32.totalorder %s11, 2
    // Predicated region
    $region17: #{rsu5_forward.32} parent=5 // pred_check
      %p175 = pneg %p174
    $region18: #{rsu5_forward.32} parent=5 // pred_check_branch
      %177 = sbr.rel (%p175) target = $region20
    $region19: #{rsu5_forward.32} parent=5 // pred_region
      // Predicated region
      $region21: #{rsu5_forward.32} parent=19 // pred_check
        %p178 = pneg %p45
      $region22: #{rsu5_forward.32} parent=19 // pred_check_branch
        %180 = sbr.rel (%p178) target = $region24
      $region23: #{rsu5_forward.32} parent=19 // pred_region
        %p181 = scmp.lt.s32.totalorder %s18, 1
        %s182 = scalar_select %p181, %s18, 1
        %p183 = scmp.lt.s32.totalorder %s19, 0
        %s184 = scalar_select %p183, %s19, 0
        %s185 = smul.addr %s182, 2
        %s186 = sadd.s32 %s184, %s185
        %s187 = smul.addr %s186, 4
        %s188 = scalar_lea.vmem %s0, %s187
      $region24: #{rsu5_forward.32} parent=19 // pred_fallthru
        _
      // Predicated region
      $region25: #{rsu5_forward.32} parent=19 // pred_check
        %p189 = pneg %p73
      $region26: #{rsu5_forward.32} parent=19 // pred_check_branch
        %191 = sbr.rel (%p189) target = $region28
      $region27: #{rsu5_forward.32} parent=19 // pred_region
        %p192 = scmp.lt.s32.totalorder %s18, 1
        %s193 = scalar_select %p192, %s18, 1
        %p194 = scmp.lt.s32.totalorder %s19, 0
        %s195 = scalar_select %p194, %s19, 0
        %s196 = smul.addr %s193, 2
        %s197 = sadd.s32 %s195, %s196
        %s198 = smul.addr %s197, 4
        %s199 = scalar_lea.vmem %s1, %s198
      $region28: #{rsu5_forward.32} parent=19 // pred_fallthru
        _
    $region20: #{rsu5_forward.32} parent=5 // pred_fallthru
      _
    %p200 = scmp.le.s32.totalorder 1, %s11
    %p201 = scmp.lt.s32.totalorder %s11, 3
    %p202 = pnand %p200, %p201
    %p203 = pneg %p202
    // Predicated region
    $region29: #{rsu5_forward.32} parent=5 // pred_check
      _
    $region30: #{rsu5_forward.32} parent=5 // pred_check_branch
      %205 = sbr.rel (%p202) target = $region32
    $region31: #{rsu5_forward.32} parent=5 // pred_region
      %s206 = ssub.s32 %s11, 1
      %p207 = scmp.lt.s32.totalorder %s20, 1
      %s208 = scalar_select %p207, %s20, 1
      %p209 = scmp.lt.s32.totalorder %s21, 0
      %s210 = scalar_select %p209, %s21, 0
      %s211 = smul.addr %s208, 2
      %s212 = sadd.s32 %s210, %s211
      %s213 = smul.addr %s212, 4
      %s214 = scalar_lea.vmem %s0, %s213
      %p215 = pneg %p51
      %p216 = pneg %p48
      %p217 = scmp.lt.s32.totalorder %s20, 1
      %s218 = scalar_select %p217, %s20, 1
      %p219 = scmp.lt.s32.totalorder %s21, 0
      %s220 = scalar_select %p219, %s21, 0
      %s221 = smul.addr %s218, 2
      %s222 = sadd.s32 %s220, %s221
      %s223 = smul.addr %s222, 4
      %s224 = scalar_lea.vmem %s1, %s223
      %p225 = pneg %p79
      %p226 = pneg %p76
      %p227 = pneg %p100
      %p228 = pneg %p97
      %p229 = pneg %p128
      %p230 = pneg %p125
      %p231 = scmp.lt.s32.totalorder %s20, 1
      %s232 = scalar_select %p231, %s20, 1
      %p233 = scmp.lt.s32.totalorder %s21, 0
      %s234 = scalar_select %p233, %s21, 0
      %s235 = smul.addr %s232, 2
      %s236 = sadd.s32 %s234, %s235
      %s237 = smul.addr %s236, 4
      %s238 = scalar_lea.vmem %s3, %s237
      %p239 = pneg %p156
      %p240 = pneg %p153
      %p241 = scmp.lt.s32.totalorder %s20, 1
      %s242 = scalar_select %p241, %s20, 1
      %p243 = scmp.lt.s32.totalorder %s21, 0
      %s244 = scalar_select %p243, %s21, 0
      %s245 = smul.addr %s244, 2
      %s246 = smul.addr %s242, 2
      %s247 = sadd.s32 %s245, %s246
      %s248 = smul.addr %s247, 8
      %s249 = scalar_lea.vmem %s4, %s248
      %p250 = scmp.lt.s32.totalorder %s20, 1
      %s251 = scalar_select %p250, %s20, 1
      %p252 = scmp.lt.s32.totalorder %s21, 0
      %s253 = scalar_select %p252, %s21, 0
      %s254 = smul.addr %s251, 2
      %s255 = sadd.s32 %s253, %s254
      %s256 = smul.addr %s255, 4
      %s257 = scalar_lea.vmem %s0, %s256
      %p258 = scmp.lt.s32.totalorder %s20, 1
      %s259 = scalar_select %p258, %s20, 1
      %p260 = scmp.lt.s32.totalorder %s21, 0
      %s261 = scalar_select %p260, %s21, 0
      %s262 = smul.addr %s259, 2
      %s263 = sadd.s32 %s261, %s262
      %s264 = smul.addr %s263, 4
      %s265 = scalar_lea.vmem %s1, %s264
      %p266 = scmp.lt.s32.totalorder %s20, 1
      %s267 = scalar_select %p266, %s20, 1
      %p268 = scmp.lt.s32.totalorder %s21, 0
      %s269 = scalar_select %p268, %s21, 0
      %s270 = smul.addr %s267, 2
      %s271 = sadd.s32 %s269, %s270
      %s272 = smul.addr %s271, 4
      %s273 = scalar_lea.vmem %s3, %s272
      %p274 = scmp.lt.s32.totalorder %s20, 1
      %s275 = scalar_select %p274, %s20, 1
      %p276 = scmp.lt.s32.totalorder %s21, 0
      %s277 = scalar_select %p276, %s21, 0
      %s278 = smul.addr %s277, 2
      %s279 = smul.addr %s275, 2
      %s280 = sadd.s32 %s278, %s279
      %s281 = smul.addr %s280, 8
      %s282 = scalar_lea.vmem %s4, %s281
      %v284 = vld [vmem:[%s257] sm:$0xf]
      %v285 = vld [vmem:[%s257 + $0x4] sm:$0xf]
      %v288 = vunpack.c.l.b16 %v284
      %v289 = vunpack.c.l.b16 %v285
      %v290 = vpack.c.b16 %v289, %v288
      %291 = vrot.lane.b32.xlu0 %v290, 2
      %v292 = vpop.permute.xlu0 %291
      %vm293 = vcmask 15360
      %v296 = vsel %vm293, 0, %v292
      %298 = vrot.lane.b32.xlu0 %v290, 126
      %v299 = vpop.permute.xlu0 %298
      %v301 = vsel %vm293, %v299, 0
      %v303 = vld [vmem:[%s265] sm:$0xf]
      %v304 = vld [vmem:[%s265 + $0x4] sm:$0xf]
      %v307 = vunpack.c.l.b16 %v303
      %v308 = vunpack.c.l.b16 %v304
      %v309 = vpack.c.b16 %v308, %v307
      %310 = vrot.lane.b32.xlu0 %v309, 2
      %v311 = vpop.permute.xlu0 %310
      %v313 = vsel %vm293, 0, %v311
      %315 = vrot.lane.b32.xlu0 %v309, 126
      %v316 = vpop.permute.xlu0 %315
      %v318 = vsel %vm293, %v316, 0
      %v322 = vld [vmem:[%s2] sm:$0xf]
      %v323 = vld [vmem:[%s2 + $0x4] sm:$0xf]
      %v326 = vunpack.c.l.b16 %v322
      %v327 = vunpack.c.l.b16 %v323
      %v328 = vpack.c.b16 %v327, %v326
      %vm329 = vcmask 785408
      %v331 = vsel %vm329, %v328, 0
      %333 = vmatprep.subr.bf16.mxu0 0
      %334 = vmatpush1.bf16.msra.mxu0 %v296
      %335 = vmatprep.subr.bf16.mxu0 0
      %336 = vmatpush1.bf16.msra.mxu0 %v290
      %337 = vmatprep.subr.bf16.mxu0 0
      %338 = vmatpush1.bf16.msra.mxu0 %v301
      %339 = vmatprep.subr.bf16.mxu0 0
      %340 = vmatpush1.bf16.msra.mxu0 %v313
      %341 = vmatprep.subr.bf16.mxu0 0
      %342 = vmatpush1.bf16.msra.mxu0 %v309
      %343 = vmatprep.subr.bf16.mxu0 0
      %344 = vmatpush1.bf16.msra.mxu0 %v318
      %345 = vmatprep.subr.bf16.mxu0 0
      %346 = vmatpush1.bf16.msra.mxu0 0
      %347 = vmatprep.subr.bf16.mxu0 0
      %348 = vmatpush1.bf16.msra.mxu0 0
      %349 = vmatprep.subr.bf16.mxu0 0
      %350 = vmatpush1.bf16.msra.mxu0 0
      %351 = vmatprep.subr.bf16.mxu0 0
      %352 = vmatpush1.bf16.msra.mxu0 0
      %353 = vmatprep.subr.bf16.mxu0 0
      %354 = vmatpush1.bf16.msra.mxu0 0
      %355 = vmatprep.subr.bf16.mxu0 0
      %356 = vmatpush1.bf16.msra.mxu0 0
      %357 = vmatprep.subr.bf16.mxu0 0
      %358 = vmatpush1.bf16.msra.mxu0 0
      %359 = vmatprep.subr.bf16.mxu0 0
      %360 = vmatpush1.bf16.msra.mxu0 0
      %361 = vmatprep.subr.bf16.mxu0 0
      %362 = vmatpush1.bf16.msra.mxu0 0
      %363 = vmatprep.subr.bf16.mxu0 0
      %364 = vmatpush1.bf16.msra.mxu0 0
      %365 = vmatprep.mubr.bf16.mxu0 0
      %366 = vmatmul.mubr.bf16.gmra.mrb[0].mxu0 %v331
      %v367 = vpop.f32.mrb[0].mxu0
      %v368 = vadd.f32 0.0, %v367
      %v369 = vpop.f32.mrb[0].mxu0
      %v370 = vpop.f32.mrb[0].mxu0
      %v371 = vadd.f32 0.0, %v370
      %v372 = vpop.f32.mrb[0].mxu0
      %373 = vdwg.mxu0
      %s374 = scalar_lea.vmem %s2, 8
      %v375 = vld [vmem:[%s374] sm:$0xf]
      %v376 = vld [vmem:[%s374 + $0x4] sm:$0xf]
      %s377 = scalar_lea.vmem %s2, 16
      %v378 = vld [vmem:[%s377] sm:$0xf]
      %v379 = vld [vmem:[%s377 + $0x4] sm:$0xf]
      %v382 = vunpack.c.l.b16 %v378
      %v383 = vunpack.c.l.b16 %v379
      %v384 = vpack.c.b16 %v383, %v382
      %v386 = vsel %vm329, %v384, 0
      %388 = vmatprep.subr.bf16.mxu0 0
      %389 = vmatpush1.bf16.msra.mxu0 %v296
      %390 = vmatprep.subr.bf16.mxu0 0
      %391 = vmatpush1.bf16.msra.mxu0 %v290
      %392 = vmatprep.subr.bf16.mxu0 0
      %393 = vmatpush1.bf16.msra.mxu0 %v301
      %394 = vmatprep.subr.bf16.mxu0 0
      %395 = vmatpush1.bf16.msra.mxu0 %v313
      %396 = vmatprep.subr.bf16.mxu0 0
      %397 = vmatpush1.bf16.msra.mxu0 %v309
      %398 = vmatprep.subr.bf16.mxu0 0
      %399 = vmatpush1.bf16.msra.mxu0 %v318
      %400 = vmatprep.subr.bf16.mxu0 0
      %401 = vmatpush1.bf16.msra.mxu0 0
      %402 = vmatprep.subr.bf16.mxu0 0
      %403 = vmatpush1.bf16.msra.mxu0 0
      %404 = vmatprep.subr.bf16.mxu0 0
      %405 = vmatpush1.bf16.msra.mxu0 0
      %406 = vmatprep.subr.bf16.mxu0 0
      %407 = vmatpush1.bf16.msra.mxu0 0
      %408 = vmatprep.subr.bf16.mxu0 0
      %409 = vmatpush1.bf16.msra.mxu0 0
      %410 = vmatprep.subr.bf16.mxu0 0
      %411 = vmatpush1.bf16.msra.mxu0 0
      %412 = vmatprep.subr.bf16.mxu0 0
      %413 = vmatpush1.bf16.msra.mxu0 0
      %414 = vmatprep.subr.bf16.mxu0 0
      %415 = vmatpush1.bf16.msra.mxu0 0
      %416 = vmatprep.subr.bf16.mxu0 0
      %417 = vmatpush1.bf16.msra.mxu0 0
      %418 = vmatprep.subr.bf16.mxu0 0
      %419 = vmatpush1.bf16.msra.mxu0 0
      %420 = vmatprep.mubr.bf16.mxu0 0
      %421 = vmatmul.mubr.bf16.gmra.mrb[0].mxu0 %v386
      %v422 = vpop.f32.mrb[0].mxu0
      %v423 = vadd.f32 0.0, %v422
      %v424 = vpop.f32.mrb[0].mxu0
      %v425 = vpop.f32.mrb[0].mxu0
      %v426 = vadd.f32 0.0, %v425
      %v427 = vpop.f32.mrb[0].mxu0
      %428 = vdwg.mxu0
      %v429 = vlaneseq
      %v430 = vand.u32 %v429, 127
      %vm431 = vcmp.lt.s32.totalorder %v430, 0
      %v432 = vsub.s32 0, %v430
      %v433 = vsel %vm431, %v432, %v430
      %v434 = vshrl.u32 %v433, 1
      %v435 = vand.u32 %v433, 1
      %v436 = vsub.s32 0, %v435
      %v437 = vsel %vm431, %v436, %v435
      %vm438 = vcmp.ne.s32.totalorder %v437, 0
      %vm439 = vcmp.lt.s32.totalorder %v437, 0
      %vm440 = vmand %vm439, %vm438
      %v441 = vadd.s32 %v437, 2
      %v442 = vsel %vm440, %v441, %v437
      %445 = vrot.lane.b32.xlu0 %v368, 1
      %v446 = vpop.permute.xlu0 %445
      %447 = vrot.lane.b32.xlu0 %v371, 1
      %v448 = vpop.permute.xlu0 %447
      %vm451 = vcmask 7168
      %v452 = vsel %vm451, 0.0, %v446
      %v453 = vsel %vm451, 0.0, %v448
      %456 = vrot.lane.b32.xlu0 %v423, 127
      %v457 = vpop.permute.xlu0 %456
      %458 = vrot.lane.b32.xlu0 %v426, 127
      %v459 = vpop.permute.xlu0 %458
      %vm462 = vcmask 23552
      %v463 = vsel %vm462, %v457, 0.0
      %v464 = vsel %vm462, %v459, 0.0
      %vm465 = vcmp.ge.s32.totalorder %v442, 1
      %v466 = vsel %vm465, 1, 0
      %vm467 = vcmp.eq.s32.totalorder %v466, 1
      %v468 = vsel %vm467, %v452, 0.0
      %v469 = vsel %vm467, %v453, 0.0
      %v472 = vunpack.c.l.b16 %v375
      %v473 = vunpack.c.l.b16 %v376
      %v474 = vpack.c.b16 %v473, %v472
      %v476 = vsel %vm329, %v474, 0
      %478 = vmatprep.subr.bf16.mxu0 0
      %479 = vmatpush1.bf16.msra.mxu0 %v296
      %480 = vmatprep.subr.bf16.mxu0 0
      %481 = vmatpush1.bf16.msra.mxu0 %v290
      %482 = vmatprep.subr.bf16.mxu0 0
      %483 = vmatpush1.bf16.msra.mxu0 %v301
      %484 = vmatprep.subr.bf16.mxu0 0
      %485 = vmatpush1.bf16.msra.mxu0 %v313
      %486 = vmatprep.subr.bf16.mxu0 0
      %487 = vmatpush1.bf16.msra.mxu0 %v309
      %488 = vmatprep.subr.bf16.mxu0 0
      %489 = vmatpush1.bf16.msra.mxu0 %v318
      %490 = vmatprep.subr.bf16.mxu0 0
      %491 = vmatpush1.bf16.msra.mxu0 0
      %492 = vmatprep.subr.bf16.mxu0 0
      %493 = vmatpush1.bf16.msra.mxu0 0
      %494 = vmatprep.subr.bf16.mxu0 0
      %495 = vmatpush1.bf16.msra.mxu0 0
      %496 = vmatprep.subr.bf16.mxu0 0
      %497 = vmatpush1.bf16.msra.mxu0 0
      %498 = vmatprep.subr.bf16.mxu0 0
      %499 = vmatpush1.bf16.msra.mxu0 0
      %500 = vmatprep.subr.bf16.mxu0 0
      %501 = vmatpush1.bf16.msra.mxu0 0
      %502 = vmatprep.subr.bf16.mxu0 0
      %503 = vmatpush1.bf16.msra.mxu0 0
      %504 = vmatprep.subr.bf16.mxu0 0
      %505 = vmatpush1.bf16.msra.mxu0 0
      %506 = vmatprep.subr.bf16.mxu0 0
      %507 = vmatpush1.bf16.msra.mxu0 0
      %508 = vmatprep.subr.bf16.mxu0 0
      %509 = vmatpush1.bf16.msra.mxu0 0
      %510 = vmatprep.mubr.bf16.mxu0 0
      %511 = vmatmul.mubr.bf16.gmra.mrb[0].mxu0 %v476
      %v512 = vpop.f32.mrb[0].mxu0
      %v513 = vadd.f32 %v468, %v512
      %v514 = vpop.f32.mrb[0].mxu0
      %v515 = vpop.f32.mrb[0].mxu0
      %v516 = vadd.f32 %v469, %v515
      %v517 = vpop.f32.mrb[0].mxu0
      %518 = vdwg.mxu0
      %vm519 = vcmp.lt.s32.totalorder %v442, 1
      %v520 = vsel %vm519, 1, 0
      %vm521 = vcmp.eq.s32.totalorder %v520, 1
      %v522 = vsel %vm521, %v463, 0.0
      %v523 = vsel %vm521, %v464, 0.0
      %v524 = vadd.f32 %v513, %v522
      %v525 = vadd.f32 %v516, %v523
      %v526 = vpack.c.bf16 %v525, %v524
      %v528 = vunpack.c.l.b16 %v526
      %v529 = vunpack.c.h.b16 %v526
      %v530 = vpack.c.b16 %v528, %v528
      %v531 = vpack.c.b16 %v529, %v529
      %vm534 = vcmask 27648
      %535 = vst.msk [vmem:[%s273] sm:$0xf] %vm534, %v530
      %536 = vst.msk [vmem:[%s273 + $0x4] sm:$0xf] %vm534, %v531
      %vm537 = vcmask 31744
      %v538 = vsel %vm537, %v524, 0.0
      %539 = vadd.xlane.f32.xlu0 %v538
      %v540 = vpop.xlane.xlu0 %539
      %v541 = vsel %vm537, %v525, 0.0
      %542 = vadd.xlane.f32.xlu0 %v541
      %v543 = vpop.xlane.xlu0 %542
      %v544 = vmul.f32 %v524, %v524
      %v545 = vmul.f32 %v525, %v525
      %v546 = vsel %vm537, %v544, 0.0
      %547 = vadd.xlane.f32.xlu0 %v546
      %v548 = vpop.xlane.xlu0 %547
      %v549 = vsel %vm537, %v545, 0.0
      %550 = vadd.xlane.f32.xlu0 %v549
      %v551 = vpop.xlane.xlu0 %550
      %v552 = vsel %vm451, %v540, %v548
      %v553 = vsel %vm451, %v543, %v551
      %554 = vst.msk [vmem:[%s282] sm:$0xff] %vm293, %v552
      %555 = vst.msk [vmem:[%s282 + $0x8] sm:$0xff] %vm293, %v553
      %p556 = scmp.lt.s32.totalorder %s20, 1
      %s557 = scalar_select %p556, %s20, 1
      %p558 = scmp.lt.s32.totalorder %s21, 0
      %s559 = scalar_select %p558, %s21, 0
      %s560 = smul.addr %s557, 2
      %s561 = sadd.s32 %s559, %s560
      %s562 = smul.addr %s561, 4
      %s563 = scalar_lea.vmem %s3, %s562
      %p564 = scmp.lt.s32.totalorder %s20, 1
      %s565 = scalar_select %p564, %s20, 1
      %p566 = scmp.lt.s32.totalorder %s21, 0
      %s567 = scalar_select %p566, %s21, 0
      %s568 = smul.addr %s567, 2
      %s569 = smul.addr %s565, 2
      %s570 = sadd.s32 %s568, %s569
      %s571 = smul.addr %s570, 8
      %s572 = scalar_lea.vmem %s4, %s571
      // Predicated region
      $region33: #{rsu5_forward.32} parent=31 // pred_check
        %p573 = pneg %p125
      $region34: #{rsu5_forward.32} parent=31 // pred_check_branch
        %575 = sbr.rel (%p573) target = $region36
      $region35: #{rsu5_forward.32} parent=31 // pred_region
        _
      $region36: #{rsu5_forward.32} parent=31 // pred_fallthru
        _
      // Predicated region
      $region37: #{rsu5_forward.32} parent=31 // pred_check
        %p576 = pneg %p153
      $region38: #{rsu5_forward.32} parent=31 // pred_check_branch
        %578 = sbr.rel (%p576) target = $region40
      $region39: #{rsu5_forward.32} parent=31 // pred_region
        _
      $region40: #{rsu5_forward.32} parent=31 // pred_fallthru
        _
    $region32: #{rsu5_forward.32} parent=5 // pred_fallthru
      _
    %p579 = scmp.le.s32.totalorder 2, %s11
    // Predicated region
    $region41: #{rsu5_forward.32} parent=5 // pred_check
      %p580 = pneg %p579
    $region42: #{rsu5_forward.32} parent=5 // pred_check_branch
      %582 = sbr.rel (%p580) target = $region44
    $region43: #{rsu5_forward.32} parent=5 // pred_region
      %s583 = ssub.s32 %s11, 2
      // Predicated region
      $region45: #{rsu5_forward.32} parent=43 // pred_check
        %p584 = pneg %p131
      $region46: #{rsu5_forward.32} parent=43 // pred_check_branch
        %586 = sbr.rel (%p584) target = $region48
      $region47: #{rsu5_forward.32} parent=43 // pred_region
        %p587 = scmp.lt.s32.totalorder %s22, 1
        %s588 = scalar_select %p587, %s22, 1
        %p589 = scmp.lt.s32.totalorder %s23, 0
        %s590 = scalar_select %p589, %s23, 0
        %s591 = smul.addr %s588, 2
        %s592 = sadd.s32 %s590, %s591
        %s593 = smul.addr %s592, 4
        %s594 = scalar_lea.vmem %s3, %s593
      $region48: #{rsu5_forward.32} parent=43 // pred_fallthru
        _
      // Predicated region
      $region49: #{rsu5_forward.32} parent=43 // pred_check
        %p595 = pneg %p159
      $region50: #{rsu5_forward.32} parent=43 // pred_check_branch
        %597 = sbr.rel (%p595) target = $region52
      $region51: #{rsu5_forward.32} parent=43 // pred_region
        %p598 = scmp.lt.s32.totalorder %s22, 1
        %s599 = scalar_select %p598, %s22, 1
        %p600 = scmp.lt.s32.totalorder %s23, 0
        %s601 = scalar_select %p600, %s23, 0
        %s602 = smul.addr %s601, 2
        %s603 = smul.addr %s599, 2
        %s604 = sadd.s32 %s602, %s603
        %s605 = smul.addr %s604, 8
        %s606 = scalar_lea.vmem %s4, %s605
      $region52: #{rsu5_forward.32} parent=43 // pred_fallthru
        _
    $region44: #{rsu5_forward.32} parent=5 // pred_fallthru
      _
  $region6: #{rsu5_forward.32} parent=0 // loop_footer
    %s15 = sadd.s32 1, %s11
  $region7: #{rsu5_forward.32} parent=0 // loop_footer_branch
    %10 = sbr.rel target = $region3
  $region8: #{rsu5_forward.32} parent=0 // loop_exit
    _

// kernel: rsu5_forward.36
$region0: #{rsu5_forward.36}
  #allocation0 [shape = 'u32[]', space=smem, size = 0x4, offset = 0x4, fixed_abs, tag = 'smem constant byte address 0x4 - core index']
  #allocation1 [shape = 'u32[144,128]{1,0:T(1,128)}', space=vmem, size = 0x12000, scoped, tag = 'internal scratch']
  %s0 = inlined_call_operand.vmem [shape: bf16[2,16,64], index: 0, kind: input, shape index: {}]
  %s1 = inlined_call_operand.vmem [shape: bf16[2,16,64], index: 1, kind: input, shape index: {}]
  %s2 = inlined_call_operand.vmem [shape: bf16[3,16,96], index: 2, kind: input, shape index: {}]
  %s3 = inlined_call_operand.vmem [shape: bf16[2,16,64], index: 3, kind: output, shape index: {0}]
  %s4 = inlined_call_operand.vmem [shape: f32[2,1,16,2], index: 4, kind: output, shape index: {1}]
  %5 = xla_tuple %s3, %s4
  %s6 = sld [smem:[#allocation0]]
  $region53: #{rsu5_forward.36} parent=0
    _
  %s8 = ssub.s32 1, %s6
  %s9 = scalar_select 0, %s8, %s6
  loop: start=0, step=1, limit=4
  $region2: #{rsu5_forward.36} parent=0 // loop_pre_header
    _
  $region3: #{rsu5_forward.36} parent=0 // loop_header
    %s11 = sphi 0, %s15
    %p12 = scmp.ge.s32.totalorder %s11, 4
    %s18 = sphi 0, %s30
    %s19 = sphi 0, %s26
    %s20 = sphi 0, %s18
    %s21 = sphi 0, %s19
    %s22 = sphi 0, %s20
    %s23 = sphi 0, %s21
    %s35 = sphi 0, %s37
    %s38 = sphi 0, %s35
    %s39 = sphi 0, %s38
    %s55 = sphi 0, %s39
    %s63 = sphi 0, %s65
    %s66 = sphi 0, %s63
    %s67 = sphi 0, %s66
    %s83 = sphi 0, %s67
    %s87 = sphi 0, %s87
    %s89 = sphi 0, %s87
    %s90 = sphi 0, %s89
    %s104 = sphi 0, %s90
    %s112 = sphi 0, %s114
    %s115 = sphi 0, %s112
    %s116 = sphi 0, %s115
    %s132 = sphi 0, %s116
    %s140 = sphi 0, %s142
    %s143 = sphi 0, %s140
    %s144 = sphi 0, %s143
    %s160 = sphi 0, %s144
  $region4: #{rsu5_forward.36} parent=0 // loop_header_branch
    %14 = sbr.rel (%p12) target = $region8
  $region5: #{rsu5_forward.36} parent=0 // loop_body
    %s16 = ssub.s32 %s11, 1
    %s17 = ssub.s32 %s11, 2
    %s24 = sadd.s32 1, %s19
    %p25 = scmp.ge.s32.totalorder %s24, 1
    %s26 = scalar_select %p25, 0, %s24
    %s27 = sadd.s32 1, %s18
    %s28 = scalar_select %p25, %s27, %s18
    %p29 = scmp.ge.s32.totalorder %s28, 2
    %s30 = scalar_select %p29, 0, %s28
    %s31 = ssub.s32 %s18, %s30
    %s32 = ssub.s32 %s19, %s26
    %s33 = sor.u32 %s31, %s32
    %p34 = scmp.eq.s32.totalorder %s33, 0
    %s36 = sadd.s32 %s35, 1
    %s37 = scalar_select %p34, %s35, %s36
    %p40 = pneg %p34
    %p41 = scmp.eq.s32.totalorder %s11, 1
    %p42 = por %p40, %p41
    %p43 = scmp.ne.s32.totalorder %s35, %s38
    %p44 = scmp.eq.s32.totalorder %s11, 0
    %p45 = por %p43, %p44
    %p46 = scmp.ne.s32.totalorder %s35, %s38
    %p47 = scmp.eq.s32.totalorder %s16, 1
    %p48 = por %p46, %p47
    %p49 = scmp.ne.s32.totalorder %s38, %s39
    %p50 = scmp.eq.s32.totalorder %s16, 0
    %p51 = por %p49, %p50
    %p52 = scmp.ne.s32.totalorder %s38, %s39
    %p53 = scmp.eq.s32.totalorder %s17, 1
    %p54 = por %p52, %p53
    %p56 = scmp.ne.s32.totalorder %s39, %s55
    %p57 = scmp.eq.s32.totalorder %s17, 0
    %p58 = por %p56, %p57
    %s59 = ssub.s32 %s18, %s30
    %s60 = ssub.s32 %s19, %s26
    %s61 = sor.u32 %s59, %s60
    %p62 = scmp.eq.s32.totalorder %s61, 0
    %s64 = sadd.s32 %s63, 1
    %s65 = scalar_select %p62, %s63, %s64
    %p68 = pneg %p62
    %p69 = scmp.eq.s32.totalorder %s11, 1
    %p70 = por %p68, %p69
    %p71 = scmp.ne.s32.totalorder %s63, %s66
    %p72 = scmp.eq.s32.totalorder %s11, 0
    %p73 = por %p71, %p72
    %p74 = scmp.ne.s32.totalorder %s63, %s66
    %p75 = scmp.eq.s32.totalorder %s16, 1
    %p76 = por %p74, %p75
    %p77 = scmp.ne.s32.totalorder %s66, %s67
    %p78 = scmp.eq.s32.totalorder %s16, 0
    %p79 = por %p77, %p78
    %p80 = scmp.ne.s32.totalorder %s66, %s67
    %p81 = scmp.eq.s32.totalorder %s17, 1
    %p82 = por %p80, %p81
    %p84 = scmp.ne.s32.totalorder %s67, %s83
    %p85 = scmp.eq.s32.totalorder %s17, 0
    %p86 = por %p84, %p85
    %s88 = sadd.s32 %s87, 1
    %p91 = scmp.eq.s32.totalorder %s11, 1
    %p92 = scmp.ne.s32.totalorder %s87, %s89
    %p93 = scmp.eq.s32.totalorder %s11, 0
    %p94 = por %p92, %p93
    %p95 = scmp.ne.s32.totalorder %s87, %s89
    %p96 = scmp.eq.s32.totalorder %s16, 1
    %p97 = por %p95, %p96
    %p98 = scmp.ne.s32.totalorder %s89, %s90
    %p99 = scmp.eq.s32.totalorder %s16, 0
    %p100 = por %p98, %p99
    %p101 = scmp.ne.s32.totalorder %s89, %s90
    %p102 = scmp.eq.s32.totalorder %s17, 1
    %p103 = por %p101, %p102
    %p105 = scmp.ne.s32.totalorder %s90, %s104
    %p106 = scmp.eq.s32.totalorder %s17, 0
    %p107 = por %p105, %p106
    %s108 = ssub.s32 %s18, %s30
    %s109 = ssub.s32 %s19, %s26
    %s110 = sor.u32 %s108, %s109
    %p111 = scmp.eq.s32.totalorder %s110, 0
    %s113 = sadd.s32 %s112, 1
    %s114 = scalar_select %p111, %s112, %s113
    %p117 = pneg %p111
    %p118 = scmp.eq.s32.totalorder %s11, 1
    %p119 = por %p117, %p118
    %p120 = scmp.ne.s32.totalorder %s112, %s115
    %p121 = scmp.eq.s32.totalorder %s11, 0
    %p122 = por %p120, %p121
    %p123 = scmp.ne.s32.totalorder %s112, %s115
    %p124 = scmp.eq.s32.totalorder %s16, 1
    %p125 = por %p123, %p124
    %p126 = scmp.ne.s32.totalorder %s115, %s116
    %p127 = scmp.eq.s32.totalorder %s16, 0
    %p128 = por %p126, %p127
    %p129 = scmp.ne.s32.totalorder %s115, %s116
    %p130 = scmp.eq.s32.totalorder %s17, 1
    %p131 = por %p129, %p130
    %p133 = scmp.ne.s32.totalorder %s116, %s132
    %p134 = scmp.eq.s32.totalorder %s17, 0
    %p135 = por %p133, %p134
    %s136 = ssub.s32 %s18, %s30
    %s137 = ssub.s32 %s19, %s26
    %s138 = sor.u32 %s136, %s137
    %p139 = scmp.eq.s32.totalorder %s138, 0
    %s141 = sadd.s32 %s140, 1
    %s142 = scalar_select %p139, %s140, %s141
    %p145 = pneg %p139
    %p146 = scmp.eq.s32.totalorder %s11, 1
    %p147 = por %p145, %p146
    %p148 = scmp.ne.s32.totalorder %s140, %s143
    %p149 = scmp.eq.s32.totalorder %s11, 0
    %p150 = por %p148, %p149
    %p151 = scmp.ne.s32.totalorder %s140, %s143
    %p152 = scmp.eq.s32.totalorder %s16, 1
    %p153 = por %p151, %p152
    %p154 = scmp.ne.s32.totalorder %s143, %s144
    %p155 = scmp.eq.s32.totalorder %s16, 0
    %p156 = por %p154, %p155
    %p157 = scmp.ne.s32.totalorder %s143, %s144
    %p158 = scmp.eq.s32.totalorder %s17, 1
    %p159 = por %p157, %p158
    %p161 = scmp.ne.s32.totalorder %s144, %s160
    %p162 = scmp.eq.s32.totalorder %s17, 0
    %p163 = por %p161, %p162
    %p164 = scmp.le.s32.totalorder 1, %s11
    %p165 = scmp.lt.s32.totalorder %s11, 3
    %p166 = pnand %p164, %p165
    %p167 = pneg %p166
    // Predicated region
    $region9: #{rsu5_forward.36} parent=5 // pred_check
      _
    $region10: #{rsu5_forward.36} parent=5 // pred_check_branch
      %169 = sbr.rel (%p166) target = $region12
    $region11: #{rsu5_forward.36} parent=5 // pred_region
      %s170 = ssub.s32 %s11, 1
      // Predicated region
      $region13: #{rsu5_forward.36} parent=11 // pred_check
        %p171 = pneg %p100
      $region14: #{rsu5_forward.36} parent=11 // pred_check_branch
        %173 = sbr.rel (%p171) target = $region16
      $region15: #{rsu5_forward.36} parent=11 // pred_region
        _
      $region16: #{rsu5_forward.36} parent=11 // pred_fallthru
        _
    $region12: #{rsu5_forward.36} parent=5 // pred_fallthru
      _
    %p174 = scmp.lt.s32.totalorder %s11, 2
    // Predicated region
    $region17: #{rsu5_forward.36} parent=5 // pred_check
      %p175 = pneg %p174
    $region18: #{rsu5_forward.36} parent=5 // pred_check_branch
      %177 = sbr.rel (%p175) target = $region20
    $region19: #{rsu5_forward.36} parent=5 // pred_region
      // Predicated region
      $region21: #{rsu5_forward.36} parent=19 // pred_check
        %p178 = pneg %p45
      $region22: #{rsu5_forward.36} parent=19 // pred_check_branch
        %180 = sbr.rel (%p178) target = $region24
      $region23: #{rsu5_forward.36} parent=19 // pred_region
        %p181 = scmp.lt.s32.totalorder %s18, 1
        %s182 = scalar_select %p181, %s18, 1
        %p183 = scmp.lt.s32.totalorder %s19, 0
        %s184 = scalar_select %p183, %s19, 0
        %s185 = smul.addr %s182, 2
        %s186 = sadd.s32 %s184, %s185
        %s187 = smul.addr %s186, 4
        %s188 = scalar_lea.vmem %s0, %s187
      $region24: #{rsu5_forward.36} parent=19 // pred_fallthru
        _
      // Predicated region
      $region25: #{rsu5_forward.36} parent=19 // pred_check
        %p189 = pneg %p73
      $region26: #{rsu5_forward.36} parent=19 // pred_check_branch
        %191 = sbr.rel (%p189) target = $region28
      $region27: #{rsu5_forward.36} parent=19 // pred_region
        %p192 = scmp.lt.s32.totalorder %s18, 1
        %s193 = scalar_select %p192, %s18, 1
        %p194 = scmp.lt.s32.totalorder %s19, 0
        %s195 = scalar_select %p194, %s19, 0
        %s196 = smul.addr %s193, 2
        %s197 = sadd.s32 %s195, %s196
        %s198 = smul.addr %s197, 4
        %s199 = scalar_lea.vmem %s1, %s198
      $region28: #{rsu5_forward.36} parent=19 // pred_fallthru
        _
    $region20: #{rsu5_forward.36} parent=5 // pred_fallthru
      _
    %p200 = scmp.le.s32.totalorder 1, %s11
    %p201 = scmp.lt.s32.totalorder %s11, 3
    %p202 = pnand %p200, %p201
    %p203 = pneg %p202
    // Predicated region
    $region29: #{rsu5_forward.36} parent=5 // pred_check
      _
    $region30: #{rsu5_forward.36} parent=5 // pred_check_branch
      %205 = sbr.rel (%p202) target = $region32
    $region31: #{rsu5_forward.36} parent=5 // pred_region
      %s206 = ssub.s32 %s11, 1
      %p207 = scmp.lt.s32.totalorder %s20, 1
      %s208 = scalar_select %p207, %s20, 1
      %p209 = scmp.lt.s32.totalorder %s21, 0
      %s210 = scalar_select %p209, %s21, 0
      %s211 = smul.addr %s208, 2
      %s212 = sadd.s32 %s210, %s211
      %s213 = smul.addr %s212, 4
      %s214 = scalar_lea.vmem %s0, %s213
      %p215 = pneg %p51
      %p216 = pneg %p48
      %p217 = scmp.lt.s32.totalorder %s20, 1
      %s218 = scalar_select %p217, %s20, 1
      %p219 = scmp.lt.s32.totalorder %s21, 0
      %s220 = scalar_select %p219, %s21, 0
      %s221 = smul.addr %s218, 2
      %s222 = sadd.s32 %s220, %s221
      %s223 = smul.addr %s222, 4
      %s224 = scalar_lea.vmem %s1, %s223
      %p225 = pneg %p79
      %p226 = pneg %p76
      %p227 = pneg %p100
      %p228 = pneg %p97
      %p229 = pneg %p128
      %p230 = pneg %p125
      %p231 = scmp.lt.s32.totalorder %s20, 1
      %s232 = scalar_select %p231, %s20, 1
      %p233 = scmp.lt.s32.totalorder %s21, 0
      %s234 = scalar_select %p233, %s21, 0
      %s235 = smul.addr %s232, 2
      %s236 = sadd.s32 %s234, %s235
      %s237 = smul.addr %s236, 4
      %s238 = scalar_lea.vmem %s3, %s237
      %p239 = pneg %p156
      %p240 = pneg %p153
      %p241 = scmp.lt.s32.totalorder %s20, 1
      %s242 = scalar_select %p241, %s20, 1
      %p243 = scmp.lt.s32.totalorder %s21, 0
      %s244 = scalar_select %p243, %s21, 0
      %s245 = smul.addr %s244, 2
      %s246 = smul.addr %s242, 2
      %s247 = sadd.s32 %s245, %s246
      %s248 = smul.addr %s247, 8
      %s249 = scalar_lea.vmem %s4, %s248
      %p250 = scmp.lt.s32.totalorder %s20, 1
      %s251 = scalar_select %p250, %s20, 1
      %p252 = scmp.lt.s32.totalorder %s21, 0
      %s253 = scalar_select %p252, %s21, 0
      %s254 = smul.addr %s251, 2
      %s255 = sadd.s32 %s253, %s254
      %s256 = smul.addr %s255, 4
      %s257 = scalar_lea.vmem %s0, %s256
      %p258 = scmp.lt.s32.totalorder %s20, 1
      %s259 = scalar_select %p258, %s20, 1
      %p260 = scmp.lt.s32.totalorder %s21, 0
      %s261 = scalar_select %p260, %s21, 0
      %s262 = smul.addr %s259, 2
      %s263 = sadd.s32 %s261, %s262
      %s264 = smul.addr %s263, 4
      %s265 = scalar_lea.vmem %s1, %s264
      %p266 = scmp.lt.s32.totalorder %s20, 1
      %s267 = scalar_select %p266, %s20, 1
      %p268 = scmp.lt.s32.totalorder %s21, 0
      %s269 = scalar_select %p268, %s21, 0
      %s270 = smul.addr %s267, 2
      %s271 = sadd.s32 %s269, %s270
      %s272 = smul.addr %s271, 4
      %s273 = scalar_lea.vmem %s3, %s272
      %p274 = scmp.lt.s32.totalorder %s20, 1
      %s275 = scalar_select %p274, %s20, 1
      %p276 = scmp.lt.s32.totalorder %s21, 0
      %s277 = scalar_select %p276, %s21, 0
      %s278 = smul.addr %s277, 2
      %s279 = smul.addr %s275, 2
      %s280 = sadd.s32 %s278, %s279
      %s281 = smul.addr %s280, 8
      %s282 = scalar_lea.vmem %s4, %s281
      %v284 = vld [vmem:[%s257] sm:$0xf]
      %v285 = vld [vmem:[%s257 + $0x4] sm:$0xf]
      %v288 = vunpack.c.l.b16 %v284
      %v289 = vunpack.c.l.b16 %v285
      %v290 = vpack.c.b16 %v289, %v288
      %291 = vrot.lane.b32.xlu0 %v290, 8
      %v292 = vpop.permute.xlu0 %291
      %vm293 = vcmask 64512
      %v296 = vsel %vm293, 0, %v292
      %298 = vrot.lane.b32.xlu0 %v290, 120
      %v299 = vpop.permute.xlu0 %298
      %vm300 = vcmask 457728
      %v302 = vsel %vm300, %v299, 0
      %v304 = vld [vmem:[%s265] sm:$0xf]
      %v305 = vld [vmem:[%s265 + $0x4] sm:$0xf]
      %v308 = vunpack.c.l.b16 %v304
      %v309 = vunpack.c.l.b16 %v305
      %v310 = vpack.c.b16 %v309, %v308
      %311 = vrot.lane.b32.xlu0 %v310, 8
      %v312 = vpop.permute.xlu0 %311
      %v314 = vsel %vm293, 0, %v312
      %316 = vrot.lane.b32.xlu0 %v310, 120
      %v317 = vpop.permute.xlu0 %316
      %v319 = vsel %vm300, %v317, 0
      %v323 = vld [vmem:[%s2] sm:$0xf]
      %v324 = vld [vmem:[%s2 + $0x4] sm:$0xf]
      %v327 = vunpack.c.l.b16 %v323
      %v328 = vunpack.c.l.b16 %v324
      %v329 = vpack.c.b16 %v328, %v327
      %vm330 = vcmask 785408
      %v332 = vsel %vm330, %v329, 0
      %334 = vmatprep.subr.bf16.mxu0 0
      %335 = vmatpush1.bf16.msra.mxu0 %v296
      %336 = vmatprep.subr.bf16.mxu0 0
      %337 = vmatpush1.bf16.msra.mxu0 %v290
      %338 = vmatprep.subr.bf16.mxu0 0
      %339 = vmatpush1.bf16.msra.mxu0 %v302
      %340 = vmatprep.subr.bf16.mxu0 0
      %341 = vmatpush1.bf16.msra.mxu0 %v314
      %342 = vmatprep.subr.bf16.mxu0 0
      %343 = vmatpush1.bf16.msra.mxu0 %v310
      %344 = vmatprep.subr.bf16.mxu0 0
      %345 = vmatpush1.bf16.msra.mxu0 %v319
      %346 = vmatprep.subr.bf16.mxu0 0
      %347 = vmatpush1.bf16.msra.mxu0 0
      %348 = vmatprep.subr.bf16.mxu0 0
      %349 = vmatpush1.bf16.msra.mxu0 0
      %350 = vmatprep.subr.bf16.mxu0 0
      %351 = vmatpush1.bf16.msra.mxu0 0
      %352 = vmatprep.subr.bf16.mxu0 0
      %353 = vmatpush1.bf16.msra.mxu0 0
      %354 = vmatprep.subr.bf16.mxu0 0
      %355 = vmatpush1.bf16.msra.mxu0 0
      %356 = vmatprep.subr.bf16.mxu0 0
      %357 = vmatpush1.bf16.msra.mxu0 0
      %358 = vmatprep.subr.bf16.mxu0 0
      %359 = vmatpush1.bf16.msra.mxu0 0
      %360 = vmatprep.subr.bf16.mxu0 0
      %361 = vmatpush1.bf16.msra.mxu0 0
      %362 = vmatprep.subr.bf16.mxu0 0
      %363 = vmatpush1.bf16.msra.mxu0 0
      %364 = vmatprep.subr.bf16.mxu0 0
      %365 = vmatpush1.bf16.msra.mxu0 0
      %366 = vmatprep.mubr.bf16.mxu0 0
      %367 = vmatmul.mubr.bf16.gmra.mrb[0].mxu0 %v332
      %v368 = vpop.f32.mrb[0].mxu0
      %v369 = vadd.f32 0.0, %v368
      %v370 = vpop.f32.mrb[0].mxu0
      %v371 = vpop.f32.mrb[0].mxu0
      %v372 = vadd.f32 0.0, %v371
      %v373 = vpop.f32.mrb[0].mxu0
      %374 = vdwg.mxu0
      %s375 = scalar_lea.vmem %s2, 8
      %v376 = vld [vmem:[%s375] sm:$0xf]
      %v377 = vld [vmem:[%s375 + $0x4] sm:$0xf]
      %s378 = scalar_lea.vmem %s2, 16
      %v379 = vld [vmem:[%s378] sm:$0xf]
      %v380 = vld [vmem:[%s378 + $0x4] sm:$0xf]
      %v383 = vunpack.c.l.b16 %v379
      %v384 = vunpack.c.l.b16 %v380
      %v385 = vpack.c.b16 %v384, %v383
      %v387 = vsel %vm330, %v385, 0
      %389 = vmatprep.subr.bf16.mxu0 0
      %390 = vmatpush1.bf16.msra.mxu0 %v296
      %391 = vmatprep.subr.bf16.mxu0 0
      %392 = vmatpush1.bf16.msra.mxu0 %v290
      %393 = vmatprep.subr.bf16.mxu0 0
      %394 = vmatpush1.bf16.msra.mxu0 %v302
      %395 = vmatprep.subr.bf16.mxu0 0
      %396 = vmatpush1.bf16.msra.mxu0 %v314
      %397 = vmatprep.subr.bf16.mxu0 0
      %398 = vmatpush1.bf16.msra.mxu0 %v310
      %399 = vmatprep.subr.bf16.mxu0 0
      %400 = vmatpush1.bf16.msra.mxu0 %v319
      %401 = vmatprep.subr.bf16.mxu0 0
      %402 = vmatpush1.bf16.msra.mxu0 0
      %403 = vmatprep.subr.bf16.mxu0 0
      %404 = vmatpush1.bf16.msra.mxu0 0
      %405 = vmatprep.subr.bf16.mxu0 0
      %406 = vmatpush1.bf16.msra.mxu0 0
      %407 = vmatprep.subr.bf16.mxu0 0
      %408 = vmatpush1.bf16.msra.mxu0 0
      %409 = vmatprep.subr.bf16.mxu0 0
      %410 = vmatpush1.bf16.msra.mxu0 0
      %411 = vmatprep.subr.bf16.mxu0 0
      %412 = vmatpush1.bf16.msra.mxu0 0
      %413 = vmatprep.subr.bf16.mxu0 0
      %414 = vmatpush1.bf16.msra.mxu0 0
      %415 = vmatprep.subr.bf16.mxu0 0
      %416 = vmatpush1.bf16.msra.mxu0 0
      %417 = vmatprep.subr.bf16.mxu0 0
      %418 = vmatpush1.bf16.msra.mxu0 0
      %419 = vmatprep.subr.bf16.mxu0 0
      %420 = vmatpush1.bf16.msra.mxu0 0
      %421 = vmatprep.mubr.bf16.mxu0 0
      %422 = vmatmul.mubr.bf16.gmra.mrb[0].mxu0 %v387
      %v423 = vpop.f32.mrb[0].mxu0
      %v424 = vadd.f32 0.0, %v423
      %v425 = vpop.f32.mrb[0].mxu0
      %v426 = vpop.f32.mrb[0].mxu0
      %v427 = vadd.f32 0.0, %v426
      %v428 = vpop.f32.mrb[0].mxu0
      %429 = vdwg.mxu0
      %v430 = vlaneseq
      %v431 = vand.u32 %v430, 127
      %vm432 = vcmp.lt.s32.totalorder %v431, 0
      %v433 = vsub.s32 0, %v431
      %v434 = vsel %vm432, %v433, %v431
      %v435 = vshrl.u32 %v434, 3
      %v436 = vand.u32 %v434, 7
      %v437 = vsub.s32 0, %v436
      %v438 = vsel %vm432, %v437, %v436
      %vm439 = vcmp.ne.s32.totalorder %v438, 0
      %vm440 = vcmp.lt.s32.totalorder %v438, 0
      %vm441 = vmand %vm440, %vm439
      %v442 = vadd.s32 %v438, 8
      %v443 = vsel %vm441, %v442, %v438
      %446 = vrot.lane.b32.xlu0 %v369, 1
      %v447 = vpop.permute.xlu0 %446
      %448 = vrot.lane.b32.xlu0 %v372, 1
      %v449 = vpop.permute.xlu0 %448
      %vm452 = vcmask 7168
      %v453 = vsel %vm452, 0.0, %v447
      %v454 = vsel %vm452, 0.0, %v449
      %457 = vrot.lane.b32.xlu0 %v424, 127
      %v458 = vpop.permute.xlu0 %457
      %459 = vrot.lane.b32.xlu0 %v427, 127
      %v460 = vpop.permute.xlu0 %459
      %vm463 = vcmask 515072
      %v464 = vsel %vm463, %v458, 0.0
      %v465 = vsel %vm463, %v460, 0.0
      %vm466 = vcmp.ge.s32.totalorder %v443, 1
      %v467 = vsel %vm466, 1, 0
      %vm468 = vcmp.eq.s32.totalorder %v467, 1
      %v469 = vsel %vm468, %v453, 0.0
      %v470 = vsel %vm468, %v454, 0.0
      %v473 = vunpack.c.l.b16 %v376
      %v474 = vunpack.c.l.b16 %v377
      %v475 = vpack.c.b16 %v474, %v473
      %v477 = vsel %vm330, %v475, 0
      %479 = vmatprep.subr.bf16.mxu0 0
      %480 = vmatpush1.bf16.msra.mxu0 %v296
      %481 = vmatprep.subr.bf16.mxu0 0
      %482 = vmatpush1.bf16.msra.mxu0 %v290
      %483 = vmatprep.subr.bf16.mxu0 0
      %484 = vmatpush1.bf16.msra.mxu0 %v302
      %485 = vmatprep.subr.bf16.mxu0 0
      %486 = vmatpush1.bf16.msra.mxu0 %v314
      %487 = vmatprep.subr.bf16.mxu0 0
      %488 = vmatpush1.bf16.msra.mxu0 %v310
      %489 = vmatprep.subr.bf16.mxu0 0
      %490 = vmatpush1.bf16.msra.mxu0 %v319
      %491 = vmatprep.subr.bf16.mxu0 0
      %492 = vmatpush1.bf16.msra.mxu0 0
      %493 = vmatprep.subr.bf16.mxu0 0
      %494 = vmatpush1.bf16.msra.mxu0 0
      %495 = vmatprep.subr.bf16.mxu0 0
      %496 = vmatpush1.bf16.msra.mxu0 0
      %497 = vmatprep.subr.bf16.mxu0 0
      %498 = vmatpush1.bf16.msra.mxu0 0
      %499 = vmatprep.subr.bf16.mxu0 0
      %500 = vmatpush1.bf16.msra.mxu0 0
      %501 = vmatprep.subr.bf16.mxu0 0
      %502 = vmatpush1.bf16.msra.mxu0 0
      %503 = vmatprep.subr.bf16.mxu0 0
      %504 = vmatpush1.bf16.msra.mxu0 0
      %505 = vmatprep.subr.bf16.mxu0 0
      %506 = vmatpush1.bf16.msra.mxu0 0
      %507 = vmatprep.subr.bf16.mxu0 0
      %508 = vmatpush1.bf16.msra.mxu0 0
      %509 = vmatprep.subr.bf16.mxu0 0
      %510 = vmatpush1.bf16.msra.mxu0 0
      %511 = vmatprep.mubr.bf16.mxu0 0
      %512 = vmatmul.mubr.bf16.gmra.mrb[0].mxu0 %v477
      %v513 = vpop.f32.mrb[0].mxu0
      %v514 = vadd.f32 %v469, %v513
      %v515 = vpop.f32.mrb[0].mxu0
      %v516 = vpop.f32.mrb[0].mxu0
      %v517 = vadd.f32 %v470, %v516
      %v518 = vpop.f32.mrb[0].mxu0
      %519 = vdwg.mxu0
      %vm520 = vcmp.lt.s32.totalorder %v443, 7
      %v521 = vsel %vm520, 1, 0
      %vm522 = vcmp.eq.s32.totalorder %v521, 1
      %v523 = vsel %vm522, %v464, 0.0
      %v524 = vsel %vm522, %v465, 0.0
      %v525 = vadd.f32 %v514, %v523
      %v526 = vadd.f32 %v517, %v524
      %v527 = vpack.c.bf16 %v526, %v525
      %v529 = vunpack.c.l.b16 %v527
      %v530 = vunpack.c.h.b16 %v527
      %v531 = vpack.c.b16 %v529, %v529
      %v532 = vpack.c.b16 %v530, %v530
      %vm535 = vcmask 519168
      %536 = vst.msk [vmem:[%s273] sm:$0xf] %vm535, %v531
      %537 = vst.msk [vmem:[%s273 + $0x4] sm:$0xf] %vm535, %v532
      %vm538 = vcmask 523264
      %v539 = vsel %vm538, %v525, 0.0
      %540 = vadd.xlane.f32.xlu0 %v539
      %v541 = vpop.xlane.xlu0 %540
      %v542 = vsel %vm538, %v526, 0.0
      %543 = vadd.xlane.f32.xlu0 %v542
      %v544 = vpop.xlane.xlu0 %543
      %v545 = vmul.f32 %v525, %v525
      %v546 = vmul.f32 %v526, %v526
      %v547 = vsel %vm538, %v545, 0.0
      %548 = vadd.xlane.f32.xlu0 %v547
      %v549 = vpop.xlane.xlu0 %548
      %v550 = vsel %vm538, %v546, 0.0
      %551 = vadd.xlane.f32.xlu0 %v550
      %v552 = vpop.xlane.xlu0 %551
      %v553 = vsel %vm452, %v541, %v549
      %v554 = vsel %vm452, %v544, %v552
      %vm555 = vcmask 15360
      %556 = vst.msk [vmem:[%s282] sm:$0xff] %vm555, %v553
      %557 = vst.msk [vmem:[%s282 + $0x8] sm:$0xff] %vm555, %v554
      %p558 = scmp.lt.s32.totalorder %s20, 1
      %s559 = scalar_select %p558, %s20, 1
      %p560 = scmp.lt.s32.totalorder %s21, 0
      %s561 = scalar_select %p560, %s21, 0
      %s562 = smul.addr %s559, 2
      %s563 = sadd.s32 %s561, %s562
      %s564 = smul.addr %s563, 4
      %s565 = scalar_lea.vmem %s3, %s564
      %p566 = scmp.lt.s32.totalorder %s20, 1
      %s567 = scalar_select %p566, %s20, 1
      %p568 = scmp.lt.s32.totalorder %s21, 0
      %s569 = scalar_select %p568, %s21, 0
      %s570 = smul.addr %s569, 2
      %s571 = smul.addr %s567, 2
      %s572 = sadd.s32 %s570, %s571
      %s573 = smul.addr %s572, 8
      %s574 = scalar_lea.vmem %s4, %s573
      // Predicated region
      $region33: #{rsu5_forward.36} parent=31 // pred_check
        %p575 = pneg %p125
      $region34: #{rsu5_forward.36} parent=31 // pred_check_branch
        %577 = sbr.rel (%p575) target = $region36
      $region35: #{rsu5_forward.36} parent=31 // pred_region
        _
      $region36: #{rsu5_forward.36} parent=31 // pred_fallthru
        _
      // Predicated region
      $region37: #{rsu5_forward.36} parent=31 // pred_check
        %p578 = pneg %p153
      $region38: #{rsu5_forward.36} parent=31 // pred_check_branch
        %580 = sbr.rel (%p578) target = $region40
      $region39: #{rsu5_forward.36} parent=31 // pred_region
        _
      $region40: #{rsu5_forward.36} parent=31 // pred_fallthru
        _
    $region32: #{rsu5_forward.36} parent=5 // pred_fallthru
      _
    %p581 = scmp.le.s32.totalorder 2, %s11
    // Predicated region
    $region41: #{rsu5_forward.36} parent=5 // pred_check
      %p582 = pneg %p581
    $region42: #{rsu5_forward.36} parent=5 // pred_check_branch
      %584 = sbr.rel (%p582) target = $region44
    $region43: #{rsu5_forward.36} parent=5 // pred_region
      %s585 = ssub.s32 %s11, 2
      // Predicated region
      $region45: #{rsu5_forward.36} parent=43 // pred_check
        %p586 = pneg %p131
      $region46: #{rsu5_forward.36} parent=43 // pred_check_branch
        %588 = sbr.rel (%p586) target = $region48
      $region47: #{rsu5_forward.36} parent=43 // pred_region
        %p589 = scmp.lt.s32.totalorder %s22, 1
        %s590 = scalar_select %p589, %s22, 1
        %p591 = scmp.lt.s32.totalorder %s23, 0
        %s592 = scalar_select %p591, %s23, 0
        %s593 = smul.addr %s590, 2
        %s594 = sadd.s32 %s592, %s593
        %s595 = smul.addr %s594, 4
        %s596 = scalar_lea.vmem %s3, %s595
      $region48: #{rsu5_forward.36} parent=43 // pred_fallthru
        _
      // Predicated region
      $region49: #{rsu5_forward.36} parent=43 // pred_check
        %p597 = pneg %p159
      $region50: #{rsu5_forward.36} parent=43 // pred_check_branch
        %599 = sbr.rel (%p597) target = $region52
      $region51: #{rsu5_forward.36} parent=43 // pred_region
        %p600 = scmp.lt.s32.totalorder %s22, 1
        %s601 = scalar_select %p600, %s22, 1
        %p602 = scmp.lt.s32.totalorder %s23, 0
        %s603 = scalar_select %p602, %s23, 0
        %s604 = smul.addr %s603, 2
        %s605 = smul.addr %s601, 2
        %s606 = sadd.s32 %s604, %s605
        %s607 = smul.addr %s606, 8
        %s608 = scalar_lea.vmem %s4, %s607
      $region52: #{rsu5_forward.36} parent=43 // pred_fallthru
        _
    $region44: #{rsu5_forward.36} parent=5 // pred_fallthru
      _
  $region6: #{rsu5_forward.36} parent=0 // loop_footer
    %s15 = sadd.s32 1, %s11
  $region7: #{rsu5_forward.36} parent=0 // loop_footer_branch
    %10 = sbr.rel target = $region3
  $region8: #{rsu5_forward.36} parent=0 // loop_exit
    _

// kernel: rsu5_forward.34
$region0: #{rsu5_forward.34}
  #allocation0 [shape = 'u32[]', space=smem, size = 0x4, offset = 0x4, fixed_abs, tag = 'smem constant byte address 0x4 - core index']
  #allocation1 [shape = 'u32[144,128]{1,0:T(1,128)}', space=vmem, size = 0x12000, scoped, tag = 'internal scratch']
  %s0 = inlined_call_operand.vmem [shape: bf16[2,16,16], index: 0, kind: input, shape index: {}]
  %s1 = inlined_call_operand.vmem [shape: bf16[2,16,16], index: 1, kind: input, shape index: {}]
  %s2 = inlined_call_operand.vmem [shape: bf16[3,16,96], index: 2, kind: input, shape index: {}]
  %s3 = inlined_call_operand.vmem [shape: bf16[2,16,16], index: 3, kind: output, shape index: {0}]
  %s4 = inlined_call_operand.vmem [shape: f32[2,1,16,2], index: 4, kind: output, shape index: {1}]
  %5 = xla_tuple %s3, %s4
  %s6 = sld [smem:[#allocation0]]
  $region53: #{rsu5_forward.34} parent=0
    _
  %s8 = ssub.s32 1, %s6
  %s9 = scalar_select 0, %s8, %s6
  loop: start=0, step=1, limit=4
  $region2: #{rsu5_forward.34} parent=0 // loop_pre_header
    _
  $region3: #{rsu5_forward.34} parent=0 // loop_header
    %s11 = sphi 0, %s15
    %p12 = scmp.ge.s32.totalorder %s11, 4
    %s18 = sphi 0, %s30
    %s19 = sphi 0, %s26
    %s20 = sphi 0, %s18
    %s21 = sphi 0, %s19
    %s22 = sphi 0, %s20
    %s23 = sphi 0, %s21
    %s35 = sphi 0, %s37
    %s38 = sphi 0, %s35
    %s39 = sphi 0, %s38
    %s55 = sphi 0, %s39
    %s63 = sphi 0, %s65
    %s66 = sphi 0, %s63
    %s67 = sphi 0, %s66
    %s83 = sphi 0, %s67
    %s87 = sphi 0, %s87
    %s89 = sphi 0, %s87
    %s90 = sphi 0, %s89
    %s104 = sphi 0, %s90
    %s112 = sphi 0, %s114
    %s115 = sphi 0, %s112
    %s116 = sphi 0, %s115
    %s132 = sphi 0, %s116
    %s140 = sphi 0, %s142
    %s143 = sphi 0, %s140
    %s144 = sphi 0, %s143
    %s160 = sphi 0, %s144
  $region4: #{rsu5_forward.34} parent=0 // loop_header_branch
    %14 = sbr.rel (%p12) target = $region8
  $region5: #{rsu5_forward.34} parent=0 // loop_body
    %s16 = ssub.s32 %s11, 1
    %s17 = ssub.s32 %s11, 2
    %s24 = sadd.s32 1, %s19
    %p25 = scmp.ge.s32.totalorder %s24, 1
    %s26 = scalar_select %p25, 0, %s24
    %s27 = sadd.s32 1, %s18
    %s28 = scalar_select %p25, %s27, %s18
    %p29 = scmp.ge.s32.totalorder %s28, 2
    %s30 = scalar_select %p29, 0, %s28
    %s31 = ssub.s32 %s18, %s30
    %s32 = ssub.s32 %s19, %s26
    %s33 = sor.u32 %s31, %s32
    %p34 = scmp.eq.s32.totalorder %s33, 0
    %s36 = sadd.s32 %s35, 1
    %s37 = scalar_select %p34, %s35, %s36
    %p40 = pneg %p34
    %p41 = scmp.eq.s32.totalorder %s11, 1
    %p42 = por %p40, %p41
    %p43 = scmp.ne.s32.totalorder %s35, %s38
    %p44 = scmp.eq.s32.totalorder %s11, 0
    %p45 = por %p43, %p44
    %p46 = scmp.ne.s32.totalorder %s35, %s38
    %p47 = scmp.eq.s32.totalorder %s16, 1
    %p48 = por %p46, %p47
    %p49 = scmp.ne.s32.totalorder %s38, %s39
    %p50 = scmp.eq.s32.totalorder %s16, 0
    %p51 = por %p49, %p50
    %p52 = scmp.ne.s32.totalorder %s38, %s39
    %p53 = scmp.eq.s32.totalorder %s17, 1
    %p54 = por %p52, %p53
    %p56 = scmp.ne.s32.totalorder %s39, %s55
    %p57 = scmp.eq.s32.totalorder %s17, 0
    %p58 = por %p56, %p57
    %s59 = ssub.s32 %s18, %s30
    %s60 = ssub.s32 %s19, %s26
    %s61 = sor.u32 %s59, %s60
    %p62 = scmp.eq.s32.totalorder %s61, 0
    %s64 = sadd.s32 %s63, 1
    %s65 = scalar_select %p62, %s63, %s64
    %p68 = pneg %p62
    %p69 = scmp.eq.s32.totalorder %s11, 1
    %p70 = por %p68, %p69
    %p71 = scmp.ne.s32.totalorder %s63, %s66
    %p72 = scmp.eq.s32.totalorder %s11, 0
    %p73 = por %p71, %p72
    %p74 = scmp.ne.s32.totalorder %s63, %s66
    %p75 = scmp.eq.s32.totalorder %s16, 1
    %p76 = por %p74, %p75
    %p77 = scmp.ne.s32.totalorder %s66, %s67
    %p78 = scmp.eq.s32.totalorder %s16, 0
    %p79 = por %p77, %p78
    %p80 = scmp.ne.s32.totalorder %s66, %s67
    %p81 = scmp.eq.s32.totalorder %s17, 1
    %p82 = por %p80, %p81
    %p84 = scmp.ne.s32.totalorder %s67, %s83
    %p85 = scmp.eq.s32.totalorder %s17, 0
    %p86 = por %p84, %p85
    %s88 = sadd.s32 %s87, 1
    %p91 = scmp.eq.s32.totalorder %s11, 1
    %p92 = scmp.ne.s32.totalorder %s87, %s89
    %p93 = scmp.eq.s32.totalorder %s11, 0
    %p94 = por %p92, %p93
    %p95 = scmp.ne.s32.totalorder %s87, %s89
    %p96 = scmp.eq.s32.totalorder %s16, 1
    %p97 = por %p95, %p96
    %p98 = scmp.ne.s32.totalorder %s89, %s90
    %p99 = scmp.eq.s32.totalorder %s16, 0
    %p100 = por %p98, %p99
    %p101 = scmp.ne.s32.totalorder %s89, %s90
    %p102 = scmp.eq.s32.totalorder %s17, 1
    %p103 = por %p101, %p102
    %p105 = scmp.ne.s32.totalorder %s90, %s104
    %p106 = scmp.eq.s32.totalorder %s17, 0
    %p107 = por %p105, %p106
    %s108 = ssub.s32 %s18, %s30
    %s109 = ssub.s32 %s19, %s26
    %s110 = sor.u32 %s108, %s109
    %p111 = scmp.eq.s32.totalorder %s110, 0
    %s113 = sadd.s32 %s112, 1
    %s114 = scalar_select %p111, %s112, %s113
    %p117 = pneg %p111
    %p118 = scmp.eq.s32.totalorder %s11, 1
    %p119 = por %p117, %p118
    %p120 = scmp.ne.s32.totalorder %s112, %s115
    %p121 = scmp.eq.s32.totalorder %s11, 0
    %p122 = por %p120, %p121
    %p123 = scmp.ne.s32.totalorder %s112, %s115
    %p124 = scmp.eq.s32.totalorder %s16, 1
    %p125 = por %p123, %p124
    %p126 = scmp.ne.s32.totalorder %s115, %s116
    %p127 = scmp.eq.s32.totalorder %s16, 0
    %p128 = por %p126, %p127
    %p129 = scmp.ne.s32.totalorder %s115, %s116
    %p130 = scmp.eq.s32.totalorder %s17, 1
    %p131 = por %p129, %p130
    %p133 = scmp.ne.s32.totalorder %s116, %s132
    %p134 = scmp.eq.s32.totalorder %s17, 0
    %p135 = por %p133, %p134
    %s136 = ssub.s32 %s18, %s30
    %s137 = ssub.s32 %s19, %s26
    %s138 = sor.u32 %s136, %s137
    %p139 = scmp.eq.s32.totalorder %s138, 0
    %s141 = sadd.s32 %s140, 1
    %s142 = scalar_select %p139, %s140, %s141
    %p145 = pneg %p139
    %p146 = scmp.eq.s32.totalorder %s11, 1
    %p147 = por %p145, %p146
    %p148 = scmp.ne.s32.totalorder %s140, %s143
    %p149 = scmp.eq.s32.totalorder %s11, 0
    %p150 = por %p148, %p149
    %p151 = scmp.ne.s32.totalorder %s140, %s143
    %p152 = scmp.eq.s32.totalorder %s16, 1
    %p153 = por %p151, %p152
    %p154 = scmp.ne.s32.totalorder %s143, %s144
    %p155 = scmp.eq.s32.totalorder %s16, 0
    %p156 = por %p154, %p155
    %p157 = scmp.ne.s32.totalorder %s143, %s144
    %p158 = scmp.eq.s32.totalorder %s17, 1
    %p159 = por %p157, %p158
    %p161 = scmp.ne.s32.totalorder %s144, %s160
    %p162 = scmp.eq.s32.totalorder %s17, 0
    %p163 = por %p161, %p162
    %p164 = scmp.le.s32.totalorder 1, %s11
    %p165 = scmp.lt.s32.totalorder %s11, 3
    %p166 = pnand %p164, %p165
    %p167 = pneg %p166
    // Predicated region
    $region9: #{rsu5_forward.34} parent=5 // pred_check
      _
    $region10: #{rsu5_forward.34} parent=5 // pred_check_branch
      %169 = sbr.rel (%p166) target = $region12
    $region11: #{rsu5_forward.34} parent=5 // pred_region
      %s170 = ssub.s32 %s11, 1
      // Predicated region
      $region13: #{rsu5_forward.34} parent=11 // pred_check
        %p171 = pneg %p100
      $region14: #{rsu5_forward.34} parent=11 // pred_check_branch
        %173 = sbr.rel (%p171) target = $region16
      $region15: #{rsu5_forward.34} parent=11 // pred_region
        _
      $region16: #{rsu5_forward.34} parent=11 // pred_fallthru
        _
    $region12: #{rsu5_forward.34} parent=5 // pred_fallthru
      _
    %p174 = scmp.lt.s32.totalorder %s11, 2
    // Predicated region
    $region17: #{rsu5_forward.34} parent=5 // pred_check
      %p175 = pneg %p174
    $region18: #{rsu5_forward.34} parent=5 // pred_check_branch
      %177 = sbr.rel (%p175) target = $region20
    $region19: #{rsu5_forward.34} parent=5 // pred_region
      // Predicated region
      $region21: #{rsu5_forward.34} parent=19 // pred_check
        %p178 = pneg %p45
      $region22: #{rsu5_forward.34} parent=19 // pred_check_branch
        %180 = sbr.rel (%p178) target = $region24
      $region23: #{rsu5_forward.34} parent=19 // pred_region
        %p181 = scmp.lt.s32.totalorder %s18, 1
        %s182 = scalar_select %p181, %s18, 1
        %p183 = scmp.lt.s32.totalorder %s19, 0
        %s184 = scalar_select %p183, %s19, 0
        %s185 = smul.addr %s182, 2
        %s186 = sadd.s32 %s184, %s185
        %s187 = smul.addr %s186, 4
        %s188 = scalar_lea.vmem %s0, %s187
      $region24: #{rsu5_forward.34} parent=19 // pred_fallthru
        _
      // Predicated region
      $region25: #{rsu5_forward.34} parent=19 // pred_check
        %p189 = pneg %p73
      $region26: #{rsu5_forward.34} parent=19 // pred_check_branch
        %191 = sbr.rel (%p189) target = $region28
      $region27: #{rsu5_forward.34} parent=19 // pred_region
        %p192 = scmp.lt.s32.totalorder %s18, 1
        %s193 = scalar_select %p192, %s18, 1
        %p194 = scmp.lt.s32.totalorder %s19, 0
        %s195 = scalar_select %p194, %s19, 0
        %s196 = smul.addr %s193, 2
        %s197 = sadd.s32 %s195, %s196
        %s198 = smul.addr %s197, 4
        %s199 = scalar_lea.vmem %s1, %s198
      $region28: #{rsu5_forward.34} parent=19 // pred_fallthru
        _
    $region20: #{rsu5_forward.34} parent=5 // pred_fallthru
      _
    %p200 = scmp.le.s32.totalorder 1, %s11
    %p201 = scmp.lt.s32.totalorder %s11, 3
    %p202 = pnand %p200, %p201
    %p203 = pneg %p202
    // Predicated region
    $region29: #{rsu5_forward.34} parent=5 // pred_check
      _
    $region30: #{rsu5_forward.34} parent=5 // pred_check_branch
      %205 = sbr.rel (%p202) target = $region32
    $region31: #{rsu5_forward.34} parent=5 // pred_region
      %s206 = ssub.s32 %s11, 1
      %p207 = scmp.lt.s32.totalorder %s20, 1
      %s208 = scalar_select %p207, %s20, 1
      %p209 = scmp.lt.s32.totalorder %s21, 0
      %s210 = scalar_select %p209, %s21, 0
      %s211 = smul.addr %s208, 2
      %s212 = sadd.s32 %s210, %s211
      %s213 = smul.addr %s212, 4
      %s214 = scalar_lea.vmem %s0, %s213
      %p215 = pneg %p51
      %p216 = pneg %p48
      %p217 = scmp.lt.s32.totalorder %s20, 1
      %s218 = scalar_select %p217, %s20, 1
      %p219 = scmp.lt.s32.totalorder %s21, 0
      %s220 = scalar_select %p219, %s21, 0
      %s221 = smul.addr %s218, 2
      %s222 = sadd.s32 %s220, %s221
      %s223 = smul.addr %s222, 4
      %s224 = scalar_lea.vmem %s1, %s223
      %p225 = pneg %p79
      %p226 = pneg %p76
      %p227 = pneg %p100
      %p228 = pneg %p97
      %p229 = pneg %p128
      %p230 = pneg %p125
      %p231 = scmp.lt.s32.totalorder %s20, 1
      %s232 = scalar_select %p231, %s20, 1
      %p233 = scmp.lt.s32.totalorder %s21, 0
      %s234 = scalar_select %p233, %s21, 0
      %s235 = smul.addr %s232, 2
      %s236 = sadd.s32 %s234, %s235
      %s237 = smul.addr %s236, 4
      %s238 = scalar_lea.vmem %s3, %s237
      %p239 = pneg %p156
      %p240 = pneg %p153
      %p241 = scmp.lt.s32.totalorder %s20, 1
      %s242 = scalar_select %p241, %s20, 1
      %p243 = scmp.lt.s32.totalorder %s21, 0
      %s244 = scalar_select %p243, %s21, 0
      %s245 = smul.addr %s244, 2
      %s246 = smul.addr %s242, 2
      %s247 = sadd.s32 %s245, %s246
      %s248 = smul.addr %s247, 8
      %s249 = scalar_lea.vmem %s4, %s248
      %p250 = scmp.lt.s32.totalorder %s20, 1
      %s251 = scalar_select %p250, %s20, 1
      %p252 = scmp.lt.s32.totalorder %s21, 0
      %s253 = scalar_select %p252, %s21, 0
      %s254 = smul.addr %s251, 2
      %s255 = sadd.s32 %s253, %s254
      %s256 = smul.addr %s255, 4
      %s257 = scalar_lea.vmem %s0, %s256
      %p258 = scmp.lt.s32.totalorder %s20, 1
      %s259 = scalar_select %p258, %s20, 1
      %p260 = scmp.lt.s32.totalorder %s21, 0
      %s261 = scalar_select %p260, %s21, 0
      %s262 = smul.addr %s259, 2
      %s263 = sadd.s32 %s261, %s262
      %s264 = smul.addr %s263, 4
      %s265 = scalar_lea.vmem %s1, %s264
      %p266 = scmp.lt.s32.totalorder %s20, 1
      %s267 = scalar_select %p266, %s20, 1
      %p268 = scmp.lt.s32.totalorder %s21, 0
      %s269 = scalar_select %p268, %s21, 0
      %s270 = smul.addr %s267, 2
      %s271 = sadd.s32 %s269, %s270
      %s272 = smul.addr %s271, 4
      %s273 = scalar_lea.vmem %s3, %s272
      %p274 = scmp.lt.s32.totalorder %s20, 1
      %s275 = scalar_select %p274, %s20, 1
      %p276 = scmp.lt.s32.totalorder %s21, 0
      %s277 = scalar_select %p276, %s21, 0
      %s278 = smul.addr %s277, 2
      %s279 = smul.addr %s275, 2
      %s280 = sadd.s32 %s278, %s279
      %s281 = smul.addr %s280, 8
      %s282 = scalar_lea.vmem %s4, %s281
      %v284 = vld [vmem:[%s257] sm:$0xf]
      %v285 = vld [vmem:[%s257 + $0x4] sm:$0xf]
      %v288 = vunpack.c.l.b16 %v284
      %v289 = vunpack.c.l.b16 %v285
      %v290 = vpack.c.b16 %v289, %v288
      %291 = vrot.lane.b32.xlu0 %v290, 4
      %v292 = vpop.permute.xlu0 %291
      %vm293 = vcmask 31744
      %v296 = vsel %vm293, 0, %v292
      %298 = vrot.lane.b32.xlu0 %v290, 124
      %v299 = vpop.permute.xlu0 %298
      %vm300 = vcmask 97280
      %v302 = vsel %vm300, %v299, 0
      %v304 = vld [vmem:[%s265] sm:$0xf]
      %v305 = vld [vmem:[%s265 + $0x4] sm:$0xf]
      %v308 = vunpack.c.l.b16 %v304
      %v309 = vunpack.c.l.b16 %v305
      %v310 = vpack.c.b16 %v309, %v308
      %311 = vrot.lane.b32.xlu0 %v310, 4
      %v312 = vpop.permute.xlu0 %311
      %v314 = vsel %vm293, 0, %v312
      %316 = vrot.lane.b32.xlu0 %v310, 124
      %v317 = vpop.permute.xlu0 %316
      %v319 = vsel %vm300, %v317, 0
      %v323 = vld [vmem:[%s2] sm:$0xf]
      %v324 = vld [vmem:[%s2 + $0x4] sm:$0xf]
      %v327 = vunpack.c.l.b16 %v323
      %v328 = vunpack.c.l.b16 %v324
      %v329 = vpack.c.b16 %v328, %v327
      %vm330 = vcmask 785408
      %v332 = vsel %vm330, %v329, 0
      %334 = vmatprep.subr.bf16.mxu0 0
      %335 = vmatpush1.bf16.msra.mxu0 %v296
      %336 = vmatprep.subr.bf16.mxu0 0
      %337 = vmatpush1.bf16.msra.mxu0 %v290
      %338 = vmatprep.subr.bf16.mxu0 0
      %339 = vmatpush1.bf16.msra.mxu0 %v302
      %340 = vmatprep.subr.bf16.mxu0 0
      %341 = vmatpush1.bf16.msra.mxu0 %v314
      %342 = vmatprep.subr.bf16.mxu0 0
      %343 = vmatpush1.bf16.msra.mxu0 %v310
      %344 = vmatprep.subr.bf16.mxu0 0
      %345 = vmatpush1.bf16.msra.mxu0 %v319
      %346 = vmatprep.subr.bf16.mxu0 0
      %347 = vmatpush1.bf16.msra.mxu0 0
      %348 = vmatprep.subr.bf16.mxu0 0
      %349 = vmatpush1.bf16.msra.mxu0 0
      %350 = vmatprep.subr.bf16.mxu0 0
      %351 = vmatpush1.bf16.msra.mxu0 0
      %352 = vmatprep.subr.bf16.mxu0 0
      %353 = vmatpush1.bf16.msra.mxu0 0
      %354 = vmatprep.subr.bf16.mxu0 0
      %355 = vmatpush1.bf16.msra.mxu0 0
      %356 = vmatprep.subr.bf16.mxu0 0
      %357 = vmatpush1.bf16.msra.mxu0 0
      %358 = vmatprep.subr.bf16.mxu0 0
      %359 = vmatpush1.bf16.msra.mxu0 0
      %360 = vmatprep.subr.bf16.mxu0 0
      %361 = vmatpush1.bf16.msra.mxu0 0
      %362 = vmatprep.subr.bf16.mxu0 0
      %363 = vmatpush1.bf16.msra.mxu0 0
      %364 = vmatprep.subr.bf16.mxu0 0
      %365 = vmatpush1.bf16.msra.mxu0 0
      %366 = vmatprep.mubr.bf16.mxu0 0
      %367 = vmatmul.mubr.bf16.gmra.mrb[0].mxu0 %v332
      %v368 = vpop.f32.mrb[0].mxu0
      %v369 = vadd.f32 0.0, %v368
      %v370 = vpop.f32.mrb[0].mxu0
      %v371 = vpop.f32.mrb[0].mxu0
      %v372 = vadd.f32 0.0, %v371
      %v373 = vpop.f32.mrb[0].mxu0
      %374 = vdwg.mxu0
      %s375 = scalar_lea.vmem %s2, 8
      %v376 = vld [vmem:[%s375] sm:$0xf]
      %v377 = vld [vmem:[%s375 + $0x4] sm:$0xf]
      %s378 = scalar_lea.vmem %s2, 16
      %v379 = vld [vmem:[%s378] sm:$0xf]
      %v380 = vld [vmem:[%s378 + $0x4] sm:$0xf]
      %v383 = vunpack.c.l.b16 %v379
      %v384 = vunpack.c.l.b16 %v380
      %v385 = vpack.c.b16 %v384, %v383
      %v387 = vsel %vm330, %v385, 0
      %389 = vmatprep.subr.bf16.mxu0 0
      %390 = vmatpush1.bf16.msra.mxu0 %v296
      %391 = vmatprep.subr.bf16.mxu0 0
      %392 = vmatpush1.bf16.msra.mxu0 %v290
      %393 = vmatprep.subr.bf16.mxu0 0
      %394 = vmatpush1.bf16.msra.mxu0 %v302
      %395 = vmatprep.subr.bf16.mxu0 0
      %396 = vmatpush1.bf16.msra.mxu0 %v314
      %397 = vmatprep.subr.bf16.mxu0 0
      %398 = vmatpush1.bf16.msra.mxu0 %v310
      %399 = vmatprep.subr.bf16.mxu0 0
      %400 = vmatpush1.bf16.msra.mxu0 %v319
      %401 = vmatprep.subr.bf16.mxu0 0
      %402 = vmatpush1.bf16.msra.mxu0 0
      %403 = vmatprep.subr.bf16.mxu0 0
      %404 = vmatpush1.bf16.msra.mxu0 0
      %405 = vmatprep.subr.bf16.mxu0 0
      %406 = vmatpush1.bf16.msra.mxu0 0
      %407 = vmatprep.subr.bf16.mxu0 0
      %408 = vmatpush1.bf16.msra.mxu0 0
      %409 = vmatprep.subr.bf16.mxu0 0
      %410 = vmatpush1.bf16.msra.mxu0 0
      %411 = vmatprep.subr.bf16.mxu0 0
      %412 = vmatpush1.bf16.msra.mxu0 0
      %413 = vmatprep.subr.bf16.mxu0 0
      %414 = vmatpush1.bf16.msra.mxu0 0
      %415 = vmatprep.subr.bf16.mxu0 0
      %416 = vmatpush1.bf16.msra.mxu0 0
      %417 = vmatprep.subr.bf16.mxu0 0
      %418 = vmatpush1.bf16.msra.mxu0 0
      %419 = vmatprep.subr.bf16.mxu0 0
      %420 = vmatpush1.bf16.msra.mxu0 0
      %421 = vmatprep.mubr.bf16.mxu0 0
      %422 = vmatmul.mubr.bf16.gmra.mrb[0].mxu0 %v387
      %v423 = vpop.f32.mrb[0].mxu0
      %v424 = vadd.f32 0.0, %v423
      %v425 = vpop.f32.mrb[0].mxu0
      %v426 = vpop.f32.mrb[0].mxu0
      %v427 = vadd.f32 0.0, %v426
      %v428 = vpop.f32.mrb[0].mxu0
      %429 = vdwg.mxu0
      %v430 = vlaneseq
      %v431 = vand.u32 %v430, 127
      %vm432 = vcmp.lt.s32.totalorder %v431, 0
      %v433 = vsub.s32 0, %v431
      %v434 = vsel %vm432, %v433, %v431
      %v435 = vshrl.u32 %v434, 2
      %v436 = vand.u32 %v434, 3
      %v437 = vsub.s32 0, %v436
      %v438 = vsel %vm432, %v437, %v436
      %vm439 = vcmp.ne.s32.totalorder %v438, 0
      %vm440 = vcmp.lt.s32.totalorder %v438, 0
      %vm441 = vmand %vm440, %vm439
      %v442 = vadd.s32 %v438, 4
      %v443 = vsel %vm441, %v442, %v438
      %446 = vrot.lane.b32.xlu0 %v369, 1
      %v447 = vpop.permute.xlu0 %446
      %448 = vrot.lane.b32.xlu0 %v372, 1
      %v449 = vpop.permute.xlu0 %448
      %vm452 = vcmask 7168
      %v453 = vsel %vm452, 0.0, %v447
      %v454 = vsel %vm452, 0.0, %v449
      %457 = vrot.lane.b32.xlu0 %v424, 127
      %v458 = vpop.permute.xlu0 %457
      %459 = vrot.lane.b32.xlu0 %v427, 127
      %v460 = vpop.permute.xlu0 %459
      %vm463 = vcmask 121856
      %v464 = vsel %vm463, %v458, 0.0
      %v465 = vsel %vm463, %v460, 0.0
      %vm466 = vcmp.ge.s32.totalorder %v443, 1
      %v467 = vsel %vm466, 1, 0
      %vm468 = vcmp.eq.s32.totalorder %v467, 1
      %v469 = vsel %vm468, %v453, 0.0
      %v470 = vsel %vm468, %v454, 0.0
      %v473 = vunpack.c.l.b16 %v376
      %v474 = vunpack.c.l.b16 %v377
      %v475 = vpack.c.b16 %v474, %v473
      %v477 = vsel %vm330, %v475, 0
      %479 = vmatprep.subr.bf16.mxu0 0
      %480 = vmatpush1.bf16.msra.mxu0 %v296
      %481 = vmatprep.subr.bf16.mxu0 0
      %482 = vmatpush1.bf16.msra.mxu0 %v290
      %483 = vmatprep.subr.bf16.mxu0 0
      %484 = vmatpush1.bf16.msra.mxu0 %v302
      %485 = vmatprep.subr.bf16.mxu0 0
      %486 = vmatpush1.bf16.msra.mxu0 %v314
      %487 = vmatprep.subr.bf16.mxu0 0
      %488 = vmatpush1.bf16.msra.mxu0 %v310
      %489 = vmatprep.subr.bf16.mxu0 0
      %490 = vmatpush1.bf16.msra.mxu0 %v319
      %491 = vmatprep.subr.bf16.mxu0 0
      %492 = vmatpush1.bf16.msra.mxu0 0
      %493 = vmatprep.subr.bf16.mxu0 0
      %494 = vmatpush1.bf16.msra.mxu0 0
      %495 = vmatprep.subr.bf16.mxu0 0
      %496 = vmatpush1.bf16.msra.mxu0 0
      %497 = vmatprep.subr.bf16.mxu0 0
      %498 = vmatpush1.bf16.msra.mxu0 0
      %499 = vmatprep.subr.bf16.mxu0 0
      %500 = vmatpush1.bf16.msra.mxu0 0
      %501 = vmatprep.subr.bf16.mxu0 0
      %502 = vmatpush1.bf16.msra.mxu0 0
      %503 = vmatprep.subr.bf16.mxu0 0
      %504 = vmatpush1.bf16.msra.mxu0 0
      %505 = vmatprep.subr.bf16.mxu0 0
      %506 = vmatpush1.bf16.msra.mxu0 0
      %507 = vmatprep.subr.bf16.mxu0 0
      %508 = vmatpush1.bf16.msra.mxu0 0
      %509 = vmatprep.subr.bf16.mxu0 0
      %510 = vmatpush1.bf16.msra.mxu0 0
      %511 = vmatprep.mubr.bf16.mxu0 0
      %512 = vmatmul.mubr.bf16.gmra.mrb[0].mxu0 %v477
      %v513 = vpop.f32.mrb[0].mxu0
      %v514 = vadd.f32 %v469, %v513
      %v515 = vpop.f32.mrb[0].mxu0
      %v516 = vpop.f32.mrb[0].mxu0
      %v517 = vadd.f32 %v470, %v516
      %v518 = vpop.f32.mrb[0].mxu0
      %519 = vdwg.mxu0
      %vm520 = vcmp.lt.s32.totalorder %v443, 3
      %v521 = vsel %vm520, 1, 0
      %vm522 = vcmp.eq.s32.totalorder %v521, 1
      %v523 = vsel %vm522, %v464, 0.0
      %v524 = vsel %vm522, %v465, 0.0
      %v525 = vadd.f32 %v514, %v523
      %v526 = vadd.f32 %v517, %v524
      %v527 = vpack.c.bf16 %v526, %v525
      %v529 = vunpack.c.l.b16 %v527
      %v530 = vunpack.c.h.b16 %v527
      %v531 = vpack.c.b16 %v529, %v529
      %v532 = vpack.c.b16 %v530, %v530
      %vm535 = vcmask 125952
      %536 = vst.msk [vmem:[%s273] sm:$0xf] %vm535, %v531
      %537 = vst.msk [vmem:[%s273 + $0x4] sm:$0xf] %vm535, %v532
      %vm538 = vcmask 130048
      %v539 = vsel %vm538, %v525, 0.0
      %540 = vadd.xlane.f32.xlu0 %v539
      %v541 = vpop.xlane.xlu0 %540
      %v542 = vsel %vm538, %v526, 0.0
      %543 = vadd.xlane.f32.xlu0 %v542
      %v544 = vpop.xlane.xlu0 %543
      %v545 = vmul.f32 %v525, %v525
      %v546 = vmul.f32 %v526, %v526
      %v547 = vsel %vm538, %v545, 0.0
      %548 = vadd.xlane.f32.xlu0 %v547
      %v549 = vpop.xlane.xlu0 %548
      %v550 = vsel %vm538, %v546, 0.0
      %551 = vadd.xlane.f32.xlu0 %v550
      %v552 = vpop.xlane.xlu0 %551
      %v553 = vsel %vm452, %v541, %v549
      %v554 = vsel %vm452, %v544, %v552
      %vm555 = vcmask 15360
      %556 = vst.msk [vmem:[%s282] sm:$0xff] %vm555, %v553
      %557 = vst.msk [vmem:[%s282 + $0x8] sm:$0xff] %vm555, %v554
      %p558 = scmp.lt.s32.totalorder %s20, 1
      %s559 = scalar_select %p558, %s20, 1
      %p560 = scmp.lt.s32.totalorder %s21, 0
      %s561 = scalar_select %p560, %s21, 0
      %s562 = smul.addr %s559, 2
      %s563 = sadd.s32 %s561, %s562
      %s564 = smul.addr %s563, 4
      %s565 = scalar_lea.vmem %s3, %s564
      %p566 = scmp.lt.s32.totalorder %s20, 1
      %s567 = scalar_select %p566, %s20, 1
      %p568 = scmp.lt.s32.totalorder %s21, 0
      %s569 = scalar_select %p568, %s21, 0
      %s570 = smul.addr %s569, 2
      %s571 = smul.addr %s567, 2
      %s572 = sadd.s32 %s570, %s571
      %s573 = smul.addr %s572, 8
      %s574 = scalar_lea.vmem %s4, %s573
      // Predicated region
      $region33: #{rsu5_forward.34} parent=31 // pred_check
        %p575 = pneg %p125
      $region34: #{rsu5_forward.34} parent=31 // pred_check_branch
        %577 = sbr.rel (%p575) target = $region36
      $region35: #{rsu5_forward.34} parent=31 // pred_region
        _
      $region36: #{rsu5_forward.34} parent=31 // pred_fallthru
        _
      // Predicated region
      $region37: #{rsu5_forward.34} parent=31 // pred_check
        %p578 = pneg %p153
      $region38: #{rsu5_forward.34} parent=31 // pred_check_branch
        %580 = sbr.rel (%p578) target = $region40
      $region39: #{rsu5_forward.34} parent=31 // pred_region
        _
      $region40: #{rsu5_forward.34} parent=31 // pred_fallthru
        _
    $region32: #{rsu5_forward.34} parent=5 // pred_fallthru
      _
    %p581 = scmp.le.s32.totalorder 2, %s11
    // Predicated region
    $region41: #{rsu5_forward.34} parent=5 // pred_check
      %p582 = pneg %p581
    $region42: #{rsu5_forward.34} parent=5 // pred_check_branch
      %584 = sbr.rel (%p582) target = $region44
    $region43: #{rsu5_forward.34} parent=5 // pred_region
      %s585 = ssub.s32 %s11, 2
      // Predicated region
      $region45: #{rsu5_forward.34} parent=43 // pred_check
        %p586 = pneg %p131
      $region46: #{rsu5_forward.34} parent=43 // pred_check_branch
        %588 = sbr.rel (%p586) target = $region48
      $region47: #{rsu5_forward.34} parent=43 // pred_region
        %p589 = scmp.lt.s32.totalorder %s22, 1
        %s590 = scalar_select %p589, %s22, 1
        %p591 = scmp.lt.s32.totalorder %s23, 0
        %s592 = scalar_select %p591, %s23, 0
        %s593 = smul.addr %s590, 2
        %s594 = sadd.s32 %s592, %s593
        %s595 = smul.addr %s594, 4
        %s596 = scalar_lea.vmem %s3, %s595
      $region48: #{rsu5_forward.34} parent=43 // pred_fallthru
        _
      // Predicated region
      $region49: #{rsu5_forward.34} parent=43 // pred_check
        %p597 = pneg %p159
      $region50: #{rsu5_forward.34} parent=43 // pred_check_branch
        %599 = sbr.rel (%p597) target = $region52
      $region51: #{rsu5_forward.34} parent=43 // pred_region
        %p600 = scmp.lt.s32.totalorder %s22, 1
        %s601 = scalar_select %p600, %s22, 1
        %p602 = scmp.lt.s32.totalorder %s23, 0
        %s603 = scalar_select %p602, %s23, 0
        %s604 = smul.addr %s603, 2
        %s605 = smul.addr %s601, 2
        %s606 = sadd.s32 %s604, %s605
        %s607 = smul.addr %s606, 8
        %s608 = scalar_lea.vmem %s4, %s607
      $region52: #{rsu5_forward.34} parent=43 // pred_fallthru
        _
    $region44: #{rsu5_forward.34} parent=5 // pred_fallthru
      _
  $region6: #{rsu5_forward.34} parent=0 // loop_footer
    %s15 = sadd.s32 1, %s11
  $region7: #{rsu5_forward.34} parent=0 // loop_footer_branch
    %10 = sbr.rel target = $region3
  $region8: #{rsu5_forward.34} parent=0 // loop_exit
    _

// kernel: rsu5_forward.39
$region0: #{rsu5_forward.39}
  #allocation0 [shape = 'u32[]', space=smem, size = 0x4, offset = 0x4, fixed_abs, tag = 'smem constant byte address 0x4 - core index']
  #allocation1 [shape = 'u32[144,128]{1,0:T(1,128)}', space=vmem, size = 0x12000, scoped, tag = 'internal scratch']
  %s0 = inlined_call_operand.vmem [shape: bf16[2,16,256], index: 0, kind: input, shape index: {}]
  %s1 = inlined_call_operand.vmem [shape: f32[16,2], index: 1, kind: input, shape index: {}]
  %s2 = inlined_call_operand.vmem [shape: bf16[2,16,256], index: 2, kind: input, shape index: {}]
  %s3 = inlined_call_operand.vmem [shape: bf16[2,16,256], index: 3, kind: output, shape index: {}]
  %s4 = sld [smem:[#allocation0]]
  $region45: #{rsu5_forward.39} parent=0
    _
  %s6 = ssub.s32 1, %s4
  %s7 = scalar_select 0, %s6, %s4
  loop: start=0, step=1, limit=4
  $region2: #{rsu5_forward.39} parent=0 // loop_pre_header
    _
  $region3: #{rsu5_forward.39} parent=0 // loop_header
    %s9 = sphi 0, %s13
    %p10 = scmp.ge.s32.totalorder %s9, 4
    %s16 = sphi 0, %s28
    %s17 = sphi 0, %s24
    %s18 = sphi 0, %s16
    %s19 = sphi 0, %s17
    %s20 = sphi 0, %s18
    %s21 = sphi 0, %s19
    %s33 = sphi 0, %s35
    %s36 = sphi 0, %s33
    %s37 = sphi 0, %s36
    %s53 = sphi 0, %s37
    %s57 = sphi 0, %s57
    %s59 = sphi 0, %s57
    %s60 = sphi 0, %s59
    %s74 = sphi 0, %s60
    %s82 = sphi 0, %s84
    %s85 = sphi 0, %s82
    %s86 = sphi 0, %s85
    %s102 = sphi 0, %s86
    %s110 = sphi 0, %s112
    %s113 = sphi 0, %s110
    %s114 = sphi 0, %s113
    %s130 = sphi 0, %s114
  $region4: #{rsu5_forward.39} parent=0 // loop_header_branch
    %12 = sbr.rel (%p10) target = $region8
  $region5: #{rsu5_forward.39} parent=0 // loop_body
    %s14 = ssub.s32 %s9, 1
    %s15 = ssub.s32 %s9, 2
    %s22 = sadd.s32 1, %s17
    %p23 = scmp.ge.s32.totalorder %s22, 1
    %s24 = scalar_select %p23, 0, %s22
    %s25 = sadd.s32 1, %s16
    %s26 = scalar_select %p23, %s25, %s16
    %p27 = scmp.ge.s32.totalorder %s26, 2
    %s28 = scalar_select %p27, 0, %s26
    %s29 = ssub.s32 %s16, %s28
    %s30 = ssub.s32 %s17, %s24
    %s31 = sor.u32 %s29, %s30
    %p32 = scmp.eq.s32.totalorder %s31, 0
    %s34 = sadd.s32 %s33, 1
    %s35 = scalar_select %p32, %s33, %s34
    %p38 = pneg %p32
    %p39 = scmp.eq.s32.totalorder %s9, 1
    %p40 = por %p38, %p39
    %p41 = scmp.ne.s32.totalorder %s33, %s36
    %p42 = scmp.eq.s32.totalorder %s9, 0
    %p43 = por %p41, %p42
    %p44 = scmp.ne.s32.totalorder %s33, %s36
    %p45 = scmp.eq.s32.totalorder %s14, 1
    %p46 = por %p44, %p45
    %p47 = scmp.ne.s32.totalorder %s36, %s37
    %p48 = scmp.eq.s32.totalorder %s14, 0
    %p49 = por %p47, %p48
    %p50 = scmp.ne.s32.totalorder %s36, %s37
    %p51 = scmp.eq.s32.totalorder %s15, 1
    %p52 = por %p50, %p51
    %p54 = scmp.ne.s32.totalorder %s37, %s53
    %p55 = scmp.eq.s32.totalorder %s15, 0
    %p56 = por %p54, %p55
    %s58 = sadd.s32 %s57, 1
    %p61 = scmp.eq.s32.totalorder %s9, 1
    %p62 = scmp.ne.s32.totalorder %s57, %s59
    %p63 = scmp.eq.s32.totalorder %s9, 0
    %p64 = por %p62, %p63
    %p65 = scmp.ne.s32.totalorder %s57, %s59
    %p66 = scmp.eq.s32.totalorder %s14, 1
    %p67 = por %p65, %p66
    %p68 = scmp.ne.s32.totalorder %s59, %s60
    %p69 = scmp.eq.s32.totalorder %s14, 0
    %p70 = por %p68, %p69
    %p71 = scmp.ne.s32.totalorder %s59, %s60
    %p72 = scmp.eq.s32.totalorder %s15, 1
    %p73 = por %p71, %p72
    %p75 = scmp.ne.s32.totalorder %s60, %s74
    %p76 = scmp.eq.s32.totalorder %s15, 0
    %p77 = por %p75, %p76
    %s78 = ssub.s32 %s16, %s28
    %s79 = ssub.s32 %s17, %s24
    %s80 = sor.u32 %s78, %s79
    %p81 = scmp.eq.s32.totalorder %s80, 0
    %s83 = sadd.s32 %s82, 1
    %s84 = scalar_select %p81, %s82, %s83
    %p87 = pneg %p81
    %p88 = scmp.eq.s32.totalorder %s9, 1
    %p89 = por %p87, %p88
    %p90 = scmp.ne.s32.totalorder %s82, %s85
    %p91 = scmp.eq.s32.totalorder %s9, 0
    %p92 = por %p90, %p91
    %p93 = scmp.ne.s32.totalorder %s82, %s85
    %p94 = scmp.eq.s32.totalorder %s14, 1
    %p95 = por %p93, %p94
    %p96 = scmp.ne.s32.totalorder %s85, %s86
    %p97 = scmp.eq.s32.totalorder %s14, 0
    %p98 = por %p96, %p97
    %p99 = scmp.ne.s32.totalorder %s85, %s86
    %p100 = scmp.eq.s32.totalorder %s15, 1
    %p101 = por %p99, %p100
    %p103 = scmp.ne.s32.totalorder %s86, %s102
    %p104 = scmp.eq.s32.totalorder %s15, 0
    %p105 = por %p103, %p104
    %s106 = ssub.s32 %s16, %s28
    %s107 = ssub.s32 %s17, %s24
    %s108 = sor.u32 %s106, %s107
    %p109 = scmp.eq.s32.totalorder %s108, 0
    %s111 = sadd.s32 %s110, 1
    %s112 = scalar_select %p109, %s110, %s111
    %p115 = pneg %p109
    %p116 = scmp.eq.s32.totalorder %s9, 1
    %p117 = por %p115, %p116
    %p118 = scmp.ne.s32.totalorder %s110, %s113
    %p119 = scmp.eq.s32.totalorder %s9, 0
    %p120 = por %p118, %p119
    %p121 = scmp.ne.s32.totalorder %s110, %s113
    %p122 = scmp.eq.s32.totalorder %s14, 1
    %p123 = por %p121, %p122
    %p124 = scmp.ne.s32.totalorder %s113, %s114
    %p125 = scmp.eq.s32.totalorder %s14, 0
    %p126 = por %p124, %p125
    %p127 = scmp.ne.s32.totalorder %s113, %s114
    %p128 = scmp.eq.s32.totalorder %s15, 1
    %p129 = por %p127, %p128
    %p131 = scmp.ne.s32.totalorder %s114, %s130
    %p132 = scmp.eq.s32.totalorder %s15, 0
    %p133 = por %p131, %p132
    %p134 = scmp.le.s32.totalorder 1, %s9
    %p135 = scmp.lt.s32.totalorder %s9, 3
    %p136 = pnand %p134, %p135
    %p137 = pneg %p136
    // Predicated region
    $region9: #{rsu5_forward.39} parent=5 // pred_check
      _
    $region10: #{rsu5_forward.39} parent=5 // pred_check_branch
      %139 = sbr.rel (%p136) target = $region12
    $region11: #{rsu5_forward.39} parent=5 // pred_region
      %s140 = ssub.s32 %s9, 1
      // Predicated region
      $region13: #{rsu5_forward.39} parent=11 // pred_check
        %p141 = pneg %p70
      $region14: #{rsu5_forward.39} parent=11 // pred_check_branch
        %143 = sbr.rel (%p141) target = $region16
      $region15: #{rsu5_forward.39} parent=11 // pred_region
        _
      $region16: #{rsu5_forward.39} parent=11 // pred_fallthru
        _
    $region12: #{rsu5_forward.39} parent=5 // pred_fallthru
      _
    %p144 = scmp.lt.s32.totalorder %s9, 2
    // Predicated region
    $region17: #{rsu5_forward.39} parent=5 // pred_check
      %p145 = pneg %p144
    $region18: #{rsu5_forward.39} parent=5 // pred_check_branch
      %147 = sbr.rel (%p145) target = $region20
    $region19: #{rsu5_forward.39} parent=5 // pred_region
      // Predicated region
      $region21: #{rsu5_forward.39} parent=19 // pred_check
        %p148 = pneg %p43
      $region22: #{rsu5_forward.39} parent=19 // pred_check_branch
        %150 = sbr.rel (%p148) target = $region24
      $region23: #{rsu5_forward.39} parent=19 // pred_region
        %s151 = smul.u32 2, %s17
        %p152 = scmp.lt.s32.totalorder %s16, 1
        %s153 = scalar_select %p152, %s16, 1
        %p154 = scmp.lt.s32.totalorder %s151, 1
        %s155 = scalar_select %p154, %s151, 1
        %s156 = smul.addr %s153, 4
        %s157 = sadd.s32 %s155, %s156
        %s158 = smul.addr %s157, 4
        %s159 = scalar_lea.vmem %s0, %s158
        %s160 = smul.u32 2, %s17
      $region24: #{rsu5_forward.39} parent=19 // pred_fallthru
        _
      // Predicated region
      $region25: #{rsu5_forward.39} parent=19 // pred_check
        %p161 = pneg %p92
      $region26: #{rsu5_forward.39} parent=19 // pred_check_branch
        %163 = sbr.rel (%p161) target = $region28
      $region27: #{rsu5_forward.39} parent=19 // pred_region
        %s164 = smul.u32 2, %s17
        %p165 = scmp.lt.s32.totalorder %s16, 1
        %s166 = scalar_select %p165, %s16, 1
        %p167 = scmp.lt.s32.totalorder %s164, 1
        %s168 = scalar_select %p167, %s164, 1
        %s169 = smul.addr %s166, 4
        %s170 = sadd.s32 %s168, %s169
        %s171 = smul.addr %s170, 4
        %s172 = scalar_lea.vmem %s2, %s171
        %s173 = smul.u32 2, %s17
      $region28: #{rsu5_forward.39} parent=19 // pred_fallthru
        _
    $region20: #{rsu5_forward.39} parent=5 // pred_fallthru
      _
    %p174 = scmp.le.s32.totalorder 1, %s9
    %p175 = scmp.lt.s32.totalorder %s9, 3
    %p176 = pnand %p174, %p175
    %p177 = pneg %p176
    // Predicated region
    $region29: #{rsu5_forward.39} parent=5 // pred_check
      _
    $region30: #{rsu5_forward.39} parent=5 // pred_check_branch
      %179 = sbr.rel (%p176) target = $region32
    $region31: #{rsu5_forward.39} parent=5 // pred_region
      %s180 = ssub.s32 %s9, 1
      %s181 = smul.u32 2, %s19
      %p182 = scmp.lt.s32.totalorder %s18, 1
      %s183 = scalar_select %p182, %s18, 1
      %p184 = scmp.lt.s32.totalorder %s181, 1
      %s185 = scalar_select %p184, %s181, 1
      %s186 = smul.addr %s183, 4
      %s187 = sadd.s32 %s185, %s186
      %s188 = smul.addr %s187, 4
      %s189 = scalar_lea.vmem %s0, %s188
      %p190 = pneg %p49
      %p191 = pneg %p46
      %p192 = pneg %p70
      %p193 = pneg %p67
      %s194 = smul.u32 2, %s19
      %p195 = scmp.lt.s32.totalorder %s18, 1
      %s196 = scalar_select %p195, %s18, 1
      %p197 = scmp.lt.s32.totalorder %s194, 1
      %s198 = scalar_select %p197, %s194, 1
      %s199 = smul.addr %s196, 4
      %s200 = sadd.s32 %s198, %s199
      %s201 = smul.addr %s200, 4
      %s202 = scalar_lea.vmem %s2, %s201
      %p203 = pneg %p98
      %p204 = pneg %p95
      %p205 = pneg %p126
      %p206 = pneg %p123
      %s207 = smul.u32 2, %s19
      %p208 = scmp.lt.s32.totalorder %s18, 1
      %s209 = scalar_select %p208, %s18, 1
      %p210 = scmp.lt.s32.totalorder %s207, 1
      %s211 = scalar_select %p210, %s207, 1
      %s212 = smul.addr %s209, 4
      %s213 = sadd.s32 %s211, %s212
      %s214 = smul.addr %s213, 4
      %s215 = scalar_lea.vmem %s3, %s214
      %s216 = smul.u32 2, %s19
      %p217 = scmp.lt.s32.totalorder %s18, 1
      %s218 = scalar_select %p217, %s18, 1
      %p219 = scmp.lt.s32.totalorder %s216, 1
      %s220 = scalar_select %p219, %s216, 1
      %s221 = smul.addr %s218, 4
      %s222 = sadd.s32 %s220, %s221
      %s223 = smul.addr %s222, 4
      %s224 = scalar_lea.vmem %s0, %s223
      %s225 = smul.u32 2, %s19
      %s226 = smul.u32 2, %s19
      %p227 = scmp.lt.s32.totalorder %s18, 1
      %s228 = scalar_select %p227, %s18, 1
      %p229 = scmp.lt.s32.totalorder %s226, 1
      %s230 = scalar_select %p229, %s226, 1
      %s231 = smul.addr %s228, 4
      %s232 = sadd.s32 %s230, %s231
      %s233 = smul.addr %s232, 4
      %s234 = scalar_lea.vmem %s2, %s233
      %s235 = smul.u32 2, %s19
      %s236 = smul.u32 2, %s19
      %p237 = scmp.lt.s32.totalorder %s18, 1
      %s238 = scalar_select %p237, %s18, 1
      %p239 = scmp.lt.s32.totalorder %s236, 1
      %s240 = scalar_select %p239, %s236, 1
      %s241 = smul.addr %s238, 4
      %s242 = sadd.s32 %s240, %s241
      %s243 = smul.addr %s242, 4
      %s244 = scalar_lea.vmem %s3, %s243
      %s245 = smul.u32 2, %s19
      %v246 = vld [vmem:[%s1] sm:$0xff]
      %v247 = vld [vmem:[%s1 + $0x8] sm:$0xff]
      %v248 = vld [vmem:[%s224] sm:$0xff]
      %v249 = vld [vmem:[%s224 + $0x8] sm:$0xff]
      %v250 = vunpack.c.l.bf16 %v248
      %v251 = vunpack.c.h.bf16 %v248
      %v252 = vunpack.c.l.bf16 %v249
      %v253 = vunpack.c.h.bf16 %v249
      %255 = vset.pattern.permute.xlu0 0
      %256 = vperm.xlu0 %255, %v246
      %v257 = vpop.permute.xlu0 %256
      %260 = vset.pattern.permute.xlu0 0
      %261 = vperm.xlu0 %260, %v247
      %v262 = vpop.permute.xlu0 %261
      %v264 = vmul.f32 %v250, %v257
      %v265 = vmul.f32 %v251, %v257
      %v266 = vmul.f32 %v252, %v262
      %v267 = vmul.f32 %v253, %v262
      %268 = vset.pattern.permute.xlu0 1
      %269 = vperm.xlu0 %268, %v246
      %v270 = vpop.permute.xlu0 %269
      %272 = vset.pattern.permute.xlu0 1
      %273 = vperm.xlu0 %272, %v247
      %v274 = vpop.permute.xlu0 %273
      %v276 = vadd.f32 %v264, %v270
      %v277 = vadd.f32 %v265, %v270
      %v278 = vadd.f32 %v266, %v274
      %v279 = vadd.f32 %v267, %v274
      %v280 = vmax.f32 %v276, 0.0
      %v281 = vmax.f32 %v277, 0.0
      %v282 = vmax.f32 %v278, 0.0
      %v283 = vmax.f32 %v279, 0.0
      %v284 = vld [vmem:[%s234] sm:$0xff]
      %v285 = vld [vmem:[%s234 + $0x8] sm:$0xff]
      %v286 = vunpack.c.l.bf16 %v284
      %v287 = vunpack.c.h.bf16 %v284
      %v288 = vunpack.c.l.bf16 %v285
      %v289 = vunpack.c.h.bf16 %v285
      %v290 = vadd.f32 %v280, %v286
      %v291 = vadd.f32 %v281, %v287
      %v292 = vadd.f32 %v282, %v288
      %v293 = vadd.f32 %v283, %v289
      %v294 = vpack.c.bf16 %v292, %v290
      %v295 = vpack.c.bf16 %v293, %v291
      %v298 = vunpack.c.l.b16 %v294
      %v299 = vunpack.c.l.b16 %v295
      %v300 = vunpack.c.h.b16 %v294
      %v301 = vunpack.c.h.b16 %v295
      %v302 = vpack.c.b16 %v299, %v298
      %v303 = vpack.c.b16 %v301, %v300
      %306 = vst [vmem:[%s244] sm:$0xff] %v302
      %307 = vst [vmem:[%s244 + $0x8] sm:$0xff] %v303
      %s308 = smul.u32 2, %s19
      %p309 = scmp.lt.s32.totalorder %s18, 1
      %s310 = scalar_select %p309, %s18, 1
      %p311 = scmp.lt.s32.totalorder %s308, 1
      %s312 = scalar_select %p311, %s308, 1
      %s313 = smul.addr %s310, 4
      %s314 = sadd.s32 %s312, %s313
      %s315 = smul.addr %s314, 4
      %s316 = scalar_lea.vmem %s3, %s315
      // Predicated region
      $region33: #{rsu5_forward.39} parent=31 // pred_check
        %p317 = pneg %p123
      $region34: #{rsu5_forward.39} parent=31 // pred_check_branch
        %319 = sbr.rel (%p317) target = $region36
      $region35: #{rsu5_forward.39} parent=31 // pred_region
        %s320 = smul.u32 2, %s19
      $region36: #{rsu5_forward.39} parent=31 // pred_fallthru
        _
    $region32: #{rsu5_forward.39} parent=5 // pred_fallthru
      _
    %p321 = scmp.le.s32.totalorder 2, %s9
    // Predicated region
    $region37: #{rsu5_forward.39} parent=5 // pred_check
      %p322 = pneg %p321
    $region38: #{rsu5_forward.39} parent=5 // pred_check_branch
      %324 = sbr.rel (%p322) target = $region40
    $region39: #{rsu5_forward.39} parent=5 // pred_region
      %s325 = ssub.s32 %s9, 2
      // Predicated region
      $region41: #{rsu5_forward.39} parent=39 // pred_check
        %p326 = pneg %p129
      $region42: #{rsu5_forward.39} parent=39 // pred_check_branch
        %328 = sbr.rel (%p326) target = $region44
      $region43: #{rsu5_forward.39} parent=39 // pred_region
        %s329 = smul.u32 2, %s21
        %p330 = scmp.lt.s32.totalorder %s20, 1
        %s331 = scalar_select %p330, %s20, 1
        %p332 = scmp.lt.s32.totalorder %s329, 1
        %s333 = scalar_select %p332, %s329, 1
        %s334 = smul.addr %s331, 4
        %s335 = sadd.s32 %s333, %s334
        %s336 = smul.addr %s335, 4
        %s337 = scalar_lea.vmem %s3, %s336
      $region44: #{rsu5_forward.39} parent=39 // pred_fallthru
        _
    $region40: #{rsu5_forward.39} parent=5 // pred_fallthru
      _
  $region6: #{rsu5_forward.39} parent=0 // loop_footer
    %s13 = sadd.s32 1, %s9
  $region7: #{rsu5_forward.39} parent=0 // loop_footer_branch
    %8 = sbr.rel target = $region3
  $region8: #{rsu5_forward.39} parent=0 // loop_exit
    _

// kernel: rsu5_forward.38
$region0: #{rsu5_forward.38}
  #allocation0 [shape = 'u32[]', space=smem, size = 0x4, offset = 0x4, fixed_abs, tag = 'smem constant byte address 0x4 - core index']
  #allocation1 [shape = 'u32[144,128]{1,0:T(1,128)}', space=vmem, size = 0x12000, scoped, tag = 'internal scratch']
  %s0 = inlined_call_operand.vmem [shape: bf16[2,16,256], index: 0, kind: input, shape index: {}]
  %s1 = inlined_call_operand.vmem [shape: bf16[2,16,256], index: 1, kind: input, shape index: {}]
  %s2 = inlined_call_operand.vmem [shape: bf16[3,16,96], index: 2, kind: input, shape index: {}]
  %s3 = inlined_call_operand.vmem [shape: bf16[2,16,256], index: 3, kind: output, shape index: {0}]
  %s4 = inlined_call_operand.vmem [shape: f32[2,1,16,2], index: 4, kind: output, shape index: {1}]
  %5 = xla_tuple %s3, %s4
  %s6 = sld [smem:[#allocation0]]
  $region53: #{rsu5_forward.38} parent=0
    _
  %s8 = ssub.s32 1, %s6
  %s9 = scalar_select 0, %s8, %s6
  loop: start=0, step=1, limit=4
  $region2: #{rsu5_forward.38} parent=0 // loop_pre_header
    _
  $region3: #{rsu5_forward.38} parent=0 // loop_header
    %s11 = sphi 0, %s15
    %p12 = scmp.ge.s32.totalorder %s11, 4
    %s18 = sphi 0, %s30
    %s19 = sphi 0, %s26
    %s20 = sphi 0, %s18
    %s21 = sphi 0, %s19
    %s22 = sphi 0, %s20
    %s23 = sphi 0, %s21
    %s35 = sphi 0, %s37
    %s38 = sphi 0, %s35
    %s39 = sphi 0, %s38
    %s55 = sphi 0, %s39
    %s63 = sphi 0, %s65
    %s66 = sphi 0, %s63
    %s67 = sphi 0, %s66
    %s83 = sphi 0, %s67
    %s87 = sphi 0, %s87
    %s89 = sphi 0, %s87
    %s90 = sphi 0, %s89
    %s104 = sphi 0, %s90
    %s112 = sphi 0, %s114
    %s115 = sphi 0, %s112
    %s116 = sphi 0, %s115
    %s132 = sphi 0, %s116
    %s140 = sphi 0, %s142
    %s143 = sphi 0, %s140
    %s144 = sphi 0, %s143
    %s160 = sphi 0, %s144
  $region4: #{rsu5_forward.38} parent=0 // loop_header_branch
    %14 = sbr.rel (%p12) target = $region8
  $region5: #{rsu5_forward.38} parent=0 // loop_body
    %s16 = ssub.s32 %s11, 1
    %s17 = ssub.s32 %s11, 2
    %s24 = sadd.s32 1, %s19
    %p25 = scmp.ge.s32.totalorder %s24, 1
    %s26 = scalar_select %p25, 0, %s24
    %s27 = sadd.s32 1, %s18
    %s28 = scalar_select %p25, %s27, %s18
    %p29 = scmp.ge.s32.totalorder %s28, 2
    %s30 = scalar_select %p29, 0, %s28
    %s31 = ssub.s32 %s18, %s30
    %s32 = ssub.s32 %s19, %s26
    %s33 = sor.u32 %s31, %s32
    %p34 = scmp.eq.s32.totalorder %s33, 0
    %s36 = sadd.s32 %s35, 1
    %s37 = scalar_select %p34, %s35, %s36
    %p40 = pneg %p34
    %p41 = scmp.eq.s32.totalorder %s11, 1
    %p42 = por %p40, %p41
    %p43 = scmp.ne.s32.totalorder %s35, %s38
    %p44 = scmp.eq.s32.totalorder %s11, 0
    %p45 = por %p43, %p44
    %p46 = scmp.ne.s32.totalorder %s35, %s38
    %p47 = scmp.eq.s32.totalorder %s16, 1
    %p48 = por %p46, %p47
    %p49 = scmp.ne.s32.totalorder %s38, %s39
    %p50 = scmp.eq.s32.totalorder %s16, 0
    %p51 = por %p49, %p50
    %p52 = scmp.ne.s32.totalorder %s38, %s39
    %p53 = scmp.eq.s32.totalorder %s17, 1
    %p54 = por %p52, %p53
    %p56 = scmp.ne.s32.totalorder %s39, %s55
    %p57 = scmp.eq.s32.totalorder %s17, 0
    %p58 = por %p56, %p57
    %s59 = ssub.s32 %s18, %s30
    %s60 = ssub.s32 %s19, %s26
    %s61 = sor.u32 %s59, %s60
    %p62 = scmp.eq.s32.totalorder %s61, 0
    %s64 = sadd.s32 %s63, 1
    %s65 = scalar_select %p62, %s63, %s64
    %p68 = pneg %p62
    %p69 = scmp.eq.s32.totalorder %s11, 1
    %p70 = por %p68, %p69
    %p71 = scmp.ne.s32.totalorder %s63, %s66
    %p72 = scmp.eq.s32.totalorder %s11, 0
    %p73 = por %p71, %p72
    %p74 = scmp.ne.s32.totalorder %s63, %s66
    %p75 = scmp.eq.s32.totalorder %s16, 1
    %p76 = por %p74, %p75
    %p77 = scmp.ne.s32.totalorder %s66, %s67
    %p78 = scmp.eq.s32.totalorder %s16, 0
    %p79 = por %p77, %p78
    %p80 = scmp.ne.s32.totalorder %s66, %s67
    %p81 = scmp.eq.s32.totalorder %s17, 1
    %p82 = por %p80, %p81
    %p84 = scmp.ne.s32.totalorder %s67, %s83
    %p85 = scmp.eq.s32.totalorder %s17, 0
    %p86 = por %p84, %p85
    %s88 = sadd.s32 %s87, 1
    %p91 = scmp.eq.s32.totalorder %s11, 1
    %p92 = scmp.ne.s32.totalorder %s87, %s89
    %p93 = scmp.eq.s32.totalorder %s11, 0
    %p94 = por %p92, %p93
    %p95 = scmp.ne.s32.totalorder %s87, %s89
    %p96 = scmp.eq.s32.totalorder %s16, 1
    %p97 = por %p95, %p96
    %p98 = scmp.ne.s32.totalorder %s89, %s90
    %p99 = scmp.eq.s32.totalorder %s16, 0
    %p100 = por %p98, %p99
    %p101 = scmp.ne.s32.totalorder %s89, %s90
    %p102 = scmp.eq.s32.totalorder %s17, 1
    %p103 = por %p101, %p102
    %p105 = scmp.ne.s32.totalorder %s90, %s104
    %p106 = scmp.eq.s32.totalorder %s17, 0
    %p107 = por %p105, %p106
    %s108 = ssub.s32 %s18, %s30
    %s109 = ssub.s32 %s19, %s26
    %s110 = sor.u32 %s108, %s109
    %p111 = scmp.eq.s32.totalorder %s110, 0
    %s113 = sadd.s32 %s112, 1
    %s114 = scalar_select %p111, %s112, %s113
    %p117 = pneg %p111
    %p118 = scmp.eq.s32.totalorder %s11, 1
    %p119 = por %p117, %p118
    %p120 = scmp.ne.s32.totalorder %s112, %s115
    %p121 = scmp.eq.s32.totalorder %s11, 0
    %p122 = por %p120, %p121
    %p123 = scmp.ne.s32.totalorder %s112, %s115
    %p124 = scmp.eq.s32.totalorder %s16, 1
    %p125 = por %p123, %p124
    %p126 = scmp.ne.s32.totalorder %s115, %s116
    %p127 = scmp.eq.s32.totalorder %s16, 0
    %p128 = por %p126, %p127
    %p129 = scmp.ne.s32.totalorder %s115, %s116
    %p130 = scmp.eq.s32.totalorder %s17, 1
    %p131 = por %p129, %p130
    %p133 = scmp.ne.s32.totalorder %s116, %s132
    %p134 = scmp.eq.s32.totalorder %s17, 0
    %p135 = por %p133, %p134
    %s136 = ssub.s32 %s18, %s30
    %s137 = ssub.s32 %s19, %s26
    %s138 = sor.u32 %s136, %s137
    %p139 = scmp.eq.s32.totalorder %s138, 0
    %s141 = sadd.s32 %s140, 1
    %s142 = scalar_select %p139, %s140, %s141
    %p145 = pneg %p139
    %p146 = scmp.eq.s32.totalorder %s11, 1
    %p147 = por %p145, %p146
    %p148 = scmp.ne.s32.totalorder %s140, %s143
    %p149 = scmp.eq.s32.totalorder %s11, 0
    %p150 = por %p148, %p149
    %p151 = scmp.ne.s32.totalorder %s140, %s143
    %p152 = scmp.eq.s32.totalorder %s16, 1
    %p153 = por %p151, %p152
    %p154 = scmp.ne.s32.totalorder %s143, %s144
    %p155 = scmp.eq.s32.totalorder %s16, 0
    %p156 = por %p154, %p155
    %p157 = scmp.ne.s32.totalorder %s143, %s144
    %p158 = scmp.eq.s32.totalorder %s17, 1
    %p159 = por %p157, %p158
    %p161 = scmp.ne.s32.totalorder %s144, %s160
    %p162 = scmp.eq.s32.totalorder %s17, 0
    %p163 = por %p161, %p162
    %p164 = scmp.le.s32.totalorder 1, %s11
    %p165 = scmp.lt.s32.totalorder %s11, 3
    %p166 = pnand %p164, %p165
    %p167 = pneg %p166
    // Predicated region
    $region9: #{rsu5_forward.38} parent=5 // pred_check
      _
    $region10: #{rsu5_forward.38} parent=5 // pred_check_branch
      %169 = sbr.rel (%p166) target = $region12
    $region11: #{rsu5_forward.38} parent=5 // pred_region
      %s170 = ssub.s32 %s11, 1
      // Predicated region
      $region13: #{rsu5_forward.38} parent=11 // pred_check
        %p171 = pneg %p100
      $region14: #{rsu5_forward.38} parent=11 // pred_check_branch
        %173 = sbr.rel (%p171) target = $region16
      $region15: #{rsu5_forward.38} parent=11 // pred_region
        _
      $region16: #{rsu5_forward.38} parent=11 // pred_fallthru
        _
    $region12: #{rsu5_forward.38} parent=5 // pred_fallthru
      _
    %p174 = scmp.lt.s32.totalorder %s11, 2
    // Predicated region
    $region17: #{rsu5_forward.38} parent=5 // pred_check
      %p175 = pneg %p174
    $region18: #{rsu5_forward.38} parent=5 // pred_check_branch
      %177 = sbr.rel (%p175) target = $region20
    $region19: #{rsu5_forward.38} parent=5 // pred_region
      // Predicated region
      $region21: #{rsu5_forward.38} parent=19 // pred_check
        %p178 = pneg %p45
      $region22: #{rsu5_forward.38} parent=19 // pred_check_branch
        %180 = sbr.rel (%p178) target = $region24
      $region23: #{rsu5_forward.38} parent=19 // pred_region
        %s181 = smul.u32 2, %s19
        %p182 = scmp.lt.s32.totalorder %s18, 1
        %s183 = scalar_select %p182, %s18, 1
        %p184 = scmp.lt.s32.totalorder %s181, 1
        %s185 = scalar_select %p184, %s181, 1
        %s186 = smul.addr %s183, 4
        %s187 = sadd.s32 %s185, %s186
        %s188 = smul.addr %s187, 4
        %s189 = scalar_lea.vmem %s0, %s188
        %s190 = smul.u32 2, %s19
      $region24: #{rsu5_forward.38} parent=19 // pred_fallthru
        _
      // Predicated region
      $region25: #{rsu5_forward.38} parent=19 // pred_check
        %p191 = pneg %p73
      $region26: #{rsu5_forward.38} parent=19 // pred_check_branch
        %193 = sbr.rel (%p191) target = $region28
      $region27: #{rsu5_forward.38} parent=19 // pred_region
        %s194 = smul.u32 2, %s19
        %p195 = scmp.lt.s32.totalorder %s18, 1
        %s196 = scalar_select %p195, %s18, 1
        %p197 = scmp.lt.s32.totalorder %s194, 1
        %s198 = scalar_select %p197, %s194, 1
        %s199 = smul.addr %s196, 4
        %s200 = sadd.s32 %s198, %s199
        %s201 = smul.addr %s200, 4
        %s202 = scalar_lea.vmem %s1, %s201
        %s203 = smul.u32 2, %s19
      $region28: #{rsu5_forward.38} parent=19 // pred_fallthru
        _
    $region20: #{rsu5_forward.38} parent=5 // pred_fallthru
      _
    %p204 = scmp.le.s32.totalorder 1, %s11
    %p205 = scmp.lt.s32.totalorder %s11, 3
    %p206 = pnand %p204, %p205
    %p207 = pneg %p206
    // Predicated region
    $region29: #{rsu5_forward.38} parent=5 // pred_check
      _
    $region30: #{rsu5_forward.38} parent=5 // pred_check_branch
      %209 = sbr.rel (%p206) target = $region32
    $region31: #{rsu5_forward.38} parent=5 // pred_region
      %s210 = ssub.s32 %s11, 1
      %s211 = smul.u32 2, %s21
      %p212 = scmp.lt.s32.totalorder %s20, 1
      %s213 = scalar_select %p212, %s20, 1
      %p214 = scmp.lt.s32.totalorder %s211, 1
      %s215 = scalar_select %p214, %s211, 1
      %s216 = smul.addr %s213, 4
      %s217 = sadd.s32 %s215, %s216
      %s218 = smul.addr %s217, 4
      %s219 = scalar_lea.vmem %s0, %s218
      %p220 = pneg %p51
      %p221 = pneg %p48
      %s222 = smul.u32 2, %s21
      %p223 = scmp.lt.s32.totalorder %s20, 1
      %s224 = scalar_select %p223, %s20, 1
      %p225 = scmp.lt.s32.totalorder %s222, 1
      %s226 = scalar_select %p225, %s222, 1
      %s227 = smul.addr %s224, 4
      %s228 = sadd.s32 %s226, %s227
      %s229 = smul.addr %s228, 4
      %s230 = scalar_lea.vmem %s1, %s229
      %p231 = pneg %p79
      %p232 = pneg %p76
      %p233 = pneg %p100
      %p234 = pneg %p97
      %p235 = pneg %p128
      %p236 = pneg %p125
      %s237 = smul.u32 2, %s21
      %p238 = scmp.lt.s32.totalorder %s20, 1
      %s239 = scalar_select %p238, %s20, 1
      %p240 = scmp.lt.s32.totalorder %s237, 1
      %s241 = scalar_select %p240, %s237, 1
      %s242 = smul.addr %s239, 4
      %s243 = sadd.s32 %s241, %s242
      %s244 = smul.addr %s243, 4
      %s245 = scalar_lea.vmem %s3, %s244
      %p246 = pneg %p156
      %p247 = pneg %p153
      %p248 = scmp.lt.s32.totalorder %s20, 1
      %s249 = scalar_select %p248, %s20, 1
      %p250 = scmp.lt.s32.totalorder %s21, 0
      %s251 = scalar_select %p250, %s21, 0
      %s252 = smul.addr %s251, 2
      %s253 = smul.addr %s249, 2
      %s254 = sadd.s32 %s252, %s253
      %s255 = smul.addr %s254, 8
      %s256 = scalar_lea.vmem %s4, %s255
      %s257 = smul.u32 2, %s21
      %p258 = scmp.lt.s32.totalorder %s20, 1
      %s259 = scalar_select %p258, %s20, 1
      %p260 = scmp.lt.s32.totalorder %s257, 1
      %s261 = scalar_select %p260, %s257, 1
      %s262 = smul.addr %s259, 4
      %s263 = sadd.s32 %s261, %s262
      %s264 = smul.addr %s263, 4
      %s265 = scalar_lea.vmem %s0, %s264
      %s266 = smul.u32 2, %s21
      %s267 = smul.u32 2, %s21
      %p268 = scmp.lt.s32.totalorder %s20, 1
      %s269 = scalar_select %p268, %s20, 1
      %p270 = scmp.lt.s32.totalorder %s267, 1
      %s271 = scalar_select %p270, %s267, 1
      %s272 = smul.addr %s269, 4
      %s273 = sadd.s32 %s271, %s272
      %s274 = smul.addr %s273, 4
      %s275 = scalar_lea.vmem %s1, %s274
      %s276 = smul.u32 2, %s21
      %s277 = smul.u32 2, %s21
      %p278 = scmp.lt.s32.totalorder %s20, 1
      %s279 = scalar_select %p278, %s20, 1
      %p280 = scmp.lt.s32.totalorder %s277, 1
      %s281 = scalar_select %p280, %s277, 1
      %s282 = smul.addr %s279, 4
      %s283 = sadd.s32 %s281, %s282
      %s284 = smul.addr %s283, 4
      %s285 = scalar_lea.vmem %s3, %s284
      %s286 = smul.u32 2, %s21
      %p287 = scmp.lt.s32.totalorder %s20, 1
      %s288 = scalar_select %p287, %s20, 1
      %p289 = scmp.lt.s32.totalorder %s21, 0
      %s290 = scalar_select %p289, %s21, 0
      %s291 = smul.addr %s290, 2
      %s292 = smul.addr %s288, 2
      %s293 = sadd.s32 %s291, %s292
      %s294 = smul.addr %s293, 8
      %s295 = scalar_lea.vmem %s4, %s294
      %v297 = vld [vmem:[%s265] sm:$0xff]
      %v298 = vld [vmem:[%s265 + $0x8] sm:$0xff]
      %v301 = vunpack.c.l.b16 %v297
      %v302 = vunpack.c.h.b16 %v297
      %v303 = vunpack.c.l.b16 %v298
      %v304 = vunpack.c.h.b16 %v298
      %v305 = vpack.c.b16 %v303, %v301
      %v306 = vpack.c.b16 %v304, %v302
      %307 = vrot.lane.b32.xlu0 %v305, 16
      %v308 = vpop.permute.xlu0 %307
      %309 = vrot.lane.b32.xlu0 %v306, 16
      %v310 = vpop.permute.xlu0 %309
      %vm311 = vcmask 130048
      %v312 = vsel %vm311, %v308, %v310
      %vm314 = vcmask 130048
      %v317 = vsel %vm314, 0, %v308
      %319 = vrot.lane.b32.xlu0 %v305, 112
      %v320 = vpop.permute.xlu0 %319
      %321 = vrot.lane.b32.xlu0 %v306, 112
      %v322 = vpop.permute.xlu0 %321
      %vm323 = vcmask 916480
      %v324 = vsel %vm323, %v320, %v322
      %vm326 = vcmask 916480
      %v328 = vsel %vm326, %v322, 0
      %v330 = vld [vmem:[%s275] sm:$0xff]
      %v331 = vld [vmem:[%s275 + $0x8] sm:$0xff]
      %v334 = vunpack.c.l.b16 %v330
      %v335 = vunpack.c.h.b16 %v330
      %v336 = vunpack.c.l.b16 %v331
      %v337 = vunpack.c.h.b16 %v331
      %v338 = vpack.c.b16 %v336, %v334
      %v339 = vpack.c.b16 %v337, %v335
      %340 = vrot.lane.b32.xlu0 %v338, 16
      %v341 = vpop.permute.xlu0 %340
      %342 = vrot.lane.b32.xlu0 %v339, 16
      %v343 = vpop.permute.xlu0 %342
      %v344 = vsel %vm311, %v341, %v343
      %v347 = vsel %vm314, 0, %v341
      %349 = vrot.lane.b32.xlu0 %v338, 112
      %v350 = vpop.permute.xlu0 %349
      %351 = vrot.lane.b32.xlu0 %v339, 112
      %v352 = vpop.permute.xlu0 %351
      %v353 = vsel %vm323, %v350, %v352
      %v356 = vsel %vm326, %v352, 0
      %v362 = vld [vmem:[%s2] sm:$0xf]
      %v363 = vld [vmem:[%s2 + $0x4] sm:$0xf]
      %v366 = vunpack.c.l.b16 %v362
      %v367 = vunpack.c.l.b16 %v363
      %v368 = vpack.c.b16 %v367, %v366
      %vm369 = vcmask 785408
      %v371 = vsel %vm369, %v368, 0
      %373 = vmatprep.subr.bf16.mxu0 %v312
      %374 = vmatpush1.bf16.msra.mxu0 %v317
      %375 = vmatprep.subr.bf16.mxu0 %v306
      %376 = vmatpush1.bf16.msra.mxu0 %v305
      %377 = vmatprep.subr.bf16.mxu0 %v328
      %378 = vmatpush1.bf16.msra.mxu0 %v324
      %379 = vmatprep.subr.bf16.mxu0 %v344
      %380 = vmatpush1.bf16.msra.mxu0 %v347
      %381 = vmatprep.subr.bf16.mxu0 %v339
      %382 = vmatpush1.bf16.msra.mxu0 %v338
      %383 = vmatprep.subr.bf16.mxu0 %v356
      %384 = vmatpush1.bf16.msra.mxu0 %v353
      %385 = vmatprep.subr.bf16.mxu0 0
      %386 = vmatpush1.bf16.msra.mxu0 0
      %387 = vmatprep.subr.bf16.mxu0 0
      %388 = vmatpush1.bf16.msra.mxu0 0
      %389 = vmatprep.subr.bf16.mxu0 0
      %390 = vmatpush1.bf16.msra.mxu0 0
      %391 = vmatprep.subr.bf16.mxu0 0
      %392 = vmatpush1.bf16.msra.mxu0 0
      %393 = vmatprep.subr.bf16.mxu0 0
      %394 = vmatpush1.bf16.msra.mxu0 0
      %395 = vmatprep.subr.bf16.mxu0 0
      %396 = vmatpush1.bf16.msra.mxu0 0
      %397 = vmatprep.subr.bf16.mxu0 0
      %398 = vmatpush1.bf16.msra.mxu0 0
      %399 = vmatprep.subr.bf16.mxu0 0
      %400 = vmatpush1.bf16.msra.mxu0 0
      %401 = vmatprep.subr.bf16.mxu0 0
      %402 = vmatpush1.bf16.msra.mxu0 0
      %403 = vmatprep.subr.bf16.mxu0 0
      %404 = vmatpush1.bf16.msra.mxu0 0
      %405 = vmatprep.mubr.bf16.mxu0 0
      %406 = vmatmul.mubr.bf16.gmra.mrb[0].mxu0 %v371
      %v407 = vpop.f32.mrb[0].mxu0
      %v408 = vadd.f32 0.0, %v407
      %v409 = vpop.f32.mrb[0].mxu0
      %v410 = vadd.f32 0.0, %v409
      %v411 = vpop.f32.mrb[0].mxu0
      %v412 = vadd.f32 0.0, %v411
      %v413 = vpop.f32.mrb[0].mxu0
      %v414 = vadd.f32 0.0, %v413
      %415 = vdwg.mxu0
      %s416 = scalar_lea.vmem %s2, 8
      %v417 = vld [vmem:[%s416] sm:$0xf]
      %v418 = vld [vmem:[%s416 + $0x4] sm:$0xf]
      %s419 = scalar_lea.vmem %s2, 16
      %v420 = vld [vmem:[%s419] sm:$0xf]
      %v421 = vld [vmem:[%s419 + $0x4] sm:$0xf]
      %v424 = vunpack.c.l.b16 %v420
      %v425 = vunpack.c.l.b16 %v421
      %v426 = vpack.c.b16 %v425, %v424
      %v428 = vsel %vm369, %v426, 0
      %430 = vmatprep.subr.bf16.mxu0 %v312
      %431 = vmatpush1.bf16.msra.mxu0 %v317
      %432 = vmatprep.subr.bf16.mxu0 %v306
      %433 = vmatpush1.bf16.msra.mxu0 %v305
      %434 = vmatprep.subr.bf16.mxu0 %v328
      %435 = vmatpush1.bf16.msra.mxu0 %v324
      %436 = vmatprep.subr.bf16.mxu0 %v344
      %437 = vmatpush1.bf16.msra.mxu0 %v347
      %438 = vmatprep.subr.bf16.mxu0 %v339
      %439 = vmatpush1.bf16.msra.mxu0 %v338
      %440 = vmatprep.subr.bf16.mxu0 %v356
      %441 = vmatpush1.bf16.msra.mxu0 %v353
      %442 = vmatprep.subr.bf16.mxu0 0
      %443 = vmatpush1.bf16.msra.mxu0 0
      %444 = vmatprep.subr.bf16.mxu0 0
      %445 = vmatpush1.bf16.msra.mxu0 0
      %446 = vmatprep.subr.bf16.mxu0 0
      %447 = vmatpush1.bf16.msra.mxu0 0
      %448 = vmatprep.subr.bf16.mxu0 0
      %449 = vmatpush1.bf16.msra.mxu0 0
      %450 = vmatprep.subr.bf16.mxu0 0
      %451 = vmatpush1.bf16.msra.mxu0 0
      %452 = vmatprep.subr.bf16.mxu0 0
      %453 = vmatpush1.bf16.msra.mxu0 0
      %454 = vmatprep.subr.bf16.mxu0 0
      %455 = vmatpush1.bf16.msra.mxu0 0
      %456 = vmatprep.subr.bf16.mxu0 0
      %457 = vmatpush1.bf16.msra.mxu0 0
      %458 = vmatprep.subr.bf16.mxu0 0
      %459 = vmatpush1.bf16.msra.mxu0 0
      %460 = vmatprep.subr.bf16.mxu0 0
      %461 = vmatpush1.bf16.msra.mxu0 0
      %462 = vmatprep.mubr.bf16.mxu0 0
      %463 = vmatmul.mubr.bf16.gmra.mrb[0].mxu0 %v428
      %v464 = vpop.f32.mrb[0].mxu0
      %v465 = vadd.f32 0.0, %v464
      %v466 = vpop.f32.mrb[0].mxu0
      %v467 = vadd.f32 0.0, %v466
      %v468 = vpop.f32.mrb[0].mxu0
      %v469 = vadd.f32 0.0, %v468
      %v470 = vpop.f32.mrb[0].mxu0
      %v471 = vadd.f32 0.0, %v470
      %472 = vdwg.mxu0
      %v473 = vlaneseq
      %v474 = vand.u32 %v473, 127
      %v475 = vadd.s32 %v474, 128
      %vm476 = vcmp.lt.s32.totalorder %v474, 0
      %v477 = vsub.s32 0, %v474
      %v478 = vsel %vm476, %v477, %v474
      %v479 = vshrl.u32 %v478, 4
      %v480 = vand.u32 %v478, 15
      %v481 = vsub.s32 0, %v480
      %v482 = vsel %vm476, %v481, %v480
      %vm483 = vcmp.lt.s32.totalorder %v475, 0
      %v484 = vsub.s32 0, %v475
      %v485 = vsel %vm483, %v484, %v475
      %v486 = vshrl.u32 %v485, 4
      %v487 = vand.u32 %v485, 15
      %v488 = vsub.s32 0, %v487
      %v489 = vsel %vm483, %v488, %v487
      %vm490 = vcmp.ne.s32.totalorder %v482, 0
      %vm491 = vcmp.ne.s32.totalorder %v489, 0
      %vm492 = vcmp.lt.s32.totalorder %v482, 0
      %vm493 = vcmp.lt.s32.totalorder %v489, 0
      %vm494 = vmand %vm492, %vm490
      %vm495 = vmand %vm493, %vm491
      %v496 = vadd.s32 %v482, 16
      %v497 = vadd.s32 %v489, 16
      %v498 = vsel %vm494, %v496, %v482
      %v499 = vsel %vm495, %v497, %v489
      %504 = vrot.lane.b32.xlu0 %v408, 1
      %v505 = vpop.permute.xlu0 %504
      %506 = vrot.lane.b32.xlu0 %v410, 1
      %v507 = vpop.permute.xlu0 %506
      %508 = vrot.lane.b32.xlu0 %v412, 1
      %v509 = vpop.permute.xlu0 %508
      %510 = vrot.lane.b32.xlu0 %v414, 1
      %v511 = vpop.permute.xlu0 %510
      %vm512 = vcmask 7168
      %v513 = vsel %vm512, %v505, %v507
      %v514 = vsel %vm512, %v509, %v511
      %v519 = vsel %vm512, 0.0, %v505
      %v520 = vsel %vm512, 0.0, %v509
      %525 = vrot.lane.b32.xlu0 %v465, 127
      %v526 = vpop.permute.xlu0 %525
      %527 = vrot.lane.b32.xlu0 %v467, 127
      %v528 = vpop.permute.xlu0 %527
      %529 = vrot.lane.b32.xlu0 %v469, 127
      %v530 = vpop.permute.xlu0 %529
      %531 = vrot.lane.b32.xlu0 %v471, 127
      %v532 = vpop.permute.xlu0 %531
      %vm533 = vcmask 1039360
      %v534 = vsel %vm533, %v526, %v528
      %v535 = vsel %vm533, %v530, %v532
      %v540 = vsel %vm533, %v528, 0.0
      %v541 = vsel %vm533, %v532, 0.0
      %vm542 = vcmp.ge.s32.totalorder %v498, 1
      %vm543 = vcmp.ge.s32.totalorder %v499, 1
      %v544 = vsel %vm542, 1, 0
      %v545 = vsel %vm543, 1, 0
      %vm546 = vcmp.eq.s32.totalorder %v544, 1
      %vm547 = vcmp.eq.s32.totalorder %v545, 1
      %v548 = vsel %vm546, %v519, 0.0
      %v549 = vsel %vm547, %v513, 0.0
      %v550 = vsel %vm546, %v520, 0.0
      %v551 = vsel %vm547, %v514, 0.0
      %v554 = vunpack.c.l.b16 %v417
      %v555 = vunpack.c.l.b16 %v418
      %v556 = vpack.c.b16 %v555, %v554
      %v558 = vsel %vm369, %v556, 0
      %560 = vmatprep.subr.bf16.mxu0 %v312
      %561 = vmatpush1.bf16.msra.mxu0 %v317
      %562 = vmatprep.subr.bf16.mxu0 %v306
      %563 = vmatpush1.bf16.msra.mxu0 %v305
      %564 = vmatprep.subr.bf16.mxu0 %v328
      %565 = vmatpush1.bf16.msra.mxu0 %v324
      %566 = vmatprep.subr.bf16.mxu0 %v344
      %567 = vmatpush1.bf16.msra.mxu0 %v347
      %568 = vmatprep.subr.bf16.mxu0 %v339
      %569 = vmatpush1.bf16.msra.mxu0 %v338
      %570 = vmatprep.subr.bf16.mxu0 %v356
      %571 = vmatpush1.bf16.msra.mxu0 %v353
      %572 = vmatprep.subr.bf16.mxu0 0
      %573 = vmatpush1.bf16.msra.mxu0 0
      %574 = vmatprep.subr.bf16.mxu0 0
      %575 = vmatpush1.bf16.msra.mxu0 0
      %576 = vmatprep.subr.bf16.mxu0 0
      %577 = vmatpush1.bf16.msra.mxu0 0
      %578 = vmatprep.subr.bf16.mxu0 0
      %579 = vmatpush1.bf16.msra.mxu0 0
      %580 = vmatprep.subr.bf16.mxu0 0
      %581 = vmatpush1.bf16.msra.mxu0 0
      %582 = vmatprep.subr.bf16.mxu0 0
      %583 = vmatpush1.bf16.msra.mxu0 0
      %584 = vmatprep.subr.bf16.mxu0 0
      %585 = vmatpush1.bf16.msra.mxu0 0
      %586 = vmatprep.subr.bf16.mxu0 0
      %587 = vmatpush1.bf16.msra.mxu0 0
      %588 = vmatprep.subr.bf16.mxu0 0
      %589 = vmatpush1.bf16.msra.mxu0 0
      %590 = vmatprep.subr.bf16.mxu0 0
      %591 = vmatpush1.bf16.msra.mxu0 0
      %592 = vmatprep.mubr.bf16.mxu0 0
      %593 = vmatmul.mubr.bf16.gmra.mrb[0].mxu0 %v558
      %v594 = vpop.f32.mrb[0].mxu0
      %v595 = vadd.f32 %v548, %v594
      %v596 = vpop.f32.mrb[0].mxu0
      %v597 = vadd.f32 %v549, %v596
      %v598 = vpop.f32.mrb[0].mxu0
      %v599 = vadd.f32 %v550, %v598
      %v600 = vpop.f32.mrb[0].mxu0
      %v601 = vadd.f32 %v551, %v600
      %602 = vdwg.mxu0
      %vm603 = vcmp.lt.s32.totalorder %v498, 15
      %vm604 = vcmp.lt.s32.totalorder %v499, 15
      %v605 = vsel %vm603, 1, 0
      %v606 = vsel %vm604, 1, 0
      %vm607 = vcmp.eq.s32.totalorder %v605, 1
      %vm608 = vcmp.eq.s32.totalorder %v606, 1
      %v609 = vsel %vm607, %v534, 0.0
      %v610 = vsel %vm608, %v540, 0.0
      %v611 = vsel %vm607, %v535, 0.0
      %v612 = vsel %vm608, %v541, 0.0
      %v613 = vadd.f32 %v595, %v609
      %v614 = vadd.f32 %v597, %v610
      %v615 = vadd.f32 %v599, %v611
      %v616 = vadd.f32 %v601, %v612
      %v617 = vpack.c.bf16 %v615, %v613
      %v618 = vpack.c.bf16 %v616, %v614
      %v621 = vunpack.c.l.b16 %v617
      %v622 = vunpack.c.l.b16 %v618
      %v623 = vunpack.c.h.b16 %v617
      %v624 = vunpack.c.h.b16 %v618
      %v625 = vpack.c.b16 %v622, %v621
      %v626 = vpack.c.b16 %v624, %v623
      %629 = vst [vmem:[%s285] sm:$0xff] %v625
      %630 = vst [vmem:[%s285 + $0x8] sm:$0xff] %v626
      %v631 = vadd.f32 %v613, %v614
      %632 = vadd.xlane.f32.xlu0 %v631
      %v633 = vpop.xlane.xlu0 %632
      %v634 = vadd.f32 %v615, %v616
      %635 = vadd.xlane.f32.xlu0 %v634
      %v636 = vpop.xlane.xlu0 %635
      %v637 = vmul.f32 %v613, %v613
      %v638 = vmul.f32 %v614, %v614
      %v639 = vmul.f32 %v615, %v615
      %v640 = vmul.f32 %v616, %v616
      %v641 = vadd.f32 %v637, %v638
      %642 = vadd.xlane.f32.xlu0 %v641
      %v643 = vpop.xlane.xlu0 %642
      %v644 = vadd.f32 %v639, %v640
      %645 = vadd.xlane.f32.xlu0 %v644
      %v646 = vpop.xlane.xlu0 %645
      %v647 = vsel %vm512, %v633, %v643
      %v648 = vsel %vm512, %v636, %v646
      %vm649 = vcmask 15360
      %650 = vst.msk [vmem:[%s295] sm:$0xff] %vm649, %v647
      %651 = vst.msk [vmem:[%s295 + $0x8] sm:$0xff] %vm649, %v648
      %s652 = smul.u32 2, %s21
      %p653 = scmp.lt.s32.totalorder %s20, 1
      %s654 = scalar_select %p653, %s20, 1
      %p655 = scmp.lt.s32.totalorder %s652, 1
      %s656 = scalar_select %p655, %s652, 1
      %s657 = smul.addr %s654, 4
      %s658 = sadd.s32 %s656, %s657
      %s659 = smul.addr %s658, 4
      %s660 = scalar_lea.vmem %s3, %s659
      %p661 = scmp.lt.s32.totalorder %s20, 1
      %s662 = scalar_select %p661, %s20, 1
      %p663 = scmp.lt.s32.totalorder %s21, 0
      %s664 = scalar_select %p663, %s21, 0
      %s665 = smul.addr %s664, 2
      %s666 = smul.addr %s662, 2
      %s667 = sadd.s32 %s665, %s666
      %s668 = smul.addr %s667, 8
      %s669 = scalar_lea.vmem %s4, %s668
      // Predicated region
      $region33: #{rsu5_forward.38} parent=31 // pred_check
        %p670 = pneg %p125
      $region34: #{rsu5_forward.38} parent=31 // pred_check_branch
        %672 = sbr.rel (%p670) target = $region36
      $region35: #{rsu5_forward.38} parent=31 // pred_region
        %s673 = smul.u32 2, %s21
      $region36: #{rsu5_forward.38} parent=31 // pred_fallthru
        _
      // Predicated region
      $region37: #{rsu5_forward.38} parent=31 // pred_check
        %p674 = pneg %p153
      $region38: #{rsu5_forward.38} parent=31 // pred_check_branch
        %676 = sbr.rel (%p674) target = $region40
      $region39: #{rsu5_forward.38} parent=31 // pred_region
        _
      $region40: #{rsu5_forward.38} parent=31 // pred_fallthru
        _
    $region32: #{rsu5_forward.38} parent=5 // pred_fallthru
      _
    %p677 = scmp.le.s32.totalorder 2, %s11
    // Predicated region
    $region41: #{rsu5_forward.38} parent=5 // pred_check
      %p678 = pneg %p677
    $region42: #{rsu5_forward.38} parent=5 // pred_check_branch
      %680 = sbr.rel (%p678) target = $region44
    $region43: #{rsu5_forward.38} parent=5 // pred_region
      %s681 = ssub.s32 %s11, 2
      // Predicated region
      $region45: #{rsu5_forward.38} parent=43 // pred_check
        %p682 = pneg %p131
      $region46: #{rsu5_forward.38} parent=43 // pred_check_branch
        %684 = sbr.rel (%p682) target = $region48
      $region47: #{rsu5_forward.38} parent=43 // pred_region
        %s685 = smul.u32 2, %s23
        %p686 = scmp.lt.s32.totalorder %s22, 1
        %s687 = scalar_select %p686, %s22, 1
        %p688 = scmp.lt.s32.totalorder %s685, 1
        %s689 = scalar_select %p688, %s685, 1
        %s690 = smul.addr %s687, 4
        %s691 = sadd.s32 %s689, %s690
        %s692 = smul.addr %s691, 4
        %s693 = scalar_lea.vmem %s3, %s692
      $region48: #{rsu5_forward.38} parent=43 // pred_fallthru
        _
      // Predicated region
      $region49: #{rsu5_forward.38} parent=43 // pred_check
        %p694 = pneg %p159
      $region50: #{rsu5_forward.38} parent=43 // pred_check_branch
        %696 = sbr.rel (%p694) target = $region52
      $region51: #{rsu5_forward.38} parent=43 // pred_region
        %p697 = scmp.lt.s32.totalorder %s22, 1
        %s698 = scalar_select %p697, %s22, 1
        %p699 = scmp.lt.s32.totalorder %s23, 0
        %s700 = scalar_select %p699, %s23, 0
        %s701 = smul.addr %s700, 2
        %s702 = smul.addr %s698, 2
        %s703 = sadd.s32 %s701, %s702
        %s704 = smul.addr %s703, 8
        %s705 = scalar_lea.vmem %s4, %s704
      $region52: #{rsu5_forward.38} parent=43 // pred_fallthru
        _
    $region44: #{rsu5_forward.38} parent=5 // pred_fallthru
      _
  $region6: #{rsu5_forward.38} parent=0 // loop_footer
    %s15 = sadd.s32 1, %s11
  $region7: #{rsu5_forward.38} parent=0 // loop_footer_branch
    %10 = sbr.rel target = $region3
  $region8: #{rsu5_forward.38} parent=0 // loop_exit
    _

</llo_original>
